<compile_context>
chip_gen: v7x
topology: tpu7x:2x2x1
jax: 0.10.0
libtpu: 0.0.40
codegen_flags: <defaults>
</compile_context>

<pallas_src>
import functools

import jax
import jax.numpy as jnp
from jax.experimental import pallas as pl
from jax.experimental.pallas import tpu as pltpu

GN_EPS = 1e-5


def _matmul_gn_relu_kernel(x_ref, w_ref, gamma_ref, beta_ref, gmat_ref, gmatT_ref,
                           o_ref, *, batch, spatial, cpg, eps):
    # Grid: (cout tile j [parallel], K tile k [arbitrary]).  Refs:
    #   x_ref     : (B*S, kt)        bf16 im2col patches (K ordered (ky,kx,cin))
    #   w_ref     : (kt, ct)         bf16 weight slice for this (k, j) tile
    #   gamma/beta: (1, ct)          f32 GN affine slice
    #   gmat/gmatT: (ct, G) / (G, ct) f32 one-hot group membership (group-aligned tile)
    #   o_ref     : (B*S, ct)        f32 output; block index constant across k => resident,
    #                                used directly as the accumulator.
    k = pl.program_id(1)
    nk = pl.num_programs(1)

    @pl.when(k == 0)
    def _init():
        o_ref[...] = jnp.zeros_like(o_ref)

    # One long-K MXU matmul per step; f32 accumulation into the resident output block.
    o_ref[...] += jnp.dot(x_ref[...], w_ref[...], preferred_element_type=jnp.float32)

    @pl.when(k == nk - 1)
    def _finalize():
        ct = o_ref.shape[-1]
        h = o_ref[...].reshape(batch, spatial, ct)        # (B, S, ct) f32, per-sample view
        n = jnp.float32(spatial * cpg)
        gm = gmat_ref[...]                                # (ct, G)
        gmt = gmatT_ref[...]                              # (G, ct)

        # Per-sample GroupNorm: group stats via lane-dense matmuls against the
        # membership matrix; broadcast back per-channel with its transpose.
        csum = jnp.sum(h, axis=1)                                            # (B, ct)
        gmean = jnp.dot(csum, gm, preferred_element_type=jnp.float32) / n    # (B, G)
        cmean = jnp.dot(gmean, gmt, preferred_element_type=jnp.float32)      # (B, ct)
        d = h - cmean[:, None, :]
        gvar = jnp.dot(jnp.sum(d * d, axis=1), gm,
                       preferred_element_type=jnp.float32) / n               # (B, G)
        cinv = jnp.dot(jax.lax.rsqrt(gvar + eps), gmt,
                       preferred_element_type=jnp.float32)                   # (B, ct)

        y = d * cinv[:, None, :] * gamma_ref[...] + beta_ref[...]
        o_ref[...] = jnp.maximum(y, 0.0).reshape(batch * spatial, ct)


def _im2col_3x3_s2_p1(x_nhwc):
    """3x3 / stride-2 / pad-1 patches: (B,H,W,C) -> (B*Ho*Wo, 9*C), K ordered (ky,kx,c)."""
    B, H, W, C = x_nhwc.shape
    assert H % 2 == 0 and W % 2 == 0
    Ho, Wo = H // 2, W // 2
    xp = jnp.pad(x_nhwc, ((0, 0), (1, 1), (1, 1), (0, 0)))
    taps = [xp[:, ky:ky + 2 * Ho:2, kx:kx + 2 * Wo:2, :]
            for ky in range(3) for kx in range(3)]        # each (B, Ho, Wo, C)
    patches = jnp.concatenate(taps, axis=-1)              # (B, Ho, Wo, 9*C)
    return patches.reshape(B * Ho * Wo, 9 * C), Ho, Wo


def conv3x3s2_gn_relu(x_nhwc, w_hwio, gamma, beta, *, num_groups, kt, cout_tiles):
    """Fused Conv2d(k=3, s=2, p=1, bias=False) + GroupNorm + ReLU.

    x_nhwc : (B, H, W, Cin) f32, H and W even.
    w_hwio : (3, 3, Cin, Cout) f32 (PyTorch OIHW maps via transpose(2, 3, 1, 0)).
    Returns (B, H//2, W//2, Cout) f32 NHWC.
    """
    B, H, W, Cin = x_nhwc.shape
    KH, KW, Cin_w, Cout = w_hwio.shape
    assert (KH, KW) == (3, 3) and Cin_w == Cin
    assert Cout % num_groups == 0
    cpg = Cout // num_groups

    ct = Cout // cout_tiles
    assert Cout % cout_tiles == 0
    assert ct % 128 == 0 and ct % cpg == 0     # lane-dense & group-aligned Cout tiles

    # Host-side layout plumbing: im2col to a lane-dense GEMM slab, bf16 for the MXU.
    patches, Ho, Wo = _im2col_3x3_s2_p1(x_nhwc)
    S = Ho * Wo
    M = B * S
    K = 9 * Cin
    assert K % kt == 0 and kt % 128 == 0 and M % 8 == 0

    patches_bf = patches.astype(jnp.bfloat16)                       # (M, K)
    w2d_bf = w_hwio.reshape(K, Cout).astype(jnp.bfloat16)           # (K, Cout)

    # One-hot group-membership matrix for GroupNorm stats (f32, stays lane-dense).
    gidx = jnp.arange(Cout) // cpg
    gmat = (gidx[:, None] == jnp.arange(num_groups)[None, :]).astype(jnp.float32)
    gmatT = jnp.transpose(gmat)
    gamma2 = gamma.reshape(1, Cout).astype(jnp.float32)
    beta2 = beta.reshape(1, Cout).astype(jnp.float32)

    nk = K // kt
    grid = (cout_tiles, nk)
    kernel = functools.partial(_matmul_gn_relu_kernel,
                               batch=B, spatial=S, cpg=cpg, eps=GN_EPS)

    # Honest traffic estimate: weights streamed once, patches once per cout tile.
    flops = 2 * M * K * Cout
    bytes_accessed = (cout_tiles * M * K * 2      # bf16 patches
                      + K * Cout * 2              # bf16 weights (single pass)
                      + M * Cout * 4              # f32 output
                      + 4 * (2 * Cout + 2 * Cout * num_groups))

    out = pl.pallas_call(
        kernel,
        out_shape=jax.ShapeDtypeStruct((M, Cout), jnp.float32),
        grid_spec=pltpu.PrefetchScalarGridSpec(
            num_scalar_prefetch=0,
            grid=grid,
            in_specs=[
                pl.BlockSpec((M, kt), lambda j, k: (0, k)),
                pl.BlockSpec((kt, ct), lambda j, k: (k, j)),
                pl.BlockSpec((1, ct), lambda j, k: (0, j)),
                pl.BlockSpec((1, ct), lambda j, k: (0, j)),
                pl.BlockSpec((ct, num_groups), lambda j, k: (j, 0)),
                pl.BlockSpec((num_groups, ct), lambda j, k: (0, j)),
            ],
            out_specs=pl.BlockSpec((M, ct), lambda j, k: (0, j)),
        ),
        compiler_params=pltpu.CompilerParams(
            dimension_semantics=("parallel", "arbitrary"),
            vmem_limit_bytes=32 * 1024 * 1024,
        ),
        cost_estimate=pl.CostEstimate(flops=int(flops),
                                      transcendentals=int(B * num_groups * cout_tiles),
                                      bytes_accessed=int(bytes_accessed)),
    )(patches_bf, w2d_bf, gamma2, beta2, gmat, gmatT)

    return out.reshape(B, Ho, Wo, Cout)


def conv_feat_finetune_forward(dino_feat, params):
    """dino_feat: (B, 1024, H, W) NCHW f32.  Returns (B, 128, H//4, W//4) NCHW."""
    w1, g1, b1, w2, g2, b2 = params
    x = jnp.transpose(dino_feat, (0, 2, 3, 1))                               # NCHW -> NHWC
    # conv1: K = 9*1024 = 9216 -> two K tiles; Cout=512 split into 2 group-aligned
    # lane-dense tiles (the "parallel" axis for v7x's two TensorCores).
    h = conv3x3s2_gn_relu(x, w1, g1, b1, num_groups=32, kt=4608, cout_tiles=2)
    # TODO(synk): the PyTorch module constructs its second norm as GroupNorm(32, 1024),
    # which cannot be applied to a 128-channel tensor (raises in PyTorch); we implement
    # the evident intent, GroupNorm(32, 128).
    y = conv3x3s2_gn_relu(h, w2, g2, b2, num_groups=32, kt=2304, cout_tiles=1)
    return jnp.transpose(y, (0, 3, 1, 2))                                    # NHWC -> NCHW


def _reference(x_nchw, params):
    """Pure-JAX f32 reference for correctness checking (true module semantics)."""
    w1, g1, b1, w2, g2, b2 = params

    def block(x, w, gamma, beta, groups):
        y = jax.lax.conv_general_dilated(
            x, w, window_strides=(2, 2), padding=((1, 1), (1, 1)),
            dimension_numbers=("NCHW", "HWIO", "NCHW"))
        B, C, Hh, Ww = y.shape
        yg = y.reshape(B, groups, C // groups, Hh, Ww)
        mean = yg.mean(axis=(2, 3, 4), keepdims=True)
        var = ((yg - mean) ** 2).mean(axis=(2, 3, 4), keepdims=True)
        yn = ((yg - mean) / jnp.sqrt(var + GN_EPS)).reshape(B, C, Hh, Ww)
        yn = yn * gamma.reshape(1, C, 1, 1) + beta.reshape(1, C, 1, 1)
        return jnp.maximum(yn, 0.0)

    h = block(x_nchw, w1, g1, b1, 32)
    return block(h, w2, g2, b2, 32)


def init_params(key):
    k1, k2, k3, k4, k5, k6 = jax.random.split(key, 6)
    # Conv weights in HWIO; GN affine perturbed from the PyTorch defaults so the
    # gamma/beta path is actually exercised.
    w1 = 0.02 * jax.random.normal(k1, (3, 3, 1024, 512), jnp.float32)
    w2 = 0.02 * jax.random.normal(k2, (3, 3, 512, 128), jnp.float32)
    g1 = 1.0 + 0.1 * jax.random.normal(k3, (512,), jnp.float32)
    b1 = 0.1 * jax.random.normal(k4, (512,), jnp.float32)
    g2 = 1.0 + 0.1 * jax.random.normal(k5, (128,), jnp.float32)
    b2 = 0.1 * jax.random.normal(k6, (128,), jnp.float32)
    return (w1, g1, b1, w2, g2, b2)


if __name__ == "__main__":
    # Channel widths are fixed by the module (1024 -> 512 -> 128); small spatial extent.
    B, C_IN, H, W = 2, 1024, 16, 16

    key = jax.random.PRNGKey(0)
    kx, kp = jax.random.split(key)
    x = jax.random.normal(kx, (B, C_IN, H, W), jnp.float32)
    params = init_params(kp)

    out = conv_feat_finetune_forward(x, params)
    jax.block_until_ready(out)
    assert out.shape == (B, 128, H // 4, W // 4), out.shape

    ref = _reference(x, params)
    jax.block_until_ready(ref)
    # Tolerance accommodates bf16 MXU inputs (GN math itself stays f32).
    assert bool(jnp.allclose(out, ref, atol=3e-2, rtol=3e-2)), float(
        jnp.max(jnp.abs(out - ref)))

    print("KERNEL_OK")
</pallas_src>

<mosaic_0001>
module attributes {stable_mosaic.version = 11 : i64} {
  func.func @_matmul_gn_relu_kernel(%arg0: i32, %arg1: i32, %arg2: memref<128x4608xbf16, #tpu.memory_space<vmem>>, %arg3: memref<4608x256xbf16, #tpu.memory_space<vmem>>, %arg4: memref<1x256xf32, #tpu.memory_space<vmem>>, %arg5: memref<1x256xf32, #tpu.memory_space<vmem>>, %arg6: memref<256x32xf32, #tpu.memory_space<vmem>>, %arg7: memref<32x256xf32, #tpu.memory_space<vmem>>, %arg8: memref<128x256xf32, #tpu.memory_space<vmem>>) attributes {dimension_semantics = [#tpu.dimension_semantics<parallel>, #tpu.dimension_semantics<arbitrary>], iteration_bounds = array<i64: 2, 2>, scalar_prefetch = 0 : i64, scratch_operands = 0 : i64, tpu.core_type = #tpu.core_type<tc>, window_params = [{transform_indices = @transform_0, window_bounds = array<i64: 128, 4608>}, {transform_indices = @transform_1, window_bounds = array<i64: 4608, 256>}, {transform_indices = @transform_2, window_bounds = array<i64: 1, 256>}, {transform_indices = @transform_3, window_bounds = array<i64: 1, 256>}, {transform_indices = @transform_4, window_bounds = array<i64: 256, 32>}, {transform_indices = @transform_5, window_bounds = array<i64: 32, 256>}, {transform_indices = @transform_6, window_bounds = array<i64: 128, 256>}]} {
    %c0_i32 = arith.constant 0 : i32
    %0 = arith.cmpi eq, %arg1, %c0_i32 : i32
    %1 = arith.extui %0 : i1 to i32
    %c0_i32_0 = arith.constant 0 : i32
    %2 = arith.cmpi ne, %1, %c0_i32_0 : i32
    scf.if %2 {
      %cst_9 = arith.constant 0.000000e+00 : f32
      %12 = vector.broadcast %cst_9 : f32 to vector<128x256xf32>
      %c0_10 = arith.constant 0 : index
      %c0_11 = arith.constant 0 : index
      %13 = vector.load %arg8[%c0_10, %c0_11] : memref<128x256xf32, #tpu.memory_space<vmem>>, vector<128x256xf32>
      tpu.vector_store %arg8[%c0_10, %c0_11], %12 {strides = array<i32>} : memref<128x256xf32, #tpu.memory_space<vmem>>, vector<128x256xf32>,
    } else {
    }
    %c0 = arith.constant 0 : index
    %c0_1 = arith.constant 0 : index
    %3 = vector.load %arg8[%c0, %c0_1] : memref<128x256xf32, #tpu.memory_space<vmem>>, vector<128x256xf32>
    %c0_2 = arith.constant 0 : index
    %c0_3 = arith.constant 0 : index
    %4 = vector.load %arg2[%c0_2, %c0_3] : memref<128x4608xbf16, #tpu.memory_space<vmem>>, vector<128x4608xbf16>
    %c0_4 = arith.constant 0 : index
    %c0_5 = arith.constant 0 : index
    %5 = vector.load %arg3[%c0_4, %c0_5] : memref<4608x256xbf16, #tpu.memory_space<vmem>>, vector<4608x256xbf16>
    %cst = arith.constant dense<0.000000e+00> : vector<128x256xf32>
    %6 = tpu.matmul %4, %5, %cst {dimension_numbers = #tpu.dot_dimension_numbers<[1], [0], [0], [1], [0, 0, 1, 1], [], []>} : vector<128x4608xbf16>, vector<4608x256xbf16>, vector<128x256xf32> -> vector<128x256xf32>
    %7 = arith.addf %3, %6 : vector<128x256xf32>
    %c0_6 = arith.constant 0 : index
    %c0_7 = arith.constant 0 : index
    %8 = vector.load %arg8[%c0_6, %c0_7] : memref<128x256xf32, #tpu.memory_space<vmem>>, vector<128x256xf32>
    tpu.vector_store %arg8[%c0_6, %c0_7], %7 {strides = array<i32>} : memref<128x256xf32, #tpu.memory_space<vmem>>, vector<128x256xf32>,
    %c1_i32 = arith.constant 1 : i32
    %9 = arith.cmpi eq, %arg1, %c1_i32 : i32
    %10 = arith.extui %9 : i1 to i32
    %c0_i32_8 = arith.constant 0 : i32
    %11 = arith.cmpi ne, %10, %c0_i32_8 : i32
    scf.if %11 {
      %c0_9 = arith.constant 0 : index
      %c0_10 = arith.constant 0 : index
      %12 = vector.load %arg8[%c0_9, %c0_10] : memref<128x256xf32, #tpu.memory_space<vmem>>, vector<128x256xf32>
      %13 = vector.shape_cast %12 : vector<128x256xf32> to vector<2x64x256xf32>
      %c0_11 = arith.constant 0 : index
      %c0_12 = arith.constant 0 : index
      %14 = vector.load %arg6[%c0_11, %c0_12] : memref<256x32xf32, #tpu.memory_space<vmem>>, vector<256x32xf32>
      %c0_13 = arith.constant 0 : index
      %c0_14 = arith.constant 0 : index
      %15 = vector.load %arg7[%c0_13, %c0_14] : memref<32x256xf32, #tpu.memory_space<vmem>>, vector<32x256xf32>
      %cst_15 = arith.constant dense<0.000000e+00> : vector<2x256xf32>
      %16 = vector.multi_reduction <add>, %13, %cst_15 [1] : vector<2x64x256xf32> to vector<2x256xf32>
      %cst_16 = arith.constant dense<0.000000e+00> : vector<2x32xf32>
      %17 = tpu.matmul %16, %14, %cst_16 {dimension_numbers = #tpu.dot_dimension_numbers<[1], [0], [0], [1], [0, 0, 1, 1], [], []>} : vector<2x256xf32>, vector<256x32xf32>, vector<2x32xf32> -> vector<2x32xf32>
      %cst_17 = arith.constant 1.024000e+03 : f32
      %18 = vector.broadcast %cst_17 : f32 to vector<2x32xf32>
      %19 = arith.divf %17, %18 : vector<2x32xf32>
      %cst_18 = arith.constant dense<0.000000e+00> : vector<2x256xf32>
      %20 = tpu.matmul %19, %15, %cst_18 {dimension_numbers = #tpu.dot_dimension_numbers<[1], [0], [0], [1], [0, 0, 1, 1], [], []>} : vector<2x32xf32>, vector<32x256xf32>, vector<2x256xf32> -> vector<2x256xf32>
      %21 = vector.shape_cast %20 : vector<2x256xf32> to vector<2x1x256xf32>
      %22 = vector.broadcast %21 : vector<2x1x256xf32> to vector<2x64x256xf32>
      %23 = arith.subf %13, %22 : vector<2x64x256xf32>
      %24 = arith.mulf %23, %23 : vector<2x64x256xf32>
      %cst_19 = arith.constant dense<0.000000e+00> : vector<2x256xf32>
      %25 = vector.multi_reduction <add>, %24, %cst_19 [1] : vector<2x64x256xf32> to vector<2x256xf32>
      %cst_20 = arith.constant dense<0.000000e+00> : vector<2x32xf32>
      %26 = tpu.matmul %25, %14, %cst_20 {dimension_numbers = #tpu.dot_dimension_numbers<[1], [0], [0], [1], [0, 0, 1, 1], [], []>} : vector<2x256xf32>, vector<256x32xf32>, vector<2x32xf32> -> vector<2x32xf32>
      %cst_21 = arith.constant 1.024000e+03 : f32
      %27 = vector.broadcast %cst_21 : f32 to vector<2x32xf32>
      %28 = arith.divf %26, %27 : vector<2x32xf32>
      %cst_22 = arith.constant 9.99999974E-6 : f32
      %29 = vector.broadcast %cst_22 : f32 to vector<2x32xf32>
      %30 = arith.addf %28, %29 : vector<2x32xf32>
      %31 = math.rsqrt %30 : vector<2x32xf32>
      %cst_23 = arith.constant dense<0.000000e+00> : vector<2x256xf32>
      %32 = tpu.matmul %31, %15, %cst_23 {dimension_numbers = #tpu.dot_dimension_numbers<[1], [0], [0], [1], [0, 0, 1, 1], [], []>} : vector<2x32xf32>, vector<32x256xf32>, vector<2x256xf32> -> vector<2x256xf32>
      %33 = vector.shape_cast %32 : vector<2x256xf32> to vector<2x1x256xf32>
      %34 = vector.broadcast %33 : vector<2x1x256xf32> to vector<2x64x256xf32>
      %35 = arith.mulf %23, %34 : vector<2x64x256xf32>
      %c0_24 = arith.constant 0 : index
      %c0_25 = arith.constant 0 : index
      %36 = vector.load %arg4[%c0_24, %c0_25] : memref<1x256xf32, #tpu.memory_space<vmem>>, vector<1x256xf32>
      %37 = vector.shape_cast %36 : vector<1x256xf32> to vector<1x1x256xf32>
      %38 = vector.broadcast %37 : vector<1x1x256xf32> to vector<2x64x256xf32>
      %39 = arith.mulf %35, %38 : vector<2x64x256xf32>
      %c0_26 = arith.constant 0 : index
      %c0_27 = arith.constant 0 : index
      %40 = vector.load %arg5[%c0_26, %c0_27] : memref<1x256xf32, #tpu.memory_space<vmem>>, vector<1x256xf32>
      %41 = vector.shape_cast %40 : vector<1x256xf32> to vector<1x1x256xf32>
      %42 = vector.broadcast %41 : vector<1x1x256xf32> to vector<2x64x256xf32>
      %43 = arith.addf %39, %42 : vector<2x64x256xf32>
      %cst_28 = arith.constant 0.000000e+00 : f32
      %44 = vector.broadcast %cst_28 : f32 to vector<2x64x256xf32>
      %45 = arith.maximumf %43, %44 : vector<2x64x256xf32>
      %46 = vector.shape_cast %45 : vector<2x64x256xf32> to vector<128x256xf32>
      %c0_29 = arith.constant 0 : index
      %c0_30 = arith.constant 0 : index
      %47 = vector.load %arg8[%c0_29, %c0_30] : memref<128x256xf32, #tpu.memory_space<vmem>>, vector<128x256xf32>
      tpu.vector_store %arg8[%c0_29, %c0_30], %46 {strides = array<i32>} : memref<128x256xf32, #tpu.memory_space<vmem>>, vector<128x256xf32>,
    } else {
    }
    return
  }
  func.func @transform_0(%arg0: i32, %arg1: i32) -> (i32, i32) {
    %c0_i32 = arith.constant 0 : i32
    %c0_i32_0 = arith.constant 0 : i32
    return %c0_i32, %arg1 : i32, i32
  }
  func.func @transform_1(%arg0: i32, %arg1: i32) -> (i32, i32) {
    %c0_i32 = arith.constant 0 : i32
    return %arg1, %arg0 : i32, i32
  }
  func.func @transform_2(%arg0: i32, %arg1: i32) -> (i32, i32) {
    %c0_i32 = arith.constant 0 : i32
    %c0_i32_0 = arith.constant 0 : i32
    return %c0_i32, %arg0 : i32, i32
  }
  func.func @transform_3(%arg0: i32, %arg1: i32) -> (i32, i32) {
    %c0_i32 = arith.constant 0 : i32
    %c0_i32_0 = arith.constant 0 : i32
    return %c0_i32, %arg0 : i32, i32
  }
  func.func @transform_4(%arg0: i32, %arg1: i32) -> (i32, i32) {
    %c0_i32 = arith.constant 0 : i32
    %c0_i32_0 = arith.constant 0 : i32
    return %arg0, %c0_i32 : i32, i32
  }
  func.func @transform_5(%arg0: i32, %arg1: i32) -> (i32, i32) {
    %c0_i32 = arith.constant 0 : i32
    %c0_i32_0 = arith.constant 0 : i32
    return %c0_i32, %arg0 : i32, i32
  }
  func.func @transform_6(%arg0: i32, %arg1: i32) -> (i32, i32) {
    %c0_i32 = arith.constant 0 : i32
    %c0_i32_0 = arith.constant 0 : i32
    return %c0_i32, %arg0 : i32, i32
  }
}

</mosaic_0001>

<llo_original>
// kernel: tpu_custom_call.1
$region0: #{tpu_custom_call.1}
  #allocation0 [shape = 'u32[]', space=smem, size = 0x4, offset = 0x4, fixed_abs, tag = 'smem constant byte address 0x4 - core index']
  #allocation1 [shape = 'u32[144,128]{1,0:T(1,128)}', space=vmem, size = 0x12000, scoped, tag = 'internal scratch']
  %s0 = inlined_call_operand.hbm [shape: bf16[128,9216], index: 0, kind: input, shape index: {}]
  %s1 = inlined_call_operand.hbm [shape: bf16[9216,512], index: 1, kind: input, shape index: {}]
  %s2 = inlined_call_operand.hbm [shape: f32[1,512], index: 2, kind: input, shape index: {}]
  %s3 = inlined_call_operand.hbm [shape: f32[1,512], index: 3, kind: input, shape index: {}]
  %s4 = inlined_call_operand.vmem [shape: f32[512,32], index: 4, kind: input, shape index: {}]
  %s5 = inlined_call_operand.hbm [shape: f32[32,512], index: 5, kind: input, shape index: {}]
  %s6 = inlined_call_operand.hbm [shape: f32[128,512], index: 6, kind: output, shape index: {}]
  %s7 = sld [smem:[#allocation0]]
  $region85: #{tpu_custom_call.1} parent=0
    _
  %s9 = ssub.s32 1, %s7
  %s10 = scalar_select 0, %s9, %s7
  $region1: #{tpu_custom_call.1} parent=0
    #allocation2 [shape = 'u8[2359296]{0}', space=vmem, size = 0x240000, scoped, tag = 'input window, operand 0']
    #allocation3 [shape = 's32[2]{0}', space=sflag, size = 0x8, scoped, tag = 'scoped memory for tpu_custom_call.1']
    #allocation4 [shape = 's32[2]{0}', space=sflag, size = 0x8, scoped, tag = 'scoped memory for tpu_custom_call.1']
    #allocation5 [shape = 'u8[4718592]{0}', space=vmem, size = 0x480000, scoped, tag = 'input window, operand 1']
    #allocation6 [shape = 's32[2]{0}', space=sflag, size = 0x8, scoped, tag = 'scoped memory for tpu_custom_call.1']
    #allocation7 [shape = 'u8[2048]{0}', space=vmem, size = 0x800, scoped, tag = 'input window, operand 2']
    #allocation8 [shape = 'u8[2048]{0}', space=vmem, size = 0x800, scoped, tag = 'input window, operand 3']
    #allocation9 [shape = 's32[2]{0}', space=sflag, size = 0x8, scoped, tag = 'scoped memory for tpu_custom_call.1']
    #allocation10 [shape = 'u8[65536]{0}', space=vmem, size = 0x10000, scoped, tag = 'input window, operand 5']
    #allocation11 [shape = 'u8[262144]{0}', space=vmem, size = 0x40000, scoped, tag = 'output window, operand 0']
    %11 = vsyncpa [#allocation3], 0
    %s12 = scalar_lea.sflag [#allocation3], 1
    %13 = vsyncpa %s12, 0
    %14 = vsyncpa [#allocation6], 0
    %s15 = scalar_lea.sflag [#allocation6], 1
    %16 = vsyncpa %s15, 0
    %17 = vsyncpa [#allocation9], 0
    %s18 = scalar_lea.sflag [#allocation9], 1
    %19 = vsyncpa %s18, 0
    %20 = vsyncpa [#allocation4], 0
    %s21 = scalar_lea.sflag [#allocation4], 1
    %22 = vsyncpa %s21, 0
    loop: start=0, step=1, limit=6
    $region2: #{tpu_custom_call.1} parent=1 // loop_pre_header
      _
    $region3: #{tpu_custom_call.1} parent=1 // loop_header
      %s24 = sphi 0, %s28
      %p25 = scmp.ge.s32.totalorder %s24, 6
      %s31 = sphi 0, %s43
      %s32 = sphi 0, %s39
      %s33 = sphi 0, %s31
      %s34 = sphi 0, %s32
      %s35 = sphi 0, %s33
      %s36 = sphi 0, %s34
      %s46 = sphi 0, %s48
      %s49 = sphi 0, %s46
      %s50 = sphi 0, %s49
      %s66 = sphi 0, %s50
      %s74 = sphi 0, %s76
      %s77 = sphi 0, %s74
      %s78 = sphi 0, %s77
      %s94 = sphi 0, %s78
      %s100 = sphi 0, %s102
      %s103 = sphi 0, %s100
      %s104 = sphi 0, %s103
      %s120 = sphi 0, %s104
      %s126 = sphi 0, %s128
      %s129 = sphi 0, %s126
      %s130 = sphi 0, %s129
      %s146 = sphi 0, %s130
      %s152 = sphi 0, %s154
      %s155 = sphi 0, %s152
      %s156 = sphi 0, %s155
      %s172 = sphi 0, %s156
      %s178 = sphi 0, %s180
      %s181 = sphi 0, %s178
      %s182 = sphi 0, %s181
      %s198 = sphi 0, %s182
      %s204 = sphi 0, %s206
      %s207 = sphi 0, %s204
      %s208 = sphi 0, %s207
      %s224 = sphi 0, %s208
    $region4: #{tpu_custom_call.1} parent=1 // loop_header_branch
      %27 = sbr.rel (%p25) target = $region8
    $region5: #{tpu_custom_call.1} parent=1 // loop_body
      %s29 = ssub.s32 %s24, 1
      %s30 = ssub.s32 %s24, 2
      %s37 = sadd.s32 1, %s32
      %p38 = scmp.ge.s32.totalorder %s37, 2
      %s39 = scalar_select %p38, 0, %s37
      %s40 = sadd.s32 1, %s31
      %s41 = scalar_select %p38, %s40, %s31
      %p42 = scmp.ge.s32.totalorder %s41, 2
      %s43 = scalar_select %p42, 0, %s41
      %s44 = ssub.s32 %s32, %s39
      %p45 = scmp.eq.s32.totalorder %s44, 0
      %s47 = sadd.s32 %s46, 1
      %s48 = scalar_select %p45, %s46, %s47
      %p51 = pneg %p45
      %p52 = scmp.eq.s32.totalorder %s24, 3
      %p53 = por %p51, %p52
      %p54 = scmp.ne.s32.totalorder %s46, %s49
      %p55 = scmp.eq.s32.totalorder %s24, 0
      %p56 = por %p54, %p55
      %p57 = scmp.ne.s32.totalorder %s46, %s49
      %p58 = scmp.eq.s32.totalorder %s29, 3
      %p59 = por %p57, %p58
      %p60 = scmp.ne.s32.totalorder %s49, %s50
      %p61 = scmp.eq.s32.totalorder %s29, 0
      %p62 = por %p60, %p61
      %p63 = scmp.ne.s32.totalorder %s49, %s50
      %p64 = scmp.eq.s32.totalorder %s30, 3
      %p65 = por %p63, %p64
      %p67 = scmp.ne.s32.totalorder %s50, %s66
      %p68 = scmp.eq.s32.totalorder %s30, 0
      %p69 = por %p67, %p68
      %s70 = ssub.s32 %s32, %s39
      %s71 = ssub.s32 %s31, %s43
      %s72 = sor.u32 %s70, %s71
      %p73 = scmp.eq.s32.totalorder %s72, 0
      %s75 = sadd.s32 %s74, 1
      %s76 = scalar_select %p73, %s74, %s75
      %p79 = pneg %p73
      %p80 = scmp.eq.s32.totalorder %s24, 3
      %p81 = por %p79, %p80
      %p82 = scmp.ne.s32.totalorder %s74, %s77
      %p83 = scmp.eq.s32.totalorder %s24, 0
      %p84 = por %p82, %p83
      %p85 = scmp.ne.s32.totalorder %s74, %s77
      %p86 = scmp.eq.s32.totalorder %s29, 3
      %p87 = por %p85, %p86
      %p88 = scmp.ne.s32.totalorder %s77, %s78
      %p89 = scmp.eq.s32.totalorder %s29, 0
      %p90 = por %p88, %p89
      %p91 = scmp.ne.s32.totalorder %s77, %s78
      %p92 = scmp.eq.s32.totalorder %s30, 3
      %p93 = por %p91, %p92
      %p95 = scmp.ne.s32.totalorder %s78, %s94
      %p96 = scmp.eq.s32.totalorder %s30, 0
      %p97 = por %p95, %p96
      %s98 = ssub.s32 %s31, %s43
      %p99 = scmp.eq.s32.totalorder %s98, 0
      %s101 = sadd.s32 %s100, 1
      %s102 = scalar_select %p99, %s100, %s101
      %p105 = pneg %p99
      %p106 = scmp.eq.s32.totalorder %s24, 3
      %p107 = por %p105, %p106
      %p108 = scmp.ne.s32.totalorder %s100, %s103
      %p109 = scmp.eq.s32.totalorder %s24, 0
      %p110 = por %p108, %p109
      %p111 = scmp.ne.s32.totalorder %s100, %s103
      %p112 = scmp.eq.s32.totalorder %s29, 3
      %p113 = por %p111, %p112
      %p114 = scmp.ne.s32.totalorder %s103, %s104
      %p115 = scmp.eq.s32.totalorder %s29, 0
      %p116 = por %p114, %p115
      %p117 = scmp.ne.s32.totalorder %s103, %s104
      %p118 = scmp.eq.s32.totalorder %s30, 3
      %p119 = por %p117, %p118
      %p121 = scmp.ne.s32.totalorder %s104, %s120
      %p122 = scmp.eq.s32.totalorder %s30, 0
      %p123 = por %p121, %p122
      %s124 = ssub.s32 %s31, %s43
      %p125 = scmp.eq.s32.totalorder %s124, 0
      %s127 = sadd.s32 %s126, 1
      %s128 = scalar_select %p125, %s126, %s127
      %p131 = pneg %p125
      %p132 = scmp.eq.s32.totalorder %s24, 3
      %p133 = por %p131, %p132
      %p134 = scmp.ne.s32.totalorder %s126, %s129
      %p135 = scmp.eq.s32.totalorder %s24, 0
      %p136 = por %p134, %p135
      %p137 = scmp.ne.s32.totalorder %s126, %s129
      %p138 = scmp.eq.s32.totalorder %s29, 3
      %p139 = por %p137, %p138
      %p140 = scmp.ne.s32.totalorder %s129, %s130
      %p141 = scmp.eq.s32.totalorder %s29, 0
      %p142 = por %p140, %p141
      %p143 = scmp.ne.s32.totalorder %s129, %s130
      %p144 = scmp.eq.s32.totalorder %s30, 3
      %p145 = por %p143, %p144
      %p147 = scmp.ne.s32.totalorder %s130, %s146
      %p148 = scmp.eq.s32.totalorder %s30, 0
      %p149 = por %p147, %p148
      %s150 = ssub.s32 %s31, %s43
      %p151 = scmp.eq.s32.totalorder %s150, 0
      %s153 = sadd.s32 %s152, 1
      %s154 = scalar_select %p151, %s152, %s153
      %p157 = pneg %p151
      %p158 = scmp.eq.s32.totalorder %s24, 3
      %p159 = por %p157, %p158
      %p160 = scmp.ne.s32.totalorder %s152, %s155
      %p161 = scmp.eq.s32.totalorder %s24, 0
      %p162 = por %p160, %p161
      %p163 = scmp.ne.s32.totalorder %s152, %s155
      %p164 = scmp.eq.s32.totalorder %s29, 3
      %p165 = por %p163, %p164
      %p166 = scmp.ne.s32.totalorder %s155, %s156
      %p167 = scmp.eq.s32.totalorder %s29, 0
      %p168 = por %p166, %p167
      %p169 = scmp.ne.s32.totalorder %s155, %s156
      %p170 = scmp.eq.s32.totalorder %s30, 3
      %p171 = por %p169, %p170
      %p173 = scmp.ne.s32.totalorder %s156, %s172
      %p174 = scmp.eq.s32.totalorder %s30, 0
      %p175 = por %p173, %p174
      %s176 = ssub.s32 %s31, %s43
      %p177 = scmp.eq.s32.totalorder %s176, 0
      %s179 = sadd.s32 %s178, 1
      %s180 = scalar_select %p177, %s178, %s179
      %p183 = pneg %p177
      %p184 = scmp.eq.s32.totalorder %s24, 3
      %p185 = por %p183, %p184
      %p186 = scmp.ne.s32.totalorder %s178, %s181
      %p187 = scmp.eq.s32.totalorder %s24, 0
      %p188 = por %p186, %p187
      %p189 = scmp.ne.s32.totalorder %s178, %s181
      %p190 = scmp.eq.s32.totalorder %s29, 3
      %p191 = por %p189, %p190
      %p192 = scmp.ne.s32.totalorder %s181, %s182
      %p193 = scmp.eq.s32.totalorder %s29, 0
      %p194 = por %p192, %p193
      %p195 = scmp.ne.s32.totalorder %s181, %s182
      %p196 = scmp.eq.s32.totalorder %s30, 3
      %p197 = por %p195, %p196
      %p199 = scmp.ne.s32.totalorder %s182, %s198
      %p200 = scmp.eq.s32.totalorder %s30, 0
      %p201 = por %p199, %p200
      %s202 = ssub.s32 %s31, %s43
      %p203 = scmp.eq.s32.totalorder %s202, 0
      %s205 = sadd.s32 %s204, 1
      %s206 = scalar_select %p203, %s204, %s205
      %p209 = pneg %p203
      %p210 = scmp.eq.s32.totalorder %s24, 3
      %p211 = por %p209, %p210
      %p212 = scmp.ne.s32.totalorder %s204, %s207
      %p213 = scmp.eq.s32.totalorder %s24, 0
      %p214 = por %p212, %p213
      %p215 = scmp.ne.s32.totalorder %s204, %s207
      %p216 = scmp.eq.s32.totalorder %s29, 3
      %p217 = por %p215, %p216
      %p218 = scmp.ne.s32.totalorder %s207, %s208
      %p219 = scmp.eq.s32.totalorder %s29, 0
      %p220 = por %p218, %p219
      %p221 = scmp.ne.s32.totalorder %s207, %s208
      %p222 = scmp.eq.s32.totalorder %s30, 3
      %p223 = por %p221, %p222
      %p225 = scmp.ne.s32.totalorder %s208, %s224
      %p226 = scmp.eq.s32.totalorder %s30, 0
      %p227 = por %p225, %p226
      %p228 = scmp.le.s32.totalorder 1, %s24
      %p229 = scmp.lt.s32.totalorder %s24, 5
      %p230 = pnand %p228, %p229
      %p231 = pneg %p230
      // Predicated region
      $region9: #{tpu_custom_call.1} parent=5 // pred_check
        _
      $region10: #{tpu_custom_call.1} parent=5 // pred_check_branch
        %233 = sbr.rel (%p230) target = $region12
      $region11: #{tpu_custom_call.1} parent=5 // pred_region
        %s234 = ssub.s32 %s24, 1
      $region12: #{tpu_custom_call.1} parent=5 // pred_fallthru
        _
      %p235 = scmp.lt.s32.totalorder %s24, 4
      // Predicated region
      $region13: #{tpu_custom_call.1} parent=5 // pred_check
        %p236 = pneg %p235
      $region14: #{tpu_custom_call.1} parent=5 // pred_check_branch
        %238 = sbr.rel (%p236) target = $region16
      $region15: #{tpu_custom_call.1} parent=5 // pred_region
        // Predicated region
        $region17: #{tpu_custom_call.1} parent=15 // pred_check
          %p239 = pneg %p56
        $region18: #{tpu_custom_call.1} parent=15 // pred_check_branch
          %241 = sbr.rel (%p239) target = $region20
        $region19: #{tpu_custom_call.1} parent=15 // pred_region
          %s242 = sand.u32 %s46, 1
          %s243 = scalar_lea.sflag [#allocation3], %s242
          %s244 = sand.u32 %s46, 1
          %s245 = smul.addr %s244, 2304
          %s246 = scalar_lea.vmem [#allocation2], %s245
          %s247 = smul.u32 36, %s32
          %s249 = ssub.s32 36864, 36864
          %250 = vsyncadd %s243, %s249
          %s251 = smul.addr %s247, 64
          %s252 = scalar_lea.hbm %s0, %s251
          %s253 = sshll.u32 %s246, 4
          %s254 = int_to_ptr.vmem [resolvable:$true] %s253
          %259 = dma.hbm_to_vmem [thread:$0]  %s252, 36864, %s254, %s243, 4608, 2304, 144
        $region20: #{tpu_custom_call.1} parent=15 // pred_fallthru
          _
        // Predicated region
        $region21: #{tpu_custom_call.1} parent=15 // pred_check
          %p260 = pneg %p84
        $region22: #{tpu_custom_call.1} parent=15 // pred_check_branch
          %262 = sbr.rel (%p260) target = $region24
        $region23: #{tpu_custom_call.1} parent=15 // pred_region
          %s263 = sand.u32 %s24, 1
          %s264 = scalar_lea.sflag [#allocation6], %s263
          %s265 = sand.u32 %s74, 1
          %s266 = smul.addr %s265, 4608
          %s267 = scalar_lea.vmem [#allocation5], %s266
          %s268 = smul.u32 576, %s32
          %s269 = smul.u32 2, %s31
          %s271 = ssub.s32 73728, 73728
          %272 = vsyncadd %s264, %s271
          %s273 = smul.addr %s268, 4
          %s274 = sadd.s32 %s269, %s273
          %s275 = smul.addr %s274, 64
          %s276 = scalar_lea.hbm %s1, %s275
          %s277 = sshll.u32 %s267, 4
          %s278 = int_to_ptr.vmem [resolvable:$true] %s277
          %283 = dma.hbm_to_vmem [thread:$0]  %s276, 73728, %s278, %s264, 256, 128, 8
        $region24: #{tpu_custom_call.1} parent=15 // pred_fallthru
          _
        // Predicated region
        $region25: #{tpu_custom_call.1} parent=15 // pred_check
          %p284 = pneg %p110
        $region26: #{tpu_custom_call.1} parent=15 // pred_check_branch
          %286 = sbr.rel (%p284) target = $region28
        $region27: #{tpu_custom_call.1} parent=15 // pred_region
          %s287 = sand.u32 %s24, 1
          %s288 = scalar_lea.sflag [#allocation6], %s287
          %s289 = sand.u32 %s100, 1
          %s290 = smul.addr %s289, 2
          %s291 = scalar_lea.vmem [#allocation7], %s290
          %s292 = smul.u32 2, %s31
          %s294 = ssub.s32 32, 32
          %295 = vsyncadd %s288, %s294
          %s296 = smul.addr %s292, 16
          %s297 = scalar_lea.hbm %s2, %s296
          %s299 = sshll.u32 %s291, 4
          %s300 = int_to_ptr.vmem [resolvable:$true] %s299
          %302 = dma.hbm_to_vmem [thread:$0]  %s297, 32, %s300, %s288
        $region28: #{tpu_custom_call.1} parent=15 // pred_fallthru
          _
        // Predicated region
        $region29: #{tpu_custom_call.1} parent=15 // pred_check
          %p303 = pneg %p136
        $region30: #{tpu_custom_call.1} parent=15 // pred_check_branch
          %305 = sbr.rel (%p303) target = $region32
        $region31: #{tpu_custom_call.1} parent=15 // pred_region
          %s306 = sand.u32 %s24, 1
          %s307 = scalar_lea.sflag [#allocation9], %s306
          %s308 = sand.u32 %s126, 1
          %s309 = smul.addr %s308, 2
          %s310 = scalar_lea.vmem [#allocation8], %s309
          %s311 = smul.u32 2, %s31
          %s313 = ssub.s32 32, 32
          %314 = vsyncadd %s307, %s313
          %s315 = smul.addr %s311, 16
          %s316 = scalar_lea.hbm %s3, %s315
          %s318 = sshll.u32 %s310, 4
          %s319 = int_to_ptr.vmem [resolvable:$true] %s318
          %321 = dma.hbm_to_vmem [thread:$0]  %s316, 32, %s319, %s307
        $region32: #{tpu_custom_call.1} parent=15 // pred_fallthru
          _
        // Predicated region
        $region33: #{tpu_custom_call.1} parent=15 // pred_check
          %p322 = pneg %p162
        $region34: #{tpu_custom_call.1} parent=15 // pred_check_branch
          %324 = sbr.rel (%p322) target = $region36
        $region35: #{tpu_custom_call.1} parent=15 // pred_region
          %s325 = smul.u32 32, %s31
          %p326 = scmp.lt.s32.totalorder %s325, 63
          %s327 = scalar_select %p326, %s325, 63
          %s328 = smul.addr %s327, 8
          %s329 = scalar_lea.vmem %s4, %s328
          %s330 = smul.u32 32, %s31
        $region36: #{tpu_custom_call.1} parent=15 // pred_fallthru
          _
        // Predicated region
        $region37: #{tpu_custom_call.1} parent=15 // pred_check
          %p331 = pneg %p188
        $region38: #{tpu_custom_call.1} parent=15 // pred_check_branch
          %333 = sbr.rel (%p331) target = $region40
        $region39: #{tpu_custom_call.1} parent=15 // pred_region
          %s334 = sand.u32 %s24, 1
          %s335 = scalar_lea.sflag [#allocation9], %s334
          %s336 = sand.u32 %s178, 1
          %s337 = smul.addr %s336, 64
          %s338 = scalar_lea.vmem [#allocation10], %s337
          %s339 = smul.u32 2, %s31
          %s341 = ssub.s32 1024, 1024
          %342 = vsyncadd %s335, %s341
          %s343 = smul.addr %s339, 128
          %s344 = scalar_lea.hbm %s5, %s343
          %s345 = sshll.u32 %s338, 4
          %s346 = int_to_ptr.vmem [resolvable:$true] %s345
          %351 = dma.hbm_to_vmem [thread:$0]  %s344, 1024, %s346, %s335, 512, 256, 16
        $region40: #{tpu_custom_call.1} parent=15 // pred_fallthru
          _
      $region16: #{tpu_custom_call.1} parent=5 // pred_fallthru
        _
      %p352 = scmp.le.s32.totalorder 1, %s24
      %p353 = scmp.lt.s32.totalorder %s24, 5
      %p354 = pnand %p352, %p353
      %p355 = pneg %p354
      // Predicated region
      $region41: #{tpu_custom_call.1} parent=5 // pred_check
        _
      $region42: #{tpu_custom_call.1} parent=5 // pred_check_branch
        %357 = sbr.rel (%p354) target = $region44
      $region43: #{tpu_custom_call.1} parent=5 // pred_region
        %s358 = ssub.s32 %s24, 1
        %s359 = sand.u32 %s49, 1
        %s360 = scalar_lea.sflag [#allocation3], %s359
        %s361 = sand.u32 %s49, 1
        %s362 = smul.addr %s361, 2304
        %s363 = scalar_lea.vmem [#allocation2], %s362
        // Predicated region
        $region45: #{tpu_custom_call.1} parent=43 // pred_check
          %p364 = pneg %p62
        $region46: #{tpu_custom_call.1} parent=43 // pred_check_branch
          %366 = sbr.rel (%p364) target = $region48
        $region47: #{tpu_custom_call.1} parent=43 // pred_region
          %367 = dma.done %s360, 36864
        $region48: #{tpu_custom_call.1} parent=43 // pred_fallthru
          _
        %s368 = sand.u32 %s29, 1
        %s369 = scalar_lea.sflag [#allocation6], %s368
        %s370 = sand.u32 %s77, 1
        %s371 = smul.addr %s370, 4608
        %s372 = scalar_lea.vmem [#allocation5], %s371
        // Predicated region
        $region49: #{tpu_custom_call.1} parent=43 // pred_check
          %p373 = pneg %p90
        $region50: #{tpu_custom_call.1} parent=43 // pred_check_branch
          %375 = sbr.rel (%p373) target = $region52
        $region51: #{tpu_custom_call.1} parent=43 // pred_region
          %376 = dma.done %s369, 73728
        $region52: #{tpu_custom_call.1} parent=43 // pred_fallthru
          _
        %s377 = sand.u32 %s29, 1
        %s378 = scalar_lea.sflag [#allocation6], %s377
        %s379 = sand.u32 %s103, 1
        %s380 = smul.addr %s379, 2
        %s381 = scalar_lea.vmem [#allocation7], %s380
        // Predicated region
        $region53: #{tpu_custom_call.1} parent=43 // pred_check
          %p382 = pneg %p116
        $region54: #{tpu_custom_call.1} parent=43 // pred_check_branch
          %384 = sbr.rel (%p382) target = $region56
        $region55: #{tpu_custom_call.1} parent=43 // pred_region
          %385 = dma.done %s378, 32
        $region56: #{tpu_custom_call.1} parent=43 // pred_fallthru
          _
        %s386 = sand.u32 %s29, 1
        %s387 = scalar_lea.sflag [#allocation9], %s386
        %s388 = sand.u32 %s129, 1
        %s389 = smul.addr %s388, 2
        %s390 = scalar_lea.vmem [#allocation8], %s389
        // Predicated region
        $region57: #{tpu_custom_call.1} parent=43 // pred_check
          %p391 = pneg %p142
        $region58: #{tpu_custom_call.1} parent=43 // pred_check_branch
          %393 = sbr.rel (%p391) target = $region60
        $region59: #{tpu_custom_call.1} parent=43 // pred_region
          %394 = dma.done %s387, 32
        $region60: #{tpu_custom_call.1} parent=43 // pred_fallthru
          _
        %s395 = sand.u32 %s29, 1
        %s396 = scalar_lea.sflag [#allocation9], %s395
        %s397 = sand.u32 %s181, 1
        %s398 = smul.addr %s397, 64
        %s399 = scalar_lea.vmem [#allocation10], %s398
        // Predicated region
        $region61: #{tpu_custom_call.1} parent=43 // pred_check
          %p400 = pneg %p194
        $region62: #{tpu_custom_call.1} parent=43 // pred_check_branch
          %402 = sbr.rel (%p400) target = $region64
        $region63: #{tpu_custom_call.1} parent=43 // pred_region
          %403 = dma.done %s396, 1024
        $region64: #{tpu_custom_call.1} parent=43 // pred_fallthru
          _
        %s404 = sand.u32 %s49, 1
        %s405 = scalar_lea.sflag [#allocation3], %s404
        %s406 = sand.u32 %s49, 1
        %s407 = smul.addr %s406, 2304
        %s408 = scalar_lea.vmem [#allocation2], %s407
        %p409 = pneg %p62
        %p410 = pneg %p59
        %s411 = sand.u32 %s29, 1
        %s412 = scalar_lea.sflag [#allocation6], %s411
        %s413 = sand.u32 %s77, 1
        %s414 = smul.addr %s413, 4608
        %s415 = scalar_lea.vmem [#allocation5], %s414
        %p416 = pneg %p90
        %p417 = pneg %p87
        %s418 = sand.u32 %s29, 1
        %s419 = scalar_lea.sflag [#allocation6], %s418
        %s420 = sand.u32 %s103, 1
        %s421 = smul.addr %s420, 2
        %s422 = scalar_lea.vmem [#allocation7], %s421
        %p423 = pneg %p116
        %p424 = pneg %p113
        %s425 = sand.u32 %s29, 1
        %s426 = scalar_lea.sflag [#allocation9], %s425
        %s427 = sand.u32 %s129, 1
        %s428 = smul.addr %s427, 2
        %s429 = scalar_lea.vmem [#allocation8], %s428
        %p430 = pneg %p142
        %p431 = pneg %p139
        %s432 = smul.u32 32, %s33
        %p433 = scmp.lt.s32.totalorder %s432, 63
        %s434 = scalar_select %p433, %s432, 63
        %s435 = smul.addr %s434, 8
        %s436 = scalar_lea.vmem %s4, %s435
        %p437 = pneg %p168
        %p438 = pneg %p165
        %s439 = sand.u32 %s29, 1
        %s440 = scalar_lea.sflag [#allocation9], %s439
        %s441 = sand.u32 %s181, 1
        %s442 = smul.addr %s441, 64
        %s443 = scalar_lea.vmem [#allocation10], %s442
        %p444 = pneg %p194
        %p445 = pneg %p191
        %p446 = pneg %p220
        %p447 = pneg %p217
        %s448 = sand.u32 %s207, 1
        %s449 = scalar_lea.sflag [#allocation4], %s448
        %s450 = sand.u32 %s207, 1
        %s451 = smul.addr %s450, 256
        %s452 = scalar_lea.vmem [#allocation11], %s451
        %s453 = smul.u32 36, %s34
        %s454 = smul.u32 576, %s34
        %s455 = smul.u32 2, %s33
        %s456 = smul.u32 2, %s33
        %s457 = smul.u32 2, %s33
        %s458 = smul.u32 32, %s33
        %p459 = scmp.lt.s32.totalorder %s458, 63
        %s460 = scalar_select %p459, %s458, 63
        %s461 = smul.addr %s460, 8
        %s462 = scalar_lea.vmem %s4, %s461
        %s463 = smul.u32 32, %s33
        %s464 = smul.u32 2, %s33
        %s465 = smul.u32 2, %s33
        %p466 = scmp.eq.s32.totalorder %s34, 0
        // Predicated region
        $region65: #{tpu_custom_call.1} parent=43 // pred_check
          %p467 = pneg %p466
        $region66: #{tpu_custom_call.1} parent=43 // pred_check_branch
          %469 = sbr.rel (%p467) target = $region68
        $region67: #{tpu_custom_call.1} parent=43 // pred_region
          %470 = vst [vmem:[%s452] sm:$0xff] 0.0
          %471 = vst [vmem:[%s452 + $0x8] sm:$0xff] 0.0
          %472 = vst [vmem:[%s452 + $0x10] sm:$0xff] 0.0
          %473 = vst [vmem:[%s452 + $0x18] sm:$0xff] 0.0
          %474 = vst [vmem:[%s452 + $0x20] sm:$0xff] 0.0
          %475 = vst [vmem:[%s452 + $0x28] sm:$0xff] 0.0
          %476 = vst [vmem:[%s452 + $0x30] sm:$0xff] 0.0
          %477 = vst [vmem:[%s452 + $0x38] sm:$0xff] 0.0
          %478 = vst [vmem:[%s452 + $0x40] sm:$0xff] 0.0
          %479 = vst [vmem:[%s452 + $0x48] sm:$0xff] 0.0
          %480 = vst [vmem:[%s452 + $0x50] sm:$0xff] 0.0
          %481 = vst [vmem:[%s452 + $0x58] sm:$0xff] 0.0
          %482 = vst [vmem:[%s452 + $0x60] sm:$0xff] 0.0
          %483 = vst [vmem:[%s452 + $0x68] sm:$0xff] 0.0
          %484 = vst [vmem:[%s452 + $0x70] sm:$0xff] 0.0
          %485 = vst [vmem:[%s452 + $0x78] sm:$0xff] 0.0
          %486 = vst [vmem:[%s452 + $0x80] sm:$0xff] 0.0
          %487 = vst [vmem:[%s452 + $0x88] sm:$0xff] 0.0
          %488 = vst [vmem:[%s452 + $0x90] sm:$0xff] 0.0
          %489 = vst [vmem:[%s452 + $0x98] sm:$0xff] 0.0
          %490 = vst [vmem:[%s452 + $0xa0] sm:$0xff] 0.0
          %491 = vst [vmem:[%s452 + $0xa8] sm:$0xff] 0.0
          %492 = vst [vmem:[%s452 + $0xb0] sm:$0xff] 0.0
          %493 = vst [vmem:[%s452 + $0xb8] sm:$0xff] 0.0
          %494 = vst [vmem:[%s452 + $0xc0] sm:$0xff] 0.0
          %495 = vst [vmem:[%s452 + $0xc8] sm:$0xff] 0.0
          %496 = vst [vmem:[%s452 + $0xd0] sm:$0xff] 0.0
          %497 = vst [vmem:[%s452 + $0xd8] sm:$0xff] 0.0
          %498 = vst [vmem:[%s452 + $0xe0] sm:$0xff] 0.0
          %499 = vst [vmem:[%s452 + $0xe8] sm:$0xff] 0.0
          %500 = vst [vmem:[%s452 + $0xf0] sm:$0xff] 0.0
          %501 = vst [vmem:[%s452 + $0xf8] sm:$0xff] 0.0
        $region68: #{tpu_custom_call.1} parent=43 // pred_fallthru
          _
        %v502 = vld [vmem:[%s452] sm:$0xff]
        %v503 = vld [vmem:[%s452 + $0x8] sm:$0xff]
        %v504 = vld [vmem:[%s452 + $0x10] sm:$0xff]
        %v505 = vld [vmem:[%s452 + $0x18] sm:$0xff]
        %v506 = vld [vmem:[%s452 + $0x20] sm:$0xff]
        %v507 = vld [vmem:[%s452 + $0x28] sm:$0xff]
        %v508 = vld [vmem:[%s452 + $0x30] sm:$0xff]
        %v509 = vld [vmem:[%s452 + $0x38] sm:$0xff]
        %v510 = vld [vmem:[%s452 + $0x40] sm:$0xff]
        %v511 = vld [vmem:[%s452 + $0x48] sm:$0xff]
        %v512 = vld [vmem:[%s452 + $0x50] sm:$0xff]
        %v513 = vld [vmem:[%s452 + $0x58] sm:$0xff]
        %v514 = vld [vmem:[%s452 + $0x60] sm:$0xff]
        %v515 = vld [vmem:[%s452 + $0x68] sm:$0xff]
        %v516 = vld [vmem:[%s452 + $0x70] sm:$0xff]
        %v517 = vld [vmem:[%s452 + $0x78] sm:$0xff]
        %v518 = vld [vmem:[%s452 + $0x80] sm:$0xff]
        %v519 = vld [vmem:[%s452 + $0x88] sm:$0xff]
        %v520 = vld [vmem:[%s452 + $0x90] sm:$0xff]
        %v521 = vld [vmem:[%s452 + $0x98] sm:$0xff]
        %v522 = vld [vmem:[%s452 + $0xa0] sm:$0xff]
        %v523 = vld [vmem:[%s452 + $0xa8] sm:$0xff]
        %v524 = vld [vmem:[%s452 + $0xb0] sm:$0xff]
        %v525 = vld [vmem:[%s452 + $0xb8] sm:$0xff]
        %v526 = vld [vmem:[%s452 + $0xc0] sm:$0xff]
        %v527 = vld [vmem:[%s452 + $0xc8] sm:$0xff]
        %v528 = vld [vmem:[%s452 + $0xd0] sm:$0xff]
        %v529 = vld [vmem:[%s452 + $0xd8] sm:$0xff]
        %v530 = vld [vmem:[%s452 + $0xe0] sm:$0xff]
        %v531 = vld [vmem:[%s452 + $0xe8] sm:$0xff]
        %v532 = vld [vmem:[%s452 + $0xf0] sm:$0xff]
        %v533 = vld [vmem:[%s452 + $0xf8] sm:$0xff]
        %v534 = vld [vmem:[%s363] sm:$0xff]
        %v535 = vld [vmem:[%s363 + $0x8] sm:$0xff]
        %v536 = vld [vmem:[%s363 + $0x10] sm:$0xff]
        %v537 = vld [vmem:[%s363 + $0x18] sm:$0xff]
        %v538 = vld [vmem:[%s363 + $0x20] sm:$0xff]
        %v539 = vld [vmem:[%s363 + $0x28] sm:$0xff]
        %v540 = vld [vmem:[%s363 + $0x30] sm:$0xff]
        %v541 = vld [vmem:[%s363 + $0x38] sm:$0xff]
        %v542 = vld [vmem:[%s363 + $0x40] sm:$0xff]
        %v543 = vld [vmem:[%s363 + $0x48] sm:$0xff]
        %v544 = vld [vmem:[%s363 + $0x50] sm:$0xff]
        %v545 = vld [vmem:[%s363 + $0x58] sm:$0xff]
        %v546 = vld [vmem:[%s363 + $0x60] sm:$0xff]
        %v547 = vld [vmem:[%s363 + $0x68] sm:$0xff]
        %v548 = vld [vmem:[%s363 + $0x70] sm:$0xff]
        %v549 = vld [vmem:[%s363 + $0x78] sm:$0xff]
        %v550 = vld [vmem:[%s363 + $0x80] sm:$0xff]
        %v551 = vld [vmem:[%s363 + $0x88] sm:$0xff]
        %v552 = vld [vmem:[%s363 + $0x90] sm:$0xff]
        %v553 = vld [vmem:[%s363 + $0x98] sm:$0xff]
        %v554 = vld [vmem:[%s363 + $0xa0] sm:$0xff]
        %v555 = vld [vmem:[%s363 + $0xa8] sm:$0xff]
        %v556 = vld [vmem:[%s363 + $0xb0] sm:$0xff]
        %v557 = vld [vmem:[%s363 + $0xb8] sm:$0xff]
        %v558 = vld [vmem:[%s363 + $0xc0] sm:$0xff]
        %v559 = vld [vmem:[%s363 + $0xc8] sm:$0xff]
        %v560 = vld [vmem:[%s363 + $0xd0] sm:$0xff]
        %v561 = vld [vmem:[%s363 + $0xd8] sm:$0xff]
        %v562 = vld [vmem:[%s363 + $0xe0] sm:$0xff]
        %v563 = vld [vmem:[%s363 + $0xe8] sm:$0xff]
        %v564 = vld [vmem:[%s363 + $0xf0] sm:$0xff]
        %v565 = vld [vmem:[%s363 + $0xf8] sm:$0xff]
        %v566 = vld [vmem:[%s363 + $0x100] sm:$0xff]
        %v567 = vld [vmem:[%s363 + $0x108] sm:$0xff]
        %v568 = vld [vmem:[%s363 + $0x110] sm:$0xff]
        %v569 = vld [vmem:[%s363 + $0x118] sm:$0xff]
        %v570 = vld [vmem:[%s363 + $0x120] sm:$0xff]
        %v571 = vld [vmem:[%s363 + $0x128] sm:$0xff]
        %v572 = vld [vmem:[%s363 + $0x130] sm:$0xff]
        %v573 = vld [vmem:[%s363 + $0x138] sm:$0xff]
        %v574 = vld [vmem:[%s363 + $0x140] sm:$0xff]
        %v575 = vld [vmem:[%s363 + $0x148] sm:$0xff]
        %v576 = vld [vmem:[%s363 + $0x150] sm:$0xff]
        %v577 = vld [vmem:[%s363 + $0x158] sm:$0xff]
        %v578 = vld [vmem:[%s363 + $0x160] sm:$0xff]
        %v579 = vld [vmem:[%s363 + $0x168] sm:$0xff]
        %v580 = vld [vmem:[%s363 + $0x170] sm:$0xff]
        %v581 = vld [vmem:[%s363 + $0x178] sm:$0xff]
        %v582 = vld [vmem:[%s363 + $0x180] sm:$0xff]
        %v583 = vld [vmem:[%s363 + $0x188] sm:$0xff]
        %v584 = vld [vmem:[%s363 + $0x190] sm:$0xff]
        %v585 = vld [vmem:[%s363 + $0x198] sm:$0xff]
        %v586 = vld [vmem:[%s363 + $0x1a0] sm:$0xff]
        %v587 = vld [vmem:[%s363 + $0x1a8] sm:$0xff]
        %v588 = vld [vmem:[%s363 + $0x1b0] sm:$0xff]
        %v589 = vld [vmem:[%s363 + $0x1b8] sm:$0xff]
        %v590 = vld [vmem:[%s363 + $0x1c0] sm:$0xff]
        %v591 = vld [vmem:[%s363 + $0x1c8] sm:$0xff]
        %v592 = vld [vmem:[%s363 + $0x1d0] sm:$0xff]
        %v593 = vld [vmem:[%s363 + $0x1d8] sm:$0xff]
        %v594 = vld [vmem:[%s363 + $0x1e0] sm:$0xff]
        %v595 = vld [vmem:[%s363 + $0x1e8] sm:$0xff]
        %v596 = vld [vmem:[%s363 + $0x1f0] sm:$0xff]
        %v597 = vld [vmem:[%s363 + $0x1f8] sm:$0xff]
        %v598 = vld [vmem:[%s363 + $0x200] sm:$0xff]
        %v599 = vld [vmem:[%s363 + $0x208] sm:$0xff]
        %v600 = vld [vmem:[%s363 + $0x210] sm:$0xff]
        %v601 = vld [vmem:[%s363 + $0x218] sm:$0xff]
        %v602 = vld [vmem:[%s363 + $0x220] sm:$0xff]
        %v603 = vld [vmem:[%s363 + $0x228] sm:$0xff]
        %v604 = vld [vmem:[%s363 + $0x230] sm:$0xff]
        %v605 = vld [vmem:[%s363 + $0x238] sm:$0xff]
        %v606 = vld [vmem:[%s363 + $0x240] sm:$0xff]
        %v607 = vld [vmem:[%s363 + $0x248] sm:$0xff]
        %v608 = vld [vmem:[%s363 + $0x250] sm:$0xff]
        %v609 = vld [vmem:[%s363 + $0x258] sm:$0xff]
        %v610 = vld [vmem:[%s363 + $0x260] sm:$0xff]
        %v611 = vld [vmem:[%s363 + $0x268] sm:$0xff]
        %v612 = vld [vmem:[%s363 + $0x270] sm:$0xff]
        %v613 = vld [vmem:[%s363 + $0x278] sm:$0xff]
        %v614 = vld [vmem:[%s363 + $0x280] sm:$0xff]
        %v615 = vld [vmem:[%s363 + $0x288] sm:$0xff]
        %v616 = vld [vmem:[%s363 + $0x290] sm:$0xff]
        %v617 = vld [vmem:[%s363 + $0x298] sm:$0xff]
        %v618 = vld [vmem:[%s363 + $0x2a0] sm:$0xff]
        %v619 = vld [vmem:[%s363 + $0x2a8] sm:$0xff]
        %v620 = vld [vmem:[%s363 + $0x2b0] sm:$0xff]
        %v621 = vld [vmem:[%s363 + $0x2b8] sm:$0xff]
        %v622 = vld [vmem:[%s363 + $0x2c0] sm:$0xff]
        %v623 = vld [vmem:[%s363 + $0x2c8] sm:$0xff]
        %v624 = vld [vmem:[%s363 + $0x2d0] sm:$0xff]
        %v625 = vld [vmem:[%s363 + $0x2d8] sm:$0xff]
        %v626 = vld [vmem:[%s363 + $0x2e0] sm:$0xff]
        %v627 = vld [vmem:[%s363 + $0x2e8] sm:$0xff]
        %v628 = vld [vmem:[%s363 + $0x2f0] sm:$0xff]
        %v629 = vld [vmem:[%s363 + $0x2f8] sm:$0xff]
        %v630 = vld [vmem:[%s363 + $0x300] sm:$0xff]
        %v631 = vld [vmem:[%s363 + $0x308] sm:$0xff]
        %v632 = vld [vmem:[%s363 + $0x310] sm:$0xff]
        %v633 = vld [vmem:[%s363 + $0x318] sm:$0xff]
        %v634 = vld [vmem:[%s363 + $0x320] sm:$0xff]
        %v635 = vld [vmem:[%s363 + $0x328] sm:$0xff]
        %v636 = vld [vmem:[%s363 + $0x330] sm:$0xff]
        %v637 = vld [vmem:[%s363 + $0x338] sm:$0xff]
        %v638 = vld [vmem:[%s363 + $0x340] sm:$0xff]
        %v639 = vld [vmem:[%s363 + $0x348] sm:$0xff]
        %v640 = vld [vmem:[%s363 + $0x350] sm:$0xff]
        %v641 = vld [vmem:[%s363 + $0x358] sm:$0xff]
        %v642 = vld [vmem:[%s363 + $0x360] sm:$0xff]
        %v643 = vld [vmem:[%s363 + $0x368] sm:$0xff]
        %v644 = vld [vmem:[%s363 + $0x370] sm:$0xff]
        %v645 = vld [vmem:[%s363 + $0x378] sm:$0xff]
        %v646 = vld [vmem:[%s363 + $0x380] sm:$0xff]
        %v647 = vld [vmem:[%s363 + $0x388] sm:$0xff]
        %v648 = vld [vmem:[%s363 + $0x390] sm:$0xff]
        %v649 = vld [vmem:[%s363 + $0x398] sm:$0xff]
        %v650 = vld [vmem:[%s363 + $0x3a0] sm:$0xff]
        %v651 = vld [vmem:[%s363 + $0x3a8] sm:$0xff]
        %v652 = vld [vmem:[%s363 + $0x3b0] sm:$0xff]
        %v653 = vld [vmem:[%s363 + $0x3b8] sm:$0xff]
        %v654 = vld [vmem:[%s363 + $0x3c0] sm:$0xff]
        %v655 = vld [vmem:[%s363 + $0x3c8] sm:$0xff]
        %v656 = vld [vmem:[%s363 + $0x3d0] sm:$0xff]
        %v657 = vld [vmem:[%s363 + $0x3d8] sm:$0xff]
        %v658 = vld [vmem:[%s363 + $0x3e0] sm:$0xff]
        %v659 = vld [vmem:[%s363 + $0x3e8] sm:$0xff]
        %v660 = vld [vmem:[%s363 + $0x3f0] sm:$0xff]
        %v661 = vld [vmem:[%s363 + $0x3f8] sm:$0xff]
        %v662 = vld [vmem:[%s363 + $0x400] sm:$0xff]
        %v663 = vld [vmem:[%s363 + $0x408] sm:$0xff]
        %v664 = vld [vmem:[%s363 + $0x410] sm:$0xff]
        %v665 = vld [vmem:[%s363 + $0x418] sm:$0xff]
        %v666 = vld [vmem:[%s363 + $0x420] sm:$0xff]
        %v667 = vld [vmem:[%s363 + $0x428] sm:$0xff]
        %v668 = vld [vmem:[%s363 + $0x430] sm:$0xff]
        %v669 = vld [vmem:[%s363 + $0x438] sm:$0xff]
        %v670 = vld [vmem:[%s363 + $0x440] sm:$0xff]
        %v671 = vld [vmem:[%s363 + $0x448] sm:$0xff]
        %v672 = vld [vmem:[%s363 + $0x450] sm:$0xff]
        %v673 = vld [vmem:[%s363 + $0x458] sm:$0xff]
        %v674 = vld [vmem:[%s363 + $0x460] sm:$0xff]
        %v675 = vld [vmem:[%s363 + $0x468] sm:$0xff]
        %v676 = vld [vmem:[%s363 + $0x470] sm:$0xff]
        %v677 = vld [vmem:[%s363 + $0x478] sm:$0xff]
        %v678 = vld [vmem:[%s363 + $0x480] sm:$0xff]
        %v679 = vld [vmem:[%s363 + $0x488] sm:$0xff]
        %v680 = vld [vmem:[%s363 + $0x490] sm:$0xff]
        %v681 = vld [vmem:[%s363 + $0x498] sm:$0xff]
        %v682 = vld [vmem:[%s363 + $0x4a0] sm:$0xff]
        %v683 = vld [vmem:[%s363 + $0x4a8] sm:$0xff]
        %v684 = vld [vmem:[%s363 + $0x4b0] sm:$0xff]
        %v685 = vld [vmem:[%s363 + $0x4b8] sm:$0xff]
        %v686 = vld [vmem:[%s363 + $0x4c0] sm:$0xff]
        %v687 = vld [vmem:[%s363 + $0x4c8] sm:$0xff]
        %v688 = vld [vmem:[%s363 + $0x4d0] sm:$0xff]
        %v689 = vld [vmem:[%s363 + $0x4d8] sm:$0xff]
        %v690 = vld [vmem:[%s363 + $0x4e0] sm:$0xff]
        %v691 = vld [vmem:[%s363 + $0x4e8] sm:$0xff]
        %v692 = vld [vmem:[%s363 + $0x4f0] sm:$0xff]
        %v693 = vld [vmem:[%s363 + $0x4f8] sm:$0xff]
        %v694 = vld [vmem:[%s363 + $0x500] sm:$0xff]
        %v695 = vld [vmem:[%s363 + $0x508] sm:$0xff]
        %v696 = vld [vmem:[%s363 + $0x510] sm:$0xff]
        %v697 = vld [vmem:[%s363 + $0x518] sm:$0xff]
        %v698 = vld [vmem:[%s363 + $0x520] sm:$0xff]
        %v699 = vld [vmem:[%s363 + $0x528] sm:$0xff]
        %v700 = vld [vmem:[%s363 + $0x530] sm:$0xff]
        %v701 = vld [vmem:[%s363 + $0x538] sm:$0xff]
        %v702 = vld [vmem:[%s363 + $0x540] sm:$0xff]
        %v703 = vld [vmem:[%s363 + $0x548] sm:$0xff]
        %v704 = vld [vmem:[%s363 + $0x550] sm:$0xff]
        %v705 = vld [vmem:[%s363 + $0x558] sm:$0xff]
        %v706 = vld [vmem:[%s363 + $0x560] sm:$0xff]
        %v707 = vld [vmem:[%s363 + $0x568] sm:$0xff]
        %v708 = vld [vmem:[%s363 + $0x570] sm:$0xff]
        %v709 = vld [vmem:[%s363 + $0x578] sm:$0xff]
        %v710 = vld [vmem:[%s363 + $0x580] sm:$0xff]
        %v711 = vld [vmem:[%s363 + $0x588] sm:$0xff]
        %v712 = vld [vmem:[%s363 + $0x590] sm:$0xff]
        %v713 = vld [vmem:[%s363 + $0x598] sm:$0xff]
        %v714 = vld [vmem:[%s363 + $0x5a0] sm:$0xff]
        %v715 = vld [vmem:[%s363 + $0x5a8] sm:$0xff]
        %v716 = vld [vmem:[%s363 + $0x5b0] sm:$0xff]
        %v717 = vld [vmem:[%s363 + $0x5b8] sm:$0xff]
        %v718 = vld [vmem:[%s363 + $0x5c0] sm:$0xff]
        %v719 = vld [vmem:[%s363 + $0x5c8] sm:$0xff]
        %v720 = vld [vmem:[%s363 + $0x5d0] sm:$0xff]
        %v721 = vld [vmem:[%s363 + $0x5d8] sm:$0xff]
        %v722 = vld [vmem:[%s363 + $0x5e0] sm:$0xff]
        %v723 = vld [vmem:[%s363 + $0x5e8] sm:$0xff]
        %v724 = vld [vmem:[%s363 + $0x5f0] sm:$0xff]
        %v725 = vld [vmem:[%s363 + $0x5f8] sm:$0xff]
        %v726 = vld [vmem:[%s363 + $0x600] sm:$0xff]
        %v727 = vld [vmem:[%s363 + $0x608] sm:$0xff]
        %v728 = vld [vmem:[%s363 + $0x610] sm:$0xff]
        %v729 = vld [vmem:[%s363 + $0x618] sm:$0xff]
        %v730 = vld [vmem:[%s363 + $0x620] sm:$0xff]
        %v731 = vld [vmem:[%s363 + $0x628] sm:$0xff]
        %v732 = vld [vmem:[%s363 + $0x630] sm:$0xff]
        %v733 = vld [vmem:[%s363 + $0x638] sm:$0xff]
        %v734 = vld [vmem:[%s363 + $0x640] sm:$0xff]
        %v735 = vld [vmem:[%s363 + $0x648] sm:$0xff]
        %v736 = vld [vmem:[%s363 + $0x650] sm:$0xff]
        %v737 = vld [vmem:[%s363 + $0x658] sm:$0xff]
        %v738 = vld [vmem:[%s363 + $0x660] sm:$0xff]
        %v739 = vld [vmem:[%s363 + $0x668] sm:$0xff]
        %v740 = vld [vmem:[%s363 + $0x670] sm:$0xff]
        %v741 = vld [vmem:[%s363 + $0x678] sm:$0xff]
        %v742 = vld [vmem:[%s363 + $0x680] sm:$0xff]
        %v743 = vld [vmem:[%s363 + $0x688] sm:$0xff]
        %v744 = vld [vmem:[%s363 + $0x690] sm:$0xff]
        %v745 = vld [vmem:[%s363 + $0x698] sm:$0xff]
        %v746 = vld [vmem:[%s363 + $0x6a0] sm:$0xff]
        %v747 = vld [vmem:[%s363 + $0x6a8] sm:$0xff]
        %v748 = vld [vmem:[%s363 + $0x6b0] sm:$0xff]
        %v749 = vld [vmem:[%s363 + $0x6b8] sm:$0xff]
        %v750 = vld [vmem:[%s363 + $0x6c0] sm:$0xff]
        %v751 = vld [vmem:[%s363 + $0x6c8] sm:$0xff]
        %v752 = vld [vmem:[%s363 + $0x6d0] sm:$0xff]
        %v753 = vld [vmem:[%s363 + $0x6d8] sm:$0xff]
        %v754 = vld [vmem:[%s363 + $0x6e0] sm:$0xff]
        %v755 = vld [vmem:[%s363 + $0x6e8] sm:$0xff]
        %v756 = vld [vmem:[%s363 + $0x6f0] sm:$0xff]
        %v757 = vld [vmem:[%s363 + $0x6f8] sm:$0xff]
        %v758 = vld [vmem:[%s363 + $0x700] sm:$0xff]
        %v759 = vld [vmem:[%s363 + $0x708] sm:$0xff]
        %v760 = vld [vmem:[%s363 + $0x710] sm:$0xff]
        %v761 = vld [vmem:[%s363 + $0x718] sm:$0xff]
        %v762 = vld [vmem:[%s363 + $0x720] sm:$0xff]
        %v763 = vld [vmem:[%s363 + $0x728] sm:$0xff]
        %v764 = vld [vmem:[%s363 + $0x730] sm:$0xff]
        %v765 = vld [vmem:[%s363 + $0x738] sm:$0xff]
        %v766 = vld [vmem:[%s363 + $0x740] sm:$0xff]
        %v767 = vld [vmem:[%s363 + $0x748] sm:$0xff]
        %v768 = vld [vmem:[%s363 + $0x750] sm:$0xff]
        %v769 = vld [vmem:[%s363 + $0x758] sm:$0xff]
        %v770 = vld [vmem:[%s363 + $0x760] sm:$0xff]
        %v771 = vld [vmem:[%s363 + $0x768] sm:$0xff]
        %v772 = vld [vmem:[%s363 + $0x770] sm:$0xff]
        %v773 = vld [vmem:[%s363 + $0x778] sm:$0xff]
        %v774 = vld [vmem:[%s363 + $0x780] sm:$0xff]
        %v775 = vld [vmem:[%s363 + $0x788] sm:$0xff]
        %v776 = vld [vmem:[%s363 + $0x790] sm:$0xff]
        %v777 = vld [vmem:[%s363 + $0x798] sm:$0xff]
        %v778 = vld [vmem:[%s363 + $0x7a0] sm:$0xff]
        %v779 = vld [vmem:[%s363 + $0x7a8] sm:$0xff]
        %v780 = vld [vmem:[%s363 + $0x7b0] sm:$0xff]
        %v781 = vld [vmem:[%s363 + $0x7b8] sm:$0xff]
        %v782 = vld [vmem:[%s363 + $0x7c0] sm:$0xff]
        %v783 = vld [vmem:[%s363 + $0x7c8] sm:$0xff]
        %v784 = vld [vmem:[%s363 + $0x7d0] sm:$0xff]
        %v785 = vld [vmem:[%s363 + $0x7d8] sm:$0xff]
        %v786 = vld [vmem:[%s363 + $0x7e0] sm:$0xff]
        %v787 = vld [vmem:[%s363 + $0x7e8] sm:$0xff]
        %v788 = vld [vmem:[%s363 + $0x7f0] sm:$0xff]
        %v789 = vld [vmem:[%s363 + $0x7f8] sm:$0xff]
        %v790 = vld [vmem:[%s363 + $0x800] sm:$0xff]
        %v791 = vld [vmem:[%s363 + $0x808] sm:$0xff]
        %v792 = vld [vmem:[%s363 + $0x810] sm:$0xff]
        %v793 = vld [vmem:[%s363 + $0x818] sm:$0xff]
        %v794 = vld [vmem:[%s363 + $0x820] sm:$0xff]
        %v795 = vld [vmem:[%s363 + $0x828] sm:$0xff]
        %v796 = vld [vmem:[%s363 + $0x830] sm:$0xff]
        %v797 = vld [vmem:[%s363 + $0x838] sm:$0xff]
        %v798 = vld [vmem:[%s363 + $0x840] sm:$0xff]
        %v799 = vld [vmem:[%s363 + $0x848] sm:$0xff]
        %v800 = vld [vmem:[%s363 + $0x850] sm:$0xff]
        %v801 = vld [vmem:[%s363 + $0x858] sm:$0xff]
        %v802 = vld [vmem:[%s363 + $0x860] sm:$0xff]
        %v803 = vld [vmem:[%s363 + $0x868] sm:$0xff]
        %v804 = vld [vmem:[%s363 + $0x870] sm:$0xff]
        %v805 = vld [vmem:[%s363 + $0x878] sm:$0xff]
        %v806 = vld [vmem:[%s363 + $0x880] sm:$0xff]
        %v807 = vld [vmem:[%s363 + $0x888] sm:$0xff]
        %v808 = vld [vmem:[%s363 + $0x890] sm:$0xff]
        %v809 = vld [vmem:[%s363 + $0x898] sm:$0xff]
        %v810 = vld [vmem:[%s363 + $0x8a0] sm:$0xff]
        %v811 = vld [vmem:[%s363 + $0x8a8] sm:$0xff]
        %v812 = vld [vmem:[%s363 + $0x8b0] sm:$0xff]
        %v813 = vld [vmem:[%s363 + $0x8b8] sm:$0xff]
        %v814 = vld [vmem:[%s363 + $0x8c0] sm:$0xff]
        %v815 = vld [vmem:[%s363 + $0x8c8] sm:$0xff]
        %v816 = vld [vmem:[%s363 + $0x8d0] sm:$0xff]
        %v817 = vld [vmem:[%s363 + $0x8d8] sm:$0xff]
        %v818 = vld [vmem:[%s363 + $0x8e0] sm:$0xff]
        %v819 = vld [vmem:[%s363 + $0x8e8] sm:$0xff]
        %v820 = vld [vmem:[%s363 + $0x8f0] sm:$0xff]
        %v821 = vld [vmem:[%s363 + $0x8f8] sm:$0xff]
        %v822 = vld [vmem:[%s372] sm:$0xff]
        %v823 = vld [vmem:[%s372 + $0x8] sm:$0xff]
        %v824 = vld [vmem:[%s372 + $0x10] sm:$0xff]
        %v825 = vld [vmem:[%s372 + $0x18] sm:$0xff]
        %v826 = vld [vmem:[%s372 + $0x20] sm:$0xff]
        %v827 = vld [vmem:[%s372 + $0x28] sm:$0xff]
        %v828 = vld [vmem:[%s372 + $0x30] sm:$0xff]
        %v829 = vld [vmem:[%s372 + $0x38] sm:$0xff]
        %v830 = vld [vmem:[%s372 + $0x40] sm:$0xff]
        %v831 = vld [vmem:[%s372 + $0x48] sm:$0xff]
        %v832 = vld [vmem:[%s372 + $0x50] sm:$0xff]
        %v833 = vld [vmem:[%s372 + $0x58] sm:$0xff]
        %v834 = vld [vmem:[%s372 + $0x60] sm:$0xff]
        %v835 = vld [vmem:[%s372 + $0x68] sm:$0xff]
        %v836 = vld [vmem:[%s372 + $0x70] sm:$0xff]
        %v837 = vld [vmem:[%s372 + $0x78] sm:$0xff]
        %v838 = vld [vmem:[%s372 + $0x80] sm:$0xff]
        %v839 = vld [vmem:[%s372 + $0x88] sm:$0xff]
        %v840 = vld [vmem:[%s372 + $0x90] sm:$0xff]
        %v841 = vld [vmem:[%s372 + $0x98] sm:$0xff]
        %v842 = vld [vmem:[%s372 + $0xa0] sm:$0xff]
        %v843 = vld [vmem:[%s372 + $0xa8] sm:$0xff]
        %v844 = vld [vmem:[%s372 + $0xb0] sm:$0xff]
        %v845 = vld [vmem:[%s372 + $0xb8] sm:$0xff]
        %v846 = vld [vmem:[%s372 + $0xc0] sm:$0xff]
        %v847 = vld [vmem:[%s372 + $0xc8] sm:$0xff]
        %v848 = vld [vmem:[%s372 + $0xd0] sm:$0xff]
        %v849 = vld [vmem:[%s372 + $0xd8] sm:$0xff]
        %v850 = vld [vmem:[%s372 + $0xe0] sm:$0xff]
        %v851 = vld [vmem:[%s372 + $0xe8] sm:$0xff]
        %v852 = vld [vmem:[%s372 + $0xf0] sm:$0xff]
        %v853 = vld [vmem:[%s372 + $0xf8] sm:$0xff]
        %v854 = vld [vmem:[%s372 + $0x100] sm:$0xff]
        %v855 = vld [vmem:[%s372 + $0x108] sm:$0xff]
        %v856 = vld [vmem:[%s372 + $0x110] sm:$0xff]
        %v857 = vld [vmem:[%s372 + $0x118] sm:$0xff]
        %v858 = vld [vmem:[%s372 + $0x120] sm:$0xff]
        %v859 = vld [vmem:[%s372 + $0x128] sm:$0xff]
        %v860 = vld [vmem:[%s372 + $0x130] sm:$0xff]
        %v861 = vld [vmem:[%s372 + $0x138] sm:$0xff]
        %v862 = vld [vmem:[%s372 + $0x140] sm:$0xff]
        %v863 = vld [vmem:[%s372 + $0x148] sm:$0xff]
        %v864 = vld [vmem:[%s372 + $0x150] sm:$0xff]
        %v865 = vld [vmem:[%s372 + $0x158] sm:$0xff]
        %v866 = vld [vmem:[%s372 + $0x160] sm:$0xff]
        %v867 = vld [vmem:[%s372 + $0x168] sm:$0xff]
        %v868 = vld [vmem:[%s372 + $0x170] sm:$0xff]
        %v869 = vld [vmem:[%s372 + $0x178] sm:$0xff]
        %v870 = vld [vmem:[%s372 + $0x180] sm:$0xff]
        %v871 = vld [vmem:[%s372 + $0x188] sm:$0xff]
        %v872 = vld [vmem:[%s372 + $0x190] sm:$0xff]
        %v873 = vld [vmem:[%s372 + $0x198] sm:$0xff]
        %v874 = vld [vmem:[%s372 + $0x1a0] sm:$0xff]
        %v875 = vld [vmem:[%s372 + $0x1a8] sm:$0xff]
        %v876 = vld [vmem:[%s372 + $0x1b0] sm:$0xff]
        %v877 = vld [vmem:[%s372 + $0x1b8] sm:$0xff]
        %v878 = vld [vmem:[%s372 + $0x1c0] sm:$0xff]
        %v879 = vld [vmem:[%s372 + $0x1c8] sm:$0xff]
        %v880 = vld [vmem:[%s372 + $0x1d0] sm:$0xff]
        %v881 = vld [vmem:[%s372 + $0x1d8] sm:$0xff]
        %v882 = vld [vmem:[%s372 + $0x1e0] sm:$0xff]
        %v883 = vld [vmem:[%s372 + $0x1e8] sm:$0xff]
        %v884 = vld [vmem:[%s372 + $0x1f0] sm:$0xff]
        %v885 = vld [vmem:[%s372 + $0x1f8] sm:$0xff]
        %v886 = vld [vmem:[%s372 + $0x200] sm:$0xff]
        %v887 = vld [vmem:[%s372 + $0x208] sm:$0xff]
        %v888 = vld [vmem:[%s372 + $0x210] sm:$0xff]
        %v889 = vld [vmem:[%s372 + $0x218] sm:$0xff]
        %v890 = vld [vmem:[%s372 + $0x220] sm:$0xff]
        %v891 = vld [vmem:[%s372 + $0x228] sm:$0xff]
        %v892 = vld [vmem:[%s372 + $0x230] sm:$0xff]
        %v893 = vld [vmem:[%s372 + $0x238] sm:$0xff]
        %v894 = vld [vmem:[%s372 + $0x240] sm:$0xff]
        %v895 = vld [vmem:[%s372 + $0x248] sm:$0xff]
        %v896 = vld [vmem:[%s372 + $0x250] sm:$0xff]
        %v897 = vld [vmem:[%s372 + $0x258] sm:$0xff]
        %v898 = vld [vmem:[%s372 + $0x260] sm:$0xff]
        %v899 = vld [vmem:[%s372 + $0x268] sm:$0xff]
        %v900 = vld [vmem:[%s372 + $0x270] sm:$0xff]
        %v901 = vld [vmem:[%s372 + $0x278] sm:$0xff]
        %v902 = vld [vmem:[%s372 + $0x280] sm:$0xff]
        %v903 = vld [vmem:[%s372 + $0x288] sm:$0xff]
        %v904 = vld [vmem:[%s372 + $0x290] sm:$0xff]
        %v905 = vld [vmem:[%s372 + $0x298] sm:$0xff]
        %v906 = vld [vmem:[%s372 + $0x2a0] sm:$0xff]
        %v907 = vld [vmem:[%s372 + $0x2a8] sm:$0xff]
        %v908 = vld [vmem:[%s372 + $0x2b0] sm:$0xff]
        %v909 = vld [vmem:[%s372 + $0x2b8] sm:$0xff]
        %v910 = vld [vmem:[%s372 + $0x2c0] sm:$0xff]
        %v911 = vld [vmem:[%s372 + $0x2c8] sm:$0xff]
        %v912 = vld [vmem:[%s372 + $0x2d0] sm:$0xff]
        %v913 = vld [vmem:[%s372 + $0x2d8] sm:$0xff]
        %v914 = vld [vmem:[%s372 + $0x2e0] sm:$0xff]
        %v915 = vld [vmem:[%s372 + $0x2e8] sm:$0xff]
        %v916 = vld [vmem:[%s372 + $0x2f0] sm:$0xff]
        %v917 = vld [vmem:[%s372 + $0x2f8] sm:$0xff]
        %v918 = vld [vmem:[%s372 + $0x300] sm:$0xff]
        %v919 = vld [vmem:[%s372 + $0x308] sm:$0xff]
        %v920 = vld [vmem:[%s372 + $0x310] sm:$0xff]
        %v921 = vld [vmem:[%s372 + $0x318] sm:$0xff]
        %v922 = vld [vmem:[%s372 + $0x320] sm:$0xff]
        %v923 = vld [vmem:[%s372 + $0x328] sm:$0xff]
        %v924 = vld [vmem:[%s372 + $0x330] sm:$0xff]
        %v925 = vld [vmem:[%s372 + $0x338] sm:$0xff]
        %v926 = vld [vmem:[%s372 + $0x340] sm:$0xff]
        %v927 = vld [vmem:[%s372 + $0x348] sm:$0xff]
        %v928 = vld [vmem:[%s372 + $0x350] sm:$0xff]
        %v929 = vld [vmem:[%s372 + $0x358] sm:$0xff]
        %v930 = vld [vmem:[%s372 + $0x360] sm:$0xff]
        %v931 = vld [vmem:[%s372 + $0x368] sm:$0xff]
        %v932 = vld [vmem:[%s372 + $0x370] sm:$0xff]
        %v933 = vld [vmem:[%s372 + $0x378] sm:$0xff]
        %v934 = vld [vmem:[%s372 + $0x380] sm:$0xff]
        %v935 = vld [vmem:[%s372 + $0x388] sm:$0xff]
        %v936 = vld [vmem:[%s372 + $0x390] sm:$0xff]
        %v937 = vld [vmem:[%s372 + $0x398] sm:$0xff]
        %v938 = vld [vmem:[%s372 + $0x3a0] sm:$0xff]
        %v939 = vld [vmem:[%s372 + $0x3a8] sm:$0xff]
        %v940 = vld [vmem:[%s372 + $0x3b0] sm:$0xff]
        %v941 = vld [vmem:[%s372 + $0x3b8] sm:$0xff]
        %v942 = vld [vmem:[%s372 + $0x3c0] sm:$0xff]
        %v943 = vld [vmem:[%s372 + $0x3c8] sm:$0xff]
        %v944 = vld [vmem:[%s372 + $0x3d0] sm:$0xff]
        %v945 = vld [vmem:[%s372 + $0x3d8] sm:$0xff]
        %v946 = vld [vmem:[%s372 + $0x3e0] sm:$0xff]
        %v947 = vld [vmem:[%s372 + $0x3e8] sm:$0xff]
        %v948 = vld [vmem:[%s372 + $0x3f0] sm:$0xff]
        %v949 = vld [vmem:[%s372 + $0x3f8] sm:$0xff]
        %v950 = vld [vmem:[%s372 + $0x400] sm:$0xff]
        %v951 = vld [vmem:[%s372 + $0x408] sm:$0xff]
        %v952 = vld [vmem:[%s372 + $0x410] sm:$0xff]
        %v953 = vld [vmem:[%s372 + $0x418] sm:$0xff]
        %v954 = vld [vmem:[%s372 + $0x420] sm:$0xff]
        %v955 = vld [vmem:[%s372 + $0x428] sm:$0xff]
        %v956 = vld [vmem:[%s372 + $0x430] sm:$0xff]
        %v957 = vld [vmem:[%s372 + $0x438] sm:$0xff]
        %v958 = vld [vmem:[%s372 + $0x440] sm:$0xff]
        %v959 = vld [vmem:[%s372 + $0x448] sm:$0xff]
        %v960 = vld [vmem:[%s372 + $0x450] sm:$0xff]
        %v961 = vld [vmem:[%s372 + $0x458] sm:$0xff]
        %v962 = vld [vmem:[%s372 + $0x460] sm:$0xff]
        %v963 = vld [vmem:[%s372 + $0x468] sm:$0xff]
        %v964 = vld [vmem:[%s372 + $0x470] sm:$0xff]
        %v965 = vld [vmem:[%s372 + $0x478] sm:$0xff]
        %v966 = vld [vmem:[%s372 + $0x480] sm:$0xff]
        %v967 = vld [vmem:[%s372 + $0x488] sm:$0xff]
        %v968 = vld [vmem:[%s372 + $0x490] sm:$0xff]
        %v969 = vld [vmem:[%s372 + $0x498] sm:$0xff]
        %v970 = vld [vmem:[%s372 + $0x4a0] sm:$0xff]
        %v971 = vld [vmem:[%s372 + $0x4a8] sm:$0xff]
        %v972 = vld [vmem:[%s372 + $0x4b0] sm:$0xff]
        %v973 = vld [vmem:[%s372 + $0x4b8] sm:$0xff]
        %v974 = vld [vmem:[%s372 + $0x4c0] sm:$0xff]
        %v975 = vld [vmem:[%s372 + $0x4c8] sm:$0xff]
        %v976 = vld [vmem:[%s372 + $0x4d0] sm:$0xff]
        %v977 = vld [vmem:[%s372 + $0x4d8] sm:$0xff]
        %v978 = vld [vmem:[%s372 + $0x4e0] sm:$0xff]
        %v979 = vld [vmem:[%s372 + $0x4e8] sm:$0xff]
        %v980 = vld [vmem:[%s372 + $0x4f0] sm:$0xff]
        %v981 = vld [vmem:[%s372 + $0x4f8] sm:$0xff]
        %v982 = vld [vmem:[%s372 + $0x500] sm:$0xff]
        %v983 = vld [vmem:[%s372 + $0x508] sm:$0xff]
        %v984 = vld [vmem:[%s372 + $0x510] sm:$0xff]
        %v985 = vld [vmem:[%s372 + $0x518] sm:$0xff]
        %v986 = vld [vmem:[%s372 + $0x520] sm:$0xff]
        %v987 = vld [vmem:[%s372 + $0x528] sm:$0xff]
        %v988 = vld [vmem:[%s372 + $0x530] sm:$0xff]
        %v989 = vld [vmem:[%s372 + $0x538] sm:$0xff]
        %v990 = vld [vmem:[%s372 + $0x540] sm:$0xff]
        %v991 = vld [vmem:[%s372 + $0x548] sm:$0xff]
        %v992 = vld [vmem:[%s372 + $0x550] sm:$0xff]
        %v993 = vld [vmem:[%s372 + $0x558] sm:$0xff]
        %v994 = vld [vmem:[%s372 + $0x560] sm:$0xff]
        %v995 = vld [vmem:[%s372 + $0x568] sm:$0xff]
        %v996 = vld [vmem:[%s372 + $0x570] sm:$0xff]
        %v997 = vld [vmem:[%s372 + $0x578] sm:$0xff]
        %v998 = vld [vmem:[%s372 + $0x580] sm:$0xff]
        %v999 = vld [vmem:[%s372 + $0x588] sm:$0xff]
        %v1000 = vld [vmem:[%s372 + $0x590] sm:$0xff]
        %v1001 = vld [vmem:[%s372 + $0x598] sm:$0xff]
        %v1002 = vld [vmem:[%s372 + $0x5a0] sm:$0xff]
        %v1003 = vld [vmem:[%s372 + $0x5a8] sm:$0xff]
        %v1004 = vld [vmem:[%s372 + $0x5b0] sm:$0xff]
        %v1005 = vld [vmem:[%s372 + $0x5b8] sm:$0xff]
        %v1006 = vld [vmem:[%s372 + $0x5c0] sm:$0xff]
        %v1007 = vld [vmem:[%s372 + $0x5c8] sm:$0xff]
        %v1008 = vld [vmem:[%s372 + $0x5d0] sm:$0xff]
        %v1009 = vld [vmem:[%s372 + $0x5d8] sm:$0xff]
        %v1010 = vld [vmem:[%s372 + $0x5e0] sm:$0xff]
        %v1011 = vld [vmem:[%s372 + $0x5e8] sm:$0xff]
        %v1012 = vld [vmem:[%s372 + $0x5f0] sm:$0xff]
        %v1013 = vld [vmem:[%s372 + $0x5f8] sm:$0xff]
        %v1014 = vld [vmem:[%s372 + $0x600] sm:$0xff]
        %v1015 = vld [vmem:[%s372 + $0x608] sm:$0xff]
        %v1016 = vld [vmem:[%s372 + $0x610] sm:$0xff]
        %v1017 = vld [vmem:[%s372 + $0x618] sm:$0xff]
        %v1018 = vld [vmem:[%s372 + $0x620] sm:$0xff]
        %v1019 = vld [vmem:[%s372 + $0x628] sm:$0xff]
        %v1020 = vld [vmem:[%s372 + $0x630] sm:$0xff]
        %v1021 = vld [vmem:[%s372 + $0x638] sm:$0xff]
        %v1022 = vld [vmem:[%s372 + $0x640] sm:$0xff]
        %v1023 = vld [vmem:[%s372 + $0x648] sm:$0xff]
        %v1024 = vld [vmem:[%s372 + $0x650] sm:$0xff]
        %v1025 = vld [vmem:[%s372 + $0x658] sm:$0xff]
        %v1026 = vld [vmem:[%s372 + $0x660] sm:$0xff]
        %v1027 = vld [vmem:[%s372 + $0x668] sm:$0xff]
        %v1028 = vld [vmem:[%s372 + $0x670] sm:$0xff]
        %v1029 = vld [vmem:[%s372 + $0x678] sm:$0xff]
        %v1030 = vld [vmem:[%s372 + $0x680] sm:$0xff]
        %v1031 = vld [vmem:[%s372 + $0x688] sm:$0xff]
        %v1032 = vld [vmem:[%s372 + $0x690] sm:$0xff]
        %v1033 = vld [vmem:[%s372 + $0x698] sm:$0xff]
        %v1034 = vld [vmem:[%s372 + $0x6a0] sm:$0xff]
        %v1035 = vld [vmem:[%s372 + $0x6a8] sm:$0xff]
        %v1036 = vld [vmem:[%s372 + $0x6b0] sm:$0xff]
        %v1037 = vld [vmem:[%s372 + $0x6b8] sm:$0xff]
        %v1038 = vld [vmem:[%s372 + $0x6c0] sm:$0xff]
        %v1039 = vld [vmem:[%s372 + $0x6c8] sm:$0xff]
        %v1040 = vld [vmem:[%s372 + $0x6d0] sm:$0xff]
        %v1041 = vld [vmem:[%s372 + $0x6d8] sm:$0xff]
        %v1042 = vld [vmem:[%s372 + $0x6e0] sm:$0xff]
        %v1043 = vld [vmem:[%s372 + $0x6e8] sm:$0xff]
        %v1044 = vld [vmem:[%s372 + $0x6f0] sm:$0xff]
        %v1045 = vld [vmem:[%s372 + $0x6f8] sm:$0xff]
        %v1046 = vld [vmem:[%s372 + $0x700] sm:$0xff]
        %v1047 = vld [vmem:[%s372 + $0x708] sm:$0xff]
        %v1048 = vld [vmem:[%s372 + $0x710] sm:$0xff]
        %v1049 = vld [vmem:[%s372 + $0x718] sm:$0xff]
        %v1050 = vld [vmem:[%s372 + $0x720] sm:$0xff]
        %v1051 = vld [vmem:[%s372 + $0x728] sm:$0xff]
        %v1052 = vld [vmem:[%s372 + $0x730] sm:$0xff]
        %v1053 = vld [vmem:[%s372 + $0x738] sm:$0xff]
        %v1054 = vld [vmem:[%s372 + $0x740] sm:$0xff]
        %v1055 = vld [vmem:[%s372 + $0x748] sm:$0xff]
        %v1056 = vld [vmem:[%s372 + $0x750] sm:$0xff]
        %v1057 = vld [vmem:[%s372 + $0x758] sm:$0xff]
        %v1058 = vld [vmem:[%s372 + $0x760] sm:$0xff]
        %v1059 = vld [vmem:[%s372 + $0x768] sm:$0xff]
        %v1060 = vld [vmem:[%s372 + $0x770] sm:$0xff]
        %v1061 = vld [vmem:[%s372 + $0x778] sm:$0xff]
        %v1062 = vld [vmem:[%s372 + $0x780] sm:$0xff]
        %v1063 = vld [vmem:[%s372 + $0x788] sm:$0xff]
        %v1064 = vld [vmem:[%s372 + $0x790] sm:$0xff]
        %v1065 = vld [vmem:[%s372 + $0x798] sm:$0xff]
        %v1066 = vld [vmem:[%s372 + $0x7a0] sm:$0xff]
        %v1067 = vld [vmem:[%s372 + $0x7a8] sm:$0xff]
        %v1068 = vld [vmem:[%s372 + $0x7b0] sm:$0xff]
        %v1069 = vld [vmem:[%s372 + $0x7b8] sm:$0xff]
        %v1070 = vld [vmem:[%s372 + $0x7c0] sm:$0xff]
        %v1071 = vld [vmem:[%s372 + $0x7c8] sm:$0xff]
        %v1072 = vld [vmem:[%s372 + $0x7d0] sm:$0xff]
        %v1073 = vld [vmem:[%s372 + $0x7d8] sm:$0xff]
        %v1074 = vld [vmem:[%s372 + $0x7e0] sm:$0xff]
        %v1075 = vld [vmem:[%s372 + $0x7e8] sm:$0xff]
        %v1076 = vld [vmem:[%s372 + $0x7f0] sm:$0xff]
        %v1077 = vld [vmem:[%s372 + $0x7f8] sm:$0xff]
        %v1078 = vld [vmem:[%s372 + $0x800] sm:$0xff]
        %v1079 = vld [vmem:[%s372 + $0x808] sm:$0xff]
        %v1080 = vld [vmem:[%s372 + $0x810] sm:$0xff]
        %v1081 = vld [vmem:[%s372 + $0x818] sm:$0xff]
        %v1082 = vld [vmem:[%s372 + $0x820] sm:$0xff]
        %v1083 = vld [vmem:[%s372 + $0x828] sm:$0xff]
        %v1084 = vld [vmem:[%s372 + $0x830] sm:$0xff]
        %v1085 = vld [vmem:[%s372 + $0x838] sm:$0xff]
        %v1086 = vld [vmem:[%s372 + $0x840] sm:$0xff]
        %v1087 = vld [vmem:[%s372 + $0x848] sm:$0xff]
        %v1088 = vld [vmem:[%s372 + $0x850] sm:$0xff]
        %v1089 = vld [vmem:[%s372 + $0x858] sm:$0xff]
        %v1090 = vld [vmem:[%s372 + $0x860] sm:$0xff]
        %v1091 = vld [vmem:[%s372 + $0x868] sm:$0xff]
        %v1092 = vld [vmem:[%s372 + $0x870] sm:$0xff]
        %v1093 = vld [vmem:[%s372 + $0x878] sm:$0xff]
        %v1094 = vld [vmem:[%s372 + $0x880] sm:$0xff]
        %v1095 = vld [vmem:[%s372 + $0x888] sm:$0xff]
        %v1096 = vld [vmem:[%s372 + $0x890] sm:$0xff]
        %v1097 = vld [vmem:[%s372 + $0x898] sm:$0xff]
        %v1098 = vld [vmem:[%s372 + $0x8a0] sm:$0xff]
        %v1099 = vld [vmem:[%s372 + $0x8a8] sm:$0xff]
        %v1100 = vld [vmem:[%s372 + $0x8b0] sm:$0xff]
        %v1101 = vld [vmem:[%s372 + $0x8b8] sm:$0xff]
        %v1102 = vld [vmem:[%s372 + $0x8c0] sm:$0xff]
        %v1103 = vld [vmem:[%s372 + $0x8c8] sm:$0xff]
        %v1104 = vld [vmem:[%s372 + $0x8d0] sm:$0xff]
        %v1105 = vld [vmem:[%s372 + $0x8d8] sm:$0xff]
        %v1106 = vld [vmem:[%s372 + $0x8e0] sm:$0xff]
        %v1107 = vld [vmem:[%s372 + $0x8e8] sm:$0xff]
        %v1108 = vld [vmem:[%s372 + $0x8f0] sm:$0xff]
        %v1109 = vld [vmem:[%s372 + $0x8f8] sm:$0xff]
        %v1110 = vld [vmem:[%s372 + $0x900] sm:$0xff]
        %v1111 = vld [vmem:[%s372 + $0x908] sm:$0xff]
        %v1112 = vld [vmem:[%s372 + $0x910] sm:$0xff]
        %v1113 = vld [vmem:[%s372 + $0x918] sm:$0xff]
        %v1114 = vld [vmem:[%s372 + $0x920] sm:$0xff]
        %v1115 = vld [vmem:[%s372 + $0x928] sm:$0xff]
        %v1116 = vld [vmem:[%s372 + $0x930] sm:$0xff]
        %v1117 = vld [vmem:[%s372 + $0x938] sm:$0xff]
        %v1118 = vld [vmem:[%s372 + $0x940] sm:$0xff]
        %v1119 = vld [vmem:[%s372 + $0x948] sm:$0xff]
        %v1120 = vld [vmem:[%s372 + $0x950] sm:$0xff]
        %v1121 = vld [vmem:[%s372 + $0x958] sm:$0xff]
        %v1122 = vld [vmem:[%s372 + $0x960] sm:$0xff]
        %v1123 = vld [vmem:[%s372 + $0x968] sm:$0xff]
        %v1124 = vld [vmem:[%s372 + $0x970] sm:$0xff]
        %v1125 = vld [vmem:[%s372 + $0x978] sm:$0xff]
        %v1126 = vld [vmem:[%s372 + $0x980] sm:$0xff]
        %v1127 = vld [vmem:[%s372 + $0x988] sm:$0xff]
        %v1128 = vld [vmem:[%s372 + $0x990] sm:$0xff]
        %v1129 = vld [vmem:[%s372 + $0x998] sm:$0xff]
        %v1130 = vld [vmem:[%s372 + $0x9a0] sm:$0xff]
        %v1131 = vld [vmem:[%s372 + $0x9a8] sm:$0xff]
        %v1132 = vld [vmem:[%s372 + $0x9b0] sm:$0xff]
        %v1133 = vld [vmem:[%s372 + $0x9b8] sm:$0xff]
        %v1134 = vld [vmem:[%s372 + $0x9c0] sm:$0xff]
        %v1135 = vld [vmem:[%s372 + $0x9c8] sm:$0xff]
        %v1136 = vld [vmem:[%s372 + $0x9d0] sm:$0xff]
        %v1137 = vld [vmem:[%s372 + $0x9d8] sm:$0xff]
        %v1138 = vld [vmem:[%s372 + $0x9e0] sm:$0xff]
        %v1139 = vld [vmem:[%s372 + $0x9e8] sm:$0xff]
        %v1140 = vld [vmem:[%s372 + $0x9f0] sm:$0xff]
        %v1141 = vld [vmem:[%s372 + $0x9f8] sm:$0xff]
        %v1142 = vld [vmem:[%s372 + $0xa00] sm:$0xff]
        %v1143 = vld [vmem:[%s372 + $0xa08] sm:$0xff]
        %v1144 = vld [vmem:[%s372 + $0xa10] sm:$0xff]
        %v1145 = vld [vmem:[%s372 + $0xa18] sm:$0xff]
        %v1146 = vld [vmem:[%s372 + $0xa20] sm:$0xff]
        %v1147 = vld [vmem:[%s372 + $0xa28] sm:$0xff]
        %v1148 = vld [vmem:[%s372 + $0xa30] sm:$0xff]
        %v1149 = vld [vmem:[%s372 + $0xa38] sm:$0xff]
        %v1150 = vld [vmem:[%s372 + $0xa40] sm:$0xff]
        %v1151 = vld [vmem:[%s372 + $0xa48] sm:$0xff]
        %v1152 = vld [vmem:[%s372 + $0xa50] sm:$0xff]
        %v1153 = vld [vmem:[%s372 + $0xa58] sm:$0xff]
        %v1154 = vld [vmem:[%s372 + $0xa60] sm:$0xff]
        %v1155 = vld [vmem:[%s372 + $0xa68] sm:$0xff]
        %v1156 = vld [vmem:[%s372 + $0xa70] sm:$0xff]
        %v1157 = vld [vmem:[%s372 + $0xa78] sm:$0xff]
        %v1158 = vld [vmem:[%s372 + $0xa80] sm:$0xff]
        %v1159 = vld [vmem:[%s372 + $0xa88] sm:$0xff]
        %v1160 = vld [vmem:[%s372 + $0xa90] sm:$0xff]
        %v1161 = vld [vmem:[%s372 + $0xa98] sm:$0xff]
        %v1162 = vld [vmem:[%s372 + $0xaa0] sm:$0xff]
        %v1163 = vld [vmem:[%s372 + $0xaa8] sm:$0xff]
        %v1164 = vld [vmem:[%s372 + $0xab0] sm:$0xff]
        %v1165 = vld [vmem:[%s372 + $0xab8] sm:$0xff]
        %v1166 = vld [vmem:[%s372 + $0xac0] sm:$0xff]
        %v1167 = vld [vmem:[%s372 + $0xac8] sm:$0xff]
        %v1168 = vld [vmem:[%s372 + $0xad0] sm:$0xff]
        %v1169 = vld [vmem:[%s372 + $0xad8] sm:$0xff]
        %v1170 = vld [vmem:[%s372 + $0xae0] sm:$0xff]
        %v1171 = vld [vmem:[%s372 + $0xae8] sm:$0xff]
        %v1172 = vld [vmem:[%s372 + $0xaf0] sm:$0xff]
        %v1173 = vld [vmem:[%s372 + $0xaf8] sm:$0xff]
        %v1174 = vld [vmem:[%s372 + $0xb00] sm:$0xff]
        %v1175 = vld [vmem:[%s372 + $0xb08] sm:$0xff]
        %v1176 = vld [vmem:[%s372 + $0xb10] sm:$0xff]
        %v1177 = vld [vmem:[%s372 + $0xb18] sm:$0xff]
        %v1178 = vld [vmem:[%s372 + $0xb20] sm:$0xff]
        %v1179 = vld [vmem:[%s372 + $0xb28] sm:$0xff]
        %v1180 = vld [vmem:[%s372 + $0xb30] sm:$0xff]
        %v1181 = vld [vmem:[%s372 + $0xb38] sm:$0xff]
        %v1182 = vld [vmem:[%s372 + $0xb40] sm:$0xff]
        %v1183 = vld [vmem:[%s372 + $0xb48] sm:$0xff]
        %v1184 = vld [vmem:[%s372 + $0xb50] sm:$0xff]
        %v1185 = vld [vmem:[%s372 + $0xb58] sm:$0xff]
        %v1186 = vld [vmem:[%s372 + $0xb60] sm:$0xff]
        %v1187 = vld [vmem:[%s372 + $0xb68] sm:$0xff]
        %v1188 = vld [vmem:[%s372 + $0xb70] sm:$0xff]
        %v1189 = vld [vmem:[%s372 + $0xb78] sm:$0xff]
        %v1190 = vld [vmem:[%s372 + $0xb80] sm:$0xff]
        %v1191 = vld [vmem:[%s372 + $0xb88] sm:$0xff]
        %v1192 = vld [vmem:[%s372 + $0xb90] sm:$0xff]
        %v1193 = vld [vmem:[%s372 + $0xb98] sm:$0xff]
        %v1194 = vld [vmem:[%s372 + $0xba0] sm:$0xff]
        %v1195 = vld [vmem:[%s372 + $0xba8] sm:$0xff]
        %v1196 = vld [vmem:[%s372 + $0xbb0] sm:$0xff]
        %v1197 = vld [vmem:[%s372 + $0xbb8] sm:$0xff]
        %v1198 = vld [vmem:[%s372 + $0xbc0] sm:$0xff]
        %v1199 = vld [vmem:[%s372 + $0xbc8] sm:$0xff]
        %v1200 = vld [vmem:[%s372 + $0xbd0] sm:$0xff]
        %v1201 = vld [vmem:[%s372 + $0xbd8] sm:$0xff]
        %v1202 = vld [vmem:[%s372 + $0xbe0] sm:$0xff]
        %v1203 = vld [vmem:[%s372 + $0xbe8] sm:$0xff]
        %v1204 = vld [vmem:[%s372 + $0xbf0] sm:$0xff]
        %v1205 = vld [vmem:[%s372 + $0xbf8] sm:$0xff]
        %v1206 = vld [vmem:[%s372 + $0xc00] sm:$0xff]
        %v1207 = vld [vmem:[%s372 + $0xc08] sm:$0xff]
        %v1208 = vld [vmem:[%s372 + $0xc10] sm:$0xff]
        %v1209 = vld [vmem:[%s372 + $0xc18] sm:$0xff]
        %v1210 = vld [vmem:[%s372 + $0xc20] sm:$0xff]
        %v1211 = vld [vmem:[%s372 + $0xc28] sm:$0xff]
        %v1212 = vld [vmem:[%s372 + $0xc30] sm:$0xff]
        %v1213 = vld [vmem:[%s372 + $0xc38] sm:$0xff]
        %v1214 = vld [vmem:[%s372 + $0xc40] sm:$0xff]
        %v1215 = vld [vmem:[%s372 + $0xc48] sm:$0xff]
        %v1216 = vld [vmem:[%s372 + $0xc50] sm:$0xff]
        %v1217 = vld [vmem:[%s372 + $0xc58] sm:$0xff]
        %v1218 = vld [vmem:[%s372 + $0xc60] sm:$0xff]
        %v1219 = vld [vmem:[%s372 + $0xc68] sm:$0xff]
        %v1220 = vld [vmem:[%s372 + $0xc70] sm:$0xff]
        %v1221 = vld [vmem:[%s372 + $0xc78] sm:$0xff]
        %v1222 = vld [vmem:[%s372 + $0xc80] sm:$0xff]
        %v1223 = vld [vmem:[%s372 + $0xc88] sm:$0xff]
        %v1224 = vld [vmem:[%s372 + $0xc90] sm:$0xff]
        %v1225 = vld [vmem:[%s372 + $0xc98] sm:$0xff]
        %v1226 = vld [vmem:[%s372 + $0xca0] sm:$0xff]
        %v1227 = vld [vmem:[%s372 + $0xca8] sm:$0xff]
        %v1228 = vld [vmem:[%s372 + $0xcb0] sm:$0xff]
        %v1229 = vld [vmem:[%s372 + $0xcb8] sm:$0xff]
        %v1230 = vld [vmem:[%s372 + $0xcc0] sm:$0xff]
        %v1231 = vld [vmem:[%s372 + $0xcc8] sm:$0xff]
        %v1232 = vld [vmem:[%s372 + $0xcd0] sm:$0xff]
        %v1233 = vld [vmem:[%s372 + $0xcd8] sm:$0xff]
        %v1234 = vld [vmem:[%s372 + $0xce0] sm:$0xff]
        %v1235 = vld [vmem:[%s372 + $0xce8] sm:$0xff]
        %v1236 = vld [vmem:[%s372 + $0xcf0] sm:$0xff]
        %v1237 = vld [vmem:[%s372 + $0xcf8] sm:$0xff]
        %v1238 = vld [vmem:[%s372 + $0xd00] sm:$0xff]
        %v1239 = vld [vmem:[%s372 + $0xd08] sm:$0xff]
        %v1240 = vld [vmem:[%s372 + $0xd10] sm:$0xff]
        %v1241 = vld [vmem:[%s372 + $0xd18] sm:$0xff]
        %v1242 = vld [vmem:[%s372 + $0xd20] sm:$0xff]
        %v1243 = vld [vmem:[%s372 + $0xd28] sm:$0xff]
        %v1244 = vld [vmem:[%s372 + $0xd30] sm:$0xff]
        %v1245 = vld [vmem:[%s372 + $0xd38] sm:$0xff]
        %v1246 = vld [vmem:[%s372 + $0xd40] sm:$0xff]
        %v1247 = vld [vmem:[%s372 + $0xd48] sm:$0xff]
        %v1248 = vld [vmem:[%s372 + $0xd50] sm:$0xff]
        %v1249 = vld [vmem:[%s372 + $0xd58] sm:$0xff]
        %v1250 = vld [vmem:[%s372 + $0xd60] sm:$0xff]
        %v1251 = vld [vmem:[%s372 + $0xd68] sm:$0xff]
        %v1252 = vld [vmem:[%s372 + $0xd70] sm:$0xff]
        %v1253 = vld [vmem:[%s372 + $0xd78] sm:$0xff]
        %v1254 = vld [vmem:[%s372 + $0xd80] sm:$0xff]
        %v1255 = vld [vmem:[%s372 + $0xd88] sm:$0xff]
        %v1256 = vld [vmem:[%s372 + $0xd90] sm:$0xff]
        %v1257 = vld [vmem:[%s372 + $0xd98] sm:$0xff]
        %v1258 = vld [vmem:[%s372 + $0xda0] sm:$0xff]
        %v1259 = vld [vmem:[%s372 + $0xda8] sm:$0xff]
        %v1260 = vld [vmem:[%s372 + $0xdb0] sm:$0xff]
        %v1261 = vld [vmem:[%s372 + $0xdb8] sm:$0xff]
        %v1262 = vld [vmem:[%s372 + $0xdc0] sm:$0xff]
        %v1263 = vld [vmem:[%s372 + $0xdc8] sm:$0xff]
        %v1264 = vld [vmem:[%s372 + $0xdd0] sm:$0xff]
        %v1265 = vld [vmem:[%s372 + $0xdd8] sm:$0xff]
        %v1266 = vld [vmem:[%s372 + $0xde0] sm:$0xff]
        %v1267 = vld [vmem:[%s372 + $0xde8] sm:$0xff]
        %v1268 = vld [vmem:[%s372 + $0xdf0] sm:$0xff]
        %v1269 = vld [vmem:[%s372 + $0xdf8] sm:$0xff]
        %v1270 = vld [vmem:[%s372 + $0xe00] sm:$0xff]
        %v1271 = vld [vmem:[%s372 + $0xe08] sm:$0xff]
        %v1272 = vld [vmem:[%s372 + $0xe10] sm:$0xff]
        %v1273 = vld [vmem:[%s372 + $0xe18] sm:$0xff]
        %v1274 = vld [vmem:[%s372 + $0xe20] sm:$0xff]
        %v1275 = vld [vmem:[%s372 + $0xe28] sm:$0xff]
        %v1276 = vld [vmem:[%s372 + $0xe30] sm:$0xff]
        %v1277 = vld [vmem:[%s372 + $0xe38] sm:$0xff]
        %v1278 = vld [vmem:[%s372 + $0xe40] sm:$0xff]
        %v1279 = vld [vmem:[%s372 + $0xe48] sm:$0xff]
        %v1280 = vld [vmem:[%s372 + $0xe50] sm:$0xff]
        %v1281 = vld [vmem:[%s372 + $0xe58] sm:$0xff]
        %v1282 = vld [vmem:[%s372 + $0xe60] sm:$0xff]
        %v1283 = vld [vmem:[%s372 + $0xe68] sm:$0xff]
        %v1284 = vld [vmem:[%s372 + $0xe70] sm:$0xff]
        %v1285 = vld [vmem:[%s372 + $0xe78] sm:$0xff]
        %v1286 = vld [vmem:[%s372 + $0xe80] sm:$0xff]
        %v1287 = vld [vmem:[%s372 + $0xe88] sm:$0xff]
        %v1288 = vld [vmem:[%s372 + $0xe90] sm:$0xff]
        %v1289 = vld [vmem:[%s372 + $0xe98] sm:$0xff]
        %v1290 = vld [vmem:[%s372 + $0xea0] sm:$0xff]
        %v1291 = vld [vmem:[%s372 + $0xea8] sm:$0xff]
        %v1292 = vld [vmem:[%s372 + $0xeb0] sm:$0xff]
        %v1293 = vld [vmem:[%s372 + $0xeb8] sm:$0xff]
        %v1294 = vld [vmem:[%s372 + $0xec0] sm:$0xff]
        %v1295 = vld [vmem:[%s372 + $0xec8] sm:$0xff]
        %v1296 = vld [vmem:[%s372 + $0xed0] sm:$0xff]
        %v1297 = vld [vmem:[%s372 + $0xed8] sm:$0xff]
        %v1298 = vld [vmem:[%s372 + $0xee0] sm:$0xff]
        %v1299 = vld [vmem:[%s372 + $0xee8] sm:$0xff]
        %v1300 = vld [vmem:[%s372 + $0xef0] sm:$0xff]
        %v1301 = vld [vmem:[%s372 + $0xef8] sm:$0xff]
        %v1302 = vld [vmem:[%s372 + $0xf00] sm:$0xff]
        %v1303 = vld [vmem:[%s372 + $0xf08] sm:$0xff]
        %v1304 = vld [vmem:[%s372 + $0xf10] sm:$0xff]
        %v1305 = vld [vmem:[%s372 + $0xf18] sm:$0xff]
        %v1306 = vld [vmem:[%s372 + $0xf20] sm:$0xff]
        %v1307 = vld [vmem:[%s372 + $0xf28] sm:$0xff]
        %v1308 = vld [vmem:[%s372 + $0xf30] sm:$0xff]
        %v1309 = vld [vmem:[%s372 + $0xf38] sm:$0xff]
        %v1310 = vld [vmem:[%s372 + $0xf40] sm:$0xff]
        %v1311 = vld [vmem:[%s372 + $0xf48] sm:$0xff]
        %v1312 = vld [vmem:[%s372 + $0xf50] sm:$0xff]
        %v1313 = vld [vmem:[%s372 + $0xf58] sm:$0xff]
        %v1314 = vld [vmem:[%s372 + $0xf60] sm:$0xff]
        %v1315 = vld [vmem:[%s372 + $0xf68] sm:$0xff]
        %v1316 = vld [vmem:[%s372 + $0xf70] sm:$0xff]
        %v1317 = vld [vmem:[%s372 + $0xf78] sm:$0xff]
        %v1318 = vld [vmem:[%s372 + $0xf80] sm:$0xff]
        %v1319 = vld [vmem:[%s372 + $0xf88] sm:$0xff]
        %v1320 = vld [vmem:[%s372 + $0xf90] sm:$0xff]
        %v1321 = vld [vmem:[%s372 + $0xf98] sm:$0xff]
        %v1322 = vld [vmem:[%s372 + $0xfa0] sm:$0xff]
        %v1323 = vld [vmem:[%s372 + $0xfa8] sm:$0xff]
        %v1324 = vld [vmem:[%s372 + $0xfb0] sm:$0xff]
        %v1325 = vld [vmem:[%s372 + $0xfb8] sm:$0xff]
        %v1326 = vld [vmem:[%s372 + $0xfc0] sm:$0xff]
        %v1327 = vld [vmem:[%s372 + $0xfc8] sm:$0xff]
        %v1328 = vld [vmem:[%s372 + $0xfd0] sm:$0xff]
        %v1329 = vld [vmem:[%s372 + $0xfd8] sm:$0xff]
        %v1330 = vld [vmem:[%s372 + $0xfe0] sm:$0xff]
        %v1331 = vld [vmem:[%s372 + $0xfe8] sm:$0xff]
        %v1332 = vld [vmem:[%s372 + $0xff0] sm:$0xff]
        %v1333 = vld [vmem:[%s372 + $0xff8] sm:$0xff]
        %v1334 = vld [vmem:[%s372 + $0x1000] sm:$0xff]
        %v1335 = vld [vmem:[%s372 + $0x1008] sm:$0xff]
        %v1336 = vld [vmem:[%s372 + $0x1010] sm:$0xff]
        %v1337 = vld [vmem:[%s372 + $0x1018] sm:$0xff]
        %v1338 = vld [vmem:[%s372 + $0x1020] sm:$0xff]
        %v1339 = vld [vmem:[%s372 + $0x1028] sm:$0xff]
        %v1340 = vld [vmem:[%s372 + $0x1030] sm:$0xff]
        %v1341 = vld [vmem:[%s372 + $0x1038] sm:$0xff]
        %v1342 = vld [vmem:[%s372 + $0x1040] sm:$0xff]
        %v1343 = vld [vmem:[%s372 + $0x1048] sm:$0xff]
        %v1344 = vld [vmem:[%s372 + $0x1050] sm:$0xff]
        %v1345 = vld [vmem:[%s372 + $0x1058] sm:$0xff]
        %v1346 = vld [vmem:[%s372 + $0x1060] sm:$0xff]
        %v1347 = vld [vmem:[%s372 + $0x1068] sm:$0xff]
        %v1348 = vld [vmem:[%s372 + $0x1070] sm:$0xff]
        %v1349 = vld [vmem:[%s372 + $0x1078] sm:$0xff]
        %v1350 = vld [vmem:[%s372 + $0x1080] sm:$0xff]
        %v1351 = vld [vmem:[%s372 + $0x1088] sm:$0xff]
        %v1352 = vld [vmem:[%s372 + $0x1090] sm:$0xff]
        %v1353 = vld [vmem:[%s372 + $0x1098] sm:$0xff]
        %v1354 = vld [vmem:[%s372 + $0x10a0] sm:$0xff]
        %v1355 = vld [vmem:[%s372 + $0x10a8] sm:$0xff]
        %v1356 = vld [vmem:[%s372 + $0x10b0] sm:$0xff]
        %v1357 = vld [vmem:[%s372 + $0x10b8] sm:$0xff]
        %v1358 = vld [vmem:[%s372 + $0x10c0] sm:$0xff]
        %v1359 = vld [vmem:[%s372 + $0x10c8] sm:$0xff]
        %v1360 = vld [vmem:[%s372 + $0x10d0] sm:$0xff]
        %v1361 = vld [vmem:[%s372 + $0x10d8] sm:$0xff]
        %v1362 = vld [vmem:[%s372 + $0x10e0] sm:$0xff]
        %v1363 = vld [vmem:[%s372 + $0x10e8] sm:$0xff]
        %v1364 = vld [vmem:[%s372 + $0x10f0] sm:$0xff]
        %v1365 = vld [vmem:[%s372 + $0x10f8] sm:$0xff]
        %v1366 = vld [vmem:[%s372 + $0x1100] sm:$0xff]
        %v1367 = vld [vmem:[%s372 + $0x1108] sm:$0xff]
        %v1368 = vld [vmem:[%s372 + $0x1110] sm:$0xff]
        %v1369 = vld [vmem:[%s372 + $0x1118] sm:$0xff]
        %v1370 = vld [vmem:[%s372 + $0x1120] sm:$0xff]
        %v1371 = vld [vmem:[%s372 + $0x1128] sm:$0xff]
        %v1372 = vld [vmem:[%s372 + $0x1130] sm:$0xff]
        %v1373 = vld [vmem:[%s372 + $0x1138] sm:$0xff]
        %v1374 = vld [vmem:[%s372 + $0x1140] sm:$0xff]
        %v1375 = vld [vmem:[%s372 + $0x1148] sm:$0xff]
        %v1376 = vld [vmem:[%s372 + $0x1150] sm:$0xff]
        %v1377 = vld [vmem:[%s372 + $0x1158] sm:$0xff]
        %v1378 = vld [vmem:[%s372 + $0x1160] sm:$0xff]
        %v1379 = vld [vmem:[%s372 + $0x1168] sm:$0xff]
        %v1380 = vld [vmem:[%s372 + $0x1170] sm:$0xff]
        %v1381 = vld [vmem:[%s372 + $0x1178] sm:$0xff]
        %v1382 = vld [vmem:[%s372 + $0x1180] sm:$0xff]
        %v1383 = vld [vmem:[%s372 + $0x1188] sm:$0xff]
        %v1384 = vld [vmem:[%s372 + $0x1190] sm:$0xff]
        %v1385 = vld [vmem:[%s372 + $0x1198] sm:$0xff]
        %v1386 = vld [vmem:[%s372 + $0x11a0] sm:$0xff]
        %v1387 = vld [vmem:[%s372 + $0x11a8] sm:$0xff]
        %v1388 = vld [vmem:[%s372 + $0x11b0] sm:$0xff]
        %v1389 = vld [vmem:[%s372 + $0x11b8] sm:$0xff]
        %v1390 = vld [vmem:[%s372 + $0x11c0] sm:$0xff]
        %v1391 = vld [vmem:[%s372 + $0x11c8] sm:$0xff]
        %v1392 = vld [vmem:[%s372 + $0x11d0] sm:$0xff]
        %v1393 = vld [vmem:[%s372 + $0x11d8] sm:$0xff]
        %v1394 = vld [vmem:[%s372 + $0x11e0] sm:$0xff]
        %v1395 = vld [vmem:[%s372 + $0x11e8] sm:$0xff]
        %v1396 = vld [vmem:[%s372 + $0x11f0] sm:$0xff]
        %v1397 = vld [vmem:[%s372 + $0x11f8] sm:$0xff]
        %v1686 = vunpack.c.l.b16 %v534
        %v1687 = vunpack.c.h.b16 %v534
        %v1688 = vunpack.c.l.b16 %v535
        %v1689 = vunpack.c.h.b16 %v535
        %v1690 = vunpack.c.l.b16 %v536
        %v1691 = vunpack.c.h.b16 %v536
        %v1692 = vunpack.c.l.b16 %v537
        %v1693 = vunpack.c.h.b16 %v537
        %v1694 = vunpack.c.l.b16 %v538
        %v1695 = vunpack.c.h.b16 %v538
        %v1696 = vunpack.c.l.b16 %v539
        %v1697 = vunpack.c.h.b16 %v539
        %v1698 = vunpack.c.l.b16 %v540
        %v1699 = vunpack.c.h.b16 %v540
        %v1700 = vunpack.c.l.b16 %v541
        %v1701 = vunpack.c.h.b16 %v541
        %v1702 = vunpack.c.l.b16 %v542
        %v1703 = vunpack.c.h.b16 %v542
        %v1704 = vunpack.c.l.b16 %v543
        %v1705 = vunpack.c.h.b16 %v543
        %v1706 = vunpack.c.l.b16 %v544
        %v1707 = vunpack.c.h.b16 %v544
        %v1708 = vunpack.c.l.b16 %v545
        %v1709 = vunpack.c.h.b16 %v545
        %v1710 = vunpack.c.l.b16 %v546
        %v1711 = vunpack.c.h.b16 %v546
        %v1712 = vunpack.c.l.b16 %v547
        %v1713 = vunpack.c.h.b16 %v547
        %v1714 = vunpack.c.l.b16 %v548
        %v1715 = vunpack.c.h.b16 %v548
        %v1716 = vunpack.c.l.b16 %v549
        %v1717 = vunpack.c.h.b16 %v549
        %v1718 = vunpack.c.l.b16 %v550
        %v1719 = vunpack.c.h.b16 %v550
        %v1720 = vunpack.c.l.b16 %v551
        %v1721 = vunpack.c.h.b16 %v551
        %v1722 = vunpack.c.l.b16 %v552
        %v1723 = vunpack.c.h.b16 %v552
        %v1724 = vunpack.c.l.b16 %v553
        %v1725 = vunpack.c.h.b16 %v553
        %v1726 = vunpack.c.l.b16 %v554
        %v1727 = vunpack.c.h.b16 %v554
        %v1728 = vunpack.c.l.b16 %v555
        %v1729 = vunpack.c.h.b16 %v555
        %v1730 = vunpack.c.l.b16 %v556
        %v1731 = vunpack.c.h.b16 %v556
        %v1732 = vunpack.c.l.b16 %v557
        %v1733 = vunpack.c.h.b16 %v557
        %v1734 = vunpack.c.l.b16 %v558
        %v1735 = vunpack.c.h.b16 %v558
        %v1736 = vunpack.c.l.b16 %v559
        %v1737 = vunpack.c.h.b16 %v559
        %v1738 = vunpack.c.l.b16 %v560
        %v1739 = vunpack.c.h.b16 %v560
        %v1740 = vunpack.c.l.b16 %v561
        %v1741 = vunpack.c.h.b16 %v561
        %v1742 = vunpack.c.l.b16 %v562
        %v1743 = vunpack.c.h.b16 %v562
        %v1744 = vunpack.c.l.b16 %v563
        %v1745 = vunpack.c.h.b16 %v563
        %v1746 = vunpack.c.l.b16 %v564
        %v1747 = vunpack.c.h.b16 %v564
        %v1748 = vunpack.c.l.b16 %v565
        %v1749 = vunpack.c.h.b16 %v565
        %v1750 = vunpack.c.l.b16 %v566
        %v1751 = vunpack.c.h.b16 %v566
        %v1752 = vunpack.c.l.b16 %v567
        %v1753 = vunpack.c.h.b16 %v567
        %v1754 = vunpack.c.l.b16 %v568
        %v1755 = vunpack.c.h.b16 %v568
        %v1756 = vunpack.c.l.b16 %v569
        %v1757 = vunpack.c.h.b16 %v569
        %v1758 = vunpack.c.l.b16 %v570
        %v1759 = vunpack.c.h.b16 %v570
        %v1760 = vunpack.c.l.b16 %v571
        %v1761 = vunpack.c.h.b16 %v571
        %v1762 = vunpack.c.l.b16 %v572
        %v1763 = vunpack.c.h.b16 %v572
        %v1764 = vunpack.c.l.b16 %v573
        %v1765 = vunpack.c.h.b16 %v573
        %v1766 = vunpack.c.l.b16 %v574
        %v1767 = vunpack.c.h.b16 %v574
        %v1768 = vunpack.c.l.b16 %v575
        %v1769 = vunpack.c.h.b16 %v575
        %v1770 = vunpack.c.l.b16 %v576
        %v1771 = vunpack.c.h.b16 %v576
        %v1772 = vunpack.c.l.b16 %v577
        %v1773 = vunpack.c.h.b16 %v577
        %v1774 = vunpack.c.l.b16 %v578
        %v1775 = vunpack.c.h.b16 %v578
        %v1776 = vunpack.c.l.b16 %v579
        %v1777 = vunpack.c.h.b16 %v579
        %v1778 = vunpack.c.l.b16 %v580
        %v1779 = vunpack.c.h.b16 %v580
        %v1780 = vunpack.c.l.b16 %v581
        %v1781 = vunpack.c.h.b16 %v581
        %v1782 = vunpack.c.l.b16 %v582
        %v1783 = vunpack.c.h.b16 %v582
        %v1784 = vunpack.c.l.b16 %v583
        %v1785 = vunpack.c.h.b16 %v583
        %v1786 = vunpack.c.l.b16 %v584
        %v1787 = vunpack.c.h.b16 %v584
        %v1788 = vunpack.c.l.b16 %v585
        %v1789 = vunpack.c.h.b16 %v585
        %v1790 = vunpack.c.l.b16 %v586
        %v1791 = vunpack.c.h.b16 %v586
        %v1792 = vunpack.c.l.b16 %v587
        %v1793 = vunpack.c.h.b16 %v587
        %v1794 = vunpack.c.l.b16 %v588
        %v1795 = vunpack.c.h.b16 %v588
        %v1796 = vunpack.c.l.b16 %v589
        %v1797 = vunpack.c.h.b16 %v589
        %v1798 = vunpack.c.l.b16 %v590
        %v1799 = vunpack.c.h.b16 %v590
        %v1800 = vunpack.c.l.b16 %v591
        %v1801 = vunpack.c.h.b16 %v591
        %v1802 = vunpack.c.l.b16 %v592
        %v1803 = vunpack.c.h.b16 %v592
        %v1804 = vunpack.c.l.b16 %v593
        %v1805 = vunpack.c.h.b16 %v593
        %v1806 = vunpack.c.l.b16 %v594
        %v1807 = vunpack.c.h.b16 %v594
        %v1808 = vunpack.c.l.b16 %v595
        %v1809 = vunpack.c.h.b16 %v595
        %v1810 = vunpack.c.l.b16 %v596
        %v1811 = vunpack.c.h.b16 %v596
        %v1812 = vunpack.c.l.b16 %v597
        %v1813 = vunpack.c.h.b16 %v597
        %v1814 = vunpack.c.l.b16 %v598
        %v1815 = vunpack.c.h.b16 %v598
        %v1816 = vunpack.c.l.b16 %v599
        %v1817 = vunpack.c.h.b16 %v599
        %v1818 = vunpack.c.l.b16 %v600
        %v1819 = vunpack.c.h.b16 %v600
        %v1820 = vunpack.c.l.b16 %v601
        %v1821 = vunpack.c.h.b16 %v601
        %v1822 = vunpack.c.l.b16 %v602
        %v1823 = vunpack.c.h.b16 %v602
        %v1824 = vunpack.c.l.b16 %v603
        %v1825 = vunpack.c.h.b16 %v603
        %v1826 = vunpack.c.l.b16 %v604
        %v1827 = vunpack.c.h.b16 %v604
        %v1828 = vunpack.c.l.b16 %v605
        %v1829 = vunpack.c.h.b16 %v605
        %v1830 = vunpack.c.l.b16 %v606
        %v1831 = vunpack.c.h.b16 %v606
        %v1832 = vunpack.c.l.b16 %v607
        %v1833 = vunpack.c.h.b16 %v607
        %v1834 = vunpack.c.l.b16 %v608
        %v1835 = vunpack.c.h.b16 %v608
        %v1836 = vunpack.c.l.b16 %v609
        %v1837 = vunpack.c.h.b16 %v609
        %v1838 = vunpack.c.l.b16 %v610
        %v1839 = vunpack.c.h.b16 %v610
        %v1840 = vunpack.c.l.b16 %v611
        %v1841 = vunpack.c.h.b16 %v611
        %v1842 = vunpack.c.l.b16 %v612
        %v1843 = vunpack.c.h.b16 %v612
        %v1844 = vunpack.c.l.b16 %v613
        %v1845 = vunpack.c.h.b16 %v613
        %v1846 = vunpack.c.l.b16 %v614
        %v1847 = vunpack.c.h.b16 %v614
        %v1848 = vunpack.c.l.b16 %v615
        %v1849 = vunpack.c.h.b16 %v615
        %v1850 = vunpack.c.l.b16 %v616
        %v1851 = vunpack.c.h.b16 %v616
        %v1852 = vunpack.c.l.b16 %v617
        %v1853 = vunpack.c.h.b16 %v617
        %v1854 = vunpack.c.l.b16 %v618
        %v1855 = vunpack.c.h.b16 %v618
        %v1856 = vunpack.c.l.b16 %v619
        %v1857 = vunpack.c.h.b16 %v619
        %v1858 = vunpack.c.l.b16 %v620
        %v1859 = vunpack.c.h.b16 %v620
        %v1860 = vunpack.c.l.b16 %v621
        %v1861 = vunpack.c.h.b16 %v621
        %v1862 = vunpack.c.l.b16 %v622
        %v1863 = vunpack.c.h.b16 %v622
        %v1864 = vunpack.c.l.b16 %v623
        %v1865 = vunpack.c.h.b16 %v623
        %v1866 = vunpack.c.l.b16 %v624
        %v1867 = vunpack.c.h.b16 %v624
        %v1868 = vunpack.c.l.b16 %v625
        %v1869 = vunpack.c.h.b16 %v625
        %v1870 = vunpack.c.l.b16 %v626
        %v1871 = vunpack.c.h.b16 %v626
        %v1872 = vunpack.c.l.b16 %v627
        %v1873 = vunpack.c.h.b16 %v627
        %v1874 = vunpack.c.l.b16 %v628
        %v1875 = vunpack.c.h.b16 %v628
        %v1876 = vunpack.c.l.b16 %v629
        %v1877 = vunpack.c.h.b16 %v629
        %v1878 = vunpack.c.l.b16 %v630
        %v1879 = vunpack.c.h.b16 %v630
        %v1880 = vunpack.c.l.b16 %v631
        %v1881 = vunpack.c.h.b16 %v631
        %v1882 = vunpack.c.l.b16 %v632
        %v1883 = vunpack.c.h.b16 %v632
        %v1884 = vunpack.c.l.b16 %v633
        %v1885 = vunpack.c.h.b16 %v633
        %v1886 = vunpack.c.l.b16 %v634
        %v1887 = vunpack.c.h.b16 %v634
        %v1888 = vunpack.c.l.b16 %v635
        %v1889 = vunpack.c.h.b16 %v635
        %v1890 = vunpack.c.l.b16 %v636
        %v1891 = vunpack.c.h.b16 %v636
        %v1892 = vunpack.c.l.b16 %v637
        %v1893 = vunpack.c.h.b16 %v637
        %v1894 = vunpack.c.l.b16 %v638
        %v1895 = vunpack.c.h.b16 %v638
        %v1896 = vunpack.c.l.b16 %v639
        %v1897 = vunpack.c.h.b16 %v639
        %v1898 = vunpack.c.l.b16 %v640
        %v1899 = vunpack.c.h.b16 %v640
        %v1900 = vunpack.c.l.b16 %v641
        %v1901 = vunpack.c.h.b16 %v641
        %v1902 = vunpack.c.l.b16 %v642
        %v1903 = vunpack.c.h.b16 %v642
        %v1904 = vunpack.c.l.b16 %v643
        %v1905 = vunpack.c.h.b16 %v643
        %v1906 = vunpack.c.l.b16 %v644
        %v1907 = vunpack.c.h.b16 %v644
        %v1908 = vunpack.c.l.b16 %v645
        %v1909 = vunpack.c.h.b16 %v645
        %v1910 = vunpack.c.l.b16 %v646
        %v1911 = vunpack.c.h.b16 %v646
        %v1912 = vunpack.c.l.b16 %v647
        %v1913 = vunpack.c.h.b16 %v647
        %v1914 = vunpack.c.l.b16 %v648
        %v1915 = vunpack.c.h.b16 %v648
        %v1916 = vunpack.c.l.b16 %v649
        %v1917 = vunpack.c.h.b16 %v649
        %v1918 = vunpack.c.l.b16 %v650
        %v1919 = vunpack.c.h.b16 %v650
        %v1920 = vunpack.c.l.b16 %v651
        %v1921 = vunpack.c.h.b16 %v651
        %v1922 = vunpack.c.l.b16 %v652
        %v1923 = vunpack.c.h.b16 %v652
        %v1924 = vunpack.c.l.b16 %v653
        %v1925 = vunpack.c.h.b16 %v653
        %v1926 = vunpack.c.l.b16 %v654
        %v1927 = vunpack.c.h.b16 %v654
        %v1928 = vunpack.c.l.b16 %v655
        %v1929 = vunpack.c.h.b16 %v655
        %v1930 = vunpack.c.l.b16 %v656
        %v1931 = vunpack.c.h.b16 %v656
        %v1932 = vunpack.c.l.b16 %v657
        %v1933 = vunpack.c.h.b16 %v657
        %v1934 = vunpack.c.l.b16 %v658
        %v1935 = vunpack.c.h.b16 %v658
        %v1936 = vunpack.c.l.b16 %v659
        %v1937 = vunpack.c.h.b16 %v659
        %v1938 = vunpack.c.l.b16 %v660
        %v1939 = vunpack.c.h.b16 %v660
        %v1940 = vunpack.c.l.b16 %v661
        %v1941 = vunpack.c.h.b16 %v661
        %v1942 = vunpack.c.l.b16 %v662
        %v1943 = vunpack.c.h.b16 %v662
        %v1944 = vunpack.c.l.b16 %v663
        %v1945 = vunpack.c.h.b16 %v663
        %v1946 = vunpack.c.l.b16 %v664
        %v1947 = vunpack.c.h.b16 %v664
        %v1948 = vunpack.c.l.b16 %v665
        %v1949 = vunpack.c.h.b16 %v665
        %v1950 = vunpack.c.l.b16 %v666
        %v1951 = vunpack.c.h.b16 %v666
        %v1952 = vunpack.c.l.b16 %v667
        %v1953 = vunpack.c.h.b16 %v667
        %v1954 = vunpack.c.l.b16 %v668
        %v1955 = vunpack.c.h.b16 %v668
        %v1956 = vunpack.c.l.b16 %v669
        %v1957 = vunpack.c.h.b16 %v669
        %v1958 = vunpack.c.l.b16 %v670
        %v1959 = vunpack.c.h.b16 %v670
        %v1960 = vunpack.c.l.b16 %v671
        %v1961 = vunpack.c.h.b16 %v671
        %v1962 = vunpack.c.l.b16 %v672
        %v1963 = vunpack.c.h.b16 %v672
        %v1964 = vunpack.c.l.b16 %v673
        %v1965 = vunpack.c.h.b16 %v673
        %v1966 = vunpack.c.l.b16 %v674
        %v1967 = vunpack.c.h.b16 %v674
        %v1968 = vunpack.c.l.b16 %v675
        %v1969 = vunpack.c.h.b16 %v675
        %v1970 = vunpack.c.l.b16 %v676
        %v1971 = vunpack.c.h.b16 %v676
        %v1972 = vunpack.c.l.b16 %v677
        %v1973 = vunpack.c.h.b16 %v677
        %v1974 = vunpack.c.l.b16 %v678
        %v1975 = vunpack.c.h.b16 %v678
        %v1976 = vunpack.c.l.b16 %v679
        %v1977 = vunpack.c.h.b16 %v679
        %v1978 = vunpack.c.l.b16 %v680
        %v1979 = vunpack.c.h.b16 %v680
        %v1980 = vunpack.c.l.b16 %v681
        %v1981 = vunpack.c.h.b16 %v681
        %v1982 = vunpack.c.l.b16 %v682
        %v1983 = vunpack.c.h.b16 %v682
        %v1984 = vunpack.c.l.b16 %v683
        %v1985 = vunpack.c.h.b16 %v683
        %v1986 = vunpack.c.l.b16 %v684
        %v1987 = vunpack.c.h.b16 %v684
        %v1988 = vunpack.c.l.b16 %v685
        %v1989 = vunpack.c.h.b16 %v685
        %v1990 = vunpack.c.l.b16 %v686
        %v1991 = vunpack.c.h.b16 %v686
        %v1992 = vunpack.c.l.b16 %v687
        %v1993 = vunpack.c.h.b16 %v687
        %v1994 = vunpack.c.l.b16 %v688
        %v1995 = vunpack.c.h.b16 %v688
        %v1996 = vunpack.c.l.b16 %v689
        %v1997 = vunpack.c.h.b16 %v689
        %v1998 = vunpack.c.l.b16 %v690
        %v1999 = vunpack.c.h.b16 %v690
        %v2000 = vunpack.c.l.b16 %v691
        %v2001 = vunpack.c.h.b16 %v691
        %v2002 = vunpack.c.l.b16 %v692
        %v2003 = vunpack.c.h.b16 %v692
        %v2004 = vunpack.c.l.b16 %v693
        %v2005 = vunpack.c.h.b16 %v693
        %v2006 = vunpack.c.l.b16 %v694
        %v2007 = vunpack.c.h.b16 %v694
        %v2008 = vunpack.c.l.b16 %v695
        %v2009 = vunpack.c.h.b16 %v695
        %v2010 = vunpack.c.l.b16 %v696
        %v2011 = vunpack.c.h.b16 %v696
        %v2012 = vunpack.c.l.b16 %v697
        %v2013 = vunpack.c.h.b16 %v697
        %v2014 = vunpack.c.l.b16 %v698
        %v2015 = vunpack.c.h.b16 %v698
        %v2016 = vunpack.c.l.b16 %v699
        %v2017 = vunpack.c.h.b16 %v699
        %v2018 = vunpack.c.l.b16 %v700
        %v2019 = vunpack.c.h.b16 %v700
        %v2020 = vunpack.c.l.b16 %v701
        %v2021 = vunpack.c.h.b16 %v701
        %v2022 = vunpack.c.l.b16 %v702
        %v2023 = vunpack.c.h.b16 %v702
        %v2024 = vunpack.c.l.b16 %v703
        %v2025 = vunpack.c.h.b16 %v703
        %v2026 = vunpack.c.l.b16 %v704
        %v2027 = vunpack.c.h.b16 %v704
        %v2028 = vunpack.c.l.b16 %v705
        %v2029 = vunpack.c.h.b16 %v705
        %v2030 = vunpack.c.l.b16 %v706
        %v2031 = vunpack.c.h.b16 %v706
        %v2032 = vunpack.c.l.b16 %v707
        %v2033 = vunpack.c.h.b16 %v707
        %v2034 = vunpack.c.l.b16 %v708
        %v2035 = vunpack.c.h.b16 %v708
        %v2036 = vunpack.c.l.b16 %v709
        %v2037 = vunpack.c.h.b16 %v709
        %v2038 = vunpack.c.l.b16 %v710
        %v2039 = vunpack.c.h.b16 %v710
        %v2040 = vunpack.c.l.b16 %v711
        %v2041 = vunpack.c.h.b16 %v711
        %v2042 = vunpack.c.l.b16 %v712
        %v2043 = vunpack.c.h.b16 %v712
        %v2044 = vunpack.c.l.b16 %v713
        %v2045 = vunpack.c.h.b16 %v713
        %v2046 = vunpack.c.l.b16 %v714
        %v2047 = vunpack.c.h.b16 %v714
        %v2048 = vunpack.c.l.b16 %v715
        %v2049 = vunpack.c.h.b16 %v715
        %v2050 = vunpack.c.l.b16 %v716
        %v2051 = vunpack.c.h.b16 %v716
        %v2052 = vunpack.c.l.b16 %v717
        %v2053 = vunpack.c.h.b16 %v717
        %v2054 = vunpack.c.l.b16 %v718
        %v2055 = vunpack.c.h.b16 %v718
        %v2056 = vunpack.c.l.b16 %v719
        %v2057 = vunpack.c.h.b16 %v719
        %v2058 = vunpack.c.l.b16 %v720
        %v2059 = vunpack.c.h.b16 %v720
        %v2060 = vunpack.c.l.b16 %v721
        %v2061 = vunpack.c.h.b16 %v721
        %v2062 = vunpack.c.l.b16 %v722
        %v2063 = vunpack.c.h.b16 %v722
        %v2064 = vunpack.c.l.b16 %v723
        %v2065 = vunpack.c.h.b16 %v723
        %v2066 = vunpack.c.l.b16 %v724
        %v2067 = vunpack.c.h.b16 %v724
        %v2068 = vunpack.c.l.b16 %v725
        %v2069 = vunpack.c.h.b16 %v725
        %v2070 = vunpack.c.l.b16 %v726
        %v2071 = vunpack.c.h.b16 %v726
        %v2072 = vunpack.c.l.b16 %v727
        %v2073 = vunpack.c.h.b16 %v727
        %v2074 = vunpack.c.l.b16 %v728
        %v2075 = vunpack.c.h.b16 %v728
        %v2076 = vunpack.c.l.b16 %v729
        %v2077 = vunpack.c.h.b16 %v729
        %v2078 = vunpack.c.l.b16 %v730
        %v2079 = vunpack.c.h.b16 %v730
        %v2080 = vunpack.c.l.b16 %v731
        %v2081 = vunpack.c.h.b16 %v731
        %v2082 = vunpack.c.l.b16 %v732
        %v2083 = vunpack.c.h.b16 %v732
        %v2084 = vunpack.c.l.b16 %v733
        %v2085 = vunpack.c.h.b16 %v733
        %v2086 = vunpack.c.l.b16 %v734
        %v2087 = vunpack.c.h.b16 %v734
        %v2088 = vunpack.c.l.b16 %v735
        %v2089 = vunpack.c.h.b16 %v735
        %v2090 = vunpack.c.l.b16 %v736
        %v2091 = vunpack.c.h.b16 %v736
        %v2092 = vunpack.c.l.b16 %v737
        %v2093 = vunpack.c.h.b16 %v737
        %v2094 = vunpack.c.l.b16 %v738
        %v2095 = vunpack.c.h.b16 %v738
        %v2096 = vunpack.c.l.b16 %v739
        %v2097 = vunpack.c.h.b16 %v739
        %v2098 = vunpack.c.l.b16 %v740
        %v2099 = vunpack.c.h.b16 %v740
        %v2100 = vunpack.c.l.b16 %v741
        %v2101 = vunpack.c.h.b16 %v741
        %v2102 = vunpack.c.l.b16 %v742
        %v2103 = vunpack.c.h.b16 %v742
        %v2104 = vunpack.c.l.b16 %v743
        %v2105 = vunpack.c.h.b16 %v743
        %v2106 = vunpack.c.l.b16 %v744
        %v2107 = vunpack.c.h.b16 %v744
        %v2108 = vunpack.c.l.b16 %v745
        %v2109 = vunpack.c.h.b16 %v745
        %v2110 = vunpack.c.l.b16 %v746
        %v2111 = vunpack.c.h.b16 %v746
        %v2112 = vunpack.c.l.b16 %v747
        %v2113 = vunpack.c.h.b16 %v747
        %v2114 = vunpack.c.l.b16 %v748
        %v2115 = vunpack.c.h.b16 %v748
        %v2116 = vunpack.c.l.b16 %v749
        %v2117 = vunpack.c.h.b16 %v749
        %v2118 = vunpack.c.l.b16 %v750
        %v2119 = vunpack.c.h.b16 %v750
        %v2120 = vunpack.c.l.b16 %v751
        %v2121 = vunpack.c.h.b16 %v751
        %v2122 = vunpack.c.l.b16 %v752
        %v2123 = vunpack.c.h.b16 %v752
        %v2124 = vunpack.c.l.b16 %v753
        %v2125 = vunpack.c.h.b16 %v753
        %v2126 = vunpack.c.l.b16 %v754
        %v2127 = vunpack.c.h.b16 %v754
        %v2128 = vunpack.c.l.b16 %v755
        %v2129 = vunpack.c.h.b16 %v755
        %v2130 = vunpack.c.l.b16 %v756
        %v2131 = vunpack.c.h.b16 %v756
        %v2132 = vunpack.c.l.b16 %v757
        %v2133 = vunpack.c.h.b16 %v757
        %v2134 = vunpack.c.l.b16 %v758
        %v2135 = vunpack.c.h.b16 %v758
        %v2136 = vunpack.c.l.b16 %v759
        %v2137 = vunpack.c.h.b16 %v759
        %v2138 = vunpack.c.l.b16 %v760
        %v2139 = vunpack.c.h.b16 %v760
        %v2140 = vunpack.c.l.b16 %v761
        %v2141 = vunpack.c.h.b16 %v761
        %v2142 = vunpack.c.l.b16 %v762
        %v2143 = vunpack.c.h.b16 %v762
        %v2144 = vunpack.c.l.b16 %v763
        %v2145 = vunpack.c.h.b16 %v763
        %v2146 = vunpack.c.l.b16 %v764
        %v2147 = vunpack.c.h.b16 %v764
        %v2148 = vunpack.c.l.b16 %v765
        %v2149 = vunpack.c.h.b16 %v765
        %v2150 = vunpack.c.l.b16 %v766
        %v2151 = vunpack.c.h.b16 %v766
        %v2152 = vunpack.c.l.b16 %v767
        %v2153 = vunpack.c.h.b16 %v767
        %v2154 = vunpack.c.l.b16 %v768
        %v2155 = vunpack.c.h.b16 %v768
        %v2156 = vunpack.c.l.b16 %v769
        %v2157 = vunpack.c.h.b16 %v769
        %v2158 = vunpack.c.l.b16 %v770
        %v2159 = vunpack.c.h.b16 %v770
        %v2160 = vunpack.c.l.b16 %v771
        %v2161 = vunpack.c.h.b16 %v771
        %v2162 = vunpack.c.l.b16 %v772
        %v2163 = vunpack.c.h.b16 %v772
        %v2164 = vunpack.c.l.b16 %v773
        %v2165 = vunpack.c.h.b16 %v773
        %v2166 = vunpack.c.l.b16 %v774
        %v2167 = vunpack.c.h.b16 %v774
        %v2168 = vunpack.c.l.b16 %v775
        %v2169 = vunpack.c.h.b16 %v775
        %v2170 = vunpack.c.l.b16 %v776
        %v2171 = vunpack.c.h.b16 %v776
        %v2172 = vunpack.c.l.b16 %v777
        %v2173 = vunpack.c.h.b16 %v777
        %v2174 = vunpack.c.l.b16 %v778
        %v2175 = vunpack.c.h.b16 %v778
        %v2176 = vunpack.c.l.b16 %v779
        %v2177 = vunpack.c.h.b16 %v779
        %v2178 = vunpack.c.l.b16 %v780
        %v2179 = vunpack.c.h.b16 %v780
        %v2180 = vunpack.c.l.b16 %v781
        %v2181 = vunpack.c.h.b16 %v781
        %v2182 = vunpack.c.l.b16 %v782
        %v2183 = vunpack.c.h.b16 %v782
        %v2184 = vunpack.c.l.b16 %v783
        %v2185 = vunpack.c.h.b16 %v783
        %v2186 = vunpack.c.l.b16 %v784
        %v2187 = vunpack.c.h.b16 %v784
        %v2188 = vunpack.c.l.b16 %v785
        %v2189 = vunpack.c.h.b16 %v785
        %v2190 = vunpack.c.l.b16 %v786
        %v2191 = vunpack.c.h.b16 %v786
        %v2192 = vunpack.c.l.b16 %v787
        %v2193 = vunpack.c.h.b16 %v787
        %v2194 = vunpack.c.l.b16 %v788
        %v2195 = vunpack.c.h.b16 %v788
        %v2196 = vunpack.c.l.b16 %v789
        %v2197 = vunpack.c.h.b16 %v789
        %v2198 = vunpack.c.l.b16 %v790
        %v2199 = vunpack.c.h.b16 %v790
        %v2200 = vunpack.c.l.b16 %v791
        %v2201 = vunpack.c.h.b16 %v791
        %v2202 = vunpack.c.l.b16 %v792
        %v2203 = vunpack.c.h.b16 %v792
        %v2204 = vunpack.c.l.b16 %v793
        %v2205 = vunpack.c.h.b16 %v793
        %v2206 = vunpack.c.l.b16 %v794
        %v2207 = vunpack.c.h.b16 %v794
        %v2208 = vunpack.c.l.b16 %v795
        %v2209 = vunpack.c.h.b16 %v795
        %v2210 = vunpack.c.l.b16 %v796
        %v2211 = vunpack.c.h.b16 %v796
        %v2212 = vunpack.c.l.b16 %v797
        %v2213 = vunpack.c.h.b16 %v797
        %v2214 = vunpack.c.l.b16 %v798
        %v2215 = vunpack.c.h.b16 %v798
        %v2216 = vunpack.c.l.b16 %v799
        %v2217 = vunpack.c.h.b16 %v799
        %v2218 = vunpack.c.l.b16 %v800
        %v2219 = vunpack.c.h.b16 %v800
        %v2220 = vunpack.c.l.b16 %v801
        %v2221 = vunpack.c.h.b16 %v801
        %v2222 = vunpack.c.l.b16 %v802
        %v2223 = vunpack.c.h.b16 %v802
        %v2224 = vunpack.c.l.b16 %v803
        %v2225 = vunpack.c.h.b16 %v803
        %v2226 = vunpack.c.l.b16 %v804
        %v2227 = vunpack.c.h.b16 %v804
        %v2228 = vunpack.c.l.b16 %v805
        %v2229 = vunpack.c.h.b16 %v805
        %v2230 = vunpack.c.l.b16 %v806
        %v2231 = vunpack.c.h.b16 %v806
        %v2232 = vunpack.c.l.b16 %v807
        %v2233 = vunpack.c.h.b16 %v807
        %v2234 = vunpack.c.l.b16 %v808
        %v2235 = vunpack.c.h.b16 %v808
        %v2236 = vunpack.c.l.b16 %v809
        %v2237 = vunpack.c.h.b16 %v809
        %v2238 = vunpack.c.l.b16 %v810
        %v2239 = vunpack.c.h.b16 %v810
        %v2240 = vunpack.c.l.b16 %v811
        %v2241 = vunpack.c.h.b16 %v811
        %v2242 = vunpack.c.l.b16 %v812
        %v2243 = vunpack.c.h.b16 %v812
        %v2244 = vunpack.c.l.b16 %v813
        %v2245 = vunpack.c.h.b16 %v813
        %v2246 = vunpack.c.l.b16 %v814
        %v2247 = vunpack.c.h.b16 %v814
        %v2248 = vunpack.c.l.b16 %v815
        %v2249 = vunpack.c.h.b16 %v815
        %v2250 = vunpack.c.l.b16 %v816
        %v2251 = vunpack.c.h.b16 %v816
        %v2252 = vunpack.c.l.b16 %v817
        %v2253 = vunpack.c.h.b16 %v817
        %v2254 = vunpack.c.l.b16 %v818
        %v2255 = vunpack.c.h.b16 %v818
        %v2256 = vunpack.c.l.b16 %v819
        %v2257 = vunpack.c.h.b16 %v819
        %v2258 = vunpack.c.l.b16 %v820
        %v2259 = vunpack.c.h.b16 %v820
        %v2260 = vunpack.c.l.b16 %v821
        %v2261 = vunpack.c.h.b16 %v821
        %v2262 = vpack.c.b16 %v1722, %v1686
        %v2263 = vpack.c.b16 %v1723, %v1687
        %v2264 = vpack.c.b16 %v1724, %v1688
        %v2265 = vpack.c.b16 %v1725, %v1689
        %v2266 = vpack.c.b16 %v1726, %v1690
        %v2267 = vpack.c.b16 %v1727, %v1691
        %v2268 = vpack.c.b16 %v1728, %v1692
        %v2269 = vpack.c.b16 %v1729, %v1693
        %v2270 = vpack.c.b16 %v1730, %v1694
        %v2271 = vpack.c.b16 %v1731, %v1695
        %v2272 = vpack.c.b16 %v1732, %v1696
        %v2273 = vpack.c.b16 %v1733, %v1697
        %v2274 = vpack.c.b16 %v1734, %v1698
        %v2275 = vpack.c.b16 %v1735, %v1699
        %v2276 = vpack.c.b16 %v1736, %v1700
        %v2277 = vpack.c.b16 %v1737, %v1701
        %v2278 = vpack.c.b16 %v1738, %v1702
        %v2279 = vpack.c.b16 %v1739, %v1703
        %v2280 = vpack.c.b16 %v1740, %v1704
        %v2281 = vpack.c.b16 %v1741, %v1705
        %v2282 = vpack.c.b16 %v1742, %v1706
        %v2283 = vpack.c.b16 %v1743, %v1707
        %v2284 = vpack.c.b16 %v1744, %v1708
        %v2285 = vpack.c.b16 %v1745, %v1709
        %v2286 = vpack.c.b16 %v1746, %v1710
        %v2287 = vpack.c.b16 %v1747, %v1711
        %v2288 = vpack.c.b16 %v1748, %v1712
        %v2289 = vpack.c.b16 %v1749, %v1713
        %v2290 = vpack.c.b16 %v1750, %v1714
        %v2291 = vpack.c.b16 %v1751, %v1715
        %v2292 = vpack.c.b16 %v1752, %v1716
        %v2293 = vpack.c.b16 %v1753, %v1717
        %v2294 = vpack.c.b16 %v1754, %v1718
        %v2295 = vpack.c.b16 %v1755, %v1719
        %v2296 = vpack.c.b16 %v1756, %v1720
        %v2297 = vpack.c.b16 %v1757, %v1721
        %v2298 = vpack.c.b16 %v1794, %v1758
        %v2299 = vpack.c.b16 %v1795, %v1759
        %v2300 = vpack.c.b16 %v1796, %v1760
        %v2301 = vpack.c.b16 %v1797, %v1761
        %v2302 = vpack.c.b16 %v1798, %v1762
        %v2303 = vpack.c.b16 %v1799, %v1763
        %v2304 = vpack.c.b16 %v1800, %v1764
        %v2305 = vpack.c.b16 %v1801, %v1765
        %v2306 = vpack.c.b16 %v1802, %v1766
        %v2307 = vpack.c.b16 %v1803, %v1767
        %v2308 = vpack.c.b16 %v1804, %v1768
        %v2309 = vpack.c.b16 %v1805, %v1769
        %v2310 = vpack.c.b16 %v1806, %v1770
        %v2311 = vpack.c.b16 %v1807, %v1771
        %v2312 = vpack.c.b16 %v1808, %v1772
        %v2313 = vpack.c.b16 %v1809, %v1773
        %v2314 = vpack.c.b16 %v1810, %v1774
        %v2315 = vpack.c.b16 %v1811, %v1775
        %v2316 = vpack.c.b16 %v1812, %v1776
        %v2317 = vpack.c.b16 %v1813, %v1777
        %v2318 = vpack.c.b16 %v1814, %v1778
        %v2319 = vpack.c.b16 %v1815, %v1779
        %v2320 = vpack.c.b16 %v1816, %v1780
        %v2321 = vpack.c.b16 %v1817, %v1781
        %v2322 = vpack.c.b16 %v1818, %v1782
        %v2323 = vpack.c.b16 %v1819, %v1783
        %v2324 = vpack.c.b16 %v1820, %v1784
        %v2325 = vpack.c.b16 %v1821, %v1785
        %v2326 = vpack.c.b16 %v1822, %v1786
        %v2327 = vpack.c.b16 %v1823, %v1787
        %v2328 = vpack.c.b16 %v1824, %v1788
        %v2329 = vpack.c.b16 %v1825, %v1789
        %v2330 = vpack.c.b16 %v1826, %v1790
        %v2331 = vpack.c.b16 %v1827, %v1791
        %v2332 = vpack.c.b16 %v1828, %v1792
        %v2333 = vpack.c.b16 %v1829, %v1793
        %v2334 = vpack.c.b16 %v1866, %v1830
        %v2335 = vpack.c.b16 %v1867, %v1831
        %v2336 = vpack.c.b16 %v1868, %v1832
        %v2337 = vpack.c.b16 %v1869, %v1833
        %v2338 = vpack.c.b16 %v1870, %v1834
        %v2339 = vpack.c.b16 %v1871, %v1835
        %v2340 = vpack.c.b16 %v1872, %v1836
        %v2341 = vpack.c.b16 %v1873, %v1837
        %v2342 = vpack.c.b16 %v1874, %v1838
        %v2343 = vpack.c.b16 %v1875, %v1839
        %v2344 = vpack.c.b16 %v1876, %v1840
        %v2345 = vpack.c.b16 %v1877, %v1841
        %v2346 = vpack.c.b16 %v1878, %v1842
        %v2347 = vpack.c.b16 %v1879, %v1843
        %v2348 = vpack.c.b16 %v1880, %v1844
        %v2349 = vpack.c.b16 %v1881, %v1845
        %v2350 = vpack.c.b16 %v1882, %v1846
        %v2351 = vpack.c.b16 %v1883, %v1847
        %v2352 = vpack.c.b16 %v1884, %v1848
        %v2353 = vpack.c.b16 %v1885, %v1849
        %v2354 = vpack.c.b16 %v1886, %v1850
        %v2355 = vpack.c.b16 %v1887, %v1851
        %v2356 = vpack.c.b16 %v1888, %v1852
        %v2357 = vpack.c.b16 %v1889, %v1853
        %v2358 = vpack.c.b16 %v1890, %v1854
        %v2359 = vpack.c.b16 %v1891, %v1855
        %v2360 = vpack.c.b16 %v1892, %v1856
        %v2361 = vpack.c.b16 %v1893, %v1857
        %v2362 = vpack.c.b16 %v1894, %v1858
        %v2363 = vpack.c.b16 %v1895, %v1859
        %v2364 = vpack.c.b16 %v1896, %v1860
        %v2365 = vpack.c.b16 %v1897, %v1861
        %v2366 = vpack.c.b16 %v1898, %v1862
        %v2367 = vpack.c.b16 %v1899, %v1863
        %v2368 = vpack.c.b16 %v1900, %v1864
        %v2369 = vpack.c.b16 %v1901, %v1865
        %v2370 = vpack.c.b16 %v1938, %v1902
        %v2371 = vpack.c.b16 %v1939, %v1903
        %v2372 = vpack.c.b16 %v1940, %v1904
        %v2373 = vpack.c.b16 %v1941, %v1905
        %v2374 = vpack.c.b16 %v1942, %v1906
        %v2375 = vpack.c.b16 %v1943, %v1907
        %v2376 = vpack.c.b16 %v1944, %v1908
        %v2377 = vpack.c.b16 %v1945, %v1909
        %v2378 = vpack.c.b16 %v1946, %v1910
        %v2379 = vpack.c.b16 %v1947, %v1911
        %v2380 = vpack.c.b16 %v1948, %v1912
        %v2381 = vpack.c.b16 %v1949, %v1913
        %v2382 = vpack.c.b16 %v1950, %v1914
        %v2383 = vpack.c.b16 %v1951, %v1915
        %v2384 = vpack.c.b16 %v1952, %v1916
        %v2385 = vpack.c.b16 %v1953, %v1917
        %v2386 = vpack.c.b16 %v1954, %v1918
        %v2387 = vpack.c.b16 %v1955, %v1919
        %v2388 = vpack.c.b16 %v1956, %v1920
        %v2389 = vpack.c.b16 %v1957, %v1921
        %v2390 = vpack.c.b16 %v1958, %v1922
        %v2391 = vpack.c.b16 %v1959, %v1923
        %v2392 = vpack.c.b16 %v1960, %v1924
        %v2393 = vpack.c.b16 %v1961, %v1925
        %v2394 = vpack.c.b16 %v1962, %v1926
        %v2395 = vpack.c.b16 %v1963, %v1927
        %v2396 = vpack.c.b16 %v1964, %v1928
        %v2397 = vpack.c.b16 %v1965, %v1929
        %v2398 = vpack.c.b16 %v1966, %v1930
        %v2399 = vpack.c.b16 %v1967, %v1931
        %v2400 = vpack.c.b16 %v1968, %v1932
        %v2401 = vpack.c.b16 %v1969, %v1933
        %v2402 = vpack.c.b16 %v1970, %v1934
        %v2403 = vpack.c.b16 %v1971, %v1935
        %v2404 = vpack.c.b16 %v1972, %v1936
        %v2405 = vpack.c.b16 %v1973, %v1937
        %v2406 = vpack.c.b16 %v2010, %v1974
        %v2407 = vpack.c.b16 %v2011, %v1975
        %v2408 = vpack.c.b16 %v2012, %v1976
        %v2409 = vpack.c.b16 %v2013, %v1977
        %v2410 = vpack.c.b16 %v2014, %v1978
        %v2411 = vpack.c.b16 %v2015, %v1979
        %v2412 = vpack.c.b16 %v2016, %v1980
        %v2413 = vpack.c.b16 %v2017, %v1981
        %v2414 = vpack.c.b16 %v2018, %v1982
        %v2415 = vpack.c.b16 %v2019, %v1983
        %v2416 = vpack.c.b16 %v2020, %v1984
        %v2417 = vpack.c.b16 %v2021, %v1985
        %v2418 = vpack.c.b16 %v2022, %v1986
        %v2419 = vpack.c.b16 %v2023, %v1987
        %v2420 = vpack.c.b16 %v2024, %v1988
        %v2421 = vpack.c.b16 %v2025, %v1989
        %v2422 = vpack.c.b16 %v2026, %v1990
        %v2423 = vpack.c.b16 %v2027, %v1991
        %v2424 = vpack.c.b16 %v2028, %v1992
        %v2425 = vpack.c.b16 %v2029, %v1993
        %v2426 = vpack.c.b16 %v2030, %v1994
        %v2427 = vpack.c.b16 %v2031, %v1995
        %v2428 = vpack.c.b16 %v2032, %v1996
        %v2429 = vpack.c.b16 %v2033, %v1997
        %v2430 = vpack.c.b16 %v2034, %v1998
        %v2431 = vpack.c.b16 %v2035, %v1999
        %v2432 = vpack.c.b16 %v2036, %v2000
        %v2433 = vpack.c.b16 %v2037, %v2001
        %v2434 = vpack.c.b16 %v2038, %v2002
        %v2435 = vpack.c.b16 %v2039, %v2003
        %v2436 = vpack.c.b16 %v2040, %v2004
        %v2437 = vpack.c.b16 %v2041, %v2005
        %v2438 = vpack.c.b16 %v2042, %v2006
        %v2439 = vpack.c.b16 %v2043, %v2007
        %v2440 = vpack.c.b16 %v2044, %v2008
        %v2441 = vpack.c.b16 %v2045, %v2009
        %v2442 = vpack.c.b16 %v2082, %v2046
        %v2443 = vpack.c.b16 %v2083, %v2047
        %v2444 = vpack.c.b16 %v2084, %v2048
        %v2445 = vpack.c.b16 %v2085, %v2049
        %v2446 = vpack.c.b16 %v2086, %v2050
        %v2447 = vpack.c.b16 %v2087, %v2051
        %v2448 = vpack.c.b16 %v2088, %v2052
        %v2449 = vpack.c.b16 %v2089, %v2053
        %v2450 = vpack.c.b16 %v2090, %v2054
        %v2451 = vpack.c.b16 %v2091, %v2055
        %v2452 = vpack.c.b16 %v2092, %v2056
        %v2453 = vpack.c.b16 %v2093, %v2057
        %v2454 = vpack.c.b16 %v2094, %v2058
        %v2455 = vpack.c.b16 %v2095, %v2059
        %v2456 = vpack.c.b16 %v2096, %v2060
        %v2457 = vpack.c.b16 %v2097, %v2061
        %v2458 = vpack.c.b16 %v2098, %v2062
        %v2459 = vpack.c.b16 %v2099, %v2063
        %v2460 = vpack.c.b16 %v2100, %v2064
        %v2461 = vpack.c.b16 %v2101, %v2065
        %v2462 = vpack.c.b16 %v2102, %v2066
        %v2463 = vpack.c.b16 %v2103, %v2067
        %v2464 = vpack.c.b16 %v2104, %v2068
        %v2465 = vpack.c.b16 %v2105, %v2069
        %v2466 = vpack.c.b16 %v2106, %v2070
        %v2467 = vpack.c.b16 %v2107, %v2071
        %v2468 = vpack.c.b16 %v2108, %v2072
        %v2469 = vpack.c.b16 %v2109, %v2073
        %v2470 = vpack.c.b16 %v2110, %v2074
        %v2471 = vpack.c.b16 %v2111, %v2075
        %v2472 = vpack.c.b16 %v2112, %v2076
        %v2473 = vpack.c.b16 %v2113, %v2077
        %v2474 = vpack.c.b16 %v2114, %v2078
        %v2475 = vpack.c.b16 %v2115, %v2079
        %v2476 = vpack.c.b16 %v2116, %v2080
        %v2477 = vpack.c.b16 %v2117, %v2081
        %v2478 = vpack.c.b16 %v2154, %v2118
        %v2479 = vpack.c.b16 %v2155, %v2119
        %v2480 = vpack.c.b16 %v2156, %v2120
        %v2481 = vpack.c.b16 %v2157, %v2121
        %v2482 = vpack.c.b16 %v2158, %v2122
        %v2483 = vpack.c.b16 %v2159, %v2123
        %v2484 = vpack.c.b16 %v2160, %v2124
        %v2485 = vpack.c.b16 %v2161, %v2125
        %v2486 = vpack.c.b16 %v2162, %v2126
        %v2487 = vpack.c.b16 %v2163, %v2127
        %v2488 = vpack.c.b16 %v2164, %v2128
        %v2489 = vpack.c.b16 %v2165, %v2129
        %v2490 = vpack.c.b16 %v2166, %v2130
        %v2491 = vpack.c.b16 %v2167, %v2131
        %v2492 = vpack.c.b16 %v2168, %v2132
        %v2493 = vpack.c.b16 %v2169, %v2133
        %v2494 = vpack.c.b16 %v2170, %v2134
        %v2495 = vpack.c.b16 %v2171, %v2135
        %v2496 = vpack.c.b16 %v2172, %v2136
        %v2497 = vpack.c.b16 %v2173, %v2137
        %v2498 = vpack.c.b16 %v2174, %v2138
        %v2499 = vpack.c.b16 %v2175, %v2139
        %v2500 = vpack.c.b16 %v2176, %v2140
        %v2501 = vpack.c.b16 %v2177, %v2141
        %v2502 = vpack.c.b16 %v2178, %v2142
        %v2503 = vpack.c.b16 %v2179, %v2143
        %v2504 = vpack.c.b16 %v2180, %v2144
        %v2505 = vpack.c.b16 %v2181, %v2145
        %v2506 = vpack.c.b16 %v2182, %v2146
        %v2507 = vpack.c.b16 %v2183, %v2147
        %v2508 = vpack.c.b16 %v2184, %v2148
        %v2509 = vpack.c.b16 %v2185, %v2149
        %v2510 = vpack.c.b16 %v2186, %v2150
        %v2511 = vpack.c.b16 %v2187, %v2151
        %v2512 = vpack.c.b16 %v2188, %v2152
        %v2513 = vpack.c.b16 %v2189, %v2153
        %v2514 = vpack.c.b16 %v2226, %v2190
        %v2515 = vpack.c.b16 %v2227, %v2191
        %v2516 = vpack.c.b16 %v2228, %v2192
        %v2517 = vpack.c.b16 %v2229, %v2193
        %v2518 = vpack.c.b16 %v2230, %v2194
        %v2519 = vpack.c.b16 %v2231, %v2195
        %v2520 = vpack.c.b16 %v2232, %v2196
        %v2521 = vpack.c.b16 %v2233, %v2197
        %v2522 = vpack.c.b16 %v2234, %v2198
        %v2523 = vpack.c.b16 %v2235, %v2199
        %v2524 = vpack.c.b16 %v2236, %v2200
        %v2525 = vpack.c.b16 %v2237, %v2201
        %v2526 = vpack.c.b16 %v2238, %v2202
        %v2527 = vpack.c.b16 %v2239, %v2203
        %v2528 = vpack.c.b16 %v2240, %v2204
        %v2529 = vpack.c.b16 %v2241, %v2205
        %v2530 = vpack.c.b16 %v2242, %v2206
        %v2531 = vpack.c.b16 %v2243, %v2207
        %v2532 = vpack.c.b16 %v2244, %v2208
        %v2533 = vpack.c.b16 %v2245, %v2209
        %v2534 = vpack.c.b16 %v2246, %v2210
        %v2535 = vpack.c.b16 %v2247, %v2211
        %v2536 = vpack.c.b16 %v2248, %v2212
        %v2537 = vpack.c.b16 %v2249, %v2213
        %v2538 = vpack.c.b16 %v2250, %v2214
        %v2539 = vpack.c.b16 %v2251, %v2215
        %v2540 = vpack.c.b16 %v2252, %v2216
        %v2541 = vpack.c.b16 %v2253, %v2217
        %v2542 = vpack.c.b16 %v2254, %v2218
        %v2543 = vpack.c.b16 %v2255, %v2219
        %v2544 = vpack.c.b16 %v2256, %v2220
        %v2545 = vpack.c.b16 %v2257, %v2221
        %v2546 = vpack.c.b16 %v2258, %v2222
        %v2547 = vpack.c.b16 %v2259, %v2223
        %v2548 = vpack.c.b16 %v2260, %v2224
        %v2549 = vpack.c.b16 %v2261, %v2225
        %v3414 = vunpack.c.l.b16 %v822
        %v3415 = vunpack.c.h.b16 %v822
        %v3416 = vunpack.c.l.b16 %v823
        %v3417 = vunpack.c.h.b16 %v823
        %v3418 = vunpack.c.l.b16 %v824
        %v3419 = vunpack.c.h.b16 %v824
        %v3420 = vunpack.c.l.b16 %v825
        %v3421 = vunpack.c.h.b16 %v825
        %v3422 = vunpack.c.l.b16 %v826
        %v3423 = vunpack.c.h.b16 %v826
        %v3424 = vunpack.c.l.b16 %v827
        %v3425 = vunpack.c.h.b16 %v827
        %v3426 = vunpack.c.l.b16 %v828
        %v3427 = vunpack.c.h.b16 %v828
        %v3428 = vunpack.c.l.b16 %v829
        %v3429 = vunpack.c.h.b16 %v829
        %v3430 = vunpack.c.l.b16 %v830
        %v3431 = vunpack.c.h.b16 %v830
        %v3432 = vunpack.c.l.b16 %v831
        %v3433 = vunpack.c.h.b16 %v831
        %v3434 = vunpack.c.l.b16 %v832
        %v3435 = vunpack.c.h.b16 %v832
        %v3436 = vunpack.c.l.b16 %v833
        %v3437 = vunpack.c.h.b16 %v833
        %v3438 = vunpack.c.l.b16 %v834
        %v3439 = vunpack.c.h.b16 %v834
        %v3440 = vunpack.c.l.b16 %v835
        %v3441 = vunpack.c.h.b16 %v835
        %v3442 = vunpack.c.l.b16 %v836
        %v3443 = vunpack.c.h.b16 %v836
        %v3444 = vunpack.c.l.b16 %v837
        %v3445 = vunpack.c.h.b16 %v837
        %v3446 = vunpack.c.l.b16 %v838
        %v3447 = vunpack.c.h.b16 %v838
        %v3448 = vunpack.c.l.b16 %v839
        %v3449 = vunpack.c.h.b16 %v839
        %v3450 = vunpack.c.l.b16 %v840
        %v3451 = vunpack.c.h.b16 %v840
        %v3452 = vunpack.c.l.b16 %v841
        %v3453 = vunpack.c.h.b16 %v841
        %v3454 = vunpack.c.l.b16 %v842
        %v3455 = vunpack.c.h.b16 %v842
        %v3456 = vunpack.c.l.b16 %v843
        %v3457 = vunpack.c.h.b16 %v843
        %v3458 = vunpack.c.l.b16 %v844
        %v3459 = vunpack.c.h.b16 %v844
        %v3460 = vunpack.c.l.b16 %v845
        %v3461 = vunpack.c.h.b16 %v845
        %v3462 = vunpack.c.l.b16 %v846
        %v3463 = vunpack.c.h.b16 %v846
        %v3464 = vunpack.c.l.b16 %v847
        %v3465 = vunpack.c.h.b16 %v847
        %v3466 = vunpack.c.l.b16 %v848
        %v3467 = vunpack.c.h.b16 %v848
        %v3468 = vunpack.c.l.b16 %v849
        %v3469 = vunpack.c.h.b16 %v849
        %v3470 = vunpack.c.l.b16 %v850
        %v3471 = vunpack.c.h.b16 %v850
        %v3472 = vunpack.c.l.b16 %v851
        %v3473 = vunpack.c.h.b16 %v851
        %v3474 = vunpack.c.l.b16 %v852
        %v3475 = vunpack.c.h.b16 %v852
        %v3476 = vunpack.c.l.b16 %v853
        %v3477 = vunpack.c.h.b16 %v853
        %v3478 = vunpack.c.l.b16 %v854
        %v3479 = vunpack.c.h.b16 %v854
        %v3480 = vunpack.c.l.b16 %v855
        %v3481 = vunpack.c.h.b16 %v855
        %v3482 = vunpack.c.l.b16 %v856
        %v3483 = vunpack.c.h.b16 %v856
        %v3484 = vunpack.c.l.b16 %v857
        %v3485 = vunpack.c.h.b16 %v857
        %v3486 = vunpack.c.l.b16 %v858
        %v3487 = vunpack.c.h.b16 %v858
        %v3488 = vunpack.c.l.b16 %v859
        %v3489 = vunpack.c.h.b16 %v859
        %v3490 = vunpack.c.l.b16 %v860
        %v3491 = vunpack.c.h.b16 %v860
        %v3492 = vunpack.c.l.b16 %v861
        %v3493 = vunpack.c.h.b16 %v861
        %v3494 = vunpack.c.l.b16 %v862
        %v3495 = vunpack.c.h.b16 %v862
        %v3496 = vunpack.c.l.b16 %v863
        %v3497 = vunpack.c.h.b16 %v863
        %v3498 = vunpack.c.l.b16 %v864
        %v3499 = vunpack.c.h.b16 %v864
        %v3500 = vunpack.c.l.b16 %v865
        %v3501 = vunpack.c.h.b16 %v865
        %v3502 = vunpack.c.l.b16 %v866
        %v3503 = vunpack.c.h.b16 %v866
        %v3504 = vunpack.c.l.b16 %v867
        %v3505 = vunpack.c.h.b16 %v867
        %v3506 = vunpack.c.l.b16 %v868
        %v3507 = vunpack.c.h.b16 %v868
        %v3508 = vunpack.c.l.b16 %v869
        %v3509 = vunpack.c.h.b16 %v869
        %v3510 = vunpack.c.l.b16 %v870
        %v3511 = vunpack.c.h.b16 %v870
        %v3512 = vunpack.c.l.b16 %v871
        %v3513 = vunpack.c.h.b16 %v871
        %v3514 = vunpack.c.l.b16 %v872
        %v3515 = vunpack.c.h.b16 %v872
        %v3516 = vunpack.c.l.b16 %v873
        %v3517 = vunpack.c.h.b16 %v873
        %v3518 = vunpack.c.l.b16 %v874
        %v3519 = vunpack.c.h.b16 %v874
        %v3520 = vunpack.c.l.b16 %v875
        %v3521 = vunpack.c.h.b16 %v875
        %v3522 = vunpack.c.l.b16 %v876
        %v3523 = vunpack.c.h.b16 %v876
        %v3524 = vunpack.c.l.b16 %v877
        %v3525 = vunpack.c.h.b16 %v877
        %v3526 = vunpack.c.l.b16 %v878
        %v3527 = vunpack.c.h.b16 %v878
        %v3528 = vunpack.c.l.b16 %v879
        %v3529 = vunpack.c.h.b16 %v879
        %v3530 = vunpack.c.l.b16 %v880
        %v3531 = vunpack.c.h.b16 %v880
        %v3532 = vunpack.c.l.b16 %v881
        %v3533 = vunpack.c.h.b16 %v881
        %v3534 = vunpack.c.l.b16 %v882
        %v3535 = vunpack.c.h.b16 %v882
        %v3536 = vunpack.c.l.b16 %v883
        %v3537 = vunpack.c.h.b16 %v883
        %v3538 = vunpack.c.l.b16 %v884
        %v3539 = vunpack.c.h.b16 %v884
        %v3540 = vunpack.c.l.b16 %v885
        %v3541 = vunpack.c.h.b16 %v885
        %v3542 = vunpack.c.l.b16 %v886
        %v3543 = vunpack.c.h.b16 %v886
        %v3544 = vunpack.c.l.b16 %v887
        %v3545 = vunpack.c.h.b16 %v887
        %v3546 = vunpack.c.l.b16 %v888
        %v3547 = vunpack.c.h.b16 %v888
        %v3548 = vunpack.c.l.b16 %v889
        %v3549 = vunpack.c.h.b16 %v889
        %v3550 = vunpack.c.l.b16 %v890
        %v3551 = vunpack.c.h.b16 %v890
        %v3552 = vunpack.c.l.b16 %v891
        %v3553 = vunpack.c.h.b16 %v891
        %v3554 = vunpack.c.l.b16 %v892
        %v3555 = vunpack.c.h.b16 %v892
        %v3556 = vunpack.c.l.b16 %v893
        %v3557 = vunpack.c.h.b16 %v893
        %v3558 = vunpack.c.l.b16 %v894
        %v3559 = vunpack.c.h.b16 %v894
        %v3560 = vunpack.c.l.b16 %v895
        %v3561 = vunpack.c.h.b16 %v895
        %v3562 = vunpack.c.l.b16 %v896
        %v3563 = vunpack.c.h.b16 %v896
        %v3564 = vunpack.c.l.b16 %v897
        %v3565 = vunpack.c.h.b16 %v897
        %v3566 = vunpack.c.l.b16 %v898
        %v3567 = vunpack.c.h.b16 %v898
        %v3568 = vunpack.c.l.b16 %v899
        %v3569 = vunpack.c.h.b16 %v899
        %v3570 = vunpack.c.l.b16 %v900
        %v3571 = vunpack.c.h.b16 %v900
        %v3572 = vunpack.c.l.b16 %v901
        %v3573 = vunpack.c.h.b16 %v901
        %v3574 = vunpack.c.l.b16 %v902
        %v3575 = vunpack.c.h.b16 %v902
        %v3576 = vunpack.c.l.b16 %v903
        %v3577 = vunpack.c.h.b16 %v903
        %v3578 = vunpack.c.l.b16 %v904
        %v3579 = vunpack.c.h.b16 %v904
        %v3580 = vunpack.c.l.b16 %v905
        %v3581 = vunpack.c.h.b16 %v905
        %v3582 = vunpack.c.l.b16 %v906
        %v3583 = vunpack.c.h.b16 %v906
        %v3584 = vunpack.c.l.b16 %v907
        %v3585 = vunpack.c.h.b16 %v907
        %v3586 = vunpack.c.l.b16 %v908
        %v3587 = vunpack.c.h.b16 %v908
        %v3588 = vunpack.c.l.b16 %v909
        %v3589 = vunpack.c.h.b16 %v909
        %v3590 = vunpack.c.l.b16 %v910
        %v3591 = vunpack.c.h.b16 %v910
        %v3592 = vunpack.c.l.b16 %v911
        %v3593 = vunpack.c.h.b16 %v911
        %v3594 = vunpack.c.l.b16 %v912
        %v3595 = vunpack.c.h.b16 %v912
        %v3596 = vunpack.c.l.b16 %v913
        %v3597 = vunpack.c.h.b16 %v913
        %v3598 = vunpack.c.l.b16 %v914
        %v3599 = vunpack.c.h.b16 %v914
        %v3600 = vunpack.c.l.b16 %v915
        %v3601 = vunpack.c.h.b16 %v915
        %v3602 = vunpack.c.l.b16 %v916
        %v3603 = vunpack.c.h.b16 %v916
        %v3604 = vunpack.c.l.b16 %v917
        %v3605 = vunpack.c.h.b16 %v917
        %v3606 = vunpack.c.l.b16 %v918
        %v3607 = vunpack.c.h.b16 %v918
        %v3608 = vunpack.c.l.b16 %v919
        %v3609 = vunpack.c.h.b16 %v919
        %v3610 = vunpack.c.l.b16 %v920
        %v3611 = vunpack.c.h.b16 %v920
        %v3612 = vunpack.c.l.b16 %v921
        %v3613 = vunpack.c.h.b16 %v921
        %v3614 = vunpack.c.l.b16 %v922
        %v3615 = vunpack.c.h.b16 %v922
        %v3616 = vunpack.c.l.b16 %v923
        %v3617 = vunpack.c.h.b16 %v923
        %v3618 = vunpack.c.l.b16 %v924
        %v3619 = vunpack.c.h.b16 %v924
        %v3620 = vunpack.c.l.b16 %v925
        %v3621 = vunpack.c.h.b16 %v925
        %v3622 = vunpack.c.l.b16 %v926
        %v3623 = vunpack.c.h.b16 %v926
        %v3624 = vunpack.c.l.b16 %v927
        %v3625 = vunpack.c.h.b16 %v927
        %v3626 = vunpack.c.l.b16 %v928
        %v3627 = vunpack.c.h.b16 %v928
        %v3628 = vunpack.c.l.b16 %v929
        %v3629 = vunpack.c.h.b16 %v929
        %v3630 = vunpack.c.l.b16 %v930
        %v3631 = vunpack.c.h.b16 %v930
        %v3632 = vunpack.c.l.b16 %v931
        %v3633 = vunpack.c.h.b16 %v931
        %v3634 = vunpack.c.l.b16 %v932
        %v3635 = vunpack.c.h.b16 %v932
        %v3636 = vunpack.c.l.b16 %v933
        %v3637 = vunpack.c.h.b16 %v933
        %v3638 = vunpack.c.l.b16 %v934
        %v3639 = vunpack.c.h.b16 %v934
        %v3640 = vunpack.c.l.b16 %v935
        %v3641 = vunpack.c.h.b16 %v935
        %v3642 = vunpack.c.l.b16 %v936
        %v3643 = vunpack.c.h.b16 %v936
        %v3644 = vunpack.c.l.b16 %v937
        %v3645 = vunpack.c.h.b16 %v937
        %v3646 = vunpack.c.l.b16 %v938
        %v3647 = vunpack.c.h.b16 %v938
        %v3648 = vunpack.c.l.b16 %v939
        %v3649 = vunpack.c.h.b16 %v939
        %v3650 = vunpack.c.l.b16 %v940
        %v3651 = vunpack.c.h.b16 %v940
        %v3652 = vunpack.c.l.b16 %v941
        %v3653 = vunpack.c.h.b16 %v941
        %v3654 = vunpack.c.l.b16 %v942
        %v3655 = vunpack.c.h.b16 %v942
        %v3656 = vunpack.c.l.b16 %v943
        %v3657 = vunpack.c.h.b16 %v943
        %v3658 = vunpack.c.l.b16 %v944
        %v3659 = vunpack.c.h.b16 %v944
        %v3660 = vunpack.c.l.b16 %v945
        %v3661 = vunpack.c.h.b16 %v945
        %v3662 = vunpack.c.l.b16 %v946
        %v3663 = vunpack.c.h.b16 %v946
        %v3664 = vunpack.c.l.b16 %v947
        %v3665 = vunpack.c.h.b16 %v947
        %v3666 = vunpack.c.l.b16 %v948
        %v3667 = vunpack.c.h.b16 %v948
        %v3668 = vunpack.c.l.b16 %v949
        %v3669 = vunpack.c.h.b16 %v949
        %v3670 = vunpack.c.l.b16 %v950
        %v3671 = vunpack.c.h.b16 %v950
        %v3672 = vunpack.c.l.b16 %v951
        %v3673 = vunpack.c.h.b16 %v951
        %v3674 = vunpack.c.l.b16 %v952
        %v3675 = vunpack.c.h.b16 %v952
        %v3676 = vunpack.c.l.b16 %v953
        %v3677 = vunpack.c.h.b16 %v953
        %v3678 = vunpack.c.l.b16 %v954
        %v3679 = vunpack.c.h.b16 %v954
        %v3680 = vunpack.c.l.b16 %v955
        %v3681 = vunpack.c.h.b16 %v955
        %v3682 = vunpack.c.l.b16 %v956
        %v3683 = vunpack.c.h.b16 %v956
        %v3684 = vunpack.c.l.b16 %v957
        %v3685 = vunpack.c.h.b16 %v957
        %v3686 = vunpack.c.l.b16 %v958
        %v3687 = vunpack.c.h.b16 %v958
        %v3688 = vunpack.c.l.b16 %v959
        %v3689 = vunpack.c.h.b16 %v959
        %v3690 = vunpack.c.l.b16 %v960
        %v3691 = vunpack.c.h.b16 %v960
        %v3692 = vunpack.c.l.b16 %v961
        %v3693 = vunpack.c.h.b16 %v961
        %v3694 = vunpack.c.l.b16 %v962
        %v3695 = vunpack.c.h.b16 %v962
        %v3696 = vunpack.c.l.b16 %v963
        %v3697 = vunpack.c.h.b16 %v963
        %v3698 = vunpack.c.l.b16 %v964
        %v3699 = vunpack.c.h.b16 %v964
        %v3700 = vunpack.c.l.b16 %v965
        %v3701 = vunpack.c.h.b16 %v965
        %v3702 = vunpack.c.l.b16 %v966
        %v3703 = vunpack.c.h.b16 %v966
        %v3704 = vunpack.c.l.b16 %v967
        %v3705 = vunpack.c.h.b16 %v967
        %v3706 = vunpack.c.l.b16 %v968
        %v3707 = vunpack.c.h.b16 %v968
        %v3708 = vunpack.c.l.b16 %v969
        %v3709 = vunpack.c.h.b16 %v969
        %v3710 = vunpack.c.l.b16 %v970
        %v3711 = vunpack.c.h.b16 %v970
        %v3712 = vunpack.c.l.b16 %v971
        %v3713 = vunpack.c.h.b16 %v971
        %v3714 = vunpack.c.l.b16 %v972
        %v3715 = vunpack.c.h.b16 %v972
        %v3716 = vunpack.c.l.b16 %v973
        %v3717 = vunpack.c.h.b16 %v973
        %v3718 = vunpack.c.l.b16 %v974
        %v3719 = vunpack.c.h.b16 %v974
        %v3720 = vunpack.c.l.b16 %v975
        %v3721 = vunpack.c.h.b16 %v975
        %v3722 = vunpack.c.l.b16 %v976
        %v3723 = vunpack.c.h.b16 %v976
        %v3724 = vunpack.c.l.b16 %v977
        %v3725 = vunpack.c.h.b16 %v977
        %v3726 = vunpack.c.l.b16 %v978
        %v3727 = vunpack.c.h.b16 %v978
        %v3728 = vunpack.c.l.b16 %v979
        %v3729 = vunpack.c.h.b16 %v979
        %v3730 = vunpack.c.l.b16 %v980
        %v3731 = vunpack.c.h.b16 %v980
        %v3732 = vunpack.c.l.b16 %v981
        %v3733 = vunpack.c.h.b16 %v981
        %v3734 = vunpack.c.l.b16 %v982
        %v3735 = vunpack.c.h.b16 %v982
        %v3736 = vunpack.c.l.b16 %v983
        %v3737 = vunpack.c.h.b16 %v983
        %v3738 = vunpack.c.l.b16 %v984
        %v3739 = vunpack.c.h.b16 %v984
        %v3740 = vunpack.c.l.b16 %v985
        %v3741 = vunpack.c.h.b16 %v985
        %v3742 = vunpack.c.l.b16 %v986
        %v3743 = vunpack.c.h.b16 %v986
        %v3744 = vunpack.c.l.b16 %v987
        %v3745 = vunpack.c.h.b16 %v987
        %v3746 = vunpack.c.l.b16 %v988
        %v3747 = vunpack.c.h.b16 %v988
        %v3748 = vunpack.c.l.b16 %v989
        %v3749 = vunpack.c.h.b16 %v989
        %v3750 = vunpack.c.l.b16 %v990
        %v3751 = vunpack.c.h.b16 %v990
        %v3752 = vunpack.c.l.b16 %v991
        %v3753 = vunpack.c.h.b16 %v991
        %v3754 = vunpack.c.l.b16 %v992
        %v3755 = vunpack.c.h.b16 %v992
        %v3756 = vunpack.c.l.b16 %v993
        %v3757 = vunpack.c.h.b16 %v993
        %v3758 = vunpack.c.l.b16 %v994
        %v3759 = vunpack.c.h.b16 %v994
        %v3760 = vunpack.c.l.b16 %v995
        %v3761 = vunpack.c.h.b16 %v995
        %v3762 = vunpack.c.l.b16 %v996
        %v3763 = vunpack.c.h.b16 %v996
        %v3764 = vunpack.c.l.b16 %v997
        %v3765 = vunpack.c.h.b16 %v997
        %v3766 = vunpack.c.l.b16 %v998
        %v3767 = vunpack.c.h.b16 %v998
        %v3768 = vunpack.c.l.b16 %v999
        %v3769 = vunpack.c.h.b16 %v999
        %v3770 = vunpack.c.l.b16 %v1000
        %v3771 = vunpack.c.h.b16 %v1000
        %v3772 = vunpack.c.l.b16 %v1001
        %v3773 = vunpack.c.h.b16 %v1001
        %v3774 = vunpack.c.l.b16 %v1002
        %v3775 = vunpack.c.h.b16 %v1002
        %v3776 = vunpack.c.l.b16 %v1003
        %v3777 = vunpack.c.h.b16 %v1003
        %v3778 = vunpack.c.l.b16 %v1004
        %v3779 = vunpack.c.h.b16 %v1004
        %v3780 = vunpack.c.l.b16 %v1005
        %v3781 = vunpack.c.h.b16 %v1005
        %v3782 = vunpack.c.l.b16 %v1006
        %v3783 = vunpack.c.h.b16 %v1006
        %v3784 = vunpack.c.l.b16 %v1007
        %v3785 = vunpack.c.h.b16 %v1007
        %v3786 = vunpack.c.l.b16 %v1008
        %v3787 = vunpack.c.h.b16 %v1008
        %v3788 = vunpack.c.l.b16 %v1009
        %v3789 = vunpack.c.h.b16 %v1009
        %v3790 = vunpack.c.l.b16 %v1010
        %v3791 = vunpack.c.h.b16 %v1010
        %v3792 = vunpack.c.l.b16 %v1011
        %v3793 = vunpack.c.h.b16 %v1011
        %v3794 = vunpack.c.l.b16 %v1012
        %v3795 = vunpack.c.h.b16 %v1012
        %v3796 = vunpack.c.l.b16 %v1013
        %v3797 = vunpack.c.h.b16 %v1013
        %v3798 = vunpack.c.l.b16 %v1014
        %v3799 = vunpack.c.h.b16 %v1014
        %v3800 = vunpack.c.l.b16 %v1015
        %v3801 = vunpack.c.h.b16 %v1015
        %v3802 = vunpack.c.l.b16 %v1016
        %v3803 = vunpack.c.h.b16 %v1016
        %v3804 = vunpack.c.l.b16 %v1017
        %v3805 = vunpack.c.h.b16 %v1017
        %v3806 = vunpack.c.l.b16 %v1018
        %v3807 = vunpack.c.h.b16 %v1018
        %v3808 = vunpack.c.l.b16 %v1019
        %v3809 = vunpack.c.h.b16 %v1019
        %v3810 = vunpack.c.l.b16 %v1020
        %v3811 = vunpack.c.h.b16 %v1020
        %v3812 = vunpack.c.l.b16 %v1021
        %v3813 = vunpack.c.h.b16 %v1021
        %v3814 = vunpack.c.l.b16 %v1022
        %v3815 = vunpack.c.h.b16 %v1022
        %v3816 = vunpack.c.l.b16 %v1023
        %v3817 = vunpack.c.h.b16 %v1023
        %v3818 = vunpack.c.l.b16 %v1024
        %v3819 = vunpack.c.h.b16 %v1024
        %v3820 = vunpack.c.l.b16 %v1025
        %v3821 = vunpack.c.h.b16 %v1025
        %v3822 = vunpack.c.l.b16 %v1026
        %v3823 = vunpack.c.h.b16 %v1026
        %v3824 = vunpack.c.l.b16 %v1027
        %v3825 = vunpack.c.h.b16 %v1027
        %v3826 = vunpack.c.l.b16 %v1028
        %v3827 = vunpack.c.h.b16 %v1028
        %v3828 = vunpack.c.l.b16 %v1029
        %v3829 = vunpack.c.h.b16 %v1029
        %v3830 = vunpack.c.l.b16 %v1030
        %v3831 = vunpack.c.h.b16 %v1030
        %v3832 = vunpack.c.l.b16 %v1031
        %v3833 = vunpack.c.h.b16 %v1031
        %v3834 = vunpack.c.l.b16 %v1032
        %v3835 = vunpack.c.h.b16 %v1032
        %v3836 = vunpack.c.l.b16 %v1033
        %v3837 = vunpack.c.h.b16 %v1033
        %v3838 = vunpack.c.l.b16 %v1034
        %v3839 = vunpack.c.h.b16 %v1034
        %v3840 = vunpack.c.l.b16 %v1035
        %v3841 = vunpack.c.h.b16 %v1035
        %v3842 = vunpack.c.l.b16 %v1036
        %v3843 = vunpack.c.h.b16 %v1036
        %v3844 = vunpack.c.l.b16 %v1037
        %v3845 = vunpack.c.h.b16 %v1037
        %v3846 = vunpack.c.l.b16 %v1038
        %v3847 = vunpack.c.h.b16 %v1038
        %v3848 = vunpack.c.l.b16 %v1039
        %v3849 = vunpack.c.h.b16 %v1039
        %v3850 = vunpack.c.l.b16 %v1040
        %v3851 = vunpack.c.h.b16 %v1040
        %v3852 = vunpack.c.l.b16 %v1041
        %v3853 = vunpack.c.h.b16 %v1041
        %v3854 = vunpack.c.l.b16 %v1042
        %v3855 = vunpack.c.h.b16 %v1042
        %v3856 = vunpack.c.l.b16 %v1043
        %v3857 = vunpack.c.h.b16 %v1043
        %v3858 = vunpack.c.l.b16 %v1044
        %v3859 = vunpack.c.h.b16 %v1044
        %v3860 = vunpack.c.l.b16 %v1045
        %v3861 = vunpack.c.h.b16 %v1045
        %v3862 = vunpack.c.l.b16 %v1046
        %v3863 = vunpack.c.h.b16 %v1046
        %v3864 = vunpack.c.l.b16 %v1047
        %v3865 = vunpack.c.h.b16 %v1047
        %v3866 = vunpack.c.l.b16 %v1048
        %v3867 = vunpack.c.h.b16 %v1048
        %v3868 = vunpack.c.l.b16 %v1049
        %v3869 = vunpack.c.h.b16 %v1049
        %v3870 = vunpack.c.l.b16 %v1050
        %v3871 = vunpack.c.h.b16 %v1050
        %v3872 = vunpack.c.l.b16 %v1051
        %v3873 = vunpack.c.h.b16 %v1051
        %v3874 = vunpack.c.l.b16 %v1052
        %v3875 = vunpack.c.h.b16 %v1052
        %v3876 = vunpack.c.l.b16 %v1053
        %v3877 = vunpack.c.h.b16 %v1053
        %v3878 = vunpack.c.l.b16 %v1054
        %v3879 = vunpack.c.h.b16 %v1054
        %v3880 = vunpack.c.l.b16 %v1055
        %v3881 = vunpack.c.h.b16 %v1055
        %v3882 = vunpack.c.l.b16 %v1056
        %v3883 = vunpack.c.h.b16 %v1056
        %v3884 = vunpack.c.l.b16 %v1057
        %v3885 = vunpack.c.h.b16 %v1057
        %v3886 = vunpack.c.l.b16 %v1058
        %v3887 = vunpack.c.h.b16 %v1058
        %v3888 = vunpack.c.l.b16 %v1059
        %v3889 = vunpack.c.h.b16 %v1059
        %v3890 = vunpack.c.l.b16 %v1060
        %v3891 = vunpack.c.h.b16 %v1060
        %v3892 = vunpack.c.l.b16 %v1061
        %v3893 = vunpack.c.h.b16 %v1061
        %v3894 = vunpack.c.l.b16 %v1062
        %v3895 = vunpack.c.h.b16 %v1062
        %v3896 = vunpack.c.l.b16 %v1063
        %v3897 = vunpack.c.h.b16 %v1063
        %v3898 = vunpack.c.l.b16 %v1064
        %v3899 = vunpack.c.h.b16 %v1064
        %v3900 = vunpack.c.l.b16 %v1065
        %v3901 = vunpack.c.h.b16 %v1065
        %v3902 = vunpack.c.l.b16 %v1066
        %v3903 = vunpack.c.h.b16 %v1066
        %v3904 = vunpack.c.l.b16 %v1067
        %v3905 = vunpack.c.h.b16 %v1067
        %v3906 = vunpack.c.l.b16 %v1068
        %v3907 = vunpack.c.h.b16 %v1068
        %v3908 = vunpack.c.l.b16 %v1069
        %v3909 = vunpack.c.h.b16 %v1069
        %v3910 = vunpack.c.l.b16 %v1070
        %v3911 = vunpack.c.h.b16 %v1070
        %v3912 = vunpack.c.l.b16 %v1071
        %v3913 = vunpack.c.h.b16 %v1071
        %v3914 = vunpack.c.l.b16 %v1072
        %v3915 = vunpack.c.h.b16 %v1072
        %v3916 = vunpack.c.l.b16 %v1073
        %v3917 = vunpack.c.h.b16 %v1073
        %v3918 = vunpack.c.l.b16 %v1074
        %v3919 = vunpack.c.h.b16 %v1074
        %v3920 = vunpack.c.l.b16 %v1075
        %v3921 = vunpack.c.h.b16 %v1075
        %v3922 = vunpack.c.l.b16 %v1076
        %v3923 = vunpack.c.h.b16 %v1076
        %v3924 = vunpack.c.l.b16 %v1077
        %v3925 = vunpack.c.h.b16 %v1077
        %v3926 = vunpack.c.l.b16 %v1078
        %v3927 = vunpack.c.h.b16 %v1078
        %v3928 = vunpack.c.l.b16 %v1079
        %v3929 = vunpack.c.h.b16 %v1079
        %v3930 = vunpack.c.l.b16 %v1080
        %v3931 = vunpack.c.h.b16 %v1080
        %v3932 = vunpack.c.l.b16 %v1081
        %v3933 = vunpack.c.h.b16 %v1081
        %v3934 = vunpack.c.l.b16 %v1082
        %v3935 = vunpack.c.h.b16 %v1082
        %v3936 = vunpack.c.l.b16 %v1083
        %v3937 = vunpack.c.h.b16 %v1083
        %v3938 = vunpack.c.l.b16 %v1084
        %v3939 = vunpack.c.h.b16 %v1084
        %v3940 = vunpack.c.l.b16 %v1085
        %v3941 = vunpack.c.h.b16 %v1085
        %v3942 = vunpack.c.l.b16 %v1086
        %v3943 = vunpack.c.h.b16 %v1086
        %v3944 = vunpack.c.l.b16 %v1087
        %v3945 = vunpack.c.h.b16 %v1087
        %v3946 = vunpack.c.l.b16 %v1088
        %v3947 = vunpack.c.h.b16 %v1088
        %v3948 = vunpack.c.l.b16 %v1089
        %v3949 = vunpack.c.h.b16 %v1089
        %v3950 = vunpack.c.l.b16 %v1090
        %v3951 = vunpack.c.h.b16 %v1090
        %v3952 = vunpack.c.l.b16 %v1091
        %v3953 = vunpack.c.h.b16 %v1091
        %v3954 = vunpack.c.l.b16 %v1092
        %v3955 = vunpack.c.h.b16 %v1092
        %v3956 = vunpack.c.l.b16 %v1093
        %v3957 = vunpack.c.h.b16 %v1093
        %v3958 = vunpack.c.l.b16 %v1094
        %v3959 = vunpack.c.h.b16 %v1094
        %v3960 = vunpack.c.l.b16 %v1095
        %v3961 = vunpack.c.h.b16 %v1095
        %v3962 = vunpack.c.l.b16 %v1096
        %v3963 = vunpack.c.h.b16 %v1096
        %v3964 = vunpack.c.l.b16 %v1097
        %v3965 = vunpack.c.h.b16 %v1097
        %v3966 = vunpack.c.l.b16 %v1098
        %v3967 = vunpack.c.h.b16 %v1098
        %v3968 = vunpack.c.l.b16 %v1099
        %v3969 = vunpack.c.h.b16 %v1099
        %v3970 = vunpack.c.l.b16 %v1100
        %v3971 = vunpack.c.h.b16 %v1100
        %v3972 = vunpack.c.l.b16 %v1101
        %v3973 = vunpack.c.h.b16 %v1101
        %v3974 = vunpack.c.l.b16 %v1102
        %v3975 = vunpack.c.h.b16 %v1102
        %v3976 = vunpack.c.l.b16 %v1103
        %v3977 = vunpack.c.h.b16 %v1103
        %v3978 = vunpack.c.l.b16 %v1104
        %v3979 = vunpack.c.h.b16 %v1104
        %v3980 = vunpack.c.l.b16 %v1105
        %v3981 = vunpack.c.h.b16 %v1105
        %v3982 = vunpack.c.l.b16 %v1106
        %v3983 = vunpack.c.h.b16 %v1106
        %v3984 = vunpack.c.l.b16 %v1107
        %v3985 = vunpack.c.h.b16 %v1107
        %v3986 = vunpack.c.l.b16 %v1108
        %v3987 = vunpack.c.h.b16 %v1108
        %v3988 = vunpack.c.l.b16 %v1109
        %v3989 = vunpack.c.h.b16 %v1109
        %v3990 = vunpack.c.l.b16 %v1110
        %v3991 = vunpack.c.h.b16 %v1110
        %v3992 = vunpack.c.l.b16 %v1111
        %v3993 = vunpack.c.h.b16 %v1111
        %v3994 = vunpack.c.l.b16 %v1112
        %v3995 = vunpack.c.h.b16 %v1112
        %v3996 = vunpack.c.l.b16 %v1113
        %v3997 = vunpack.c.h.b16 %v1113
        %v3998 = vunpack.c.l.b16 %v1114
        %v3999 = vunpack.c.h.b16 %v1114
        %v4000 = vunpack.c.l.b16 %v1115
        %v4001 = vunpack.c.h.b16 %v1115
        %v4002 = vunpack.c.l.b16 %v1116
        %v4003 = vunpack.c.h.b16 %v1116
        %v4004 = vunpack.c.l.b16 %v1117
        %v4005 = vunpack.c.h.b16 %v1117
        %v4006 = vunpack.c.l.b16 %v1118
        %v4007 = vunpack.c.h.b16 %v1118
        %v4008 = vunpack.c.l.b16 %v1119
        %v4009 = vunpack.c.h.b16 %v1119
        %v4010 = vunpack.c.l.b16 %v1120
        %v4011 = vunpack.c.h.b16 %v1120
        %v4012 = vunpack.c.l.b16 %v1121
        %v4013 = vunpack.c.h.b16 %v1121
        %v4014 = vunpack.c.l.b16 %v1122
        %v4015 = vunpack.c.h.b16 %v1122
        %v4016 = vunpack.c.l.b16 %v1123
        %v4017 = vunpack.c.h.b16 %v1123
        %v4018 = vunpack.c.l.b16 %v1124
        %v4019 = vunpack.c.h.b16 %v1124
        %v4020 = vunpack.c.l.b16 %v1125
        %v4021 = vunpack.c.h.b16 %v1125
        %v4022 = vunpack.c.l.b16 %v1126
        %v4023 = vunpack.c.h.b16 %v1126
        %v4024 = vunpack.c.l.b16 %v1127
        %v4025 = vunpack.c.h.b16 %v1127
        %v4026 = vunpack.c.l.b16 %v1128
        %v4027 = vunpack.c.h.b16 %v1128
        %v4028 = vunpack.c.l.b16 %v1129
        %v4029 = vunpack.c.h.b16 %v1129
        %v4030 = vunpack.c.l.b16 %v1130
        %v4031 = vunpack.c.h.b16 %v1130
        %v4032 = vunpack.c.l.b16 %v1131
        %v4033 = vunpack.c.h.b16 %v1131
        %v4034 = vunpack.c.l.b16 %v1132
        %v4035 = vunpack.c.h.b16 %v1132
        %v4036 = vunpack.c.l.b16 %v1133
        %v4037 = vunpack.c.h.b16 %v1133
        %v4038 = vunpack.c.l.b16 %v1134
        %v4039 = vunpack.c.h.b16 %v1134
        %v4040 = vunpack.c.l.b16 %v1135
        %v4041 = vunpack.c.h.b16 %v1135
        %v4042 = vunpack.c.l.b16 %v1136
        %v4043 = vunpack.c.h.b16 %v1136
        %v4044 = vunpack.c.l.b16 %v1137
        %v4045 = vunpack.c.h.b16 %v1137
        %v4046 = vunpack.c.l.b16 %v1138
        %v4047 = vunpack.c.h.b16 %v1138
        %v4048 = vunpack.c.l.b16 %v1139
        %v4049 = vunpack.c.h.b16 %v1139
        %v4050 = vunpack.c.l.b16 %v1140
        %v4051 = vunpack.c.h.b16 %v1140
        %v4052 = vunpack.c.l.b16 %v1141
        %v4053 = vunpack.c.h.b16 %v1141
        %v4054 = vunpack.c.l.b16 %v1142
        %v4055 = vunpack.c.h.b16 %v1142
        %v4056 = vunpack.c.l.b16 %v1143
        %v4057 = vunpack.c.h.b16 %v1143
        %v4058 = vunpack.c.l.b16 %v1144
        %v4059 = vunpack.c.h.b16 %v1144
        %v4060 = vunpack.c.l.b16 %v1145
        %v4061 = vunpack.c.h.b16 %v1145
        %v4062 = vunpack.c.l.b16 %v1146
        %v4063 = vunpack.c.h.b16 %v1146
        %v4064 = vunpack.c.l.b16 %v1147
        %v4065 = vunpack.c.h.b16 %v1147
        %v4066 = vunpack.c.l.b16 %v1148
        %v4067 = vunpack.c.h.b16 %v1148
        %v4068 = vunpack.c.l.b16 %v1149
        %v4069 = vunpack.c.h.b16 %v1149
        %v4070 = vunpack.c.l.b16 %v1150
        %v4071 = vunpack.c.h.b16 %v1150
        %v4072 = vunpack.c.l.b16 %v1151
        %v4073 = vunpack.c.h.b16 %v1151
        %v4074 = vunpack.c.l.b16 %v1152
        %v4075 = vunpack.c.h.b16 %v1152
        %v4076 = vunpack.c.l.b16 %v1153
        %v4077 = vunpack.c.h.b16 %v1153
        %v4078 = vunpack.c.l.b16 %v1154
        %v4079 = vunpack.c.h.b16 %v1154
        %v4080 = vunpack.c.l.b16 %v1155
        %v4081 = vunpack.c.h.b16 %v1155
        %v4082 = vunpack.c.l.b16 %v1156
        %v4083 = vunpack.c.h.b16 %v1156
        %v4084 = vunpack.c.l.b16 %v1157
        %v4085 = vunpack.c.h.b16 %v1157
        %v4086 = vunpack.c.l.b16 %v1158
        %v4087 = vunpack.c.h.b16 %v1158
        %v4088 = vunpack.c.l.b16 %v1159
        %v4089 = vunpack.c.h.b16 %v1159
        %v4090 = vunpack.c.l.b16 %v1160
        %v4091 = vunpack.c.h.b16 %v1160
        %v4092 = vunpack.c.l.b16 %v1161
        %v4093 = vunpack.c.h.b16 %v1161
        %v4094 = vunpack.c.l.b16 %v1162
        %v4095 = vunpack.c.h.b16 %v1162
        %v4096 = vunpack.c.l.b16 %v1163
        %v4097 = vunpack.c.h.b16 %v1163
        %v4098 = vunpack.c.l.b16 %v1164
        %v4099 = vunpack.c.h.b16 %v1164
        %v4100 = vunpack.c.l.b16 %v1165
        %v4101 = vunpack.c.h.b16 %v1165
        %v4102 = vunpack.c.l.b16 %v1166
        %v4103 = vunpack.c.h.b16 %v1166
        %v4104 = vunpack.c.l.b16 %v1167
        %v4105 = vunpack.c.h.b16 %v1167
        %v4106 = vunpack.c.l.b16 %v1168
        %v4107 = vunpack.c.h.b16 %v1168
        %v4108 = vunpack.c.l.b16 %v1169
        %v4109 = vunpack.c.h.b16 %v1169
        %v4110 = vunpack.c.l.b16 %v1170
        %v4111 = vunpack.c.h.b16 %v1170
        %v4112 = vunpack.c.l.b16 %v1171
        %v4113 = vunpack.c.h.b16 %v1171
        %v4114 = vunpack.c.l.b16 %v1172
        %v4115 = vunpack.c.h.b16 %v1172
        %v4116 = vunpack.c.l.b16 %v1173
        %v4117 = vunpack.c.h.b16 %v1173
        %v4118 = vunpack.c.l.b16 %v1174
        %v4119 = vunpack.c.h.b16 %v1174
        %v4120 = vunpack.c.l.b16 %v1175
        %v4121 = vunpack.c.h.b16 %v1175
        %v4122 = vunpack.c.l.b16 %v1176
        %v4123 = vunpack.c.h.b16 %v1176
        %v4124 = vunpack.c.l.b16 %v1177
        %v4125 = vunpack.c.h.b16 %v1177
        %v4126 = vunpack.c.l.b16 %v1178
        %v4127 = vunpack.c.h.b16 %v1178
        %v4128 = vunpack.c.l.b16 %v1179
        %v4129 = vunpack.c.h.b16 %v1179
        %v4130 = vunpack.c.l.b16 %v1180
        %v4131 = vunpack.c.h.b16 %v1180
        %v4132 = vunpack.c.l.b16 %v1181
        %v4133 = vunpack.c.h.b16 %v1181
        %v4134 = vunpack.c.l.b16 %v1182
        %v4135 = vunpack.c.h.b16 %v1182
        %v4136 = vunpack.c.l.b16 %v1183
        %v4137 = vunpack.c.h.b16 %v1183
        %v4138 = vunpack.c.l.b16 %v1184
        %v4139 = vunpack.c.h.b16 %v1184
        %v4140 = vunpack.c.l.b16 %v1185
        %v4141 = vunpack.c.h.b16 %v1185
        %v4142 = vunpack.c.l.b16 %v1186
        %v4143 = vunpack.c.h.b16 %v1186
        %v4144 = vunpack.c.l.b16 %v1187
        %v4145 = vunpack.c.h.b16 %v1187
        %v4146 = vunpack.c.l.b16 %v1188
        %v4147 = vunpack.c.h.b16 %v1188
        %v4148 = vunpack.c.l.b16 %v1189
        %v4149 = vunpack.c.h.b16 %v1189
        %v4150 = vunpack.c.l.b16 %v1190
        %v4151 = vunpack.c.h.b16 %v1190
        %v4152 = vunpack.c.l.b16 %v1191
        %v4153 = vunpack.c.h.b16 %v1191
        %v4154 = vunpack.c.l.b16 %v1192
        %v4155 = vunpack.c.h.b16 %v1192
        %v4156 = vunpack.c.l.b16 %v1193
        %v4157 = vunpack.c.h.b16 %v1193
        %v4158 = vunpack.c.l.b16 %v1194
        %v4159 = vunpack.c.h.b16 %v1194
        %v4160 = vunpack.c.l.b16 %v1195
        %v4161 = vunpack.c.h.b16 %v1195
        %v4162 = vunpack.c.l.b16 %v1196
        %v4163 = vunpack.c.h.b16 %v1196
        %v4164 = vunpack.c.l.b16 %v1197
        %v4165 = vunpack.c.h.b16 %v1197
        %v4166 = vunpack.c.l.b16 %v1198
        %v4167 = vunpack.c.h.b16 %v1198
        %v4168 = vunpack.c.l.b16 %v1199
        %v4169 = vunpack.c.h.b16 %v1199
        %v4170 = vunpack.c.l.b16 %v1200
        %v4171 = vunpack.c.h.b16 %v1200
        %v4172 = vunpack.c.l.b16 %v1201
        %v4173 = vunpack.c.h.b16 %v1201
        %v4174 = vunpack.c.l.b16 %v1202
        %v4175 = vunpack.c.h.b16 %v1202
        %v4176 = vunpack.c.l.b16 %v1203
        %v4177 = vunpack.c.h.b16 %v1203
        %v4178 = vunpack.c.l.b16 %v1204
        %v4179 = vunpack.c.h.b16 %v1204
        %v4180 = vunpack.c.l.b16 %v1205
        %v4181 = vunpack.c.h.b16 %v1205
        %v4182 = vunpack.c.l.b16 %v1206
        %v4183 = vunpack.c.h.b16 %v1206
        %v4184 = vunpack.c.l.b16 %v1207
        %v4185 = vunpack.c.h.b16 %v1207
        %v4186 = vunpack.c.l.b16 %v1208
        %v4187 = vunpack.c.h.b16 %v1208
        %v4188 = vunpack.c.l.b16 %v1209
        %v4189 = vunpack.c.h.b16 %v1209
        %v4190 = vunpack.c.l.b16 %v1210
        %v4191 = vunpack.c.h.b16 %v1210
        %v4192 = vunpack.c.l.b16 %v1211
        %v4193 = vunpack.c.h.b16 %v1211
        %v4194 = vunpack.c.l.b16 %v1212
        %v4195 = vunpack.c.h.b16 %v1212
        %v4196 = vunpack.c.l.b16 %v1213
        %v4197 = vunpack.c.h.b16 %v1213
        %v4198 = vunpack.c.l.b16 %v1214
        %v4199 = vunpack.c.h.b16 %v1214
        %v4200 = vunpack.c.l.b16 %v1215
        %v4201 = vunpack.c.h.b16 %v1215
        %v4202 = vunpack.c.l.b16 %v1216
        %v4203 = vunpack.c.h.b16 %v1216
        %v4204 = vunpack.c.l.b16 %v1217
        %v4205 = vunpack.c.h.b16 %v1217
        %v4206 = vunpack.c.l.b16 %v1218
        %v4207 = vunpack.c.h.b16 %v1218
        %v4208 = vunpack.c.l.b16 %v1219
        %v4209 = vunpack.c.h.b16 %v1219
        %v4210 = vunpack.c.l.b16 %v1220
        %v4211 = vunpack.c.h.b16 %v1220
        %v4212 = vunpack.c.l.b16 %v1221
        %v4213 = vunpack.c.h.b16 %v1221
        %v4214 = vunpack.c.l.b16 %v1222
        %v4215 = vunpack.c.h.b16 %v1222
        %v4216 = vunpack.c.l.b16 %v1223
        %v4217 = vunpack.c.h.b16 %v1223
        %v4218 = vunpack.c.l.b16 %v1224
        %v4219 = vunpack.c.h.b16 %v1224
        %v4220 = vunpack.c.l.b16 %v1225
        %v4221 = vunpack.c.h.b16 %v1225
        %v4222 = vunpack.c.l.b16 %v1226
        %v4223 = vunpack.c.h.b16 %v1226
        %v4224 = vunpack.c.l.b16 %v1227
        %v4225 = vunpack.c.h.b16 %v1227
        %v4226 = vunpack.c.l.b16 %v1228
        %v4227 = vunpack.c.h.b16 %v1228
        %v4228 = vunpack.c.l.b16 %v1229
        %v4229 = vunpack.c.h.b16 %v1229
        %v4230 = vunpack.c.l.b16 %v1230
        %v4231 = vunpack.c.h.b16 %v1230
        %v4232 = vunpack.c.l.b16 %v1231
        %v4233 = vunpack.c.h.b16 %v1231
        %v4234 = vunpack.c.l.b16 %v1232
        %v4235 = vunpack.c.h.b16 %v1232
        %v4236 = vunpack.c.l.b16 %v1233
        %v4237 = vunpack.c.h.b16 %v1233
        %v4238 = vunpack.c.l.b16 %v1234
        %v4239 = vunpack.c.h.b16 %v1234
        %v4240 = vunpack.c.l.b16 %v1235
        %v4241 = vunpack.c.h.b16 %v1235
        %v4242 = vunpack.c.l.b16 %v1236
        %v4243 = vunpack.c.h.b16 %v1236
        %v4244 = vunpack.c.l.b16 %v1237
        %v4245 = vunpack.c.h.b16 %v1237
        %v4246 = vunpack.c.l.b16 %v1238
        %v4247 = vunpack.c.h.b16 %v1238
        %v4248 = vunpack.c.l.b16 %v1239
        %v4249 = vunpack.c.h.b16 %v1239
        %v4250 = vunpack.c.l.b16 %v1240
        %v4251 = vunpack.c.h.b16 %v1240
        %v4252 = vunpack.c.l.b16 %v1241
        %v4253 = vunpack.c.h.b16 %v1241
        %v4254 = vunpack.c.l.b16 %v1242
        %v4255 = vunpack.c.h.b16 %v1242
        %v4256 = vunpack.c.l.b16 %v1243
        %v4257 = vunpack.c.h.b16 %v1243
        %v4258 = vunpack.c.l.b16 %v1244
        %v4259 = vunpack.c.h.b16 %v1244
        %v4260 = vunpack.c.l.b16 %v1245
        %v4261 = vunpack.c.h.b16 %v1245
        %v4262 = vunpack.c.l.b16 %v1246
        %v4263 = vunpack.c.h.b16 %v1246
        %v4264 = vunpack.c.l.b16 %v1247
        %v4265 = vunpack.c.h.b16 %v1247
        %v4266 = vunpack.c.l.b16 %v1248
        %v4267 = vunpack.c.h.b16 %v1248
        %v4268 = vunpack.c.l.b16 %v1249
        %v4269 = vunpack.c.h.b16 %v1249
        %v4270 = vunpack.c.l.b16 %v1250
        %v4271 = vunpack.c.h.b16 %v1250
        %v4272 = vunpack.c.l.b16 %v1251
        %v4273 = vunpack.c.h.b16 %v1251
        %v4274 = vunpack.c.l.b16 %v1252
        %v4275 = vunpack.c.h.b16 %v1252
        %v4276 = vunpack.c.l.b16 %v1253
        %v4277 = vunpack.c.h.b16 %v1253
        %v4278 = vunpack.c.l.b16 %v1254
        %v4279 = vunpack.c.h.b16 %v1254
        %v4280 = vunpack.c.l.b16 %v1255
        %v4281 = vunpack.c.h.b16 %v1255
        %v4282 = vunpack.c.l.b16 %v1256
        %v4283 = vunpack.c.h.b16 %v1256
        %v4284 = vunpack.c.l.b16 %v1257
        %v4285 = vunpack.c.h.b16 %v1257
        %v4286 = vunpack.c.l.b16 %v1258
        %v4287 = vunpack.c.h.b16 %v1258
        %v4288 = vunpack.c.l.b16 %v1259
        %v4289 = vunpack.c.h.b16 %v1259
        %v4290 = vunpack.c.l.b16 %v1260
        %v4291 = vunpack.c.h.b16 %v1260
        %v4292 = vunpack.c.l.b16 %v1261
        %v4293 = vunpack.c.h.b16 %v1261
        %v4294 = vunpack.c.l.b16 %v1262
        %v4295 = vunpack.c.h.b16 %v1262
        %v4296 = vunpack.c.l.b16 %v1263
        %v4297 = vunpack.c.h.b16 %v1263
        %v4298 = vunpack.c.l.b16 %v1264
        %v4299 = vunpack.c.h.b16 %v1264
        %v4300 = vunpack.c.l.b16 %v1265
        %v4301 = vunpack.c.h.b16 %v1265
        %v4302 = vunpack.c.l.b16 %v1266
        %v4303 = vunpack.c.h.b16 %v1266
        %v4304 = vunpack.c.l.b16 %v1267
        %v4305 = vunpack.c.h.b16 %v1267
        %v4306 = vunpack.c.l.b16 %v1268
        %v4307 = vunpack.c.h.b16 %v1268
        %v4308 = vunpack.c.l.b16 %v1269
        %v4309 = vunpack.c.h.b16 %v1269
        %v4310 = vunpack.c.l.b16 %v1270
        %v4311 = vunpack.c.h.b16 %v1270
        %v4312 = vunpack.c.l.b16 %v1271
        %v4313 = vunpack.c.h.b16 %v1271
        %v4314 = vunpack.c.l.b16 %v1272
        %v4315 = vunpack.c.h.b16 %v1272
        %v4316 = vunpack.c.l.b16 %v1273
        %v4317 = vunpack.c.h.b16 %v1273
        %v4318 = vunpack.c.l.b16 %v1274
        %v4319 = vunpack.c.h.b16 %v1274
        %v4320 = vunpack.c.l.b16 %v1275
        %v4321 = vunpack.c.h.b16 %v1275
        %v4322 = vunpack.c.l.b16 %v1276
        %v4323 = vunpack.c.h.b16 %v1276
        %v4324 = vunpack.c.l.b16 %v1277
        %v4325 = vunpack.c.h.b16 %v1277
        %v4326 = vunpack.c.l.b16 %v1278
        %v4327 = vunpack.c.h.b16 %v1278
        %v4328 = vunpack.c.l.b16 %v1279
        %v4329 = vunpack.c.h.b16 %v1279
        %v4330 = vunpack.c.l.b16 %v1280
        %v4331 = vunpack.c.h.b16 %v1280
        %v4332 = vunpack.c.l.b16 %v1281
        %v4333 = vunpack.c.h.b16 %v1281
        %v4334 = vunpack.c.l.b16 %v1282
        %v4335 = vunpack.c.h.b16 %v1282
        %v4336 = vunpack.c.l.b16 %v1283
        %v4337 = vunpack.c.h.b16 %v1283
        %v4338 = vunpack.c.l.b16 %v1284
        %v4339 = vunpack.c.h.b16 %v1284
        %v4340 = vunpack.c.l.b16 %v1285
        %v4341 = vunpack.c.h.b16 %v1285
        %v4342 = vunpack.c.l.b16 %v1286
        %v4343 = vunpack.c.h.b16 %v1286
        %v4344 = vunpack.c.l.b16 %v1287
        %v4345 = vunpack.c.h.b16 %v1287
        %v4346 = vunpack.c.l.b16 %v1288
        %v4347 = vunpack.c.h.b16 %v1288
        %v4348 = vunpack.c.l.b16 %v1289
        %v4349 = vunpack.c.h.b16 %v1289
        %v4350 = vunpack.c.l.b16 %v1290
        %v4351 = vunpack.c.h.b16 %v1290
        %v4352 = vunpack.c.l.b16 %v1291
        %v4353 = vunpack.c.h.b16 %v1291
        %v4354 = vunpack.c.l.b16 %v1292
        %v4355 = vunpack.c.h.b16 %v1292
        %v4356 = vunpack.c.l.b16 %v1293
        %v4357 = vunpack.c.h.b16 %v1293
        %v4358 = vunpack.c.l.b16 %v1294
        %v4359 = vunpack.c.h.b16 %v1294
        %v4360 = vunpack.c.l.b16 %v1295
        %v4361 = vunpack.c.h.b16 %v1295
        %v4362 = vunpack.c.l.b16 %v1296
        %v4363 = vunpack.c.h.b16 %v1296
        %v4364 = vunpack.c.l.b16 %v1297
        %v4365 = vunpack.c.h.b16 %v1297
        %v4366 = vunpack.c.l.b16 %v1298
        %v4367 = vunpack.c.h.b16 %v1298
        %v4368 = vunpack.c.l.b16 %v1299
        %v4369 = vunpack.c.h.b16 %v1299
        %v4370 = vunpack.c.l.b16 %v1300
        %v4371 = vunpack.c.h.b16 %v1300
        %v4372 = vunpack.c.l.b16 %v1301
        %v4373 = vunpack.c.h.b16 %v1301
        %v4374 = vunpack.c.l.b16 %v1302
        %v4375 = vunpack.c.h.b16 %v1302
        %v4376 = vunpack.c.l.b16 %v1303
        %v4377 = vunpack.c.h.b16 %v1303
        %v4378 = vunpack.c.l.b16 %v1304
        %v4379 = vunpack.c.h.b16 %v1304
        %v4380 = vunpack.c.l.b16 %v1305
        %v4381 = vunpack.c.h.b16 %v1305
        %v4382 = vunpack.c.l.b16 %v1306
        %v4383 = vunpack.c.h.b16 %v1306
        %v4384 = vunpack.c.l.b16 %v1307
        %v4385 = vunpack.c.h.b16 %v1307
        %v4386 = vunpack.c.l.b16 %v1308
        %v4387 = vunpack.c.h.b16 %v1308
        %v4388 = vunpack.c.l.b16 %v1309
        %v4389 = vunpack.c.h.b16 %v1309
        %v4390 = vunpack.c.l.b16 %v1310
        %v4391 = vunpack.c.h.b16 %v1310
        %v4392 = vunpack.c.l.b16 %v1311
        %v4393 = vunpack.c.h.b16 %v1311
        %v4394 = vunpack.c.l.b16 %v1312
        %v4395 = vunpack.c.h.b16 %v1312
        %v4396 = vunpack.c.l.b16 %v1313
        %v4397 = vunpack.c.h.b16 %v1313
        %v4398 = vunpack.c.l.b16 %v1314
        %v4399 = vunpack.c.h.b16 %v1314
        %v4400 = vunpack.c.l.b16 %v1315
        %v4401 = vunpack.c.h.b16 %v1315
        %v4402 = vunpack.c.l.b16 %v1316
        %v4403 = vunpack.c.h.b16 %v1316
        %v4404 = vunpack.c.l.b16 %v1317
        %v4405 = vunpack.c.h.b16 %v1317
        %v4406 = vunpack.c.l.b16 %v1318
        %v4407 = vunpack.c.h.b16 %v1318
        %v4408 = vunpack.c.l.b16 %v1319
        %v4409 = vunpack.c.h.b16 %v1319
        %v4410 = vunpack.c.l.b16 %v1320
        %v4411 = vunpack.c.h.b16 %v1320
        %v4412 = vunpack.c.l.b16 %v1321
        %v4413 = vunpack.c.h.b16 %v1321
        %v4414 = vunpack.c.l.b16 %v1322
        %v4415 = vunpack.c.h.b16 %v1322
        %v4416 = vunpack.c.l.b16 %v1323
        %v4417 = vunpack.c.h.b16 %v1323
        %v4418 = vunpack.c.l.b16 %v1324
        %v4419 = vunpack.c.h.b16 %v1324
        %v4420 = vunpack.c.l.b16 %v1325
        %v4421 = vunpack.c.h.b16 %v1325
        %v4422 = vunpack.c.l.b16 %v1326
        %v4423 = vunpack.c.h.b16 %v1326
        %v4424 = vunpack.c.l.b16 %v1327
        %v4425 = vunpack.c.h.b16 %v1327
        %v4426 = vunpack.c.l.b16 %v1328
        %v4427 = vunpack.c.h.b16 %v1328
        %v4428 = vunpack.c.l.b16 %v1329
        %v4429 = vunpack.c.h.b16 %v1329
        %v4430 = vunpack.c.l.b16 %v1330
        %v4431 = vunpack.c.h.b16 %v1330
        %v4432 = vunpack.c.l.b16 %v1331
        %v4433 = vunpack.c.h.b16 %v1331
        %v4434 = vunpack.c.l.b16 %v1332
        %v4435 = vunpack.c.h.b16 %v1332
        %v4436 = vunpack.c.l.b16 %v1333
        %v4437 = vunpack.c.h.b16 %v1333
        %v4438 = vunpack.c.l.b16 %v1334
        %v4439 = vunpack.c.h.b16 %v1334
        %v4440 = vunpack.c.l.b16 %v1335
        %v4441 = vunpack.c.h.b16 %v1335
        %v4442 = vunpack.c.l.b16 %v1336
        %v4443 = vunpack.c.h.b16 %v1336
        %v4444 = vunpack.c.l.b16 %v1337
        %v4445 = vunpack.c.h.b16 %v1337
        %v4446 = vunpack.c.l.b16 %v1338
        %v4447 = vunpack.c.h.b16 %v1338
        %v4448 = vunpack.c.l.b16 %v1339
        %v4449 = vunpack.c.h.b16 %v1339
        %v4450 = vunpack.c.l.b16 %v1340
        %v4451 = vunpack.c.h.b16 %v1340
        %v4452 = vunpack.c.l.b16 %v1341
        %v4453 = vunpack.c.h.b16 %v1341
        %v4454 = vunpack.c.l.b16 %v1342
        %v4455 = vunpack.c.h.b16 %v1342
        %v4456 = vunpack.c.l.b16 %v1343
        %v4457 = vunpack.c.h.b16 %v1343
        %v4458 = vunpack.c.l.b16 %v1344
        %v4459 = vunpack.c.h.b16 %v1344
        %v4460 = vunpack.c.l.b16 %v1345
        %v4461 = vunpack.c.h.b16 %v1345
        %v4462 = vunpack.c.l.b16 %v1346
        %v4463 = vunpack.c.h.b16 %v1346
        %v4464 = vunpack.c.l.b16 %v1347
        %v4465 = vunpack.c.h.b16 %v1347
        %v4466 = vunpack.c.l.b16 %v1348
        %v4467 = vunpack.c.h.b16 %v1348
        %v4468 = vunpack.c.l.b16 %v1349
        %v4469 = vunpack.c.h.b16 %v1349
        %v4470 = vunpack.c.l.b16 %v1350
        %v4471 = vunpack.c.h.b16 %v1350
        %v4472 = vunpack.c.l.b16 %v1351
        %v4473 = vunpack.c.h.b16 %v1351
        %v4474 = vunpack.c.l.b16 %v1352
        %v4475 = vunpack.c.h.b16 %v1352
        %v4476 = vunpack.c.l.b16 %v1353
        %v4477 = vunpack.c.h.b16 %v1353
        %v4478 = vunpack.c.l.b16 %v1354
        %v4479 = vunpack.c.h.b16 %v1354
        %v4480 = vunpack.c.l.b16 %v1355
        %v4481 = vunpack.c.h.b16 %v1355
        %v4482 = vunpack.c.l.b16 %v1356
        %v4483 = vunpack.c.h.b16 %v1356
        %v4484 = vunpack.c.l.b16 %v1357
        %v4485 = vunpack.c.h.b16 %v1357
        %v4486 = vunpack.c.l.b16 %v1358
        %v4487 = vunpack.c.h.b16 %v1358
        %v4488 = vunpack.c.l.b16 %v1359
        %v4489 = vunpack.c.h.b16 %v1359
        %v4490 = vunpack.c.l.b16 %v1360
        %v4491 = vunpack.c.h.b16 %v1360
        %v4492 = vunpack.c.l.b16 %v1361
        %v4493 = vunpack.c.h.b16 %v1361
        %v4494 = vunpack.c.l.b16 %v1362
        %v4495 = vunpack.c.h.b16 %v1362
        %v4496 = vunpack.c.l.b16 %v1363
        %v4497 = vunpack.c.h.b16 %v1363
        %v4498 = vunpack.c.l.b16 %v1364
        %v4499 = vunpack.c.h.b16 %v1364
        %v4500 = vunpack.c.l.b16 %v1365
        %v4501 = vunpack.c.h.b16 %v1365
        %v4502 = vunpack.c.l.b16 %v1366
        %v4503 = vunpack.c.h.b16 %v1366
        %v4504 = vunpack.c.l.b16 %v1367
        %v4505 = vunpack.c.h.b16 %v1367
        %v4506 = vunpack.c.l.b16 %v1368
        %v4507 = vunpack.c.h.b16 %v1368
        %v4508 = vunpack.c.l.b16 %v1369
        %v4509 = vunpack.c.h.b16 %v1369
        %v4510 = vunpack.c.l.b16 %v1370
        %v4511 = vunpack.c.h.b16 %v1370
        %v4512 = vunpack.c.l.b16 %v1371
        %v4513 = vunpack.c.h.b16 %v1371
        %v4514 = vunpack.c.l.b16 %v1372
        %v4515 = vunpack.c.h.b16 %v1372
        %v4516 = vunpack.c.l.b16 %v1373
        %v4517 = vunpack.c.h.b16 %v1373
        %v4518 = vunpack.c.l.b16 %v1374
        %v4519 = vunpack.c.h.b16 %v1374
        %v4520 = vunpack.c.l.b16 %v1375
        %v4521 = vunpack.c.h.b16 %v1375
        %v4522 = vunpack.c.l.b16 %v1376
        %v4523 = vunpack.c.h.b16 %v1376
        %v4524 = vunpack.c.l.b16 %v1377
        %v4525 = vunpack.c.h.b16 %v1377
        %v4526 = vunpack.c.l.b16 %v1378
        %v4527 = vunpack.c.h.b16 %v1378
        %v4528 = vunpack.c.l.b16 %v1379
        %v4529 = vunpack.c.h.b16 %v1379
        %v4530 = vunpack.c.l.b16 %v1380
        %v4531 = vunpack.c.h.b16 %v1380
        %v4532 = vunpack.c.l.b16 %v1381
        %v4533 = vunpack.c.h.b16 %v1381
        %v4534 = vunpack.c.l.b16 %v1382
        %v4535 = vunpack.c.h.b16 %v1382
        %v4536 = vunpack.c.l.b16 %v1383
        %v4537 = vunpack.c.h.b16 %v1383
        %v4538 = vunpack.c.l.b16 %v1384
        %v4539 = vunpack.c.h.b16 %v1384
        %v4540 = vunpack.c.l.b16 %v1385
        %v4541 = vunpack.c.h.b16 %v1385
        %v4542 = vunpack.c.l.b16 %v1386
        %v4543 = vunpack.c.h.b16 %v1386
        %v4544 = vunpack.c.l.b16 %v1387
        %v4545 = vunpack.c.h.b16 %v1387
        %v4546 = vunpack.c.l.b16 %v1388
        %v4547 = vunpack.c.h.b16 %v1388
        %v4548 = vunpack.c.l.b16 %v1389
        %v4549 = vunpack.c.h.b16 %v1389
        %v4550 = vunpack.c.l.b16 %v1390
        %v4551 = vunpack.c.h.b16 %v1390
        %v4552 = vunpack.c.l.b16 %v1391
        %v4553 = vunpack.c.h.b16 %v1391
        %v4554 = vunpack.c.l.b16 %v1392
        %v4555 = vunpack.c.h.b16 %v1392
        %v4556 = vunpack.c.l.b16 %v1393
        %v4557 = vunpack.c.h.b16 %v1393
        %v4558 = vunpack.c.l.b16 %v1394
        %v4559 = vunpack.c.h.b16 %v1394
        %v4560 = vunpack.c.l.b16 %v1395
        %v4561 = vunpack.c.h.b16 %v1395
        %v4562 = vunpack.c.l.b16 %v1396
        %v4563 = vunpack.c.h.b16 %v1396
        %v4564 = vunpack.c.l.b16 %v1397
        %v4565 = vunpack.c.h.b16 %v1397
        %v4566 = vpack.c.b16 %v3416, %v3414
        %v4567 = vpack.c.b16 %v3417, %v3415
        %v4568 = vpack.c.b16 %v3420, %v3418
        %v4569 = vpack.c.b16 %v3421, %v3419
        %v4570 = vpack.c.b16 %v3424, %v3422
        %v4571 = vpack.c.b16 %v3425, %v3423
        %v4572 = vpack.c.b16 %v3428, %v3426
        %v4573 = vpack.c.b16 %v3429, %v3427
        %v4574 = vpack.c.b16 %v3432, %v3430
        %v4575 = vpack.c.b16 %v3433, %v3431
        %v4576 = vpack.c.b16 %v3436, %v3434
        %v4577 = vpack.c.b16 %v3437, %v3435
        %v4578 = vpack.c.b16 %v3440, %v3438
        %v4579 = vpack.c.b16 %v3441, %v3439
        %v4580 = vpack.c.b16 %v3444, %v3442
        %v4581 = vpack.c.b16 %v3445, %v3443
        %v4582 = vpack.c.b16 %v3448, %v3446
        %v4583 = vpack.c.b16 %v3449, %v3447
        %v4584 = vpack.c.b16 %v3452, %v3450
        %v4585 = vpack.c.b16 %v3453, %v3451
        %v4586 = vpack.c.b16 %v3456, %v3454
        %v4587 = vpack.c.b16 %v3457, %v3455
        %v4588 = vpack.c.b16 %v3460, %v3458
        %v4589 = vpack.c.b16 %v3461, %v3459
        %v4590 = vpack.c.b16 %v3464, %v3462
        %v4591 = vpack.c.b16 %v3465, %v3463
        %v4592 = vpack.c.b16 %v3468, %v3466
        %v4593 = vpack.c.b16 %v3469, %v3467
        %v4594 = vpack.c.b16 %v3472, %v3470
        %v4595 = vpack.c.b16 %v3473, %v3471
        %v4596 = vpack.c.b16 %v3476, %v3474
        %v4597 = vpack.c.b16 %v3477, %v3475
        %v4598 = vpack.c.b16 %v3480, %v3478
        %v4599 = vpack.c.b16 %v3481, %v3479
        %v4600 = vpack.c.b16 %v3484, %v3482
        %v4601 = vpack.c.b16 %v3485, %v3483
        %v4602 = vpack.c.b16 %v3488, %v3486
        %v4603 = vpack.c.b16 %v3489, %v3487
        %v4604 = vpack.c.b16 %v3492, %v3490
        %v4605 = vpack.c.b16 %v3493, %v3491
        %v4606 = vpack.c.b16 %v3496, %v3494
        %v4607 = vpack.c.b16 %v3497, %v3495
        %v4608 = vpack.c.b16 %v3500, %v3498
        %v4609 = vpack.c.b16 %v3501, %v3499
        %v4610 = vpack.c.b16 %v3504, %v3502
        %v4611 = vpack.c.b16 %v3505, %v3503
        %v4612 = vpack.c.b16 %v3508, %v3506
        %v4613 = vpack.c.b16 %v3509, %v3507
        %v4614 = vpack.c.b16 %v3512, %v3510
        %v4615 = vpack.c.b16 %v3513, %v3511
        %v4616 = vpack.c.b16 %v3516, %v3514
        %v4617 = vpack.c.b16 %v3517, %v3515
        %v4618 = vpack.c.b16 %v3520, %v3518
        %v4619 = vpack.c.b16 %v3521, %v3519
        %v4620 = vpack.c.b16 %v3524, %v3522
        %v4621 = vpack.c.b16 %v3525, %v3523
        %v4622 = vpack.c.b16 %v3528, %v3526
        %v4623 = vpack.c.b16 %v3529, %v3527
        %v4624 = vpack.c.b16 %v3532, %v3530
        %v4625 = vpack.c.b16 %v3533, %v3531
        %v4626 = vpack.c.b16 %v3536, %v3534
        %v4627 = vpack.c.b16 %v3537, %v3535
        %v4628 = vpack.c.b16 %v3540, %v3538
        %v4629 = vpack.c.b16 %v3541, %v3539
        %v4630 = vpack.c.b16 %v3544, %v3542
        %v4631 = vpack.c.b16 %v3545, %v3543
        %v4632 = vpack.c.b16 %v3548, %v3546
        %v4633 = vpack.c.b16 %v3549, %v3547
        %v4634 = vpack.c.b16 %v3552, %v3550
        %v4635 = vpack.c.b16 %v3553, %v3551
        %v4636 = vpack.c.b16 %v3556, %v3554
        %v4637 = vpack.c.b16 %v3557, %v3555
        %v4638 = vpack.c.b16 %v3560, %v3558
        %v4639 = vpack.c.b16 %v3561, %v3559
        %v4640 = vpack.c.b16 %v3564, %v3562
        %v4641 = vpack.c.b16 %v3565, %v3563
        %v4642 = vpack.c.b16 %v3568, %v3566
        %v4643 = vpack.c.b16 %v3569, %v3567
        %v4644 = vpack.c.b16 %v3572, %v3570
        %v4645 = vpack.c.b16 %v3573, %v3571
        %v4646 = vpack.c.b16 %v3576, %v3574
        %v4647 = vpack.c.b16 %v3577, %v3575
        %v4648 = vpack.c.b16 %v3580, %v3578
        %v4649 = vpack.c.b16 %v3581, %v3579
        %v4650 = vpack.c.b16 %v3584, %v3582
        %v4651 = vpack.c.b16 %v3585, %v3583
        %v4652 = vpack.c.b16 %v3588, %v3586
        %v4653 = vpack.c.b16 %v3589, %v3587
        %v4654 = vpack.c.b16 %v3592, %v3590
        %v4655 = vpack.c.b16 %v3593, %v3591
        %v4656 = vpack.c.b16 %v3596, %v3594
        %v4657 = vpack.c.b16 %v3597, %v3595
        %v4658 = vpack.c.b16 %v3600, %v3598
        %v4659 = vpack.c.b16 %v3601, %v3599
        %v4660 = vpack.c.b16 %v3604, %v3602
        %v4661 = vpack.c.b16 %v3605, %v3603
        %v4662 = vpack.c.b16 %v3608, %v3606
        %v4663 = vpack.c.b16 %v3609, %v3607
        %v4664 = vpack.c.b16 %v3612, %v3610
        %v4665 = vpack.c.b16 %v3613, %v3611
        %v4666 = vpack.c.b16 %v3616, %v3614
        %v4667 = vpack.c.b16 %v3617, %v3615
        %v4668 = vpack.c.b16 %v3620, %v3618
        %v4669 = vpack.c.b16 %v3621, %v3619
        %v4670 = vpack.c.b16 %v3624, %v3622
        %v4671 = vpack.c.b16 %v3625, %v3623
        %v4672 = vpack.c.b16 %v3628, %v3626
        %v4673 = vpack.c.b16 %v3629, %v3627
        %v4674 = vpack.c.b16 %v3632, %v3630
        %v4675 = vpack.c.b16 %v3633, %v3631
        %v4676 = vpack.c.b16 %v3636, %v3634
        %v4677 = vpack.c.b16 %v3637, %v3635
        %v4678 = vpack.c.b16 %v3640, %v3638
        %v4679 = vpack.c.b16 %v3641, %v3639
        %v4680 = vpack.c.b16 %v3644, %v3642
        %v4681 = vpack.c.b16 %v3645, %v3643
        %v4682 = vpack.c.b16 %v3648, %v3646
        %v4683 = vpack.c.b16 %v3649, %v3647
        %v4684 = vpack.c.b16 %v3652, %v3650
        %v4685 = vpack.c.b16 %v3653, %v3651
        %v4686 = vpack.c.b16 %v3656, %v3654
        %v4687 = vpack.c.b16 %v3657, %v3655
        %v4688 = vpack.c.b16 %v3660, %v3658
        %v4689 = vpack.c.b16 %v3661, %v3659
        %v4690 = vpack.c.b16 %v3664, %v3662
        %v4691 = vpack.c.b16 %v3665, %v3663
        %v4692 = vpack.c.b16 %v3668, %v3666
        %v4693 = vpack.c.b16 %v3669, %v3667
        %v4694 = vpack.c.b16 %v3672, %v3670
        %v4695 = vpack.c.b16 %v3673, %v3671
        %v4696 = vpack.c.b16 %v3676, %v3674
        %v4697 = vpack.c.b16 %v3677, %v3675
        %v4698 = vpack.c.b16 %v3680, %v3678
        %v4699 = vpack.c.b16 %v3681, %v3679
        %v4700 = vpack.c.b16 %v3684, %v3682
        %v4701 = vpack.c.b16 %v3685, %v3683
        %v4702 = vpack.c.b16 %v3688, %v3686
        %v4703 = vpack.c.b16 %v3689, %v3687
        %v4704 = vpack.c.b16 %v3692, %v3690
        %v4705 = vpack.c.b16 %v3693, %v3691
        %v4706 = vpack.c.b16 %v3696, %v3694
        %v4707 = vpack.c.b16 %v3697, %v3695
        %v4708 = vpack.c.b16 %v3700, %v3698
        %v4709 = vpack.c.b16 %v3701, %v3699
        %v4710 = vpack.c.b16 %v3704, %v3702
        %v4711 = vpack.c.b16 %v3705, %v3703
        %v4712 = vpack.c.b16 %v3708, %v3706
        %v4713 = vpack.c.b16 %v3709, %v3707
        %v4714 = vpack.c.b16 %v3712, %v3710
        %v4715 = vpack.c.b16 %v3713, %v3711
        %v4716 = vpack.c.b16 %v3716, %v3714
        %v4717 = vpack.c.b16 %v3717, %v3715
        %v4718 = vpack.c.b16 %v3720, %v3718
        %v4719 = vpack.c.b16 %v3721, %v3719
        %v4720 = vpack.c.b16 %v3724, %v3722
        %v4721 = vpack.c.b16 %v3725, %v3723
        %v4722 = vpack.c.b16 %v3728, %v3726
        %v4723 = vpack.c.b16 %v3729, %v3727
        %v4724 = vpack.c.b16 %v3732, %v3730
        %v4725 = vpack.c.b16 %v3733, %v3731
        %v4726 = vpack.c.b16 %v3736, %v3734
        %v4727 = vpack.c.b16 %v3737, %v3735
        %v4728 = vpack.c.b16 %v3740, %v3738
        %v4729 = vpack.c.b16 %v3741, %v3739
        %v4730 = vpack.c.b16 %v3744, %v3742
        %v4731 = vpack.c.b16 %v3745, %v3743
        %v4732 = vpack.c.b16 %v3748, %v3746
        %v4733 = vpack.c.b16 %v3749, %v3747
        %v4734 = vpack.c.b16 %v3752, %v3750
        %v4735 = vpack.c.b16 %v3753, %v3751
        %v4736 = vpack.c.b16 %v3756, %v3754
        %v4737 = vpack.c.b16 %v3757, %v3755
        %v4738 = vpack.c.b16 %v3760, %v3758
        %v4739 = vpack.c.b16 %v3761, %v3759
        %v4740 = vpack.c.b16 %v3764, %v3762
        %v4741 = vpack.c.b16 %v3765, %v3763
        %v4742 = vpack.c.b16 %v3768, %v3766
        %v4743 = vpack.c.b16 %v3769, %v3767
        %v4744 = vpack.c.b16 %v3772, %v3770
        %v4745 = vpack.c.b16 %v3773, %v3771
        %v4746 = vpack.c.b16 %v3776, %v3774
        %v4747 = vpack.c.b16 %v3777, %v3775
        %v4748 = vpack.c.b16 %v3780, %v3778
        %v4749 = vpack.c.b16 %v3781, %v3779
        %v4750 = vpack.c.b16 %v3784, %v3782
        %v4751 = vpack.c.b16 %v3785, %v3783
        %v4752 = vpack.c.b16 %v3788, %v3786
        %v4753 = vpack.c.b16 %v3789, %v3787
        %v4754 = vpack.c.b16 %v3792, %v3790
        %v4755 = vpack.c.b16 %v3793, %v3791
        %v4756 = vpack.c.b16 %v3796, %v3794
        %v4757 = vpack.c.b16 %v3797, %v3795
        %v4758 = vpack.c.b16 %v3800, %v3798
        %v4759 = vpack.c.b16 %v3801, %v3799
        %v4760 = vpack.c.b16 %v3804, %v3802
        %v4761 = vpack.c.b16 %v3805, %v3803
        %v4762 = vpack.c.b16 %v3808, %v3806
        %v4763 = vpack.c.b16 %v3809, %v3807
        %v4764 = vpack.c.b16 %v3812, %v3810
        %v4765 = vpack.c.b16 %v3813, %v3811
        %v4766 = vpack.c.b16 %v3816, %v3814
        %v4767 = vpack.c.b16 %v3817, %v3815
        %v4768 = vpack.c.b16 %v3820, %v3818
        %v4769 = vpack.c.b16 %v3821, %v3819
        %v4770 = vpack.c.b16 %v3824, %v3822
        %v4771 = vpack.c.b16 %v3825, %v3823
        %v4772 = vpack.c.b16 %v3828, %v3826
        %v4773 = vpack.c.b16 %v3829, %v3827
        %v4774 = vpack.c.b16 %v3832, %v3830
        %v4775 = vpack.c.b16 %v3833, %v3831
        %v4776 = vpack.c.b16 %v3836, %v3834
        %v4777 = vpack.c.b16 %v3837, %v3835
        %v4778 = vpack.c.b16 %v3840, %v3838
        %v4779 = vpack.c.b16 %v3841, %v3839
        %v4780 = vpack.c.b16 %v3844, %v3842
        %v4781 = vpack.c.b16 %v3845, %v3843
        %v4782 = vpack.c.b16 %v3848, %v3846
        %v4783 = vpack.c.b16 %v3849, %v3847
        %v4784 = vpack.c.b16 %v3852, %v3850
        %v4785 = vpack.c.b16 %v3853, %v3851
        %v4786 = vpack.c.b16 %v3856, %v3854
        %v4787 = vpack.c.b16 %v3857, %v3855
        %v4788 = vpack.c.b16 %v3860, %v3858
        %v4789 = vpack.c.b16 %v3861, %v3859
        %v4790 = vpack.c.b16 %v3864, %v3862
        %v4791 = vpack.c.b16 %v3865, %v3863
        %v4792 = vpack.c.b16 %v3868, %v3866
        %v4793 = vpack.c.b16 %v3869, %v3867
        %v4794 = vpack.c.b16 %v3872, %v3870
        %v4795 = vpack.c.b16 %v3873, %v3871
        %v4796 = vpack.c.b16 %v3876, %v3874
        %v4797 = vpack.c.b16 %v3877, %v3875
        %v4798 = vpack.c.b16 %v3880, %v3878
        %v4799 = vpack.c.b16 %v3881, %v3879
        %v4800 = vpack.c.b16 %v3884, %v3882
        %v4801 = vpack.c.b16 %v3885, %v3883
        %v4802 = vpack.c.b16 %v3888, %v3886
        %v4803 = vpack.c.b16 %v3889, %v3887
        %v4804 = vpack.c.b16 %v3892, %v3890
        %v4805 = vpack.c.b16 %v3893, %v3891
        %v4806 = vpack.c.b16 %v3896, %v3894
        %v4807 = vpack.c.b16 %v3897, %v3895
        %v4808 = vpack.c.b16 %v3900, %v3898
        %v4809 = vpack.c.b16 %v3901, %v3899
        %v4810 = vpack.c.b16 %v3904, %v3902
        %v4811 = vpack.c.b16 %v3905, %v3903
        %v4812 = vpack.c.b16 %v3908, %v3906
        %v4813 = vpack.c.b16 %v3909, %v3907
        %v4814 = vpack.c.b16 %v3912, %v3910
        %v4815 = vpack.c.b16 %v3913, %v3911
        %v4816 = vpack.c.b16 %v3916, %v3914
        %v4817 = vpack.c.b16 %v3917, %v3915
        %v4818 = vpack.c.b16 %v3920, %v3918
        %v4819 = vpack.c.b16 %v3921, %v3919
        %v4820 = vpack.c.b16 %v3924, %v3922
        %v4821 = vpack.c.b16 %v3925, %v3923
        %v4822 = vpack.c.b16 %v3928, %v3926
        %v4823 = vpack.c.b16 %v3929, %v3927
        %v4824 = vpack.c.b16 %v3932, %v3930
        %v4825 = vpack.c.b16 %v3933, %v3931
        %v4826 = vpack.c.b16 %v3936, %v3934
        %v4827 = vpack.c.b16 %v3937, %v3935
        %v4828 = vpack.c.b16 %v3940, %v3938
        %v4829 = vpack.c.b16 %v3941, %v3939
        %v4830 = vpack.c.b16 %v3944, %v3942
        %v4831 = vpack.c.b16 %v3945, %v3943
        %v4832 = vpack.c.b16 %v3948, %v3946
        %v4833 = vpack.c.b16 %v3949, %v3947
        %v4834 = vpack.c.b16 %v3952, %v3950
        %v4835 = vpack.c.b16 %v3953, %v3951
        %v4836 = vpack.c.b16 %v3956, %v3954
        %v4837 = vpack.c.b16 %v3957, %v3955
        %v4838 = vpack.c.b16 %v3960, %v3958
        %v4839 = vpack.c.b16 %v3961, %v3959
        %v4840 = vpack.c.b16 %v3964, %v3962
        %v4841 = vpack.c.b16 %v3965, %v3963
        %v4842 = vpack.c.b16 %v3968, %v3966
        %v4843 = vpack.c.b16 %v3969, %v3967
        %v4844 = vpack.c.b16 %v3972, %v3970
        %v4845 = vpack.c.b16 %v3973, %v3971
        %v4846 = vpack.c.b16 %v3976, %v3974
        %v4847 = vpack.c.b16 %v3977, %v3975
        %v4848 = vpack.c.b16 %v3980, %v3978
        %v4849 = vpack.c.b16 %v3981, %v3979
        %v4850 = vpack.c.b16 %v3984, %v3982
        %v4851 = vpack.c.b16 %v3985, %v3983
        %v4852 = vpack.c.b16 %v3988, %v3986
        %v4853 = vpack.c.b16 %v3989, %v3987
        %v4854 = vpack.c.b16 %v3992, %v3990
        %v4855 = vpack.c.b16 %v3993, %v3991
        %v4856 = vpack.c.b16 %v3996, %v3994
        %v4857 = vpack.c.b16 %v3997, %v3995
        %v4858 = vpack.c.b16 %v4000, %v3998
        %v4859 = vpack.c.b16 %v4001, %v3999
        %v4860 = vpack.c.b16 %v4004, %v4002
        %v4861 = vpack.c.b16 %v4005, %v4003
        %v4862 = vpack.c.b16 %v4008, %v4006
        %v4863 = vpack.c.b16 %v4009, %v4007
        %v4864 = vpack.c.b16 %v4012, %v4010
        %v4865 = vpack.c.b16 %v4013, %v4011
        %v4866 = vpack.c.b16 %v4016, %v4014
        %v4867 = vpack.c.b16 %v4017, %v4015
        %v4868 = vpack.c.b16 %v4020, %v4018
        %v4869 = vpack.c.b16 %v4021, %v4019
        %v4870 = vpack.c.b16 %v4024, %v4022
        %v4871 = vpack.c.b16 %v4025, %v4023
        %v4872 = vpack.c.b16 %v4028, %v4026
        %v4873 = vpack.c.b16 %v4029, %v4027
        %v4874 = vpack.c.b16 %v4032, %v4030
        %v4875 = vpack.c.b16 %v4033, %v4031
        %v4876 = vpack.c.b16 %v4036, %v4034
        %v4877 = vpack.c.b16 %v4037, %v4035
        %v4878 = vpack.c.b16 %v4040, %v4038
        %v4879 = vpack.c.b16 %v4041, %v4039
        %v4880 = vpack.c.b16 %v4044, %v4042
        %v4881 = vpack.c.b16 %v4045, %v4043
        %v4882 = vpack.c.b16 %v4048, %v4046
        %v4883 = vpack.c.b16 %v4049, %v4047
        %v4884 = vpack.c.b16 %v4052, %v4050
        %v4885 = vpack.c.b16 %v4053, %v4051
        %v4886 = vpack.c.b16 %v4056, %v4054
        %v4887 = vpack.c.b16 %v4057, %v4055
        %v4888 = vpack.c.b16 %v4060, %v4058
        %v4889 = vpack.c.b16 %v4061, %v4059
        %v4890 = vpack.c.b16 %v4064, %v4062
        %v4891 = vpack.c.b16 %v4065, %v4063
        %v4892 = vpack.c.b16 %v4068, %v4066
        %v4893 = vpack.c.b16 %v4069, %v4067
        %v4894 = vpack.c.b16 %v4072, %v4070
        %v4895 = vpack.c.b16 %v4073, %v4071
        %v4896 = vpack.c.b16 %v4076, %v4074
        %v4897 = vpack.c.b16 %v4077, %v4075
        %v4898 = vpack.c.b16 %v4080, %v4078
        %v4899 = vpack.c.b16 %v4081, %v4079
        %v4900 = vpack.c.b16 %v4084, %v4082
        %v4901 = vpack.c.b16 %v4085, %v4083
        %v4902 = vpack.c.b16 %v4088, %v4086
        %v4903 = vpack.c.b16 %v4089, %v4087
        %v4904 = vpack.c.b16 %v4092, %v4090
        %v4905 = vpack.c.b16 %v4093, %v4091
        %v4906 = vpack.c.b16 %v4096, %v4094
        %v4907 = vpack.c.b16 %v4097, %v4095
        %v4908 = vpack.c.b16 %v4100, %v4098
        %v4909 = vpack.c.b16 %v4101, %v4099
        %v4910 = vpack.c.b16 %v4104, %v4102
        %v4911 = vpack.c.b16 %v4105, %v4103
        %v4912 = vpack.c.b16 %v4108, %v4106
        %v4913 = vpack.c.b16 %v4109, %v4107
        %v4914 = vpack.c.b16 %v4112, %v4110
        %v4915 = vpack.c.b16 %v4113, %v4111
        %v4916 = vpack.c.b16 %v4116, %v4114
        %v4917 = vpack.c.b16 %v4117, %v4115
        %v4918 = vpack.c.b16 %v4120, %v4118
        %v4919 = vpack.c.b16 %v4121, %v4119
        %v4920 = vpack.c.b16 %v4124, %v4122
        %v4921 = vpack.c.b16 %v4125, %v4123
        %v4922 = vpack.c.b16 %v4128, %v4126
        %v4923 = vpack.c.b16 %v4129, %v4127
        %v4924 = vpack.c.b16 %v4132, %v4130
        %v4925 = vpack.c.b16 %v4133, %v4131
        %v4926 = vpack.c.b16 %v4136, %v4134
        %v4927 = vpack.c.b16 %v4137, %v4135
        %v4928 = vpack.c.b16 %v4140, %v4138
        %v4929 = vpack.c.b16 %v4141, %v4139
        %v4930 = vpack.c.b16 %v4144, %v4142
        %v4931 = vpack.c.b16 %v4145, %v4143
        %v4932 = vpack.c.b16 %v4148, %v4146
        %v4933 = vpack.c.b16 %v4149, %v4147
        %v4934 = vpack.c.b16 %v4152, %v4150
        %v4935 = vpack.c.b16 %v4153, %v4151
        %v4936 = vpack.c.b16 %v4156, %v4154
        %v4937 = vpack.c.b16 %v4157, %v4155
        %v4938 = vpack.c.b16 %v4160, %v4158
        %v4939 = vpack.c.b16 %v4161, %v4159
        %v4940 = vpack.c.b16 %v4164, %v4162
        %v4941 = vpack.c.b16 %v4165, %v4163
        %v4942 = vpack.c.b16 %v4168, %v4166
        %v4943 = vpack.c.b16 %v4169, %v4167
        %v4944 = vpack.c.b16 %v4172, %v4170
        %v4945 = vpack.c.b16 %v4173, %v4171
        %v4946 = vpack.c.b16 %v4176, %v4174
        %v4947 = vpack.c.b16 %v4177, %v4175
        %v4948 = vpack.c.b16 %v4180, %v4178
        %v4949 = vpack.c.b16 %v4181, %v4179
        %v4950 = vpack.c.b16 %v4184, %v4182
        %v4951 = vpack.c.b16 %v4185, %v4183
        %v4952 = vpack.c.b16 %v4188, %v4186
        %v4953 = vpack.c.b16 %v4189, %v4187
        %v4954 = vpack.c.b16 %v4192, %v4190
        %v4955 = vpack.c.b16 %v4193, %v4191
        %v4956 = vpack.c.b16 %v4196, %v4194
        %v4957 = vpack.c.b16 %v4197, %v4195
        %v4958 = vpack.c.b16 %v4200, %v4198
        %v4959 = vpack.c.b16 %v4201, %v4199
        %v4960 = vpack.c.b16 %v4204, %v4202
        %v4961 = vpack.c.b16 %v4205, %v4203
        %v4962 = vpack.c.b16 %v4208, %v4206
        %v4963 = vpack.c.b16 %v4209, %v4207
        %v4964 = vpack.c.b16 %v4212, %v4210
        %v4965 = vpack.c.b16 %v4213, %v4211
        %v4966 = vpack.c.b16 %v4216, %v4214
        %v4967 = vpack.c.b16 %v4217, %v4215
        %v4968 = vpack.c.b16 %v4220, %v4218
        %v4969 = vpack.c.b16 %v4221, %v4219
        %v4970 = vpack.c.b16 %v4224, %v4222
        %v4971 = vpack.c.b16 %v4225, %v4223
        %v4972 = vpack.c.b16 %v4228, %v4226
        %v4973 = vpack.c.b16 %v4229, %v4227
        %v4974 = vpack.c.b16 %v4232, %v4230
        %v4975 = vpack.c.b16 %v4233, %v4231
        %v4976 = vpack.c.b16 %v4236, %v4234
        %v4977 = vpack.c.b16 %v4237, %v4235
        %v4978 = vpack.c.b16 %v4240, %v4238
        %v4979 = vpack.c.b16 %v4241, %v4239
        %v4980 = vpack.c.b16 %v4244, %v4242
        %v4981 = vpack.c.b16 %v4245, %v4243
        %v4982 = vpack.c.b16 %v4248, %v4246
        %v4983 = vpack.c.b16 %v4249, %v4247
        %v4984 = vpack.c.b16 %v4252, %v4250
        %v4985 = vpack.c.b16 %v4253, %v4251
        %v4986 = vpack.c.b16 %v4256, %v4254
        %v4987 = vpack.c.b16 %v4257, %v4255
        %v4988 = vpack.c.b16 %v4260, %v4258
        %v4989 = vpack.c.b16 %v4261, %v4259
        %v4990 = vpack.c.b16 %v4264, %v4262
        %v4991 = vpack.c.b16 %v4265, %v4263
        %v4992 = vpack.c.b16 %v4268, %v4266
        %v4993 = vpack.c.b16 %v4269, %v4267
        %v4994 = vpack.c.b16 %v4272, %v4270
        %v4995 = vpack.c.b16 %v4273, %v4271
        %v4996 = vpack.c.b16 %v4276, %v4274
        %v4997 = vpack.c.b16 %v4277, %v4275
        %v4998 = vpack.c.b16 %v4280, %v4278
        %v4999 = vpack.c.b16 %v4281, %v4279
        %v5000 = vpack.c.b16 %v4284, %v4282
        %v5001 = vpack.c.b16 %v4285, %v4283
        %v5002 = vpack.c.b16 %v4288, %v4286
        %v5003 = vpack.c.b16 %v4289, %v4287
        %v5004 = vpack.c.b16 %v4292, %v4290
        %v5005 = vpack.c.b16 %v4293, %v4291
        %v5006 = vpack.c.b16 %v4296, %v4294
        %v5007 = vpack.c.b16 %v4297, %v4295
        %v5008 = vpack.c.b16 %v4300, %v4298
        %v5009 = vpack.c.b16 %v4301, %v4299
        %v5010 = vpack.c.b16 %v4304, %v4302
        %v5011 = vpack.c.b16 %v4305, %v4303
        %v5012 = vpack.c.b16 %v4308, %v4306
        %v5013 = vpack.c.b16 %v4309, %v4307
        %v5014 = vpack.c.b16 %v4312, %v4310
        %v5015 = vpack.c.b16 %v4313, %v4311
        %v5016 = vpack.c.b16 %v4316, %v4314
        %v5017 = vpack.c.b16 %v4317, %v4315
        %v5018 = vpack.c.b16 %v4320, %v4318
        %v5019 = vpack.c.b16 %v4321, %v4319
        %v5020 = vpack.c.b16 %v4324, %v4322
        %v5021 = vpack.c.b16 %v4325, %v4323
        %v5022 = vpack.c.b16 %v4328, %v4326
        %v5023 = vpack.c.b16 %v4329, %v4327
        %v5024 = vpack.c.b16 %v4332, %v4330
        %v5025 = vpack.c.b16 %v4333, %v4331
        %v5026 = vpack.c.b16 %v4336, %v4334
        %v5027 = vpack.c.b16 %v4337, %v4335
        %v5028 = vpack.c.b16 %v4340, %v4338
        %v5029 = vpack.c.b16 %v4341, %v4339
        %v5030 = vpack.c.b16 %v4344, %v4342
        %v5031 = vpack.c.b16 %v4345, %v4343
        %v5032 = vpack.c.b16 %v4348, %v4346
        %v5033 = vpack.c.b16 %v4349, %v4347
        %v5034 = vpack.c.b16 %v4352, %v4350
        %v5035 = vpack.c.b16 %v4353, %v4351
        %v5036 = vpack.c.b16 %v4356, %v4354
        %v5037 = vpack.c.b16 %v4357, %v4355
        %v5038 = vpack.c.b16 %v4360, %v4358
        %v5039 = vpack.c.b16 %v4361, %v4359
        %v5040 = vpack.c.b16 %v4364, %v4362
        %v5041 = vpack.c.b16 %v4365, %v4363
        %v5042 = vpack.c.b16 %v4368, %v4366
        %v5043 = vpack.c.b16 %v4369, %v4367
        %v5044 = vpack.c.b16 %v4372, %v4370
        %v5045 = vpack.c.b16 %v4373, %v4371
        %v5046 = vpack.c.b16 %v4376, %v4374
        %v5047 = vpack.c.b16 %v4377, %v4375
        %v5048 = vpack.c.b16 %v4380, %v4378
        %v5049 = vpack.c.b16 %v4381, %v4379
        %v5050 = vpack.c.b16 %v4384, %v4382
        %v5051 = vpack.c.b16 %v4385, %v4383
        %v5052 = vpack.c.b16 %v4388, %v4386
        %v5053 = vpack.c.b16 %v4389, %v4387
        %v5054 = vpack.c.b16 %v4392, %v4390
        %v5055 = vpack.c.b16 %v4393, %v4391
        %v5056 = vpack.c.b16 %v4396, %v4394
        %v5057 = vpack.c.b16 %v4397, %v4395
        %v5058 = vpack.c.b16 %v4400, %v4398
        %v5059 = vpack.c.b16 %v4401, %v4399
        %v5060 = vpack.c.b16 %v4404, %v4402
        %v5061 = vpack.c.b16 %v4405, %v4403
        %v5062 = vpack.c.b16 %v4408, %v4406
        %v5063 = vpack.c.b16 %v4409, %v4407
        %v5064 = vpack.c.b16 %v4412, %v4410
        %v5065 = vpack.c.b16 %v4413, %v4411
        %v5066 = vpack.c.b16 %v4416, %v4414
        %v5067 = vpack.c.b16 %v4417, %v4415
        %v5068 = vpack.c.b16 %v4420, %v4418
        %v5069 = vpack.c.b16 %v4421, %v4419
        %v5070 = vpack.c.b16 %v4424, %v4422
        %v5071 = vpack.c.b16 %v4425, %v4423
        %v5072 = vpack.c.b16 %v4428, %v4426
        %v5073 = vpack.c.b16 %v4429, %v4427
        %v5074 = vpack.c.b16 %v4432, %v4430
        %v5075 = vpack.c.b16 %v4433, %v4431
        %v5076 = vpack.c.b16 %v4436, %v4434
        %v5077 = vpack.c.b16 %v4437, %v4435
        %v5078 = vpack.c.b16 %v4440, %v4438
        %v5079 = vpack.c.b16 %v4441, %v4439
        %v5080 = vpack.c.b16 %v4444, %v4442
        %v5081 = vpack.c.b16 %v4445, %v4443
        %v5082 = vpack.c.b16 %v4448, %v4446
        %v5083 = vpack.c.b16 %v4449, %v4447
        %v5084 = vpack.c.b16 %v4452, %v4450
        %v5085 = vpack.c.b16 %v4453, %v4451
        %v5086 = vpack.c.b16 %v4456, %v4454
        %v5087 = vpack.c.b16 %v4457, %v4455
        %v5088 = vpack.c.b16 %v4460, %v4458
        %v5089 = vpack.c.b16 %v4461, %v4459
        %v5090 = vpack.c.b16 %v4464, %v4462
        %v5091 = vpack.c.b16 %v4465, %v4463
        %v5092 = vpack.c.b16 %v4468, %v4466
        %v5093 = vpack.c.b16 %v4469, %v4467
        %v5094 = vpack.c.b16 %v4472, %v4470
        %v5095 = vpack.c.b16 %v4473, %v4471
        %v5096 = vpack.c.b16 %v4476, %v4474
        %v5097 = vpack.c.b16 %v4477, %v4475
        %v5098 = vpack.c.b16 %v4480, %v4478
        %v5099 = vpack.c.b16 %v4481, %v4479
        %v5100 = vpack.c.b16 %v4484, %v4482
        %v5101 = vpack.c.b16 %v4485, %v4483
        %v5102 = vpack.c.b16 %v4488, %v4486
        %v5103 = vpack.c.b16 %v4489, %v4487
        %v5104 = vpack.c.b16 %v4492, %v4490
        %v5105 = vpack.c.b16 %v4493, %v4491
        %v5106 = vpack.c.b16 %v4496, %v4494
        %v5107 = vpack.c.b16 %v4497, %v4495
        %v5108 = vpack.c.b16 %v4500, %v4498
        %v5109 = vpack.c.b16 %v4501, %v4499
        %v5110 = vpack.c.b16 %v4504, %v4502
        %v5111 = vpack.c.b16 %v4505, %v4503
        %v5112 = vpack.c.b16 %v4508, %v4506
        %v5113 = vpack.c.b16 %v4509, %v4507
        %v5114 = vpack.c.b16 %v4512, %v4510
        %v5115 = vpack.c.b16 %v4513, %v4511
        %v5116 = vpack.c.b16 %v4516, %v4514
        %v5117 = vpack.c.b16 %v4517, %v4515
        %v5118 = vpack.c.b16 %v4520, %v4518
        %v5119 = vpack.c.b16 %v4521, %v4519
        %v5120 = vpack.c.b16 %v4524, %v4522
        %v5121 = vpack.c.b16 %v4525, %v4523
        %v5122 = vpack.c.b16 %v4528, %v4526
        %v5123 = vpack.c.b16 %v4529, %v4527
        %v5124 = vpack.c.b16 %v4532, %v4530
        %v5125 = vpack.c.b16 %v4533, %v4531
        %v5126 = vpack.c.b16 %v4536, %v4534
        %v5127 = vpack.c.b16 %v4537, %v4535
        %v5128 = vpack.c.b16 %v4540, %v4538
        %v5129 = vpack.c.b16 %v4541, %v4539
        %v5130 = vpack.c.b16 %v4544, %v4542
        %v5131 = vpack.c.b16 %v4545, %v4543
        %v5132 = vpack.c.b16 %v4548, %v4546
        %v5133 = vpack.c.b16 %v4549, %v4547
        %v5134 = vpack.c.b16 %v4552, %v4550
        %v5135 = vpack.c.b16 %v4553, %v4551
        %v5136 = vpack.c.b16 %v4556, %v4554
        %v5137 = vpack.c.b16 %v4557, %v4555
        %v5138 = vpack.c.b16 %v4560, %v4558
        %v5139 = vpack.c.b16 %v4561, %v4559
        %v5140 = vpack.c.b16 %v4564, %v4562
        %v5141 = vpack.c.b16 %v4565, %v4563
        %5718 = vmatprep.subr.bf16.mxu0 %v4567
        %5719 = vmatpush1.bf16.msra.mxu0 %v4566
        %5720 = vmatprep.subr.bf16.mxu0 %v4569
        %5721 = vmatpush1.bf16.msra.mxu0 %v4568
        %5722 = vmatprep.subr.bf16.mxu0 %v4571
        %5723 = vmatpush1.bf16.msra.mxu0 %v4570
        %5724 = vmatprep.subr.bf16.mxu0 %v4573
        %5725 = vmatpush1.bf16.msra.mxu0 %v4572
        %5726 = vmatprep.subr.bf16.mxu0 %v4575
        %5727 = vmatpush1.bf16.msra.mxu0 %v4574
        %5728 = vmatprep.subr.bf16.mxu0 %v4577
        %5729 = vmatpush1.bf16.msra.mxu0 %v4576
        %5730 = vmatprep.subr.bf16.mxu0 %v4579
        %5731 = vmatpush1.bf16.msra.mxu0 %v4578
        %5732 = vmatprep.subr.bf16.mxu0 %v4581
        %5733 = vmatpush1.bf16.msra.mxu0 %v4580
        %5734 = vmatprep.subr.bf16.mxu0 %v4583
        %5735 = vmatpush1.bf16.msra.mxu0 %v4582
        %5736 = vmatprep.subr.bf16.mxu0 %v4585
        %5737 = vmatpush1.bf16.msra.mxu0 %v4584
        %5738 = vmatprep.subr.bf16.mxu0 %v4587
        %5739 = vmatpush1.bf16.msra.mxu0 %v4586
        %5740 = vmatprep.subr.bf16.mxu0 %v4589
        %5741 = vmatpush1.bf16.msra.mxu0 %v4588
        %5742 = vmatprep.subr.bf16.mxu0 %v4591
        %5743 = vmatpush1.bf16.msra.mxu0 %v4590
        %5744 = vmatprep.subr.bf16.mxu0 %v4593
        %5745 = vmatpush1.bf16.msra.mxu0 %v4592
        %5746 = vmatprep.subr.bf16.mxu0 %v4595
        %5747 = vmatpush1.bf16.msra.mxu0 %v4594
        %5748 = vmatprep.subr.bf16.mxu0 %v4597
        %5749 = vmatpush1.bf16.msra.mxu0 %v4596
        %5750 = vmatprep.mubr.bf16.mxu0 %v2263
        %5751 = vmatmul.mubr.bf16.gmra.mrb[0].mxu0 %v2262
        %v5752 = vpop.f32.mrb[0].mxu0
        %v5753 = vadd.f32 0.0, %v5752
        %v5754 = vpop.f32.mrb[0].mxu0
        %v5755 = vadd.f32 0.0, %v5754
        %v5756 = vpop.f32.mrb[0].mxu0
        %v5757 = vadd.f32 0.0, %v5756
        %v5758 = vpop.f32.mrb[0].mxu0
        %v5759 = vadd.f32 0.0, %v5758
        %5760 = vmatprep.mubr.bf16.mxu0 %v2299
        %5761 = vmatmul.mubr.bf16.gmra.mrb[0].mxu0 %v2298
        %v5762 = vpop.f32.mrb[0].mxu0
        %v5763 = vadd.f32 0.0, %v5762
        %v5764 = vpop.f32.mrb[0].mxu0
        %v5765 = vadd.f32 0.0, %v5764
        %v5766 = vpop.f32.mrb[0].mxu0
        %v5767 = vadd.f32 0.0, %v5766
        %v5768 = vpop.f32.mrb[0].mxu0
        %v5769 = vadd.f32 0.0, %v5768
        %5770 = vmatprep.mubr.bf16.mxu0 %v2335
        %5771 = vmatmul.mubr.bf16.gmra.mrb[0].mxu0 %v2334
        %v5772 = vpop.f32.mrb[0].mxu0
        %v5773 = vadd.f32 0.0, %v5772
        %v5774 = vpop.f32.mrb[0].mxu0
        %v5775 = vadd.f32 0.0, %v5774
        %v5776 = vpop.f32.mrb[0].mxu0
        %v5777 = vadd.f32 0.0, %v5776
        %v5778 = vpop.f32.mrb[0].mxu0
        %v5779 = vadd.f32 0.0, %v5778
        %5780 = vmatprep.mubr.bf16.mxu0 %v2371
        %5781 = vmatmul.mubr.bf16.gmra.mrb[0].mxu0 %v2370
        %v5782 = vpop.f32.mrb[0].mxu0
        %v5783 = vadd.f32 0.0, %v5782
        %v5784 = vpop.f32.mrb[0].mxu0
        %v5785 = vadd.f32 0.0, %v5784
        %v5786 = vpop.f32.mrb[0].mxu0
        %v5787 = vadd.f32 0.0, %v5786
        %v5788 = vpop.f32.mrb[0].mxu0
        %v5789 = vadd.f32 0.0, %v5788
        %5790 = vmatprep.mubr.bf16.mxu0 %v2407
        %5791 = vmatmul.mubr.bf16.gmra.mrb[0].mxu0 %v2406
        %v5792 = vpop.f32.mrb[0].mxu0
        %v5793 = vadd.f32 0.0, %v5792
        %v5794 = vpop.f32.mrb[0].mxu0
        %v5795 = vadd.f32 0.0, %v5794
        %v5796 = vpop.f32.mrb[0].mxu0
        %v5797 = vadd.f32 0.0, %v5796
        %v5798 = vpop.f32.mrb[0].mxu0
        %v5799 = vadd.f32 0.0, %v5798
        %5800 = vmatprep.mubr.bf16.mxu0 %v2443
        %5801 = vmatmul.mubr.bf16.gmra.mrb[0].mxu0 %v2442
        %v5802 = vpop.f32.mrb[0].mxu0
        %v5803 = vadd.f32 0.0, %v5802
        %v5804 = vpop.f32.mrb[0].mxu0
        %v5805 = vadd.f32 0.0, %v5804
        %v5806 = vpop.f32.mrb[0].mxu0
        %v5807 = vadd.f32 0.0, %v5806
        %v5808 = vpop.f32.mrb[0].mxu0
        %v5809 = vadd.f32 0.0, %v5808
        %5810 = vmatprep.mubr.bf16.mxu0 %v2479
        %5811 = vmatmul.mubr.bf16.gmra.mrb[0].mxu0 %v2478
        %v5812 = vpop.f32.mrb[0].mxu0
        %v5813 = vadd.f32 0.0, %v5812
        %v5814 = vpop.f32.mrb[0].mxu0
        %v5815 = vadd.f32 0.0, %v5814
        %v5816 = vpop.f32.mrb[0].mxu0
        %v5817 = vadd.f32 0.0, %v5816
        %v5818 = vpop.f32.mrb[0].mxu0
        %v5819 = vadd.f32 0.0, %v5818
        %5820 = vmatprep.mubr.bf16.mxu0 %v2515
        %5821 = vmatmul.mubr.bf16.gmra.mrb[0].mxu0 %v2514
        %v5822 = vpop.f32.mrb[0].mxu0
        %v5823 = vadd.f32 0.0, %v5822
        %v5824 = vpop.f32.mrb[0].mxu0
        %v5825 = vadd.f32 0.0, %v5824
        %v5826 = vpop.f32.mrb[0].mxu0
        %v5827 = vadd.f32 0.0, %v5826
        %v5828 = vpop.f32.mrb[0].mxu0
        %v5829 = vadd.f32 0.0, %v5828
        %5830 = vdwg.mxu0
        %5831 = vmatprep.subr.bf16.mxu0 %v4599
        %5832 = vmatpush1.bf16.msra.mxu0 %v4598
        %5833 = vmatprep.subr.bf16.mxu0 %v4601
        %5834 = vmatpush1.bf16.msra.mxu0 %v4600
        %5835 = vmatprep.subr.bf16.mxu0 %v4603
        %5836 = vmatpush1.bf16.msra.mxu0 %v4602
        %5837 = vmatprep.subr.bf16.mxu0 %v4605
        %5838 = vmatpush1.bf16.msra.mxu0 %v4604
        %5839 = vmatprep.subr.bf16.mxu0 %v4607
        %5840 = vmatpush1.bf16.msra.mxu0 %v4606
        %5841 = vmatprep.subr.bf16.mxu0 %v4609
        %5842 = vmatpush1.bf16.msra.mxu0 %v4608
        %5843 = vmatprep.subr.bf16.mxu0 %v4611
        %5844 = vmatpush1.bf16.msra.mxu0 %v4610
        %5845 = vmatprep.subr.bf16.mxu0 %v4613
        %5846 = vmatpush1.bf16.msra.mxu0 %v4612
        %5847 = vmatprep.subr.bf16.mxu0 %v4615
        %5848 = vmatpush1.bf16.msra.mxu0 %v4614
        %5849 = vmatprep.subr.bf16.mxu0 %v4617
        %5850 = vmatpush1.bf16.msra.mxu0 %v4616
        %5851 = vmatprep.subr.bf16.mxu0 %v4619
        %5852 = vmatpush1.bf16.msra.mxu0 %v4618
        %5853 = vmatprep.subr.bf16.mxu0 %v4621
        %5854 = vmatpush1.bf16.msra.mxu0 %v4620
        %5855 = vmatprep.subr.bf16.mxu0 %v4623
        %5856 = vmatpush1.bf16.msra.mxu0 %v4622
        %5857 = vmatprep.subr.bf16.mxu0 %v4625
        %5858 = vmatpush1.bf16.msra.mxu0 %v4624
        %5859 = vmatprep.subr.bf16.mxu0 %v4627
        %5860 = vmatpush1.bf16.msra.mxu0 %v4626
        %5861 = vmatprep.subr.bf16.mxu0 %v4629
        %5862 = vmatpush1.bf16.msra.mxu0 %v4628
        %5863 = vmatprep.mubr.bf16.mxu0 %v2265
        %5864 = vmatmul.mubr.bf16.gmra.mrb[0].mxu0 %v2264
        %v5865 = vpop.f32.mrb[0].mxu0
        %v5866 = vadd.f32 %v5753, %v5865
        %v5867 = vpop.f32.mrb[0].mxu0
        %v5868 = vadd.f32 %v5755, %v5867
        %v5869 = vpop.f32.mrb[0].mxu0
        %v5870 = vadd.f32 %v5757, %v5869
        %v5871 = vpop.f32.mrb[0].mxu0
        %v5872 = vadd.f32 %v5759, %v5871
        %5873 = vmatprep.mubr.bf16.mxu0 %v2301
        %5874 = vmatmul.mubr.bf16.gmra.mrb[0].mxu0 %v2300
        %v5875 = vpop.f32.mrb[0].mxu0
        %v5876 = vadd.f32 %v5763, %v5875
        %v5877 = vpop.f32.mrb[0].mxu0
        %v5878 = vadd.f32 %v5765, %v5877
        %v5879 = vpop.f32.mrb[0].mxu0
        %v5880 = vadd.f32 %v5767, %v5879
        %v5881 = vpop.f32.mrb[0].mxu0
        %v5882 = vadd.f32 %v5769, %v5881
        %5883 = vmatprep.mubr.bf16.mxu0 %v2337
        %5884 = vmatmul.mubr.bf16.gmra.mrb[0].mxu0 %v2336
        %v5885 = vpop.f32.mrb[0].mxu0
        %v5886 = vadd.f32 %v5773, %v5885
        %v5887 = vpop.f32.mrb[0].mxu0
        %v5888 = vadd.f32 %v5775, %v5887
        %v5889 = vpop.f32.mrb[0].mxu0
        %v5890 = vadd.f32 %v5777, %v5889
        %v5891 = vpop.f32.mrb[0].mxu0
        %v5892 = vadd.f32 %v5779, %v5891
        %5893 = vmatprep.mubr.bf16.mxu0 %v2373
        %5894 = vmatmul.mubr.bf16.gmra.mrb[0].mxu0 %v2372
        %v5895 = vpop.f32.mrb[0].mxu0
        %v5896 = vadd.f32 %v5783, %v5895
        %v5897 = vpop.f32.mrb[0].mxu0
        %v5898 = vadd.f32 %v5785, %v5897
        %v5899 = vpop.f32.mrb[0].mxu0
        %v5900 = vadd.f32 %v5787, %v5899
        %v5901 = vpop.f32.mrb[0].mxu0
        %v5902 = vadd.f32 %v5789, %v5901
        %5903 = vmatprep.mubr.bf16.mxu0 %v2409
        %5904 = vmatmul.mubr.bf16.gmra.mrb[0].mxu0 %v2408
        %v5905 = vpop.f32.mrb[0].mxu0
        %v5906 = vadd.f32 %v5793, %v5905
        %v5907 = vpop.f32.mrb[0].mxu0
        %v5908 = vadd.f32 %v5795, %v5907
        %v5909 = vpop.f32.mrb[0].mxu0
        %v5910 = vadd.f32 %v5797, %v5909
        %v5911 = vpop.f32.mrb[0].mxu0
        %v5912 = vadd.f32 %v5799, %v5911
        %5913 = vmatprep.mubr.bf16.mxu0 %v2445
        %5914 = vmatmul.mubr.bf16.gmra.mrb[0].mxu0 %v2444
        %v5915 = vpop.f32.mrb[0].mxu0
        %v5916 = vadd.f32 %v5803, %v5915
        %v5917 = vpop.f32.mrb[0].mxu0
        %v5918 = vadd.f32 %v5805, %v5917
        %v5919 = vpop.f32.mrb[0].mxu0
        %v5920 = vadd.f32 %v5807, %v5919
        %v5921 = vpop.f32.mrb[0].mxu0
        %v5922 = vadd.f32 %v5809, %v5921
        %5923 = vmatprep.mubr.bf16.mxu0 %v2481
        %5924 = vmatmul.mubr.bf16.gmra.mrb[0].mxu0 %v2480
        %v5925 = vpop.f32.mrb[0].mxu0
        %v5926 = vadd.f32 %v5813, %v5925
        %v5927 = vpop.f32.mrb[0].mxu0
        %v5928 = vadd.f32 %v5815, %v5927
        %v5929 = vpop.f32.mrb[0].mxu0
        %v5930 = vadd.f32 %v5817, %v5929
        %v5931 = vpop.f32.mrb[0].mxu0
        %v5932 = vadd.f32 %v5819, %v5931
        %5933 = vmatprep.mubr.bf16.mxu0 %v2517
        %5934 = vmatmul.mubr.bf16.gmra.mrb[0].mxu0 %v2516
        %v5935 = vpop.f32.mrb[0].mxu0
        %v5936 = vadd.f32 %v5823, %v5935
        %v5937 = vpop.f32.mrb[0].mxu0
        %v5938 = vadd.f32 %v5825, %v5937
        %v5939 = vpop.f32.mrb[0].mxu0
        %v5940 = vadd.f32 %v5827, %v5939
        %v5941 = vpop.f32.mrb[0].mxu0
        %v5942 = vadd.f32 %v5829, %v5941
        %5943 = vdwg.mxu0
        %5944 = vmatprep.subr.bf16.mxu0 %v4631
        %5945 = vmatpush1.bf16.msra.mxu0 %v4630
        %5946 = vmatprep.subr.bf16.mxu0 %v4633
        %5947 = vmatpush1.bf16.msra.mxu0 %v4632
        %5948 = vmatprep.subr.bf16.mxu0 %v4635
        %5949 = vmatpush1.bf16.msra.mxu0 %v4634
        %5950 = vmatprep.subr.bf16.mxu0 %v4637
        %5951 = vmatpush1.bf16.msra.mxu0 %v4636
        %5952 = vmatprep.subr.bf16.mxu0 %v4639
        %5953 = vmatpush1.bf16.msra.mxu0 %v4638
        %5954 = vmatprep.subr.bf16.mxu0 %v4641
        %5955 = vmatpush1.bf16.msra.mxu0 %v4640
        %5956 = vmatprep.subr.bf16.mxu0 %v4643
        %5957 = vmatpush1.bf16.msra.mxu0 %v4642
        %5958 = vmatprep.subr.bf16.mxu0 %v4645
        %5959 = vmatpush1.bf16.msra.mxu0 %v4644
        %5960 = vmatprep.subr.bf16.mxu0 %v4647
        %5961 = vmatpush1.bf16.msra.mxu0 %v4646
        %5962 = vmatprep.subr.bf16.mxu0 %v4649
        %5963 = vmatpush1.bf16.msra.mxu0 %v4648
        %5964 = vmatprep.subr.bf16.mxu0 %v4651
        %5965 = vmatpush1.bf16.msra.mxu0 %v4650
        %5966 = vmatprep.subr.bf16.mxu0 %v4653
        %5967 = vmatpush1.bf16.msra.mxu0 %v4652
        %5968 = vmatprep.subr.bf16.mxu0 %v4655
        %5969 = vmatpush1.bf16.msra.mxu0 %v4654
        %5970 = vmatprep.subr.bf16.mxu0 %v4657
        %5971 = vmatpush1.bf16.msra.mxu0 %v4656
        %5972 = vmatprep.subr.bf16.mxu0 %v4659
        %5973 = vmatpush1.bf16.msra.mxu0 %v4658
        %5974 = vmatprep.subr.bf16.mxu0 %v4661
        %5975 = vmatpush1.bf16.msra.mxu0 %v4660
        %5976 = vmatprep.mubr.bf16.mxu0 %v2267
        %5977 = vmatmul.mubr.bf16.gmra.mrb[0].mxu0 %v2266
        %v5978 = vpop.f32.mrb[0].mxu0
        %v5979 = vadd.f32 %v5866, %v5978
        %v5980 = vpop.f32.mrb[0].mxu0
        %v5981 = vadd.f32 %v5868, %v5980
        %v5982 = vpop.f32.mrb[0].mxu0
        %v5983 = vadd.f32 %v5870, %v5982
        %v5984 = vpop.f32.mrb[0].mxu0
        %v5985 = vadd.f32 %v5872, %v5984
        %5986 = vmatprep.mubr.bf16.mxu0 %v2303
        %5987 = vmatmul.mubr.bf16.gmra.mrb[0].mxu0 %v2302
        %v5988 = vpop.f32.mrb[0].mxu0
        %v5989 = vadd.f32 %v5876, %v5988
        %v5990 = vpop.f32.mrb[0].mxu0
        %v5991 = vadd.f32 %v5878, %v5990
        %v5992 = vpop.f32.mrb[0].mxu0
        %v5993 = vadd.f32 %v5880, %v5992
        %v5994 = vpop.f32.mrb[0].mxu0
        %v5995 = vadd.f32 %v5882, %v5994
        %5996 = vmatprep.mubr.bf16.mxu0 %v2339
        %5997 = vmatmul.mubr.bf16.gmra.mrb[0].mxu0 %v2338
        %v5998 = vpop.f32.mrb[0].mxu0
        %v5999 = vadd.f32 %v5886, %v5998
        %v6000 = vpop.f32.mrb[0].mxu0
        %v6001 = vadd.f32 %v5888, %v6000
        %v6002 = vpop.f32.mrb[0].mxu0
        %v6003 = vadd.f32 %v5890, %v6002
        %v6004 = vpop.f32.mrb[0].mxu0
        %v6005 = vadd.f32 %v5892, %v6004
        %6006 = vmatprep.mubr.bf16.mxu0 %v2375
        %6007 = vmatmul.mubr.bf16.gmra.mrb[0].mxu0 %v2374
        %v6008 = vpop.f32.mrb[0].mxu0
        %v6009 = vadd.f32 %v5896, %v6008
        %v6010 = vpop.f32.mrb[0].mxu0
        %v6011 = vadd.f32 %v5898, %v6010
        %v6012 = vpop.f32.mrb[0].mxu0
        %v6013 = vadd.f32 %v5900, %v6012
        %v6014 = vpop.f32.mrb[0].mxu0
        %v6015 = vadd.f32 %v5902, %v6014
        %6016 = vmatprep.mubr.bf16.mxu0 %v2411
        %6017 = vmatmul.mubr.bf16.gmra.mrb[0].mxu0 %v2410
        %v6018 = vpop.f32.mrb[0].mxu0
        %v6019 = vadd.f32 %v5906, %v6018
        %v6020 = vpop.f32.mrb[0].mxu0
        %v6021 = vadd.f32 %v5908, %v6020
        %v6022 = vpop.f32.mrb[0].mxu0
        %v6023 = vadd.f32 %v5910, %v6022
        %v6024 = vpop.f32.mrb[0].mxu0
        %v6025 = vadd.f32 %v5912, %v6024
        %6026 = vmatprep.mubr.bf16.mxu0 %v2447
        %6027 = vmatmul.mubr.bf16.gmra.mrb[0].mxu0 %v2446
        %v6028 = vpop.f32.mrb[0].mxu0
        %v6029 = vadd.f32 %v5916, %v6028
        %v6030 = vpop.f32.mrb[0].mxu0
        %v6031 = vadd.f32 %v5918, %v6030
        %v6032 = vpop.f32.mrb[0].mxu0
        %v6033 = vadd.f32 %v5920, %v6032
        %v6034 = vpop.f32.mrb[0].mxu0
        %v6035 = vadd.f32 %v5922, %v6034
        %6036 = vmatprep.mubr.bf16.mxu0 %v2483
        %6037 = vmatmul.mubr.bf16.gmra.mrb[0].mxu0 %v2482
        %v6038 = vpop.f32.mrb[0].mxu0
        %v6039 = vadd.f32 %v5926, %v6038
        %v6040 = vpop.f32.mrb[0].mxu0
        %v6041 = vadd.f32 %v5928, %v6040
        %v6042 = vpop.f32.mrb[0].mxu0
        %v6043 = vadd.f32 %v5930, %v6042
        %v6044 = vpop.f32.mrb[0].mxu0
        %v6045 = vadd.f32 %v5932, %v6044
        %6046 = vmatprep.mubr.bf16.mxu0 %v2519
        %6047 = vmatmul.mubr.bf16.gmra.mrb[0].mxu0 %v2518
        %v6048 = vpop.f32.mrb[0].mxu0
        %v6049 = vadd.f32 %v5936, %v6048
        %v6050 = vpop.f32.mrb[0].mxu0
        %v6051 = vadd.f32 %v5938, %v6050
        %v6052 = vpop.f32.mrb[0].mxu0
        %v6053 = vadd.f32 %v5940, %v6052
        %v6054 = vpop.f32.mrb[0].mxu0
        %v6055 = vadd.f32 %v5942, %v6054
        %6056 = vdwg.mxu0
        %6057 = vmatprep.subr.bf16.mxu0 %v4663
        %6058 = vmatpush1.bf16.msra.mxu0 %v4662
        %6059 = vmatprep.subr.bf16.mxu0 %v4665
        %6060 = vmatpush1.bf16.msra.mxu0 %v4664
        %6061 = vmatprep.subr.bf16.mxu0 %v4667
        %6062 = vmatpush1.bf16.msra.mxu0 %v4666
        %6063 = vmatprep.subr.bf16.mxu0 %v4669
        %6064 = vmatpush1.bf16.msra.mxu0 %v4668
        %6065 = vmatprep.subr.bf16.mxu0 %v4671
        %6066 = vmatpush1.bf16.msra.mxu0 %v4670
        %6067 = vmatprep.subr.bf16.mxu0 %v4673
        %6068 = vmatpush1.bf16.msra.mxu0 %v4672
        %6069 = vmatprep.subr.bf16.mxu0 %v4675
        %6070 = vmatpush1.bf16.msra.mxu0 %v4674
        %6071 = vmatprep.subr.bf16.mxu0 %v4677
        %6072 = vmatpush1.bf16.msra.mxu0 %v4676
        %6073 = vmatprep.subr.bf16.mxu0 %v4679
        %6074 = vmatpush1.bf16.msra.mxu0 %v4678
        %6075 = vmatprep.subr.bf16.mxu0 %v4681
        %6076 = vmatpush1.bf16.msra.mxu0 %v4680
        %6077 = vmatprep.subr.bf16.mxu0 %v4683
        %6078 = vmatpush1.bf16.msra.mxu0 %v4682
        %6079 = vmatprep.subr.bf16.mxu0 %v4685
        %6080 = vmatpush1.bf16.msra.mxu0 %v4684
        %6081 = vmatprep.subr.bf16.mxu0 %v4687
        %6082 = vmatpush1.bf16.msra.mxu0 %v4686
        %6083 = vmatprep.subr.bf16.mxu0 %v4689
        %6084 = vmatpush1.bf16.msra.mxu0 %v4688
        %6085 = vmatprep.subr.bf16.mxu0 %v4691
        %6086 = vmatpush1.bf16.msra.mxu0 %v4690
        %6087 = vmatprep.subr.bf16.mxu0 %v4693
        %6088 = vmatpush1.bf16.msra.mxu0 %v4692
        %6089 = vmatprep.mubr.bf16.mxu0 %v2269
        %6090 = vmatmul.mubr.bf16.gmra.mrb[0].mxu0 %v2268
        %v6091 = vpop.f32.mrb[0].mxu0
        %v6092 = vadd.f32 %v5979, %v6091
        %v6093 = vpop.f32.mrb[0].mxu0
        %v6094 = vadd.f32 %v5981, %v6093
        %v6095 = vpop.f32.mrb[0].mxu0
        %v6096 = vadd.f32 %v5983, %v6095
        %v6097 = vpop.f32.mrb[0].mxu0
        %v6098 = vadd.f32 %v5985, %v6097
        %6099 = vmatprep.mubr.bf16.mxu0 %v2305
        %6100 = vmatmul.mubr.bf16.gmra.mrb[0].mxu0 %v2304
        %v6101 = vpop.f32.mrb[0].mxu0
        %v6102 = vadd.f32 %v5989, %v6101
        %v6103 = vpop.f32.mrb[0].mxu0
        %v6104 = vadd.f32 %v5991, %v6103
        %v6105 = vpop.f32.mrb[0].mxu0
        %v6106 = vadd.f32 %v5993, %v6105
        %v6107 = vpop.f32.mrb[0].mxu0
        %v6108 = vadd.f32 %v5995, %v6107
        %6109 = vmatprep.mubr.bf16.mxu0 %v2341
        %6110 = vmatmul.mubr.bf16.gmra.mrb[0].mxu0 %v2340
        %v6111 = vpop.f32.mrb[0].mxu0
        %v6112 = vadd.f32 %v5999, %v6111
        %v6113 = vpop.f32.mrb[0].mxu0
        %v6114 = vadd.f32 %v6001, %v6113
        %v6115 = vpop.f32.mrb[0].mxu0
        %v6116 = vadd.f32 %v6003, %v6115
        %v6117 = vpop.f32.mrb[0].mxu0
        %v6118 = vadd.f32 %v6005, %v6117
        %6119 = vmatprep.mubr.bf16.mxu0 %v2377
        %6120 = vmatmul.mubr.bf16.gmra.mrb[0].mxu0 %v2376
        %v6121 = vpop.f32.mrb[0].mxu0
        %v6122 = vadd.f32 %v6009, %v6121
        %v6123 = vpop.f32.mrb[0].mxu0
        %v6124 = vadd.f32 %v6011, %v6123
        %v6125 = vpop.f32.mrb[0].mxu0
        %v6126 = vadd.f32 %v6013, %v6125
        %v6127 = vpop.f32.mrb[0].mxu0
        %v6128 = vadd.f32 %v6015, %v6127
        %6129 = vmatprep.mubr.bf16.mxu0 %v2413
        %6130 = vmatmul.mubr.bf16.gmra.mrb[0].mxu0 %v2412
        %v6131 = vpop.f32.mrb[0].mxu0
        %v6132 = vadd.f32 %v6019, %v6131
        %v6133 = vpop.f32.mrb[0].mxu0
        %v6134 = vadd.f32 %v6021, %v6133
        %v6135 = vpop.f32.mrb[0].mxu0
        %v6136 = vadd.f32 %v6023, %v6135
        %v6137 = vpop.f32.mrb[0].mxu0
        %v6138 = vadd.f32 %v6025, %v6137
        %6139 = vmatprep.mubr.bf16.mxu0 %v2449
        %6140 = vmatmul.mubr.bf16.gmra.mrb[0].mxu0 %v2448
        %v6141 = vpop.f32.mrb[0].mxu0
        %v6142 = vadd.f32 %v6029, %v6141
        %v6143 = vpop.f32.mrb[0].mxu0
        %v6144 = vadd.f32 %v6031, %v6143
        %v6145 = vpop.f32.mrb[0].mxu0
        %v6146 = vadd.f32 %v6033, %v6145
        %v6147 = vpop.f32.mrb[0].mxu0
        %v6148 = vadd.f32 %v6035, %v6147
        %6149 = vmatprep.mubr.bf16.mxu0 %v2485
        %6150 = vmatmul.mubr.bf16.gmra.mrb[0].mxu0 %v2484
        %v6151 = vpop.f32.mrb[0].mxu0
        %v6152 = vadd.f32 %v6039, %v6151
        %v6153 = vpop.f32.mrb[0].mxu0
        %v6154 = vadd.f32 %v6041, %v6153
        %v6155 = vpop.f32.mrb[0].mxu0
        %v6156 = vadd.f32 %v6043, %v6155
        %v6157 = vpop.f32.mrb[0].mxu0
        %v6158 = vadd.f32 %v6045, %v6157
        %6159 = vmatprep.mubr.bf16.mxu0 %v2521
        %6160 = vmatmul.mubr.bf16.gmra.mrb[0].mxu0 %v2520
        %v6161 = vpop.f32.mrb[0].mxu0
        %v6162 = vadd.f32 %v6049, %v6161
        %v6163 = vpop.f32.mrb[0].mxu0
        %v6164 = vadd.f32 %v6051, %v6163
        %v6165 = vpop.f32.mrb[0].mxu0
        %v6166 = vadd.f32 %v6053, %v6165
        %v6167 = vpop.f32.mrb[0].mxu0
        %v6168 = vadd.f32 %v6055, %v6167
        %6169 = vdwg.mxu0
        %6170 = vmatprep.subr.bf16.mxu0 %v4695
        %6171 = vmatpush1.bf16.msra.mxu0 %v4694
        %6172 = vmatprep.subr.bf16.mxu0 %v4697
        %6173 = vmatpush1.bf16.msra.mxu0 %v4696
        %6174 = vmatprep.subr.bf16.mxu0 %v4699
        %6175 = vmatpush1.bf16.msra.mxu0 %v4698
        %6176 = vmatprep.subr.bf16.mxu0 %v4701
        %6177 = vmatpush1.bf16.msra.mxu0 %v4700
        %6178 = vmatprep.subr.bf16.mxu0 %v4703
        %6179 = vmatpush1.bf16.msra.mxu0 %v4702
        %6180 = vmatprep.subr.bf16.mxu0 %v4705
        %6181 = vmatpush1.bf16.msra.mxu0 %v4704
        %6182 = vmatprep.subr.bf16.mxu0 %v4707
        %6183 = vmatpush1.bf16.msra.mxu0 %v4706
        %6184 = vmatprep.subr.bf16.mxu0 %v4709
        %6185 = vmatpush1.bf16.msra.mxu0 %v4708
        %6186 = vmatprep.subr.bf16.mxu0 %v4711
        %6187 = vmatpush1.bf16.msra.mxu0 %v4710
        %6188 = vmatprep.subr.bf16.mxu0 %v4713
        %6189 = vmatpush1.bf16.msra.mxu0 %v4712
        %6190 = vmatprep.subr.bf16.mxu0 %v4715
        %6191 = vmatpush1.bf16.msra.mxu0 %v4714
        %6192 = vmatprep.subr.bf16.mxu0 %v4717
        %6193 = vmatpush1.bf16.msra.mxu0 %v4716
        %6194 = vmatprep.subr.bf16.mxu0 %v4719
        %6195 = vmatpush1.bf16.msra.mxu0 %v4718
        %6196 = vmatprep.subr.bf16.mxu0 %v4721
        %6197 = vmatpush1.bf16.msra.mxu0 %v4720
        %6198 = vmatprep.subr.bf16.mxu0 %v4723
        %6199 = vmatpush1.bf16.msra.mxu0 %v4722
        %6200 = vmatprep.subr.bf16.mxu0 %v4725
        %6201 = vmatpush1.bf16.msra.mxu0 %v4724
        %6202 = vmatprep.mubr.bf16.mxu0 %v2271
        %6203 = vmatmul.mubr.bf16.gmra.mrb[0].mxu0 %v2270
        %v6204 = vpop.f32.mrb[0].mxu0
        %v6205 = vadd.f32 %v6092, %v6204
        %v6206 = vpop.f32.mrb[0].mxu0
        %v6207 = vadd.f32 %v6094, %v6206
        %v6208 = vpop.f32.mrb[0].mxu0
        %v6209 = vadd.f32 %v6096, %v6208
        %v6210 = vpop.f32.mrb[0].mxu0
        %v6211 = vadd.f32 %v6098, %v6210
        %6212 = vmatprep.mubr.bf16.mxu0 %v2307
        %6213 = vmatmul.mubr.bf16.gmra.mrb[0].mxu0 %v2306
        %v6214 = vpop.f32.mrb[0].mxu0
        %v6215 = vadd.f32 %v6102, %v6214
        %v6216 = vpop.f32.mrb[0].mxu0
        %v6217 = vadd.f32 %v6104, %v6216
        %v6218 = vpop.f32.mrb[0].mxu0
        %v6219 = vadd.f32 %v6106, %v6218
        %v6220 = vpop.f32.mrb[0].mxu0
        %v6221 = vadd.f32 %v6108, %v6220
        %6222 = vmatprep.mubr.bf16.mxu0 %v2343
        %6223 = vmatmul.mubr.bf16.gmra.mrb[0].mxu0 %v2342
        %v6224 = vpop.f32.mrb[0].mxu0
        %v6225 = vadd.f32 %v6112, %v6224
        %v6226 = vpop.f32.mrb[0].mxu0
        %v6227 = vadd.f32 %v6114, %v6226
        %v6228 = vpop.f32.mrb[0].mxu0
        %v6229 = vadd.f32 %v6116, %v6228
        %v6230 = vpop.f32.mrb[0].mxu0
        %v6231 = vadd.f32 %v6118, %v6230
        %6232 = vmatprep.mubr.bf16.mxu0 %v2379
        %6233 = vmatmul.mubr.bf16.gmra.mrb[0].mxu0 %v2378
        %v6234 = vpop.f32.mrb[0].mxu0
        %v6235 = vadd.f32 %v6122, %v6234
        %v6236 = vpop.f32.mrb[0].mxu0
        %v6237 = vadd.f32 %v6124, %v6236
        %v6238 = vpop.f32.mrb[0].mxu0
        %v6239 = vadd.f32 %v6126, %v6238
        %v6240 = vpop.f32.mrb[0].mxu0
        %v6241 = vadd.f32 %v6128, %v6240
        %6242 = vmatprep.mubr.bf16.mxu0 %v2415
        %6243 = vmatmul.mubr.bf16.gmra.mrb[0].mxu0 %v2414
        %v6244 = vpop.f32.mrb[0].mxu0
        %v6245 = vadd.f32 %v6132, %v6244
        %v6246 = vpop.f32.mrb[0].mxu0
        %v6247 = vadd.f32 %v6134, %v6246
        %v6248 = vpop.f32.mrb[0].mxu0
        %v6249 = vadd.f32 %v6136, %v6248
        %v6250 = vpop.f32.mrb[0].mxu0
        %v6251 = vadd.f32 %v6138, %v6250
        %6252 = vmatprep.mubr.bf16.mxu0 %v2451
        %6253 = vmatmul.mubr.bf16.gmra.mrb[0].mxu0 %v2450
        %v6254 = vpop.f32.mrb[0].mxu0
        %v6255 = vadd.f32 %v6142, %v6254
        %v6256 = vpop.f32.mrb[0].mxu0
        %v6257 = vadd.f32 %v6144, %v6256
        %v6258 = vpop.f32.mrb[0].mxu0
        %v6259 = vadd.f32 %v6146, %v6258
        %v6260 = vpop.f32.mrb[0].mxu0
        %v6261 = vadd.f32 %v6148, %v6260
        %6262 = vmatprep.mubr.bf16.mxu0 %v2487
        %6263 = vmatmul.mubr.bf16.gmra.mrb[0].mxu0 %v2486
        %v6264 = vpop.f32.mrb[0].mxu0
        %v6265 = vadd.f32 %v6152, %v6264
        %v6266 = vpop.f32.mrb[0].mxu0
        %v6267 = vadd.f32 %v6154, %v6266
        %v6268 = vpop.f32.mrb[0].mxu0
        %v6269 = vadd.f32 %v6156, %v6268
        %v6270 = vpop.f32.mrb[0].mxu0
        %v6271 = vadd.f32 %v6158, %v6270
        %6272 = vmatprep.mubr.bf16.mxu0 %v2523
        %6273 = vmatmul.mubr.bf16.gmra.mrb[0].mxu0 %v2522
        %v6274 = vpop.f32.mrb[0].mxu0
        %v6275 = vadd.f32 %v6162, %v6274
        %v6276 = vpop.f32.mrb[0].mxu0
        %v6277 = vadd.f32 %v6164, %v6276
        %v6278 = vpop.f32.mrb[0].mxu0
        %v6279 = vadd.f32 %v6166, %v6278
        %v6280 = vpop.f32.mrb[0].mxu0
        %v6281 = vadd.f32 %v6168, %v6280
        %6282 = vdwg.mxu0
        %6283 = vmatprep.subr.bf16.mxu0 %v4727
        %6284 = vmatpush1.bf16.msra.mxu0 %v4726
        %6285 = vmatprep.subr.bf16.mxu0 %v4729
        %6286 = vmatpush1.bf16.msra.mxu0 %v4728
        %6287 = vmatprep.subr.bf16.mxu0 %v4731
        %6288 = vmatpush1.bf16.msra.mxu0 %v4730
        %6289 = vmatprep.subr.bf16.mxu0 %v4733
        %6290 = vmatpush1.bf16.msra.mxu0 %v4732
        %6291 = vmatprep.subr.bf16.mxu0 %v4735
        %6292 = vmatpush1.bf16.msra.mxu0 %v4734
        %6293 = vmatprep.subr.bf16.mxu0 %v4737
        %6294 = vmatpush1.bf16.msra.mxu0 %v4736
        %6295 = vmatprep.subr.bf16.mxu0 %v4739
        %6296 = vmatpush1.bf16.msra.mxu0 %v4738
        %6297 = vmatprep.subr.bf16.mxu0 %v4741
        %6298 = vmatpush1.bf16.msra.mxu0 %v4740
        %6299 = vmatprep.subr.bf16.mxu0 %v4743
        %6300 = vmatpush1.bf16.msra.mxu0 %v4742
        %6301 = vmatprep.subr.bf16.mxu0 %v4745
        %6302 = vmatpush1.bf16.msra.mxu0 %v4744
        %6303 = vmatprep.subr.bf16.mxu0 %v4747
        %6304 = vmatpush1.bf16.msra.mxu0 %v4746
        %6305 = vmatprep.subr.bf16.mxu0 %v4749
        %6306 = vmatpush1.bf16.msra.mxu0 %v4748
        %6307 = vmatprep.subr.bf16.mxu0 %v4751
        %6308 = vmatpush1.bf16.msra.mxu0 %v4750
        %6309 = vmatprep.subr.bf16.mxu0 %v4753
        %6310 = vmatpush1.bf16.msra.mxu0 %v4752
        %6311 = vmatprep.subr.bf16.mxu0 %v4755
        %6312 = vmatpush1.bf16.msra.mxu0 %v4754
        %6313 = vmatprep.subr.bf16.mxu0 %v4757
        %6314 = vmatpush1.bf16.msra.mxu0 %v4756
        %6315 = vmatprep.mubr.bf16.mxu0 %v2273
        %6316 = vmatmul.mubr.bf16.gmra.mrb[0].mxu0 %v2272
        %v6317 = vpop.f32.mrb[0].mxu0
        %v6318 = vadd.f32 %v6205, %v6317
        %v6319 = vpop.f32.mrb[0].mxu0
        %v6320 = vadd.f32 %v6207, %v6319
        %v6321 = vpop.f32.mrb[0].mxu0
        %v6322 = vadd.f32 %v6209, %v6321
        %v6323 = vpop.f32.mrb[0].mxu0
        %v6324 = vadd.f32 %v6211, %v6323
        %6325 = vmatprep.mubr.bf16.mxu0 %v2309
        %6326 = vmatmul.mubr.bf16.gmra.mrb[0].mxu0 %v2308
        %v6327 = vpop.f32.mrb[0].mxu0
        %v6328 = vadd.f32 %v6215, %v6327
        %v6329 = vpop.f32.mrb[0].mxu0
        %v6330 = vadd.f32 %v6217, %v6329
        %v6331 = vpop.f32.mrb[0].mxu0
        %v6332 = vadd.f32 %v6219, %v6331
        %v6333 = vpop.f32.mrb[0].mxu0
        %v6334 = vadd.f32 %v6221, %v6333
        %6335 = vmatprep.mubr.bf16.mxu0 %v2345
        %6336 = vmatmul.mubr.bf16.gmra.mrb[0].mxu0 %v2344
        %v6337 = vpop.f32.mrb[0].mxu0
        %v6338 = vadd.f32 %v6225, %v6337
        %v6339 = vpop.f32.mrb[0].mxu0
        %v6340 = vadd.f32 %v6227, %v6339
        %v6341 = vpop.f32.mrb[0].mxu0
        %v6342 = vadd.f32 %v6229, %v6341
        %v6343 = vpop.f32.mrb[0].mxu0
        %v6344 = vadd.f32 %v6231, %v6343
        %6345 = vmatprep.mubr.bf16.mxu0 %v2381
        %6346 = vmatmul.mubr.bf16.gmra.mrb[0].mxu0 %v2380
        %v6347 = vpop.f32.mrb[0].mxu0
        %v6348 = vadd.f32 %v6235, %v6347
        %v6349 = vpop.f32.mrb[0].mxu0
        %v6350 = vadd.f32 %v6237, %v6349
        %v6351 = vpop.f32.mrb[0].mxu0
        %v6352 = vadd.f32 %v6239, %v6351
        %v6353 = vpop.f32.mrb[0].mxu0
        %v6354 = vadd.f32 %v6241, %v6353
        %6355 = vmatprep.mubr.bf16.mxu0 %v2417
        %6356 = vmatmul.mubr.bf16.gmra.mrb[0].mxu0 %v2416
        %v6357 = vpop.f32.mrb[0].mxu0
        %v6358 = vadd.f32 %v6245, %v6357
        %v6359 = vpop.f32.mrb[0].mxu0
        %v6360 = vadd.f32 %v6247, %v6359
        %v6361 = vpop.f32.mrb[0].mxu0
        %v6362 = vadd.f32 %v6249, %v6361
        %v6363 = vpop.f32.mrb[0].mxu0
        %v6364 = vadd.f32 %v6251, %v6363
        %6365 = vmatprep.mubr.bf16.mxu0 %v2453
        %6366 = vmatmul.mubr.bf16.gmra.mrb[0].mxu0 %v2452
        %v6367 = vpop.f32.mrb[0].mxu0
        %v6368 = vadd.f32 %v6255, %v6367
        %v6369 = vpop.f32.mrb[0].mxu0
        %v6370 = vadd.f32 %v6257, %v6369
        %v6371 = vpop.f32.mrb[0].mxu0
        %v6372 = vadd.f32 %v6259, %v6371
        %v6373 = vpop.f32.mrb[0].mxu0
        %v6374 = vadd.f32 %v6261, %v6373
        %6375 = vmatprep.mubr.bf16.mxu0 %v2489
        %6376 = vmatmul.mubr.bf16.gmra.mrb[0].mxu0 %v2488
        %v6377 = vpop.f32.mrb[0].mxu0
        %v6378 = vadd.f32 %v6265, %v6377
        %v6379 = vpop.f32.mrb[0].mxu0
        %v6380 = vadd.f32 %v6267, %v6379
        %v6381 = vpop.f32.mrb[0].mxu0
        %v6382 = vadd.f32 %v6269, %v6381
        %v6383 = vpop.f32.mrb[0].mxu0
        %v6384 = vadd.f32 %v6271, %v6383
        %6385 = vmatprep.mubr.bf16.mxu0 %v2525
        %6386 = vmatmul.mubr.bf16.gmra.mrb[0].mxu0 %v2524
        %v6387 = vpop.f32.mrb[0].mxu0
        %v6388 = vadd.f32 %v6275, %v6387
        %v6389 = vpop.f32.mrb[0].mxu0
        %v6390 = vadd.f32 %v6277, %v6389
        %v6391 = vpop.f32.mrb[0].mxu0
        %v6392 = vadd.f32 %v6279, %v6391
        %v6393 = vpop.f32.mrb[0].mxu0
        %v6394 = vadd.f32 %v6281, %v6393
        %6395 = vdwg.mxu0
        %6396 = vmatprep.subr.bf16.mxu0 %v4759
        %6397 = vmatpush1.bf16.msra.mxu0 %v4758
        %6398 = vmatprep.subr.bf16.mxu0 %v4761
        %6399 = vmatpush1.bf16.msra.mxu0 %v4760
        %6400 = vmatprep.subr.bf16.mxu0 %v4763
        %6401 = vmatpush1.bf16.msra.mxu0 %v4762
        %6402 = vmatprep.subr.bf16.mxu0 %v4765
        %6403 = vmatpush1.bf16.msra.mxu0 %v4764
        %6404 = vmatprep.subr.bf16.mxu0 %v4767
        %6405 = vmatpush1.bf16.msra.mxu0 %v4766
        %6406 = vmatprep.subr.bf16.mxu0 %v4769
        %6407 = vmatpush1.bf16.msra.mxu0 %v4768
        %6408 = vmatprep.subr.bf16.mxu0 %v4771
        %6409 = vmatpush1.bf16.msra.mxu0 %v4770
        %6410 = vmatprep.subr.bf16.mxu0 %v4773
        %6411 = vmatpush1.bf16.msra.mxu0 %v4772
        %6412 = vmatprep.subr.bf16.mxu0 %v4775
        %6413 = vmatpush1.bf16.msra.mxu0 %v4774
        %6414 = vmatprep.subr.bf16.mxu0 %v4777
        %6415 = vmatpush1.bf16.msra.mxu0 %v4776
        %6416 = vmatprep.subr.bf16.mxu0 %v4779
        %6417 = vmatpush1.bf16.msra.mxu0 %v4778
        %6418 = vmatprep.subr.bf16.mxu0 %v4781
        %6419 = vmatpush1.bf16.msra.mxu0 %v4780
        %6420 = vmatprep.subr.bf16.mxu0 %v4783
        %6421 = vmatpush1.bf16.msra.mxu0 %v4782
        %6422 = vmatprep.subr.bf16.mxu0 %v4785
        %6423 = vmatpush1.bf16.msra.mxu0 %v4784
        %6424 = vmatprep.subr.bf16.mxu0 %v4787
        %6425 = vmatpush1.bf16.msra.mxu0 %v4786
        %6426 = vmatprep.subr.bf16.mxu0 %v4789
        %6427 = vmatpush1.bf16.msra.mxu0 %v4788
        %6428 = vmatprep.mubr.bf16.mxu0 %v2275
        %6429 = vmatmul.mubr.bf16.gmra.mrb[0].mxu0 %v2274
        %v6430 = vpop.f32.mrb[0].mxu0
        %v6431 = vadd.f32 %v6318, %v6430
        %v6432 = vpop.f32.mrb[0].mxu0
        %v6433 = vadd.f32 %v6320, %v6432
        %v6434 = vpop.f32.mrb[0].mxu0
        %v6435 = vadd.f32 %v6322, %v6434
        %v6436 = vpop.f32.mrb[0].mxu0
        %v6437 = vadd.f32 %v6324, %v6436
        %6438 = vmatprep.mubr.bf16.mxu0 %v2311
        %6439 = vmatmul.mubr.bf16.gmra.mrb[0].mxu0 %v2310
        %v6440 = vpop.f32.mrb[0].mxu0
        %v6441 = vadd.f32 %v6328, %v6440
        %v6442 = vpop.f32.mrb[0].mxu0
        %v6443 = vadd.f32 %v6330, %v6442
        %v6444 = vpop.f32.mrb[0].mxu0
        %v6445 = vadd.f32 %v6332, %v6444
        %v6446 = vpop.f32.mrb[0].mxu0
        %v6447 = vadd.f32 %v6334, %v6446
        %6448 = vmatprep.mubr.bf16.mxu0 %v2347
        %6449 = vmatmul.mubr.bf16.gmra.mrb[0].mxu0 %v2346
        %v6450 = vpop.f32.mrb[0].mxu0
        %v6451 = vadd.f32 %v6338, %v6450
        %v6452 = vpop.f32.mrb[0].mxu0
        %v6453 = vadd.f32 %v6340, %v6452
        %v6454 = vpop.f32.mrb[0].mxu0
        %v6455 = vadd.f32 %v6342, %v6454
        %v6456 = vpop.f32.mrb[0].mxu0
        %v6457 = vadd.f32 %v6344, %v6456
        %6458 = vmatprep.mubr.bf16.mxu0 %v2383
        %6459 = vmatmul.mubr.bf16.gmra.mrb[0].mxu0 %v2382
        %v6460 = vpop.f32.mrb[0].mxu0
        %v6461 = vadd.f32 %v6348, %v6460
        %v6462 = vpop.f32.mrb[0].mxu0
        %v6463 = vadd.f32 %v6350, %v6462
        %v6464 = vpop.f32.mrb[0].mxu0
        %v6465 = vadd.f32 %v6352, %v6464
        %v6466 = vpop.f32.mrb[0].mxu0
        %v6467 = vadd.f32 %v6354, %v6466
        %6468 = vmatprep.mubr.bf16.mxu0 %v2419
        %6469 = vmatmul.mubr.bf16.gmra.mrb[0].mxu0 %v2418
        %v6470 = vpop.f32.mrb[0].mxu0
        %v6471 = vadd.f32 %v6358, %v6470
        %v6472 = vpop.f32.mrb[0].mxu0
        %v6473 = vadd.f32 %v6360, %v6472
        %v6474 = vpop.f32.mrb[0].mxu0
        %v6475 = vadd.f32 %v6362, %v6474
        %v6476 = vpop.f32.mrb[0].mxu0
        %v6477 = vadd.f32 %v6364, %v6476
        %6478 = vmatprep.mubr.bf16.mxu0 %v2455
        %6479 = vmatmul.mubr.bf16.gmra.mrb[0].mxu0 %v2454
        %v6480 = vpop.f32.mrb[0].mxu0
        %v6481 = vadd.f32 %v6368, %v6480
        %v6482 = vpop.f32.mrb[0].mxu0
        %v6483 = vadd.f32 %v6370, %v6482
        %v6484 = vpop.f32.mrb[0].mxu0
        %v6485 = vadd.f32 %v6372, %v6484
        %v6486 = vpop.f32.mrb[0].mxu0
        %v6487 = vadd.f32 %v6374, %v6486
        %6488 = vmatprep.mubr.bf16.mxu0 %v2491
        %6489 = vmatmul.mubr.bf16.gmra.mrb[0].mxu0 %v2490
        %v6490 = vpop.f32.mrb[0].mxu0
        %v6491 = vadd.f32 %v6378, %v6490
        %v6492 = vpop.f32.mrb[0].mxu0
        %v6493 = vadd.f32 %v6380, %v6492
        %v6494 = vpop.f32.mrb[0].mxu0
        %v6495 = vadd.f32 %v6382, %v6494
        %v6496 = vpop.f32.mrb[0].mxu0
        %v6497 = vadd.f32 %v6384, %v6496
        %6498 = vmatprep.mubr.bf16.mxu0 %v2527
        %6499 = vmatmul.mubr.bf16.gmra.mrb[0].mxu0 %v2526
        %v6500 = vpop.f32.mrb[0].mxu0
        %v6501 = vadd.f32 %v6388, %v6500
        %v6502 = vpop.f32.mrb[0].mxu0
        %v6503 = vadd.f32 %v6390, %v6502
        %v6504 = vpop.f32.mrb[0].mxu0
        %v6505 = vadd.f32 %v6392, %v6504
        %v6506 = vpop.f32.mrb[0].mxu0
        %v6507 = vadd.f32 %v6394, %v6506
        %6508 = vdwg.mxu0
        %6509 = vmatprep.subr.bf16.mxu0 %v4791
        %6510 = vmatpush1.bf16.msra.mxu0 %v4790
        %6511 = vmatprep.subr.bf16.mxu0 %v4793
        %6512 = vmatpush1.bf16.msra.mxu0 %v4792
        %6513 = vmatprep.subr.bf16.mxu0 %v4795
        %6514 = vmatpush1.bf16.msra.mxu0 %v4794
        %6515 = vmatprep.subr.bf16.mxu0 %v4797
        %6516 = vmatpush1.bf16.msra.mxu0 %v4796
        %6517 = vmatprep.subr.bf16.mxu0 %v4799
        %6518 = vmatpush1.bf16.msra.mxu0 %v4798
        %6519 = vmatprep.subr.bf16.mxu0 %v4801
        %6520 = vmatpush1.bf16.msra.mxu0 %v4800
        %6521 = vmatprep.subr.bf16.mxu0 %v4803
        %6522 = vmatpush1.bf16.msra.mxu0 %v4802
        %6523 = vmatprep.subr.bf16.mxu0 %v4805
        %6524 = vmatpush1.bf16.msra.mxu0 %v4804
        %6525 = vmatprep.subr.bf16.mxu0 %v4807
        %6526 = vmatpush1.bf16.msra.mxu0 %v4806
        %6527 = vmatprep.subr.bf16.mxu0 %v4809
        %6528 = vmatpush1.bf16.msra.mxu0 %v4808
        %6529 = vmatprep.subr.bf16.mxu0 %v4811
        %6530 = vmatpush1.bf16.msra.mxu0 %v4810
        %6531 = vmatprep.subr.bf16.mxu0 %v4813
        %6532 = vmatpush1.bf16.msra.mxu0 %v4812
        %6533 = vmatprep.subr.bf16.mxu0 %v4815
        %6534 = vmatpush1.bf16.msra.mxu0 %v4814
        %6535 = vmatprep.subr.bf16.mxu0 %v4817
        %6536 = vmatpush1.bf16.msra.mxu0 %v4816
        %6537 = vmatprep.subr.bf16.mxu0 %v4819
        %6538 = vmatpush1.bf16.msra.mxu0 %v4818
        %6539 = vmatprep.subr.bf16.mxu0 %v4821
        %6540 = vmatpush1.bf16.msra.mxu0 %v4820
        %6541 = vmatprep.mubr.bf16.mxu0 %v2277
        %6542 = vmatmul.mubr.bf16.gmra.mrb[0].mxu0 %v2276
        %v6543 = vpop.f32.mrb[0].mxu0
        %v6544 = vadd.f32 %v6431, %v6543
        %v6545 = vpop.f32.mrb[0].mxu0
        %v6546 = vadd.f32 %v6433, %v6545
        %v6547 = vpop.f32.mrb[0].mxu0
        %v6548 = vadd.f32 %v6435, %v6547
        %v6549 = vpop.f32.mrb[0].mxu0
        %v6550 = vadd.f32 %v6437, %v6549
        %6551 = vmatprep.mubr.bf16.mxu0 %v2313
        %6552 = vmatmul.mubr.bf16.gmra.mrb[0].mxu0 %v2312
        %v6553 = vpop.f32.mrb[0].mxu0
        %v6554 = vadd.f32 %v6441, %v6553
        %v6555 = vpop.f32.mrb[0].mxu0
        %v6556 = vadd.f32 %v6443, %v6555
        %v6557 = vpop.f32.mrb[0].mxu0
        %v6558 = vadd.f32 %v6445, %v6557
        %v6559 = vpop.f32.mrb[0].mxu0
        %v6560 = vadd.f32 %v6447, %v6559
        %6561 = vmatprep.mubr.bf16.mxu0 %v2349
        %6562 = vmatmul.mubr.bf16.gmra.mrb[0].mxu0 %v2348
        %v6563 = vpop.f32.mrb[0].mxu0
        %v6564 = vadd.f32 %v6451, %v6563
        %v6565 = vpop.f32.mrb[0].mxu0
        %v6566 = vadd.f32 %v6453, %v6565
        %v6567 = vpop.f32.mrb[0].mxu0
        %v6568 = vadd.f32 %v6455, %v6567
        %v6569 = vpop.f32.mrb[0].mxu0
        %v6570 = vadd.f32 %v6457, %v6569
        %6571 = vmatprep.mubr.bf16.mxu0 %v2385
        %6572 = vmatmul.mubr.bf16.gmra.mrb[0].mxu0 %v2384
        %v6573 = vpop.f32.mrb[0].mxu0
        %v6574 = vadd.f32 %v6461, %v6573
        %v6575 = vpop.f32.mrb[0].mxu0
        %v6576 = vadd.f32 %v6463, %v6575
        %v6577 = vpop.f32.mrb[0].mxu0
        %v6578 = vadd.f32 %v6465, %v6577
        %v6579 = vpop.f32.mrb[0].mxu0
        %v6580 = vadd.f32 %v6467, %v6579
        %6581 = vmatprep.mubr.bf16.mxu0 %v2421
        %6582 = vmatmul.mubr.bf16.gmra.mrb[0].mxu0 %v2420
        %v6583 = vpop.f32.mrb[0].mxu0
        %v6584 = vadd.f32 %v6471, %v6583
        %v6585 = vpop.f32.mrb[0].mxu0
        %v6586 = vadd.f32 %v6473, %v6585
        %v6587 = vpop.f32.mrb[0].mxu0
        %v6588 = vadd.f32 %v6475, %v6587
        %v6589 = vpop.f32.mrb[0].mxu0
        %v6590 = vadd.f32 %v6477, %v6589
        %6591 = vmatprep.mubr.bf16.mxu0 %v2457
        %6592 = vmatmul.mubr.bf16.gmra.mrb[0].mxu0 %v2456
        %v6593 = vpop.f32.mrb[0].mxu0
        %v6594 = vadd.f32 %v6481, %v6593
        %v6595 = vpop.f32.mrb[0].mxu0
        %v6596 = vadd.f32 %v6483, %v6595
        %v6597 = vpop.f32.mrb[0].mxu0
        %v6598 = vadd.f32 %v6485, %v6597
        %v6599 = vpop.f32.mrb[0].mxu0
        %v6600 = vadd.f32 %v6487, %v6599
        %6601 = vmatprep.mubr.bf16.mxu0 %v2493
        %6602 = vmatmul.mubr.bf16.gmra.mrb[0].mxu0 %v2492
        %v6603 = vpop.f32.mrb[0].mxu0
        %v6604 = vadd.f32 %v6491, %v6603
        %v6605 = vpop.f32.mrb[0].mxu0
        %v6606 = vadd.f32 %v6493, %v6605
        %v6607 = vpop.f32.mrb[0].mxu0
        %v6608 = vadd.f32 %v6495, %v6607
        %v6609 = vpop.f32.mrb[0].mxu0
        %v6610 = vadd.f32 %v6497, %v6609
        %6611 = vmatprep.mubr.bf16.mxu0 %v2529
        %6612 = vmatmul.mubr.bf16.gmra.mrb[0].mxu0 %v2528
        %v6613 = vpop.f32.mrb[0].mxu0
        %v6614 = vadd.f32 %v6501, %v6613
        %v6615 = vpop.f32.mrb[0].mxu0
        %v6616 = vadd.f32 %v6503, %v6615
        %v6617 = vpop.f32.mrb[0].mxu0
        %v6618 = vadd.f32 %v6505, %v6617
        %v6619 = vpop.f32.mrb[0].mxu0
        %v6620 = vadd.f32 %v6507, %v6619
        %6621 = vdwg.mxu0
        %6622 = vmatprep.subr.bf16.mxu0 %v4823
        %6623 = vmatpush1.bf16.msra.mxu0 %v4822
        %6624 = vmatprep.subr.bf16.mxu0 %v4825
        %6625 = vmatpush1.bf16.msra.mxu0 %v4824
        %6626 = vmatprep.subr.bf16.mxu0 %v4827
        %6627 = vmatpush1.bf16.msra.mxu0 %v4826
        %6628 = vmatprep.subr.bf16.mxu0 %v4829
        %6629 = vmatpush1.bf16.msra.mxu0 %v4828
        %6630 = vmatprep.subr.bf16.mxu0 %v4831
        %6631 = vmatpush1.bf16.msra.mxu0 %v4830
        %6632 = vmatprep.subr.bf16.mxu0 %v4833
        %6633 = vmatpush1.bf16.msra.mxu0 %v4832
        %6634 = vmatprep.subr.bf16.mxu0 %v4835
        %6635 = vmatpush1.bf16.msra.mxu0 %v4834
        %6636 = vmatprep.subr.bf16.mxu0 %v4837
        %6637 = vmatpush1.bf16.msra.mxu0 %v4836
        %6638 = vmatprep.subr.bf16.mxu0 %v4839
        %6639 = vmatpush1.bf16.msra.mxu0 %v4838
        %6640 = vmatprep.subr.bf16.mxu0 %v4841
        %6641 = vmatpush1.bf16.msra.mxu0 %v4840
        %6642 = vmatprep.subr.bf16.mxu0 %v4843
        %6643 = vmatpush1.bf16.msra.mxu0 %v4842
        %6644 = vmatprep.subr.bf16.mxu0 %v4845
        %6645 = vmatpush1.bf16.msra.mxu0 %v4844
        %6646 = vmatprep.subr.bf16.mxu0 %v4847
        %6647 = vmatpush1.bf16.msra.mxu0 %v4846
        %6648 = vmatprep.subr.bf16.mxu0 %v4849
        %6649 = vmatpush1.bf16.msra.mxu0 %v4848
        %6650 = vmatprep.subr.bf16.mxu0 %v4851
        %6651 = vmatpush1.bf16.msra.mxu0 %v4850
        %6652 = vmatprep.subr.bf16.mxu0 %v4853
        %6653 = vmatpush1.bf16.msra.mxu0 %v4852
        %6654 = vmatprep.mubr.bf16.mxu0 %v2279
        %6655 = vmatmul.mubr.bf16.gmra.mrb[0].mxu0 %v2278
        %v6656 = vpop.f32.mrb[0].mxu0
        %v6657 = vadd.f32 %v6544, %v6656
        %v6658 = vpop.f32.mrb[0].mxu0
        %v6659 = vadd.f32 %v6546, %v6658
        %v6660 = vpop.f32.mrb[0].mxu0
        %v6661 = vadd.f32 %v6548, %v6660
        %v6662 = vpop.f32.mrb[0].mxu0
        %v6663 = vadd.f32 %v6550, %v6662
        %6664 = vmatprep.mubr.bf16.mxu0 %v2315
        %6665 = vmatmul.mubr.bf16.gmra.mrb[0].mxu0 %v2314
        %v6666 = vpop.f32.mrb[0].mxu0
        %v6667 = vadd.f32 %v6554, %v6666
        %v6668 = vpop.f32.mrb[0].mxu0
        %v6669 = vadd.f32 %v6556, %v6668
        %v6670 = vpop.f32.mrb[0].mxu0
        %v6671 = vadd.f32 %v6558, %v6670
        %v6672 = vpop.f32.mrb[0].mxu0
        %v6673 = vadd.f32 %v6560, %v6672
        %6674 = vmatprep.mubr.bf16.mxu0 %v2351
        %6675 = vmatmul.mubr.bf16.gmra.mrb[0].mxu0 %v2350
        %v6676 = vpop.f32.mrb[0].mxu0
        %v6677 = vadd.f32 %v6564, %v6676
        %v6678 = vpop.f32.mrb[0].mxu0
        %v6679 = vadd.f32 %v6566, %v6678
        %v6680 = vpop.f32.mrb[0].mxu0
        %v6681 = vadd.f32 %v6568, %v6680
        %v6682 = vpop.f32.mrb[0].mxu0
        %v6683 = vadd.f32 %v6570, %v6682
        %6684 = vmatprep.mubr.bf16.mxu0 %v2387
        %6685 = vmatmul.mubr.bf16.gmra.mrb[0].mxu0 %v2386
        %v6686 = vpop.f32.mrb[0].mxu0
        %v6687 = vadd.f32 %v6574, %v6686
        %v6688 = vpop.f32.mrb[0].mxu0
        %v6689 = vadd.f32 %v6576, %v6688
        %v6690 = vpop.f32.mrb[0].mxu0
        %v6691 = vadd.f32 %v6578, %v6690
        %v6692 = vpop.f32.mrb[0].mxu0
        %v6693 = vadd.f32 %v6580, %v6692
        %6694 = vmatprep.mubr.bf16.mxu0 %v2423
        %6695 = vmatmul.mubr.bf16.gmra.mrb[0].mxu0 %v2422
        %v6696 = vpop.f32.mrb[0].mxu0
        %v6697 = vadd.f32 %v6584, %v6696
        %v6698 = vpop.f32.mrb[0].mxu0
        %v6699 = vadd.f32 %v6586, %v6698
        %v6700 = vpop.f32.mrb[0].mxu0
        %v6701 = vadd.f32 %v6588, %v6700
        %v6702 = vpop.f32.mrb[0].mxu0
        %v6703 = vadd.f32 %v6590, %v6702
        %6704 = vmatprep.mubr.bf16.mxu0 %v2459
        %6705 = vmatmul.mubr.bf16.gmra.mrb[0].mxu0 %v2458
        %v6706 = vpop.f32.mrb[0].mxu0
        %v6707 = vadd.f32 %v6594, %v6706
        %v6708 = vpop.f32.mrb[0].mxu0
        %v6709 = vadd.f32 %v6596, %v6708
        %v6710 = vpop.f32.mrb[0].mxu0
        %v6711 = vadd.f32 %v6598, %v6710
        %v6712 = vpop.f32.mrb[0].mxu0
        %v6713 = vadd.f32 %v6600, %v6712
        %6714 = vmatprep.mubr.bf16.mxu0 %v2495
        %6715 = vmatmul.mubr.bf16.gmra.mrb[0].mxu0 %v2494
        %v6716 = vpop.f32.mrb[0].mxu0
        %v6717 = vadd.f32 %v6604, %v6716
        %v6718 = vpop.f32.mrb[0].mxu0
        %v6719 = vadd.f32 %v6606, %v6718
        %v6720 = vpop.f32.mrb[0].mxu0
        %v6721 = vadd.f32 %v6608, %v6720
        %v6722 = vpop.f32.mrb[0].mxu0
        %v6723 = vadd.f32 %v6610, %v6722
        %6724 = vmatprep.mubr.bf16.mxu0 %v2531
        %6725 = vmatmul.mubr.bf16.gmra.mrb[0].mxu0 %v2530
        %v6726 = vpop.f32.mrb[0].mxu0
        %v6727 = vadd.f32 %v6614, %v6726
        %v6728 = vpop.f32.mrb[0].mxu0
        %v6729 = vadd.f32 %v6616, %v6728
        %v6730 = vpop.f32.mrb[0].mxu0
        %v6731 = vadd.f32 %v6618, %v6730
        %v6732 = vpop.f32.mrb[0].mxu0
        %v6733 = vadd.f32 %v6620, %v6732
        %6734 = vdwg.mxu0
        %6735 = vmatprep.subr.bf16.mxu0 %v4855
        %6736 = vmatpush1.bf16.msra.mxu0 %v4854
        %6737 = vmatprep.subr.bf16.mxu0 %v4857
        %6738 = vmatpush1.bf16.msra.mxu0 %v4856
        %6739 = vmatprep.subr.bf16.mxu0 %v4859
        %6740 = vmatpush1.bf16.msra.mxu0 %v4858
        %6741 = vmatprep.subr.bf16.mxu0 %v4861
        %6742 = vmatpush1.bf16.msra.mxu0 %v4860
        %6743 = vmatprep.subr.bf16.mxu0 %v4863
        %6744 = vmatpush1.bf16.msra.mxu0 %v4862
        %6745 = vmatprep.subr.bf16.mxu0 %v4865
        %6746 = vmatpush1.bf16.msra.mxu0 %v4864
        %6747 = vmatprep.subr.bf16.mxu0 %v4867
        %6748 = vmatpush1.bf16.msra.mxu0 %v4866
        %6749 = vmatprep.subr.bf16.mxu0 %v4869
        %6750 = vmatpush1.bf16.msra.mxu0 %v4868
        %6751 = vmatprep.subr.bf16.mxu0 %v4871
        %6752 = vmatpush1.bf16.msra.mxu0 %v4870
        %6753 = vmatprep.subr.bf16.mxu0 %v4873
        %6754 = vmatpush1.bf16.msra.mxu0 %v4872
        %6755 = vmatprep.subr.bf16.mxu0 %v4875
        %6756 = vmatpush1.bf16.msra.mxu0 %v4874
        %6757 = vmatprep.subr.bf16.mxu0 %v4877
        %6758 = vmatpush1.bf16.msra.mxu0 %v4876
        %6759 = vmatprep.subr.bf16.mxu0 %v4879
        %6760 = vmatpush1.bf16.msra.mxu0 %v4878
        %6761 = vmatprep.subr.bf16.mxu0 %v4881
        %6762 = vmatpush1.bf16.msra.mxu0 %v4880
        %6763 = vmatprep.subr.bf16.mxu0 %v4883
        %6764 = vmatpush1.bf16.msra.mxu0 %v4882
        %6765 = vmatprep.subr.bf16.mxu0 %v4885
        %6766 = vmatpush1.bf16.msra.mxu0 %v4884
        %6767 = vmatprep.mubr.bf16.mxu0 %v2281
        %6768 = vmatmul.mubr.bf16.gmra.mrb[0].mxu0 %v2280
        %v6769 = vpop.f32.mrb[0].mxu0
        %v6770 = vadd.f32 %v6657, %v6769
        %v6771 = vpop.f32.mrb[0].mxu0
        %v6772 = vadd.f32 %v6659, %v6771
        %v6773 = vpop.f32.mrb[0].mxu0
        %v6774 = vadd.f32 %v6661, %v6773
        %v6775 = vpop.f32.mrb[0].mxu0
        %v6776 = vadd.f32 %v6663, %v6775
        %6777 = vmatprep.mubr.bf16.mxu0 %v2317
        %6778 = vmatmul.mubr.bf16.gmra.mrb[0].mxu0 %v2316
        %v6779 = vpop.f32.mrb[0].mxu0
        %v6780 = vadd.f32 %v6667, %v6779
        %v6781 = vpop.f32.mrb[0].mxu0
        %v6782 = vadd.f32 %v6669, %v6781
        %v6783 = vpop.f32.mrb[0].mxu0
        %v6784 = vadd.f32 %v6671, %v6783
        %v6785 = vpop.f32.mrb[0].mxu0
        %v6786 = vadd.f32 %v6673, %v6785
        %6787 = vmatprep.mubr.bf16.mxu0 %v2353
        %6788 = vmatmul.mubr.bf16.gmra.mrb[0].mxu0 %v2352
        %v6789 = vpop.f32.mrb[0].mxu0
        %v6790 = vadd.f32 %v6677, %v6789
        %v6791 = vpop.f32.mrb[0].mxu0
        %v6792 = vadd.f32 %v6679, %v6791
        %v6793 = vpop.f32.mrb[0].mxu0
        %v6794 = vadd.f32 %v6681, %v6793
        %v6795 = vpop.f32.mrb[0].mxu0
        %v6796 = vadd.f32 %v6683, %v6795
        %6797 = vmatprep.mubr.bf16.mxu0 %v2389
        %6798 = vmatmul.mubr.bf16.gmra.mrb[0].mxu0 %v2388
        %v6799 = vpop.f32.mrb[0].mxu0
        %v6800 = vadd.f32 %v6687, %v6799
        %v6801 = vpop.f32.mrb[0].mxu0
        %v6802 = vadd.f32 %v6689, %v6801
        %v6803 = vpop.f32.mrb[0].mxu0
        %v6804 = vadd.f32 %v6691, %v6803
        %v6805 = vpop.f32.mrb[0].mxu0
        %v6806 = vadd.f32 %v6693, %v6805
        %6807 = vmatprep.mubr.bf16.mxu0 %v2425
        %6808 = vmatmul.mubr.bf16.gmra.mrb[0].mxu0 %v2424
        %v6809 = vpop.f32.mrb[0].mxu0
        %v6810 = vadd.f32 %v6697, %v6809
        %v6811 = vpop.f32.mrb[0].mxu0
        %v6812 = vadd.f32 %v6699, %v6811
        %v6813 = vpop.f32.mrb[0].mxu0
        %v6814 = vadd.f32 %v6701, %v6813
        %v6815 = vpop.f32.mrb[0].mxu0
        %v6816 = vadd.f32 %v6703, %v6815
        %6817 = vmatprep.mubr.bf16.mxu0 %v2461
        %6818 = vmatmul.mubr.bf16.gmra.mrb[0].mxu0 %v2460
        %v6819 = vpop.f32.mrb[0].mxu0
        %v6820 = vadd.f32 %v6707, %v6819
        %v6821 = vpop.f32.mrb[0].mxu0
        %v6822 = vadd.f32 %v6709, %v6821
        %v6823 = vpop.f32.mrb[0].mxu0
        %v6824 = vadd.f32 %v6711, %v6823
        %v6825 = vpop.f32.mrb[0].mxu0
        %v6826 = vadd.f32 %v6713, %v6825
        %6827 = vmatprep.mubr.bf16.mxu0 %v2497
        %6828 = vmatmul.mubr.bf16.gmra.mrb[0].mxu0 %v2496
        %v6829 = vpop.f32.mrb[0].mxu0
        %v6830 = vadd.f32 %v6717, %v6829
        %v6831 = vpop.f32.mrb[0].mxu0
        %v6832 = vadd.f32 %v6719, %v6831
        %v6833 = vpop.f32.mrb[0].mxu0
        %v6834 = vadd.f32 %v6721, %v6833
        %v6835 = vpop.f32.mrb[0].mxu0
        %v6836 = vadd.f32 %v6723, %v6835
        %6837 = vmatprep.mubr.bf16.mxu0 %v2533
        %6838 = vmatmul.mubr.bf16.gmra.mrb[0].mxu0 %v2532
        %v6839 = vpop.f32.mrb[0].mxu0
        %v6840 = vadd.f32 %v6727, %v6839
        %v6841 = vpop.f32.mrb[0].mxu0
        %v6842 = vadd.f32 %v6729, %v6841
        %v6843 = vpop.f32.mrb[0].mxu0
        %v6844 = vadd.f32 %v6731, %v6843
        %v6845 = vpop.f32.mrb[0].mxu0
        %v6846 = vadd.f32 %v6733, %v6845
        %6847 = vdwg.mxu0
        %6848 = vmatprep.subr.bf16.mxu0 %v4887
        %6849 = vmatpush1.bf16.msra.mxu0 %v4886
        %6850 = vmatprep.subr.bf16.mxu0 %v4889
        %6851 = vmatpush1.bf16.msra.mxu0 %v4888
        %6852 = vmatprep.subr.bf16.mxu0 %v4891
        %6853 = vmatpush1.bf16.msra.mxu0 %v4890
        %6854 = vmatprep.subr.bf16.mxu0 %v4893
        %6855 = vmatpush1.bf16.msra.mxu0 %v4892
        %6856 = vmatprep.subr.bf16.mxu0 %v4895
        %6857 = vmatpush1.bf16.msra.mxu0 %v4894
        %6858 = vmatprep.subr.bf16.mxu0 %v4897
        %6859 = vmatpush1.bf16.msra.mxu0 %v4896
        %6860 = vmatprep.subr.bf16.mxu0 %v4899
        %6861 = vmatpush1.bf16.msra.mxu0 %v4898
        %6862 = vmatprep.subr.bf16.mxu0 %v4901
        %6863 = vmatpush1.bf16.msra.mxu0 %v4900
        %6864 = vmatprep.subr.bf16.mxu0 %v4903
        %6865 = vmatpush1.bf16.msra.mxu0 %v4902
        %6866 = vmatprep.subr.bf16.mxu0 %v4905
        %6867 = vmatpush1.bf16.msra.mxu0 %v4904
        %6868 = vmatprep.subr.bf16.mxu0 %v4907
        %6869 = vmatpush1.bf16.msra.mxu0 %v4906
        %6870 = vmatprep.subr.bf16.mxu0 %v4909
        %6871 = vmatpush1.bf16.msra.mxu0 %v4908
        %6872 = vmatprep.subr.bf16.mxu0 %v4911
        %6873 = vmatpush1.bf16.msra.mxu0 %v4910
        %6874 = vmatprep.subr.bf16.mxu0 %v4913
        %6875 = vmatpush1.bf16.msra.mxu0 %v4912
        %6876 = vmatprep.subr.bf16.mxu0 %v4915
        %6877 = vmatpush1.bf16.msra.mxu0 %v4914
        %6878 = vmatprep.subr.bf16.mxu0 %v4917
        %6879 = vmatpush1.bf16.msra.mxu0 %v4916
        %6880 = vmatprep.mubr.bf16.mxu0 %v2283
        %6881 = vmatmul.mubr.bf16.gmra.mrb[0].mxu0 %v2282
        %v6882 = vpop.f32.mrb[0].mxu0
        %v6883 = vadd.f32 %v6770, %v6882
        %v6884 = vpop.f32.mrb[0].mxu0
        %v6885 = vadd.f32 %v6772, %v6884
        %v6886 = vpop.f32.mrb[0].mxu0
        %v6887 = vadd.f32 %v6774, %v6886
        %v6888 = vpop.f32.mrb[0].mxu0
        %v6889 = vadd.f32 %v6776, %v6888
        %6890 = vmatprep.mubr.bf16.mxu0 %v2319
        %6891 = vmatmul.mubr.bf16.gmra.mrb[0].mxu0 %v2318
        %v6892 = vpop.f32.mrb[0].mxu0
        %v6893 = vadd.f32 %v6780, %v6892
        %v6894 = vpop.f32.mrb[0].mxu0
        %v6895 = vadd.f32 %v6782, %v6894
        %v6896 = vpop.f32.mrb[0].mxu0
        %v6897 = vadd.f32 %v6784, %v6896
        %v6898 = vpop.f32.mrb[0].mxu0
        %v6899 = vadd.f32 %v6786, %v6898
        %6900 = vmatprep.mubr.bf16.mxu0 %v2355
        %6901 = vmatmul.mubr.bf16.gmra.mrb[0].mxu0 %v2354
        %v6902 = vpop.f32.mrb[0].mxu0
        %v6903 = vadd.f32 %v6790, %v6902
        %v6904 = vpop.f32.mrb[0].mxu0
        %v6905 = vadd.f32 %v6792, %v6904
        %v6906 = vpop.f32.mrb[0].mxu0
        %v6907 = vadd.f32 %v6794, %v6906
        %v6908 = vpop.f32.mrb[0].mxu0
        %v6909 = vadd.f32 %v6796, %v6908
        %6910 = vmatprep.mubr.bf16.mxu0 %v2391
        %6911 = vmatmul.mubr.bf16.gmra.mrb[0].mxu0 %v2390
        %v6912 = vpop.f32.mrb[0].mxu0
        %v6913 = vadd.f32 %v6800, %v6912
        %v6914 = vpop.f32.mrb[0].mxu0
        %v6915 = vadd.f32 %v6802, %v6914
        %v6916 = vpop.f32.mrb[0].mxu0
        %v6917 = vadd.f32 %v6804, %v6916
        %v6918 = vpop.f32.mrb[0].mxu0
        %v6919 = vadd.f32 %v6806, %v6918
        %6920 = vmatprep.mubr.bf16.mxu0 %v2427
        %6921 = vmatmul.mubr.bf16.gmra.mrb[0].mxu0 %v2426
        %v6922 = vpop.f32.mrb[0].mxu0
        %v6923 = vadd.f32 %v6810, %v6922
        %v6924 = vpop.f32.mrb[0].mxu0
        %v6925 = vadd.f32 %v6812, %v6924
        %v6926 = vpop.f32.mrb[0].mxu0
        %v6927 = vadd.f32 %v6814, %v6926
        %v6928 = vpop.f32.mrb[0].mxu0
        %v6929 = vadd.f32 %v6816, %v6928
        %6930 = vmatprep.mubr.bf16.mxu0 %v2463
        %6931 = vmatmul.mubr.bf16.gmra.mrb[0].mxu0 %v2462
        %v6932 = vpop.f32.mrb[0].mxu0
        %v6933 = vadd.f32 %v6820, %v6932
        %v6934 = vpop.f32.mrb[0].mxu0
        %v6935 = vadd.f32 %v6822, %v6934
        %v6936 = vpop.f32.mrb[0].mxu0
        %v6937 = vadd.f32 %v6824, %v6936
        %v6938 = vpop.f32.mrb[0].mxu0
        %v6939 = vadd.f32 %v6826, %v6938
        %6940 = vmatprep.mubr.bf16.mxu0 %v2499
        %6941 = vmatmul.mubr.bf16.gmra.mrb[0].mxu0 %v2498
        %v6942 = vpop.f32.mrb[0].mxu0
        %v6943 = vadd.f32 %v6830, %v6942
        %v6944 = vpop.f32.mrb[0].mxu0
        %v6945 = vadd.f32 %v6832, %v6944
        %v6946 = vpop.f32.mrb[0].mxu0
        %v6947 = vadd.f32 %v6834, %v6946
        %v6948 = vpop.f32.mrb[0].mxu0
        %v6949 = vadd.f32 %v6836, %v6948
        %6950 = vmatprep.mubr.bf16.mxu0 %v2535
        %6951 = vmatmul.mubr.bf16.gmra.mrb[0].mxu0 %v2534
        %v6952 = vpop.f32.mrb[0].mxu0
        %v6953 = vadd.f32 %v6840, %v6952
        %v6954 = vpop.f32.mrb[0].mxu0
        %v6955 = vadd.f32 %v6842, %v6954
        %v6956 = vpop.f32.mrb[0].mxu0
        %v6957 = vadd.f32 %v6844, %v6956
        %v6958 = vpop.f32.mrb[0].mxu0
        %v6959 = vadd.f32 %v6846, %v6958
        %6960 = vdwg.mxu0
        %6961 = vmatprep.subr.bf16.mxu0 %v4919
        %6962 = vmatpush1.bf16.msra.mxu0 %v4918
        %6963 = vmatprep.subr.bf16.mxu0 %v4921
        %6964 = vmatpush1.bf16.msra.mxu0 %v4920
        %6965 = vmatprep.subr.bf16.mxu0 %v4923
        %6966 = vmatpush1.bf16.msra.mxu0 %v4922
        %6967 = vmatprep.subr.bf16.mxu0 %v4925
        %6968 = vmatpush1.bf16.msra.mxu0 %v4924
        %6969 = vmatprep.subr.bf16.mxu0 %v4927
        %6970 = vmatpush1.bf16.msra.mxu0 %v4926
        %6971 = vmatprep.subr.bf16.mxu0 %v4929
        %6972 = vmatpush1.bf16.msra.mxu0 %v4928
        %6973 = vmatprep.subr.bf16.mxu0 %v4931
        %6974 = vmatpush1.bf16.msra.mxu0 %v4930
        %6975 = vmatprep.subr.bf16.mxu0 %v4933
        %6976 = vmatpush1.bf16.msra.mxu0 %v4932
        %6977 = vmatprep.subr.bf16.mxu0 %v4935
        %6978 = vmatpush1.bf16.msra.mxu0 %v4934
        %6979 = vmatprep.subr.bf16.mxu0 %v4937
        %6980 = vmatpush1.bf16.msra.mxu0 %v4936
        %6981 = vmatprep.subr.bf16.mxu0 %v4939
        %6982 = vmatpush1.bf16.msra.mxu0 %v4938
        %6983 = vmatprep.subr.bf16.mxu0 %v4941
        %6984 = vmatpush1.bf16.msra.mxu0 %v4940
        %6985 = vmatprep.subr.bf16.mxu0 %v4943
        %6986 = vmatpush1.bf16.msra.mxu0 %v4942
        %6987 = vmatprep.subr.bf16.mxu0 %v4945
        %6988 = vmatpush1.bf16.msra.mxu0 %v4944
        %6989 = vmatprep.subr.bf16.mxu0 %v4947
        %6990 = vmatpush1.bf16.msra.mxu0 %v4946
        %6991 = vmatprep.subr.bf16.mxu0 %v4949
        %6992 = vmatpush1.bf16.msra.mxu0 %v4948
        %6993 = vmatprep.mubr.bf16.mxu0 %v2285
        %6994 = vmatmul.mubr.bf16.gmra.mrb[0].mxu0 %v2284
        %v6995 = vpop.f32.mrb[0].mxu0
        %v6996 = vadd.f32 %v6883, %v6995
        %v6997 = vpop.f32.mrb[0].mxu0
        %v6998 = vadd.f32 %v6885, %v6997
        %v6999 = vpop.f32.mrb[0].mxu0
        %v7000 = vadd.f32 %v6887, %v6999
        %v7001 = vpop.f32.mrb[0].mxu0
        %v7002 = vadd.f32 %v6889, %v7001
        %7003 = vmatprep.mubr.bf16.mxu0 %v2321
        %7004 = vmatmul.mubr.bf16.gmra.mrb[0].mxu0 %v2320
        %v7005 = vpop.f32.mrb[0].mxu0
        %v7006 = vadd.f32 %v6893, %v7005
        %v7007 = vpop.f32.mrb[0].mxu0
        %v7008 = vadd.f32 %v6895, %v7007
        %v7009 = vpop.f32.mrb[0].mxu0
        %v7010 = vadd.f32 %v6897, %v7009
        %v7011 = vpop.f32.mrb[0].mxu0
        %v7012 = vadd.f32 %v6899, %v7011
        %7013 = vmatprep.mubr.bf16.mxu0 %v2357
        %7014 = vmatmul.mubr.bf16.gmra.mrb[0].mxu0 %v2356
        %v7015 = vpop.f32.mrb[0].mxu0
        %v7016 = vadd.f32 %v6903, %v7015
        %v7017 = vpop.f32.mrb[0].mxu0
        %v7018 = vadd.f32 %v6905, %v7017
        %v7019 = vpop.f32.mrb[0].mxu0
        %v7020 = vadd.f32 %v6907, %v7019
        %v7021 = vpop.f32.mrb[0].mxu0
        %v7022 = vadd.f32 %v6909, %v7021
        %7023 = vmatprep.mubr.bf16.mxu0 %v2393
        %7024 = vmatmul.mubr.bf16.gmra.mrb[0].mxu0 %v2392
        %v7025 = vpop.f32.mrb[0].mxu0
        %v7026 = vadd.f32 %v6913, %v7025
        %v7027 = vpop.f32.mrb[0].mxu0
        %v7028 = vadd.f32 %v6915, %v7027
        %v7029 = vpop.f32.mrb[0].mxu0
        %v7030 = vadd.f32 %v6917, %v7029
        %v7031 = vpop.f32.mrb[0].mxu0
        %v7032 = vadd.f32 %v6919, %v7031
        %7033 = vmatprep.mubr.bf16.mxu0 %v2429
        %7034 = vmatmul.mubr.bf16.gmra.mrb[0].mxu0 %v2428
        %v7035 = vpop.f32.mrb[0].mxu0
        %v7036 = vadd.f32 %v6923, %v7035
        %v7037 = vpop.f32.mrb[0].mxu0
        %v7038 = vadd.f32 %v6925, %v7037
        %v7039 = vpop.f32.mrb[0].mxu0
        %v7040 = vadd.f32 %v6927, %v7039
        %v7041 = vpop.f32.mrb[0].mxu0
        %v7042 = vadd.f32 %v6929, %v7041
        %7043 = vmatprep.mubr.bf16.mxu0 %v2465
        %7044 = vmatmul.mubr.bf16.gmra.mrb[0].mxu0 %v2464
        %v7045 = vpop.f32.mrb[0].mxu0
        %v7046 = vadd.f32 %v6933, %v7045
        %v7047 = vpop.f32.mrb[0].mxu0
        %v7048 = vadd.f32 %v6935, %v7047
        %v7049 = vpop.f32.mrb[0].mxu0
        %v7050 = vadd.f32 %v6937, %v7049
        %v7051 = vpop.f32.mrb[0].mxu0
        %v7052 = vadd.f32 %v6939, %v7051
        %7053 = vmatprep.mubr.bf16.mxu0 %v2501
        %7054 = vmatmul.mubr.bf16.gmra.mrb[0].mxu0 %v2500
        %v7055 = vpop.f32.mrb[0].mxu0
        %v7056 = vadd.f32 %v6943, %v7055
        %v7057 = vpop.f32.mrb[0].mxu0
        %v7058 = vadd.f32 %v6945, %v7057
        %v7059 = vpop.f32.mrb[0].mxu0
        %v7060 = vadd.f32 %v6947, %v7059
        %v7061 = vpop.f32.mrb[0].mxu0
        %v7062 = vadd.f32 %v6949, %v7061
        %7063 = vmatprep.mubr.bf16.mxu0 %v2537
        %7064 = vmatmul.mubr.bf16.gmra.mrb[0].mxu0 %v2536
        %v7065 = vpop.f32.mrb[0].mxu0
        %v7066 = vadd.f32 %v6953, %v7065
        %v7067 = vpop.f32.mrb[0].mxu0
        %v7068 = vadd.f32 %v6955, %v7067
        %v7069 = vpop.f32.mrb[0].mxu0
        %v7070 = vadd.f32 %v6957, %v7069
        %v7071 = vpop.f32.mrb[0].mxu0
        %v7072 = vadd.f32 %v6959, %v7071
        %7073 = vdwg.mxu0
        %7074 = vmatprep.subr.bf16.mxu0 %v4951
        %7075 = vmatpush1.bf16.msra.mxu0 %v4950
        %7076 = vmatprep.subr.bf16.mxu0 %v4953
        %7077 = vmatpush1.bf16.msra.mxu0 %v4952
        %7078 = vmatprep.subr.bf16.mxu0 %v4955
        %7079 = vmatpush1.bf16.msra.mxu0 %v4954
        %7080 = vmatprep.subr.bf16.mxu0 %v4957
        %7081 = vmatpush1.bf16.msra.mxu0 %v4956
        %7082 = vmatprep.subr.bf16.mxu0 %v4959
        %7083 = vmatpush1.bf16.msra.mxu0 %v4958
        %7084 = vmatprep.subr.bf16.mxu0 %v4961
        %7085 = vmatpush1.bf16.msra.mxu0 %v4960
        %7086 = vmatprep.subr.bf16.mxu0 %v4963
        %7087 = vmatpush1.bf16.msra.mxu0 %v4962
        %7088 = vmatprep.subr.bf16.mxu0 %v4965
        %7089 = vmatpush1.bf16.msra.mxu0 %v4964
        %7090 = vmatprep.subr.bf16.mxu0 %v4967
        %7091 = vmatpush1.bf16.msra.mxu0 %v4966
        %7092 = vmatprep.subr.bf16.mxu0 %v4969
        %7093 = vmatpush1.bf16.msra.mxu0 %v4968
        %7094 = vmatprep.subr.bf16.mxu0 %v4971
        %7095 = vmatpush1.bf16.msra.mxu0 %v4970
        %7096 = vmatprep.subr.bf16.mxu0 %v4973
        %7097 = vmatpush1.bf16.msra.mxu0 %v4972
        %7098 = vmatprep.subr.bf16.mxu0 %v4975
        %7099 = vmatpush1.bf16.msra.mxu0 %v4974
        %7100 = vmatprep.subr.bf16.mxu0 %v4977
        %7101 = vmatpush1.bf16.msra.mxu0 %v4976
        %7102 = vmatprep.subr.bf16.mxu0 %v4979
        %7103 = vmatpush1.bf16.msra.mxu0 %v4978
        %7104 = vmatprep.subr.bf16.mxu0 %v4981
        %7105 = vmatpush1.bf16.msra.mxu0 %v4980
        %7106 = vmatprep.mubr.bf16.mxu0 %v2287
        %7107 = vmatmul.mubr.bf16.gmra.mrb[0].mxu0 %v2286
        %v7108 = vpop.f32.mrb[0].mxu0
        %v7109 = vadd.f32 %v6996, %v7108
        %v7110 = vpop.f32.mrb[0].mxu0
        %v7111 = vadd.f32 %v6998, %v7110
        %v7112 = vpop.f32.mrb[0].mxu0
        %v7113 = vadd.f32 %v7000, %v7112
        %v7114 = vpop.f32.mrb[0].mxu0
        %v7115 = vadd.f32 %v7002, %v7114
        %7116 = vmatprep.mubr.bf16.mxu0 %v2323
        %7117 = vmatmul.mubr.bf16.gmra.mrb[0].mxu0 %v2322
        %v7118 = vpop.f32.mrb[0].mxu0
        %v7119 = vadd.f32 %v7006, %v7118
        %v7120 = vpop.f32.mrb[0].mxu0
        %v7121 = vadd.f32 %v7008, %v7120
        %v7122 = vpop.f32.mrb[0].mxu0
        %v7123 = vadd.f32 %v7010, %v7122
        %v7124 = vpop.f32.mrb[0].mxu0
        %v7125 = vadd.f32 %v7012, %v7124
        %7126 = vmatprep.mubr.bf16.mxu0 %v2359
        %7127 = vmatmul.mubr.bf16.gmra.mrb[0].mxu0 %v2358
        %v7128 = vpop.f32.mrb[0].mxu0
        %v7129 = vadd.f32 %v7016, %v7128
        %v7130 = vpop.f32.mrb[0].mxu0
        %v7131 = vadd.f32 %v7018, %v7130
        %v7132 = vpop.f32.mrb[0].mxu0
        %v7133 = vadd.f32 %v7020, %v7132
        %v7134 = vpop.f32.mrb[0].mxu0
        %v7135 = vadd.f32 %v7022, %v7134
        %7136 = vmatprep.mubr.bf16.mxu0 %v2395
        %7137 = vmatmul.mubr.bf16.gmra.mrb[0].mxu0 %v2394
        %v7138 = vpop.f32.mrb[0].mxu0
        %v7139 = vadd.f32 %v7026, %v7138
        %v7140 = vpop.f32.mrb[0].mxu0
        %v7141 = vadd.f32 %v7028, %v7140
        %v7142 = vpop.f32.mrb[0].mxu0
        %v7143 = vadd.f32 %v7030, %v7142
        %v7144 = vpop.f32.mrb[0].mxu0
        %v7145 = vadd.f32 %v7032, %v7144
        %7146 = vmatprep.mubr.bf16.mxu0 %v2431
        %7147 = vmatmul.mubr.bf16.gmra.mrb[0].mxu0 %v2430
        %v7148 = vpop.f32.mrb[0].mxu0
        %v7149 = vadd.f32 %v7036, %v7148
        %v7150 = vpop.f32.mrb[0].mxu0
        %v7151 = vadd.f32 %v7038, %v7150
        %v7152 = vpop.f32.mrb[0].mxu0
        %v7153 = vadd.f32 %v7040, %v7152
        %v7154 = vpop.f32.mrb[0].mxu0
        %v7155 = vadd.f32 %v7042, %v7154
        %7156 = vmatprep.mubr.bf16.mxu0 %v2467
        %7157 = vmatmul.mubr.bf16.gmra.mrb[0].mxu0 %v2466
        %v7158 = vpop.f32.mrb[0].mxu0
        %v7159 = vadd.f32 %v7046, %v7158
        %v7160 = vpop.f32.mrb[0].mxu0
        %v7161 = vadd.f32 %v7048, %v7160
        %v7162 = vpop.f32.mrb[0].mxu0
        %v7163 = vadd.f32 %v7050, %v7162
        %v7164 = vpop.f32.mrb[0].mxu0
        %v7165 = vadd.f32 %v7052, %v7164
        %7166 = vmatprep.mubr.bf16.mxu0 %v2503
        %7167 = vmatmul.mubr.bf16.gmra.mrb[0].mxu0 %v2502
        %v7168 = vpop.f32.mrb[0].mxu0
        %v7169 = vadd.f32 %v7056, %v7168
        %v7170 = vpop.f32.mrb[0].mxu0
        %v7171 = vadd.f32 %v7058, %v7170
        %v7172 = vpop.f32.mrb[0].mxu0
        %v7173 = vadd.f32 %v7060, %v7172
        %v7174 = vpop.f32.mrb[0].mxu0
        %v7175 = vadd.f32 %v7062, %v7174
        %7176 = vmatprep.mubr.bf16.mxu0 %v2539
        %7177 = vmatmul.mubr.bf16.gmra.mrb[0].mxu0 %v2538
        %v7178 = vpop.f32.mrb[0].mxu0
        %v7179 = vadd.f32 %v7066, %v7178
        %v7180 = vpop.f32.mrb[0].mxu0
        %v7181 = vadd.f32 %v7068, %v7180
        %v7182 = vpop.f32.mrb[0].mxu0
        %v7183 = vadd.f32 %v7070, %v7182
        %v7184 = vpop.f32.mrb[0].mxu0
        %v7185 = vadd.f32 %v7072, %v7184
        %7186 = vdwg.mxu0
        %7187 = vmatprep.subr.bf16.mxu0 %v4983
        %7188 = vmatpush1.bf16.msra.mxu0 %v4982
        %7189 = vmatprep.subr.bf16.mxu0 %v4985
        %7190 = vmatpush1.bf16.msra.mxu0 %v4984
        %7191 = vmatprep.subr.bf16.mxu0 %v4987
        %7192 = vmatpush1.bf16.msra.mxu0 %v4986
        %7193 = vmatprep.subr.bf16.mxu0 %v4989
        %7194 = vmatpush1.bf16.msra.mxu0 %v4988
        %7195 = vmatprep.subr.bf16.mxu0 %v4991
        %7196 = vmatpush1.bf16.msra.mxu0 %v4990
        %7197 = vmatprep.subr.bf16.mxu0 %v4993
        %7198 = vmatpush1.bf16.msra.mxu0 %v4992
        %7199 = vmatprep.subr.bf16.mxu0 %v4995
        %7200 = vmatpush1.bf16.msra.mxu0 %v4994
        %7201 = vmatprep.subr.bf16.mxu0 %v4997
        %7202 = vmatpush1.bf16.msra.mxu0 %v4996
        %7203 = vmatprep.subr.bf16.mxu0 %v4999
        %7204 = vmatpush1.bf16.msra.mxu0 %v4998
        %7205 = vmatprep.subr.bf16.mxu0 %v5001
        %7206 = vmatpush1.bf16.msra.mxu0 %v5000
        %7207 = vmatprep.subr.bf16.mxu0 %v5003
        %7208 = vmatpush1.bf16.msra.mxu0 %v5002
        %7209 = vmatprep.subr.bf16.mxu0 %v5005
        %7210 = vmatpush1.bf16.msra.mxu0 %v5004
        %7211 = vmatprep.subr.bf16.mxu0 %v5007
        %7212 = vmatpush1.bf16.msra.mxu0 %v5006
        %7213 = vmatprep.subr.bf16.mxu0 %v5009
        %7214 = vmatpush1.bf16.msra.mxu0 %v5008
        %7215 = vmatprep.subr.bf16.mxu0 %v5011
        %7216 = vmatpush1.bf16.msra.mxu0 %v5010
        %7217 = vmatprep.subr.bf16.mxu0 %v5013
        %7218 = vmatpush1.bf16.msra.mxu0 %v5012
        %7219 = vmatprep.mubr.bf16.mxu0 %v2289
        %7220 = vmatmul.mubr.bf16.gmra.mrb[0].mxu0 %v2288
        %v7221 = vpop.f32.mrb[0].mxu0
        %v7222 = vadd.f32 %v7109, %v7221
        %v7223 = vpop.f32.mrb[0].mxu0
        %v7224 = vadd.f32 %v7111, %v7223
        %v7225 = vpop.f32.mrb[0].mxu0
        %v7226 = vadd.f32 %v7113, %v7225
        %v7227 = vpop.f32.mrb[0].mxu0
        %v7228 = vadd.f32 %v7115, %v7227
        %7229 = vmatprep.mubr.bf16.mxu0 %v2325
        %7230 = vmatmul.mubr.bf16.gmra.mrb[0].mxu0 %v2324
        %v7231 = vpop.f32.mrb[0].mxu0
        %v7232 = vadd.f32 %v7119, %v7231
        %v7233 = vpop.f32.mrb[0].mxu0
        %v7234 = vadd.f32 %v7121, %v7233
        %v7235 = vpop.f32.mrb[0].mxu0
        %v7236 = vadd.f32 %v7123, %v7235
        %v7237 = vpop.f32.mrb[0].mxu0
        %v7238 = vadd.f32 %v7125, %v7237
        %7239 = vmatprep.mubr.bf16.mxu0 %v2361
        %7240 = vmatmul.mubr.bf16.gmra.mrb[0].mxu0 %v2360
        %v7241 = vpop.f32.mrb[0].mxu0
        %v7242 = vadd.f32 %v7129, %v7241
        %v7243 = vpop.f32.mrb[0].mxu0
        %v7244 = vadd.f32 %v7131, %v7243
        %v7245 = vpop.f32.mrb[0].mxu0
        %v7246 = vadd.f32 %v7133, %v7245
        %v7247 = vpop.f32.mrb[0].mxu0
        %v7248 = vadd.f32 %v7135, %v7247
        %7249 = vmatprep.mubr.bf16.mxu0 %v2397
        %7250 = vmatmul.mubr.bf16.gmra.mrb[0].mxu0 %v2396
        %v7251 = vpop.f32.mrb[0].mxu0
        %v7252 = vadd.f32 %v7139, %v7251
        %v7253 = vpop.f32.mrb[0].mxu0
        %v7254 = vadd.f32 %v7141, %v7253
        %v7255 = vpop.f32.mrb[0].mxu0
        %v7256 = vadd.f32 %v7143, %v7255
        %v7257 = vpop.f32.mrb[0].mxu0
        %v7258 = vadd.f32 %v7145, %v7257
        %7259 = vmatprep.mubr.bf16.mxu0 %v2433
        %7260 = vmatmul.mubr.bf16.gmra.mrb[0].mxu0 %v2432
        %v7261 = vpop.f32.mrb[0].mxu0
        %v7262 = vadd.f32 %v7149, %v7261
        %v7263 = vpop.f32.mrb[0].mxu0
        %v7264 = vadd.f32 %v7151, %v7263
        %v7265 = vpop.f32.mrb[0].mxu0
        %v7266 = vadd.f32 %v7153, %v7265
        %v7267 = vpop.f32.mrb[0].mxu0
        %v7268 = vadd.f32 %v7155, %v7267
        %7269 = vmatprep.mubr.bf16.mxu0 %v2469
        %7270 = vmatmul.mubr.bf16.gmra.mrb[0].mxu0 %v2468
        %v7271 = vpop.f32.mrb[0].mxu0
        %v7272 = vadd.f32 %v7159, %v7271
        %v7273 = vpop.f32.mrb[0].mxu0
        %v7274 = vadd.f32 %v7161, %v7273
        %v7275 = vpop.f32.mrb[0].mxu0
        %v7276 = vadd.f32 %v7163, %v7275
        %v7277 = vpop.f32.mrb[0].mxu0
        %v7278 = vadd.f32 %v7165, %v7277
        %7279 = vmatprep.mubr.bf16.mxu0 %v2505
        %7280 = vmatmul.mubr.bf16.gmra.mrb[0].mxu0 %v2504
        %v7281 = vpop.f32.mrb[0].mxu0
        %v7282 = vadd.f32 %v7169, %v7281
        %v7283 = vpop.f32.mrb[0].mxu0
        %v7284 = vadd.f32 %v7171, %v7283
        %v7285 = vpop.f32.mrb[0].mxu0
        %v7286 = vadd.f32 %v7173, %v7285
        %v7287 = vpop.f32.mrb[0].mxu0
        %v7288 = vadd.f32 %v7175, %v7287
        %7289 = vmatprep.mubr.bf16.mxu0 %v2541
        %7290 = vmatmul.mubr.bf16.gmra.mrb[0].mxu0 %v2540
        %v7291 = vpop.f32.mrb[0].mxu0
        %v7292 = vadd.f32 %v7179, %v7291
        %v7293 = vpop.f32.mrb[0].mxu0
        %v7294 = vadd.f32 %v7181, %v7293
        %v7295 = vpop.f32.mrb[0].mxu0
        %v7296 = vadd.f32 %v7183, %v7295
        %v7297 = vpop.f32.mrb[0].mxu0
        %v7298 = vadd.f32 %v7185, %v7297
        %7299 = vdwg.mxu0
        %7300 = vmatprep.subr.bf16.mxu0 %v5015
        %7301 = vmatpush1.bf16.msra.mxu0 %v5014
        %7302 = vmatprep.subr.bf16.mxu0 %v5017
        %7303 = vmatpush1.bf16.msra.mxu0 %v5016
        %7304 = vmatprep.subr.bf16.mxu0 %v5019
        %7305 = vmatpush1.bf16.msra.mxu0 %v5018
        %7306 = vmatprep.subr.bf16.mxu0 %v5021
        %7307 = vmatpush1.bf16.msra.mxu0 %v5020
        %7308 = vmatprep.subr.bf16.mxu0 %v5023
        %7309 = vmatpush1.bf16.msra.mxu0 %v5022
        %7310 = vmatprep.subr.bf16.mxu0 %v5025
        %7311 = vmatpush1.bf16.msra.mxu0 %v5024
        %7312 = vmatprep.subr.bf16.mxu0 %v5027
        %7313 = vmatpush1.bf16.msra.mxu0 %v5026
        %7314 = vmatprep.subr.bf16.mxu0 %v5029
        %7315 = vmatpush1.bf16.msra.mxu0 %v5028
        %7316 = vmatprep.subr.bf16.mxu0 %v5031
        %7317 = vmatpush1.bf16.msra.mxu0 %v5030
        %7318 = vmatprep.subr.bf16.mxu0 %v5033
        %7319 = vmatpush1.bf16.msra.mxu0 %v5032
        %7320 = vmatprep.subr.bf16.mxu0 %v5035
        %7321 = vmatpush1.bf16.msra.mxu0 %v5034
        %7322 = vmatprep.subr.bf16.mxu0 %v5037
        %7323 = vmatpush1.bf16.msra.mxu0 %v5036
        %7324 = vmatprep.subr.bf16.mxu0 %v5039
        %7325 = vmatpush1.bf16.msra.mxu0 %v5038
        %7326 = vmatprep.subr.bf16.mxu0 %v5041
        %7327 = vmatpush1.bf16.msra.mxu0 %v5040
        %7328 = vmatprep.subr.bf16.mxu0 %v5043
        %7329 = vmatpush1.bf16.msra.mxu0 %v5042
        %7330 = vmatprep.subr.bf16.mxu0 %v5045
        %7331 = vmatpush1.bf16.msra.mxu0 %v5044
        %7332 = vmatprep.mubr.bf16.mxu0 %v2291
        %7333 = vmatmul.mubr.bf16.gmra.mrb[0].mxu0 %v2290
        %v7334 = vpop.f32.mrb[0].mxu0
        %v7335 = vadd.f32 %v7222, %v7334
        %v7336 = vpop.f32.mrb[0].mxu0
        %v7337 = vadd.f32 %v7224, %v7336
        %v7338 = vpop.f32.mrb[0].mxu0
        %v7339 = vadd.f32 %v7226, %v7338
        %v7340 = vpop.f32.mrb[0].mxu0
        %v7341 = vadd.f32 %v7228, %v7340
        %7342 = vmatprep.mubr.bf16.mxu0 %v2327
        %7343 = vmatmul.mubr.bf16.gmra.mrb[0].mxu0 %v2326
        %v7344 = vpop.f32.mrb[0].mxu0
        %v7345 = vadd.f32 %v7232, %v7344
        %v7346 = vpop.f32.mrb[0].mxu0
        %v7347 = vadd.f32 %v7234, %v7346
        %v7348 = vpop.f32.mrb[0].mxu0
        %v7349 = vadd.f32 %v7236, %v7348
        %v7350 = vpop.f32.mrb[0].mxu0
        %v7351 = vadd.f32 %v7238, %v7350
        %7352 = vmatprep.mubr.bf16.mxu0 %v2363
        %7353 = vmatmul.mubr.bf16.gmra.mrb[0].mxu0 %v2362
        %v7354 = vpop.f32.mrb[0].mxu0
        %v7355 = vadd.f32 %v7242, %v7354
        %v7356 = vpop.f32.mrb[0].mxu0
        %v7357 = vadd.f32 %v7244, %v7356
        %v7358 = vpop.f32.mrb[0].mxu0
        %v7359 = vadd.f32 %v7246, %v7358
        %v7360 = vpop.f32.mrb[0].mxu0
        %v7361 = vadd.f32 %v7248, %v7360
        %7362 = vmatprep.mubr.bf16.mxu0 %v2399
        %7363 = vmatmul.mubr.bf16.gmra.mrb[0].mxu0 %v2398
        %v7364 = vpop.f32.mrb[0].mxu0
        %v7365 = vadd.f32 %v7252, %v7364
        %v7366 = vpop.f32.mrb[0].mxu0
        %v7367 = vadd.f32 %v7254, %v7366
        %v7368 = vpop.f32.mrb[0].mxu0
        %v7369 = vadd.f32 %v7256, %v7368
        %v7370 = vpop.f32.mrb[0].mxu0
        %v7371 = vadd.f32 %v7258, %v7370
        %7372 = vmatprep.mubr.bf16.mxu0 %v2435
        %7373 = vmatmul.mubr.bf16.gmra.mrb[0].mxu0 %v2434
        %v7374 = vpop.f32.mrb[0].mxu0
        %v7375 = vadd.f32 %v7262, %v7374
        %v7376 = vpop.f32.mrb[0].mxu0
        %v7377 = vadd.f32 %v7264, %v7376
        %v7378 = vpop.f32.mrb[0].mxu0
        %v7379 = vadd.f32 %v7266, %v7378
        %v7380 = vpop.f32.mrb[0].mxu0
        %v7381 = vadd.f32 %v7268, %v7380
        %7382 = vmatprep.mubr.bf16.mxu0 %v2471
        %7383 = vmatmul.mubr.bf16.gmra.mrb[0].mxu0 %v2470
        %v7384 = vpop.f32.mrb[0].mxu0
        %v7385 = vadd.f32 %v7272, %v7384
        %v7386 = vpop.f32.mrb[0].mxu0
        %v7387 = vadd.f32 %v7274, %v7386
        %v7388 = vpop.f32.mrb[0].mxu0
        %v7389 = vadd.f32 %v7276, %v7388
        %v7390 = vpop.f32.mrb[0].mxu0
        %v7391 = vadd.f32 %v7278, %v7390
        %7392 = vmatprep.mubr.bf16.mxu0 %v2507
        %7393 = vmatmul.mubr.bf16.gmra.mrb[0].mxu0 %v2506
        %v7394 = vpop.f32.mrb[0].mxu0
        %v7395 = vadd.f32 %v7282, %v7394
        %v7396 = vpop.f32.mrb[0].mxu0
        %v7397 = vadd.f32 %v7284, %v7396
        %v7398 = vpop.f32.mrb[0].mxu0
        %v7399 = vadd.f32 %v7286, %v7398
        %v7400 = vpop.f32.mrb[0].mxu0
        %v7401 = vadd.f32 %v7288, %v7400
        %7402 = vmatprep.mubr.bf16.mxu0 %v2543
        %7403 = vmatmul.mubr.bf16.gmra.mrb[0].mxu0 %v2542
        %v7404 = vpop.f32.mrb[0].mxu0
        %v7405 = vadd.f32 %v7292, %v7404
        %v7406 = vpop.f32.mrb[0].mxu0
        %v7407 = vadd.f32 %v7294, %v7406
        %v7408 = vpop.f32.mrb[0].mxu0
        %v7409 = vadd.f32 %v7296, %v7408
        %v7410 = vpop.f32.mrb[0].mxu0
        %v7411 = vadd.f32 %v7298, %v7410
        %7412 = vdwg.mxu0
        %7413 = vmatprep.subr.bf16.mxu0 %v5047
        %7414 = vmatpush1.bf16.msra.mxu0 %v5046
        %7415 = vmatprep.subr.bf16.mxu0 %v5049
        %7416 = vmatpush1.bf16.msra.mxu0 %v5048
        %7417 = vmatprep.subr.bf16.mxu0 %v5051
        %7418 = vmatpush1.bf16.msra.mxu0 %v5050
        %7419 = vmatprep.subr.bf16.mxu0 %v5053
        %7420 = vmatpush1.bf16.msra.mxu0 %v5052
        %7421 = vmatprep.subr.bf16.mxu0 %v5055
        %7422 = vmatpush1.bf16.msra.mxu0 %v5054
        %7423 = vmatprep.subr.bf16.mxu0 %v5057
        %7424 = vmatpush1.bf16.msra.mxu0 %v5056
        %7425 = vmatprep.subr.bf16.mxu0 %v5059
        %7426 = vmatpush1.bf16.msra.mxu0 %v5058
        %7427 = vmatprep.subr.bf16.mxu0 %v5061
        %7428 = vmatpush1.bf16.msra.mxu0 %v5060
        %7429 = vmatprep.subr.bf16.mxu0 %v5063
        %7430 = vmatpush1.bf16.msra.mxu0 %v5062
        %7431 = vmatprep.subr.bf16.mxu0 %v5065
        %7432 = vmatpush1.bf16.msra.mxu0 %v5064
        %7433 = vmatprep.subr.bf16.mxu0 %v5067
        %7434 = vmatpush1.bf16.msra.mxu0 %v5066
        %7435 = vmatprep.subr.bf16.mxu0 %v5069
        %7436 = vmatpush1.bf16.msra.mxu0 %v5068
        %7437 = vmatprep.subr.bf16.mxu0 %v5071
        %7438 = vmatpush1.bf16.msra.mxu0 %v5070
        %7439 = vmatprep.subr.bf16.mxu0 %v5073
        %7440 = vmatpush1.bf16.msra.mxu0 %v5072
        %7441 = vmatprep.subr.bf16.mxu0 %v5075
        %7442 = vmatpush1.bf16.msra.mxu0 %v5074
        %7443 = vmatprep.subr.bf16.mxu0 %v5077
        %7444 = vmatpush1.bf16.msra.mxu0 %v5076
        %7445 = vmatprep.mubr.bf16.mxu0 %v2293
        %7446 = vmatmul.mubr.bf16.gmra.mrb[0].mxu0 %v2292
        %v7447 = vpop.f32.mrb[0].mxu0
        %v7448 = vadd.f32 %v7335, %v7447
        %v7449 = vpop.f32.mrb[0].mxu0
        %v7450 = vadd.f32 %v7337, %v7449
        %v7451 = vpop.f32.mrb[0].mxu0
        %v7452 = vadd.f32 %v7339, %v7451
        %v7453 = vpop.f32.mrb[0].mxu0
        %v7454 = vadd.f32 %v7341, %v7453
        %7455 = vmatprep.mubr.bf16.mxu0 %v2329
        %7456 = vmatmul.mubr.bf16.gmra.mrb[0].mxu0 %v2328
        %v7457 = vpop.f32.mrb[0].mxu0
        %v7458 = vadd.f32 %v7345, %v7457
        %v7459 = vpop.f32.mrb[0].mxu0
        %v7460 = vadd.f32 %v7347, %v7459
        %v7461 = vpop.f32.mrb[0].mxu0
        %v7462 = vadd.f32 %v7349, %v7461
        %v7463 = vpop.f32.mrb[0].mxu0
        %v7464 = vadd.f32 %v7351, %v7463
        %7465 = vmatprep.mubr.bf16.mxu0 %v2365
        %7466 = vmatmul.mubr.bf16.gmra.mrb[0].mxu0 %v2364
        %v7467 = vpop.f32.mrb[0].mxu0
        %v7468 = vadd.f32 %v7355, %v7467
        %v7469 = vpop.f32.mrb[0].mxu0
        %v7470 = vadd.f32 %v7357, %v7469
        %v7471 = vpop.f32.mrb[0].mxu0
        %v7472 = vadd.f32 %v7359, %v7471
        %v7473 = vpop.f32.mrb[0].mxu0
        %v7474 = vadd.f32 %v7361, %v7473
        %7475 = vmatprep.mubr.bf16.mxu0 %v2401
        %7476 = vmatmul.mubr.bf16.gmra.mrb[0].mxu0 %v2400
        %v7477 = vpop.f32.mrb[0].mxu0
        %v7478 = vadd.f32 %v7365, %v7477
        %v7479 = vpop.f32.mrb[0].mxu0
        %v7480 = vadd.f32 %v7367, %v7479
        %v7481 = vpop.f32.mrb[0].mxu0
        %v7482 = vadd.f32 %v7369, %v7481
        %v7483 = vpop.f32.mrb[0].mxu0
        %v7484 = vadd.f32 %v7371, %v7483
        %7485 = vmatprep.mubr.bf16.mxu0 %v2437
        %7486 = vmatmul.mubr.bf16.gmra.mrb[0].mxu0 %v2436
        %v7487 = vpop.f32.mrb[0].mxu0
        %v7488 = vadd.f32 %v7375, %v7487
        %v7489 = vpop.f32.mrb[0].mxu0
        %v7490 = vadd.f32 %v7377, %v7489
        %v7491 = vpop.f32.mrb[0].mxu0
        %v7492 = vadd.f32 %v7379, %v7491
        %v7493 = vpop.f32.mrb[0].mxu0
        %v7494 = vadd.f32 %v7381, %v7493
        %7495 = vmatprep.mubr.bf16.mxu0 %v2473
        %7496 = vmatmul.mubr.bf16.gmra.mrb[0].mxu0 %v2472
        %v7497 = vpop.f32.mrb[0].mxu0
        %v7498 = vadd.f32 %v7385, %v7497
        %v7499 = vpop.f32.mrb[0].mxu0
        %v7500 = vadd.f32 %v7387, %v7499
        %v7501 = vpop.f32.mrb[0].mxu0
        %v7502 = vadd.f32 %v7389, %v7501
        %v7503 = vpop.f32.mrb[0].mxu0
        %v7504 = vadd.f32 %v7391, %v7503
        %7505 = vmatprep.mubr.bf16.mxu0 %v2509
        %7506 = vmatmul.mubr.bf16.gmra.mrb[0].mxu0 %v2508
        %v7507 = vpop.f32.mrb[0].mxu0
        %v7508 = vadd.f32 %v7395, %v7507
        %v7509 = vpop.f32.mrb[0].mxu0
        %v7510 = vadd.f32 %v7397, %v7509
        %v7511 = vpop.f32.mrb[0].mxu0
        %v7512 = vadd.f32 %v7399, %v7511
        %v7513 = vpop.f32.mrb[0].mxu0
        %v7514 = vadd.f32 %v7401, %v7513
        %7515 = vmatprep.mubr.bf16.mxu0 %v2545
        %7516 = vmatmul.mubr.bf16.gmra.mrb[0].mxu0 %v2544
        %v7517 = vpop.f32.mrb[0].mxu0
        %v7518 = vadd.f32 %v7405, %v7517
        %v7519 = vpop.f32.mrb[0].mxu0
        %v7520 = vadd.f32 %v7407, %v7519
        %v7521 = vpop.f32.mrb[0].mxu0
        %v7522 = vadd.f32 %v7409, %v7521
        %v7523 = vpop.f32.mrb[0].mxu0
        %v7524 = vadd.f32 %v7411, %v7523
        %7525 = vdwg.mxu0
        %7526 = vmatprep.subr.bf16.mxu0 %v5079
        %7527 = vmatpush1.bf16.msra.mxu0 %v5078
        %7528 = vmatprep.subr.bf16.mxu0 %v5081
        %7529 = vmatpush1.bf16.msra.mxu0 %v5080
        %7530 = vmatprep.subr.bf16.mxu0 %v5083
        %7531 = vmatpush1.bf16.msra.mxu0 %v5082
        %7532 = vmatprep.subr.bf16.mxu0 %v5085
        %7533 = vmatpush1.bf16.msra.mxu0 %v5084
        %7534 = vmatprep.subr.bf16.mxu0 %v5087
        %7535 = vmatpush1.bf16.msra.mxu0 %v5086
        %7536 = vmatprep.subr.bf16.mxu0 %v5089
        %7537 = vmatpush1.bf16.msra.mxu0 %v5088
        %7538 = vmatprep.subr.bf16.mxu0 %v5091
        %7539 = vmatpush1.bf16.msra.mxu0 %v5090
        %7540 = vmatprep.subr.bf16.mxu0 %v5093
        %7541 = vmatpush1.bf16.msra.mxu0 %v5092
        %7542 = vmatprep.subr.bf16.mxu0 %v5095
        %7543 = vmatpush1.bf16.msra.mxu0 %v5094
        %7544 = vmatprep.subr.bf16.mxu0 %v5097
        %7545 = vmatpush1.bf16.msra.mxu0 %v5096
        %7546 = vmatprep.subr.bf16.mxu0 %v5099
        %7547 = vmatpush1.bf16.msra.mxu0 %v5098
        %7548 = vmatprep.subr.bf16.mxu0 %v5101
        %7549 = vmatpush1.bf16.msra.mxu0 %v5100
        %7550 = vmatprep.subr.bf16.mxu0 %v5103
        %7551 = vmatpush1.bf16.msra.mxu0 %v5102
        %7552 = vmatprep.subr.bf16.mxu0 %v5105
        %7553 = vmatpush1.bf16.msra.mxu0 %v5104
        %7554 = vmatprep.subr.bf16.mxu0 %v5107
        %7555 = vmatpush1.bf16.msra.mxu0 %v5106
        %7556 = vmatprep.subr.bf16.mxu0 %v5109
        %7557 = vmatpush1.bf16.msra.mxu0 %v5108
        %7558 = vmatprep.mubr.bf16.mxu0 %v2295
        %7559 = vmatmul.mubr.bf16.gmra.mrb[0].mxu0 %v2294
        %v7560 = vpop.f32.mrb[0].mxu0
        %v7561 = vadd.f32 %v7448, %v7560
        %v7562 = vpop.f32.mrb[0].mxu0
        %v7563 = vadd.f32 %v7450, %v7562
        %v7564 = vpop.f32.mrb[0].mxu0
        %v7565 = vadd.f32 %v7452, %v7564
        %v7566 = vpop.f32.mrb[0].mxu0
        %v7567 = vadd.f32 %v7454, %v7566
        %7568 = vmatprep.mubr.bf16.mxu0 %v2331
        %7569 = vmatmul.mubr.bf16.gmra.mrb[0].mxu0 %v2330
        %v7570 = vpop.f32.mrb[0].mxu0
        %v7571 = vadd.f32 %v7458, %v7570
        %v7572 = vpop.f32.mrb[0].mxu0
        %v7573 = vadd.f32 %v7460, %v7572
        %v7574 = vpop.f32.mrb[0].mxu0
        %v7575 = vadd.f32 %v7462, %v7574
        %v7576 = vpop.f32.mrb[0].mxu0
        %v7577 = vadd.f32 %v7464, %v7576
        %7578 = vmatprep.mubr.bf16.mxu0 %v2367
        %7579 = vmatmul.mubr.bf16.gmra.mrb[0].mxu0 %v2366
        %v7580 = vpop.f32.mrb[0].mxu0
        %v7581 = vadd.f32 %v7468, %v7580
        %v7582 = vpop.f32.mrb[0].mxu0
        %v7583 = vadd.f32 %v7470, %v7582
        %v7584 = vpop.f32.mrb[0].mxu0
        %v7585 = vadd.f32 %v7472, %v7584
        %v7586 = vpop.f32.mrb[0].mxu0
        %v7587 = vadd.f32 %v7474, %v7586
        %7588 = vmatprep.mubr.bf16.mxu0 %v2403
        %7589 = vmatmul.mubr.bf16.gmra.mrb[0].mxu0 %v2402
        %v7590 = vpop.f32.mrb[0].mxu0
        %v7591 = vadd.f32 %v7478, %v7590
        %v7592 = vpop.f32.mrb[0].mxu0
        %v7593 = vadd.f32 %v7480, %v7592
        %v7594 = vpop.f32.mrb[0].mxu0
        %v7595 = vadd.f32 %v7482, %v7594
        %v7596 = vpop.f32.mrb[0].mxu0
        %v7597 = vadd.f32 %v7484, %v7596
        %7598 = vmatprep.mubr.bf16.mxu0 %v2439
        %7599 = vmatmul.mubr.bf16.gmra.mrb[0].mxu0 %v2438
        %v7600 = vpop.f32.mrb[0].mxu0
        %v7601 = vadd.f32 %v7488, %v7600
        %v7602 = vpop.f32.mrb[0].mxu0
        %v7603 = vadd.f32 %v7490, %v7602
        %v7604 = vpop.f32.mrb[0].mxu0
        %v7605 = vadd.f32 %v7492, %v7604
        %v7606 = vpop.f32.mrb[0].mxu0
        %v7607 = vadd.f32 %v7494, %v7606
        %7608 = vmatprep.mubr.bf16.mxu0 %v2475
        %7609 = vmatmul.mubr.bf16.gmra.mrb[0].mxu0 %v2474
        %v7610 = vpop.f32.mrb[0].mxu0
        %v7611 = vadd.f32 %v7498, %v7610
        %v7612 = vpop.f32.mrb[0].mxu0
        %v7613 = vadd.f32 %v7500, %v7612
        %v7614 = vpop.f32.mrb[0].mxu0
        %v7615 = vadd.f32 %v7502, %v7614
        %v7616 = vpop.f32.mrb[0].mxu0
        %v7617 = vadd.f32 %v7504, %v7616
        %7618 = vmatprep.mubr.bf16.mxu0 %v2511
        %7619 = vmatmul.mubr.bf16.gmra.mrb[0].mxu0 %v2510
        %v7620 = vpop.f32.mrb[0].mxu0
        %v7621 = vadd.f32 %v7508, %v7620
        %v7622 = vpop.f32.mrb[0].mxu0
        %v7623 = vadd.f32 %v7510, %v7622
        %v7624 = vpop.f32.mrb[0].mxu0
        %v7625 = vadd.f32 %v7512, %v7624
        %v7626 = vpop.f32.mrb[0].mxu0
        %v7627 = vadd.f32 %v7514, %v7626
        %7628 = vmatprep.mubr.bf16.mxu0 %v2547
        %7629 = vmatmul.mubr.bf16.gmra.mrb[0].mxu0 %v2546
        %v7630 = vpop.f32.mrb[0].mxu0
        %v7631 = vadd.f32 %v7518, %v7630
        %v7632 = vpop.f32.mrb[0].mxu0
        %v7633 = vadd.f32 %v7520, %v7632
        %v7634 = vpop.f32.mrb[0].mxu0
        %v7635 = vadd.f32 %v7522, %v7634
        %v7636 = vpop.f32.mrb[0].mxu0
        %v7637 = vadd.f32 %v7524, %v7636
        %7638 = vdwg.mxu0
        %7639 = vmatprep.subr.bf16.mxu0 %v5111
        %7640 = vmatpush1.bf16.msra.mxu0 %v5110
        %7641 = vmatprep.subr.bf16.mxu0 %v5113
        %7642 = vmatpush1.bf16.msra.mxu0 %v5112
        %7643 = vmatprep.subr.bf16.mxu0 %v5115
        %7644 = vmatpush1.bf16.msra.mxu0 %v5114
        %7645 = vmatprep.subr.bf16.mxu0 %v5117
        %7646 = vmatpush1.bf16.msra.mxu0 %v5116
        %7647 = vmatprep.subr.bf16.mxu0 %v5119
        %7648 = vmatpush1.bf16.msra.mxu0 %v5118
        %7649 = vmatprep.subr.bf16.mxu0 %v5121
        %7650 = vmatpush1.bf16.msra.mxu0 %v5120
        %7651 = vmatprep.subr.bf16.mxu0 %v5123
        %7652 = vmatpush1.bf16.msra.mxu0 %v5122
        %7653 = vmatprep.subr.bf16.mxu0 %v5125
        %7654 = vmatpush1.bf16.msra.mxu0 %v5124
        %7655 = vmatprep.subr.bf16.mxu0 %v5127
        %7656 = vmatpush1.bf16.msra.mxu0 %v5126
        %7657 = vmatprep.subr.bf16.mxu0 %v5129
        %7658 = vmatpush1.bf16.msra.mxu0 %v5128
        %7659 = vmatprep.subr.bf16.mxu0 %v5131
        %7660 = vmatpush1.bf16.msra.mxu0 %v5130
        %7661 = vmatprep.subr.bf16.mxu0 %v5133
        %7662 = vmatpush1.bf16.msra.mxu0 %v5132
        %7663 = vmatprep.subr.bf16.mxu0 %v5135
        %7664 = vmatpush1.bf16.msra.mxu0 %v5134
        %7665 = vmatprep.subr.bf16.mxu0 %v5137
        %7666 = vmatpush1.bf16.msra.mxu0 %v5136
        %7667 = vmatprep.subr.bf16.mxu0 %v5139
        %7668 = vmatpush1.bf16.msra.mxu0 %v5138
        %7669 = vmatprep.subr.bf16.mxu0 %v5141
        %7670 = vmatpush1.bf16.msra.mxu0 %v5140
        %7671 = vmatprep.mubr.bf16.mxu0 %v2297
        %7672 = vmatmul.mubr.bf16.gmra.mrb[0].mxu0 %v2296
        %v7673 = vpop.f32.mrb[0].mxu0
        %v7674 = vadd.f32 %v7561, %v7673
        %v7675 = vpop.f32.mrb[0].mxu0
        %v7676 = vadd.f32 %v7563, %v7675
        %v7677 = vpop.f32.mrb[0].mxu0
        %v7678 = vadd.f32 %v7565, %v7677
        %v7679 = vpop.f32.mrb[0].mxu0
        %v7680 = vadd.f32 %v7567, %v7679
        %7681 = vmatprep.mubr.bf16.mxu0 %v2333
        %7682 = vmatmul.mubr.bf16.gmra.mrb[0].mxu0 %v2332
        %v7683 = vpop.f32.mrb[0].mxu0
        %v7684 = vadd.f32 %v7571, %v7683
        %v7685 = vpop.f32.mrb[0].mxu0
        %v7686 = vadd.f32 %v7573, %v7685
        %v7687 = vpop.f32.mrb[0].mxu0
        %v7688 = vadd.f32 %v7575, %v7687
        %v7689 = vpop.f32.mrb[0].mxu0
        %v7690 = vadd.f32 %v7577, %v7689
        %7691 = vmatprep.mubr.bf16.mxu0 %v2369
        %7692 = vmatmul.mubr.bf16.gmra.mrb[0].mxu0 %v2368
        %v7693 = vpop.f32.mrb[0].mxu0
        %v7694 = vadd.f32 %v7581, %v7693
        %v7695 = vpop.f32.mrb[0].mxu0
        %v7696 = vadd.f32 %v7583, %v7695
        %v7697 = vpop.f32.mrb[0].mxu0
        %v7698 = vadd.f32 %v7585, %v7697
        %v7699 = vpop.f32.mrb[0].mxu0
        %v7700 = vadd.f32 %v7587, %v7699
        %7701 = vmatprep.mubr.bf16.mxu0 %v2405
        %7702 = vmatmul.mubr.bf16.gmra.mrb[0].mxu0 %v2404
        %v7703 = vpop.f32.mrb[0].mxu0
        %v7704 = vadd.f32 %v7591, %v7703
        %v7705 = vpop.f32.mrb[0].mxu0
        %v7706 = vadd.f32 %v7593, %v7705
        %v7707 = vpop.f32.mrb[0].mxu0
        %v7708 = vadd.f32 %v7595, %v7707
        %v7709 = vpop.f32.mrb[0].mxu0
        %v7710 = vadd.f32 %v7597, %v7709
        %7711 = vmatprep.mubr.bf16.mxu0 %v2441
        %7712 = vmatmul.mubr.bf16.gmra.mrb[0].mxu0 %v2440
        %v7713 = vpop.f32.mrb[0].mxu0
        %v7714 = vadd.f32 %v7601, %v7713
        %v7715 = vpop.f32.mrb[0].mxu0
        %v7716 = vadd.f32 %v7603, %v7715
        %v7717 = vpop.f32.mrb[0].mxu0
        %v7718 = vadd.f32 %v7605, %v7717
        %v7719 = vpop.f32.mrb[0].mxu0
        %v7720 = vadd.f32 %v7607, %v7719
        %7721 = vmatprep.mubr.bf16.mxu0 %v2477
        %7722 = vmatmul.mubr.bf16.gmra.mrb[0].mxu0 %v2476
        %v7723 = vpop.f32.mrb[0].mxu0
        %v7724 = vadd.f32 %v7611, %v7723
        %v7725 = vpop.f32.mrb[0].mxu0
        %v7726 = vadd.f32 %v7613, %v7725
        %v7727 = vpop.f32.mrb[0].mxu0
        %v7728 = vadd.f32 %v7615, %v7727
        %v7729 = vpop.f32.mrb[0].mxu0
        %v7730 = vadd.f32 %v7617, %v7729
        %7731 = vmatprep.mubr.bf16.mxu0 %v2513
        %7732 = vmatmul.mubr.bf16.gmra.mrb[0].mxu0 %v2512
        %v7733 = vpop.f32.mrb[0].mxu0
        %v7734 = vadd.f32 %v7621, %v7733
        %v7735 = vpop.f32.mrb[0].mxu0
        %v7736 = vadd.f32 %v7623, %v7735
        %v7737 = vpop.f32.mrb[0].mxu0
        %v7738 = vadd.f32 %v7625, %v7737
        %v7739 = vpop.f32.mrb[0].mxu0
        %v7740 = vadd.f32 %v7627, %v7739
        %7741 = vmatprep.mubr.bf16.mxu0 %v2549
        %7742 = vmatmul.mubr.bf16.gmra.mrb[0].mxu0 %v2548
        %v7743 = vpop.f32.mrb[0].mxu0
        %v7744 = vadd.f32 %v7631, %v7743
        %v7745 = vpop.f32.mrb[0].mxu0
        %v7746 = vadd.f32 %v7633, %v7745
        %v7747 = vpop.f32.mrb[0].mxu0
        %v7748 = vadd.f32 %v7635, %v7747
        %v7749 = vpop.f32.mrb[0].mxu0
        %v7750 = vadd.f32 %v7637, %v7749
        %7751 = vdwg.mxu0
        %v7752 = vadd.f32 %v502, %v7674
        %v7753 = vadd.f32 %v503, %v7676
        %v7754 = vadd.f32 %v504, %v7678
        %v7755 = vadd.f32 %v505, %v7680
        %v7756 = vadd.f32 %v506, %v7684
        %v7757 = vadd.f32 %v507, %v7686
        %v7758 = vadd.f32 %v508, %v7688
        %v7759 = vadd.f32 %v509, %v7690
        %v7760 = vadd.f32 %v510, %v7694
        %v7761 = vadd.f32 %v511, %v7696
        %v7762 = vadd.f32 %v512, %v7698
        %v7763 = vadd.f32 %v513, %v7700
        %v7764 = vadd.f32 %v514, %v7704
        %v7765 = vadd.f32 %v515, %v7706
        %v7766 = vadd.f32 %v516, %v7708
        %v7767 = vadd.f32 %v517, %v7710
        %v7768 = vadd.f32 %v518, %v7714
        %v7769 = vadd.f32 %v519, %v7716
        %v7770 = vadd.f32 %v520, %v7718
        %v7771 = vadd.f32 %v521, %v7720
        %v7772 = vadd.f32 %v522, %v7724
        %v7773 = vadd.f32 %v523, %v7726
        %v7774 = vadd.f32 %v524, %v7728
        %v7775 = vadd.f32 %v525, %v7730
        %v7776 = vadd.f32 %v526, %v7734
        %v7777 = vadd.f32 %v527, %v7736
        %v7778 = vadd.f32 %v528, %v7738
        %v7779 = vadd.f32 %v529, %v7740
        %v7780 = vadd.f32 %v530, %v7744
        %v7781 = vadd.f32 %v531, %v7746
        %v7782 = vadd.f32 %v532, %v7748
        %v7783 = vadd.f32 %v533, %v7750
        %7784 = vst [vmem:[%s452] sm:$0xff] %v7752
        %7785 = vst [vmem:[%s452 + $0x8] sm:$0xff] %v7753
        %7786 = vst [vmem:[%s452 + $0x10] sm:$0xff] %v7754
        %7787 = vst [vmem:[%s452 + $0x18] sm:$0xff] %v7755
        %7788 = vst [vmem:[%s452 + $0x20] sm:$0xff] %v7756
        %7789 = vst [vmem:[%s452 + $0x28] sm:$0xff] %v7757
        %7790 = vst [vmem:[%s452 + $0x30] sm:$0xff] %v7758
        %7791 = vst [vmem:[%s452 + $0x38] sm:$0xff] %v7759
        %7792 = vst [vmem:[%s452 + $0x40] sm:$0xff] %v7760
        %7793 = vst [vmem:[%s452 + $0x48] sm:$0xff] %v7761
        %7794 = vst [vmem:[%s452 + $0x50] sm:$0xff] %v7762
        %7795 = vst [vmem:[%s452 + $0x58] sm:$0xff] %v7763
        %7796 = vst [vmem:[%s452 + $0x60] sm:$0xff] %v7764
        %7797 = vst [vmem:[%s452 + $0x68] sm:$0xff] %v7765
        %7798 = vst [vmem:[%s452 + $0x70] sm:$0xff] %v7766
        %7799 = vst [vmem:[%s452 + $0x78] sm:$0xff] %v7767
        %7800 = vst [vmem:[%s452 + $0x80] sm:$0xff] %v7768
        %7801 = vst [vmem:[%s452 + $0x88] sm:$0xff] %v7769
        %7802 = vst [vmem:[%s452 + $0x90] sm:$0xff] %v7770
        %7803 = vst [vmem:[%s452 + $0x98] sm:$0xff] %v7771
        %7804 = vst [vmem:[%s452 + $0xa0] sm:$0xff] %v7772
        %7805 = vst [vmem:[%s452 + $0xa8] sm:$0xff] %v7773
        %7806 = vst [vmem:[%s452 + $0xb0] sm:$0xff] %v7774
        %7807 = vst [vmem:[%s452 + $0xb8] sm:$0xff] %v7775
        %7808 = vst [vmem:[%s452 + $0xc0] sm:$0xff] %v7776
        %7809 = vst [vmem:[%s452 + $0xc8] sm:$0xff] %v7777
        %7810 = vst [vmem:[%s452 + $0xd0] sm:$0xff] %v7778
        %7811 = vst [vmem:[%s452 + $0xd8] sm:$0xff] %v7779
        %7812 = vst [vmem:[%s452 + $0xe0] sm:$0xff] %v7780
        %7813 = vst [vmem:[%s452 + $0xe8] sm:$0xff] %v7781
        %7814 = vst [vmem:[%s452 + $0xf0] sm:$0xff] %v7782
        %7815 = vst [vmem:[%s452 + $0xf8] sm:$0xff] %v7783
        %p7816 = scmp.eq.s32.totalorder %s34, 1
        // Predicated region
        $region69: #{tpu_custom_call.1} parent=43 // pred_check
          %p7817 = pneg %p7816
        $region70: #{tpu_custom_call.1} parent=43 // pred_check_branch
          %7819 = sbr.rel (%p7817) target = $region72
        $region71: #{tpu_custom_call.1} parent=43 // pred_region
          %v7820 = vld [vmem:[%s452] sm:$0xff]
          %v7821 = vld [vmem:[%s452 + $0x8] sm:$0xff]
          %v7822 = vld [vmem:[%s452 + $0x10] sm:$0xff]
          %v7823 = vld [vmem:[%s452 + $0x18] sm:$0xff]
          %v7824 = vld [vmem:[%s452 + $0x20] sm:$0xff]
          %v7825 = vld [vmem:[%s452 + $0x28] sm:$0xff]
          %v7826 = vld [vmem:[%s452 + $0x30] sm:$0xff]
          %v7827 = vld [vmem:[%s452 + $0x38] sm:$0xff]
          %v7828 = vld [vmem:[%s452 + $0x40] sm:$0xff]
          %v7829 = vld [vmem:[%s452 + $0x48] sm:$0xff]
          %v7830 = vld [vmem:[%s452 + $0x50] sm:$0xff]
          %v7831 = vld [vmem:[%s452 + $0x58] sm:$0xff]
          %v7832 = vld [vmem:[%s452 + $0x60] sm:$0xff]
          %v7833 = vld [vmem:[%s452 + $0x68] sm:$0xff]
          %v7834 = vld [vmem:[%s452 + $0x70] sm:$0xff]
          %v7835 = vld [vmem:[%s452 + $0x78] sm:$0xff]
          %v7836 = vld [vmem:[%s452 + $0x80] sm:$0xff]
          %v7837 = vld [vmem:[%s452 + $0x88] sm:$0xff]
          %v7838 = vld [vmem:[%s452 + $0x90] sm:$0xff]
          %v7839 = vld [vmem:[%s452 + $0x98] sm:$0xff]
          %v7840 = vld [vmem:[%s452 + $0xa0] sm:$0xff]
          %v7841 = vld [vmem:[%s452 + $0xa8] sm:$0xff]
          %v7842 = vld [vmem:[%s452 + $0xb0] sm:$0xff]
          %v7843 = vld [vmem:[%s452 + $0xb8] sm:$0xff]
          %v7844 = vld [vmem:[%s452 + $0xc0] sm:$0xff]
          %v7845 = vld [vmem:[%s452 + $0xc8] sm:$0xff]
          %v7846 = vld [vmem:[%s452 + $0xd0] sm:$0xff]
          %v7847 = vld [vmem:[%s452 + $0xd8] sm:$0xff]
          %v7848 = vld [vmem:[%s452 + $0xe0] sm:$0xff]
          %v7849 = vld [vmem:[%s452 + $0xe8] sm:$0xff]
          %v7850 = vld [vmem:[%s452 + $0xf0] sm:$0xff]
          %v7851 = vld [vmem:[%s452 + $0xf8] sm:$0xff]
          %v7852 = vld [vmem:[%s462] sm:$0xff]
          %v7853 = vld [vmem:[%s462 + $0x8] sm:$0xff]
          %v7854 = vld [vmem:[%s462 + $0x10] sm:$0xff]
          %v7855 = vld [vmem:[%s462 + $0x18] sm:$0xff]
          %v7856 = vld [vmem:[%s462 + $0x20] sm:$0xff]
          %v7857 = vld [vmem:[%s462 + $0x28] sm:$0xff]
          %v7858 = vld [vmem:[%s462 + $0x30] sm:$0xff]
          %v7859 = vld [vmem:[%s462 + $0x38] sm:$0xff]
          %v7860 = vld [vmem:[%s462 + $0x40] sm:$0xff]
          %v7861 = vld [vmem:[%s462 + $0x48] sm:$0xff]
          %v7862 = vld [vmem:[%s462 + $0x50] sm:$0xff]
          %v7863 = vld [vmem:[%s462 + $0x58] sm:$0xff]
          %v7864 = vld [vmem:[%s462 + $0x60] sm:$0xff]
          %v7865 = vld [vmem:[%s462 + $0x68] sm:$0xff]
          %v7866 = vld [vmem:[%s462 + $0x70] sm:$0xff]
          %v7867 = vld [vmem:[%s462 + $0x78] sm:$0xff]
          %v7868 = vld [vmem:[%s462 + $0x80] sm:$0xff]
          %v7869 = vld [vmem:[%s462 + $0x88] sm:$0xff]
          %v7870 = vld [vmem:[%s462 + $0x90] sm:$0xff]
          %v7871 = vld [vmem:[%s462 + $0x98] sm:$0xff]
          %v7872 = vld [vmem:[%s462 + $0xa0] sm:$0xff]
          %v7873 = vld [vmem:[%s462 + $0xa8] sm:$0xff]
          %v7874 = vld [vmem:[%s462 + $0xb0] sm:$0xff]
          %v7875 = vld [vmem:[%s462 + $0xb8] sm:$0xff]
          %v7876 = vld [vmem:[%s462 + $0xc0] sm:$0xff]
          %v7877 = vld [vmem:[%s462 + $0xc8] sm:$0xff]
          %v7878 = vld [vmem:[%s462 + $0xd0] sm:$0xff]
          %v7879 = vld [vmem:[%s462 + $0xd8] sm:$0xff]
          %v7880 = vld [vmem:[%s462 + $0xe0] sm:$0xff]
          %v7881 = vld [vmem:[%s462 + $0xe8] sm:$0xff]
          %v7882 = vld [vmem:[%s462 + $0xf0] sm:$0xff]
          %v7883 = vld [vmem:[%s462 + $0xf8] sm:$0xff]
          %v7884 = vld [vmem:[%s399] sm:$0xff]
          %v7885 = vld [vmem:[%s399 + $0x8] sm:$0xff]
          %v7886 = vld [vmem:[%s399 + $0x10] sm:$0xff]
          %v7887 = vld [vmem:[%s399 + $0x18] sm:$0xff]
          %v7888 = vld [vmem:[%s399 + $0x20] sm:$0xff]
          %v7889 = vld [vmem:[%s399 + $0x28] sm:$0xff]
          %v7890 = vld [vmem:[%s399 + $0x30] sm:$0xff]
          %v7891 = vld [vmem:[%s399 + $0x38] sm:$0xff]
          %v7892 = vadd.f32 %v7820, %v7822
          %v7893 = vadd.f32 %v7892, %v7824
          %v7894 = vadd.f32 %v7893, %v7826
          %v7895 = vadd.f32 %v7894, %v7828
          %v7896 = vadd.f32 %v7895, %v7830
          %v7897 = vadd.f32 %v7896, %v7832
          %v7898 = vadd.f32 %v7897, %v7834
          %v7899 = vrot.slane %v7898, 4
          %v7900 = vadd.f32 %v7898, %v7899
          %v7901 = vrot.slane %v7900, 2
          %v7902 = vadd.f32 %v7900, %v7901
          %v7903 = vrot.slane %v7902, 1
          %v7904 = vadd.f32 %v7902, %v7903
          %v7905 = vadd.f32 %v7821, %v7823
          %v7906 = vadd.f32 %v7905, %v7825
          %v7907 = vadd.f32 %v7906, %v7827
          %v7908 = vadd.f32 %v7907, %v7829
          %v7909 = vadd.f32 %v7908, %v7831
          %v7910 = vadd.f32 %v7909, %v7833
          %v7911 = vadd.f32 %v7910, %v7835
          %v7912 = vrot.slane %v7911, 4
          %v7913 = vadd.f32 %v7911, %v7912
          %v7914 = vrot.slane %v7913, 2
          %v7915 = vadd.f32 %v7913, %v7914
          %v7916 = vrot.slane %v7915, 1
          %v7917 = vadd.f32 %v7915, %v7916
          %v7918 = vadd.f32 %v7836, %v7838
          %v7919 = vadd.f32 %v7918, %v7840
          %v7920 = vadd.f32 %v7919, %v7842
          %v7921 = vadd.f32 %v7920, %v7844
          %v7922 = vadd.f32 %v7921, %v7846
          %v7923 = vadd.f32 %v7922, %v7848
          %v7924 = vadd.f32 %v7923, %v7850
          %v7925 = vrot.slane %v7924, 4
          %v7926 = vadd.f32 %v7924, %v7925
          %v7927 = vrot.slane %v7926, 2
          %v7928 = vadd.f32 %v7926, %v7927
          %v7929 = vrot.slane %v7928, 1
          %v7930 = vadd.f32 %v7928, %v7929
          %v7931 = vadd.f32 %v7837, %v7839
          %v7932 = vadd.f32 %v7931, %v7841
          %v7933 = vadd.f32 %v7932, %v7843
          %v7934 = vadd.f32 %v7933, %v7845
          %v7935 = vadd.f32 %v7934, %v7847
          %v7936 = vadd.f32 %v7935, %v7849
          %v7937 = vadd.f32 %v7936, %v7851
          %v7938 = vrot.slane %v7937, 4
          %v7939 = vadd.f32 %v7937, %v7938
          %v7940 = vrot.slane %v7939, 2
          %v7941 = vadd.f32 %v7939, %v7940
          %v7942 = vrot.slane %v7941, 1
          %v7943 = vadd.f32 %v7941, %v7942
          %vm7948 = vcmask 1041409
          %v7949 = vsel %vm7948, %v7930, %v7904
          %v7950 = vsel %vm7948, %v7943, %v7917
          %7953 = vmatprep.subr.mxu0 0.0
          %7954 = vmatpush1.msra.mxu0 %v7852
          %7955 = vmatprep.subr.mxu0 0.0
          %7956 = vmatpush1.msra.mxu0 %v7853
          %7957 = vmatprep.subr.mxu0 0.0
          %7958 = vmatpush1.msra.mxu0 %v7854
          %7959 = vmatprep.subr.mxu0 0.0
          %7960 = vmatpush1.msra.mxu0 %v7855
          %7961 = vmatprep.subr.mxu0 0.0
          %7962 = vmatpush1.msra.mxu0 %v7856
          %7963 = vmatprep.subr.mxu0 0.0
          %7964 = vmatpush1.msra.mxu0 %v7857
          %7965 = vmatprep.subr.mxu0 0.0
          %7966 = vmatpush1.msra.mxu0 %v7858
          %7967 = vmatprep.subr.mxu0 0.0
          %7968 = vmatpush1.msra.mxu0 %v7859
          %7969 = vmatprep.subr.mxu0 0.0
          %7970 = vmatpush1.msra.mxu0 %v7860
          %7971 = vmatprep.subr.mxu0 0.0
          %7972 = vmatpush1.msra.mxu0 %v7861
          %7973 = vmatprep.subr.mxu0 0.0
          %7974 = vmatpush1.msra.mxu0 %v7862
          %7975 = vmatprep.subr.mxu0 0.0
          %7976 = vmatpush1.msra.mxu0 %v7863
          %7977 = vmatprep.subr.mxu0 0.0
          %7978 = vmatpush1.msra.mxu0 %v7864
          %7979 = vmatprep.subr.mxu0 0.0
          %7980 = vmatpush1.msra.mxu0 %v7865
          %7981 = vmatprep.subr.mxu0 0.0
          %7982 = vmatpush1.msra.mxu0 %v7866
          %7983 = vmatprep.subr.mxu0 0.0
          %7984 = vmatpush1.msra.mxu0 %v7867
          %7985 = vmatprep.subr.mxu0 0.0
          %7986 = vmatpush1.msra.mxu0 %v7868
          %7987 = vmatprep.subr.mxu0 0.0
          %7988 = vmatpush1.msra.mxu0 %v7869
          %7989 = vmatprep.subr.mxu0 0.0
          %7990 = vmatpush1.msra.mxu0 %v7870
          %7991 = vmatprep.subr.mxu0 0.0
          %7992 = vmatpush1.msra.mxu0 %v7871
          %7993 = vmatprep.subr.mxu0 0.0
          %7994 = vmatpush1.msra.mxu0 %v7872
          %7995 = vmatprep.subr.mxu0 0.0
          %7996 = vmatpush1.msra.mxu0 %v7873
          %7997 = vmatprep.subr.mxu0 0.0
          %7998 = vmatpush1.msra.mxu0 %v7874
          %7999 = vmatprep.subr.mxu0 0.0
          %8000 = vmatpush1.msra.mxu0 %v7875
          %8001 = vmatprep.subr.mxu0 0.0
          %8002 = vmatpush1.msra.mxu0 %v7876
          %8003 = vmatprep.subr.mxu0 0.0
          %8004 = vmatpush1.msra.mxu0 %v7877
          %8005 = vmatprep.subr.mxu0 0.0
          %8006 = vmatpush1.msra.mxu0 %v7878
          %8007 = vmatprep.subr.mxu0 0.0
          %8008 = vmatpush1.msra.mxu0 %v7879
          %8009 = vmatprep.subr.mxu0 0.0
          %8010 = vmatpush1.msra.mxu0 %v7880
          %8011 = vmatprep.subr.mxu0 0.0
          %8012 = vmatpush1.msra.mxu0 %v7881
          %8013 = vmatprep.subr.mxu0 0.0
          %8014 = vmatpush1.msra.mxu0 %v7882
          %8015 = vmatprep.subr.mxu0 0.0
          %8016 = vmatpush1.msra.mxu0 %v7883
          %8017 = vmatprep.mubr.f32.mxu0 %v7950
          %8018 = vmatmul.mubr.f32.gmra.mrb[0].mxu0 %v7949
          %v8019 = vpop.f32.mrb[0].mxu0
          %v8020 = vadd.f32 0.0, %v8019
          %v8021 = vpop.f32.mrb[0].mxu0
          %8022 = vdwg.mxu0
          %v8023 = vrcp.pop 1024.0
          %v8024 = vmul.f32 %v8020, %v8023
          %vm8025 = vcmask 261120
          %v8027 = vsel %vm8025, %v8024, 0
          %8029 = vmatprep.subr.mxu0 %v7885
          %8030 = vmatpush1.msra.mxu0 %v7884
          %8031 = vmatprep.subr.mxu0 %v7887
          %8032 = vmatpush1.msra.mxu0 %v7886
          %8033 = vmatprep.subr.mxu0 %v7889
          %8034 = vmatpush1.msra.mxu0 %v7888
          %8035 = vmatprep.subr.mxu0 %v7891
          %8036 = vmatpush1.msra.mxu0 %v7890
          %8037 = vmatprep.subr.mxu0 0.0
          %8038 = vmatpush1.msra.mxu0 0.0
          %8039 = vmatprep.subr.mxu0 0.0
          %8040 = vmatpush1.msra.mxu0 0.0
          %8041 = vmatprep.subr.mxu0 0.0
          %8042 = vmatpush1.msra.mxu0 0.0
          %8043 = vmatprep.subr.mxu0 0.0
          %8044 = vmatpush1.msra.mxu0 0.0
          %8045 = vmatprep.subr.mxu0 0.0
          %8046 = vmatpush1.msra.mxu0 0.0
          %8047 = vmatprep.subr.mxu0 0.0
          %8048 = vmatpush1.msra.mxu0 0.0
          %8049 = vmatprep.subr.mxu0 0.0
          %8050 = vmatpush1.msra.mxu0 0.0
          %8051 = vmatprep.subr.mxu0 0.0
          %8052 = vmatpush1.msra.mxu0 0.0
          %8053 = vmatprep.subr.mxu0 0.0
          %8054 = vmatpush1.msra.mxu0 0.0
          %8055 = vmatprep.subr.mxu0 0.0
          %8056 = vmatpush1.msra.mxu0 0.0
          %8057 = vmatprep.subr.mxu0 0.0
          %8058 = vmatpush1.msra.mxu0 0.0
          %8059 = vmatprep.subr.mxu0 0.0
          %8060 = vmatpush1.msra.mxu0 0.0
          %8061 = vmatprep.subr.mxu0 0.0
          %8062 = vmatpush1.msra.mxu0 0.0
          %8063 = vmatprep.subr.mxu0 0.0
          %8064 = vmatpush1.msra.mxu0 0.0
          %8065 = vmatprep.subr.mxu0 0.0
          %8066 = vmatpush1.msra.mxu0 0.0
          %8067 = vmatprep.subr.mxu0 0.0
          %8068 = vmatpush1.msra.mxu0 0.0
          %8069 = vmatprep.subr.mxu0 0.0
          %8070 = vmatpush1.msra.mxu0 0.0
          %8071 = vmatprep.subr.mxu0 0.0
          %8072 = vmatpush1.msra.mxu0 0.0
          %8073 = vmatprep.subr.mxu0 0.0
          %8074 = vmatpush1.msra.mxu0 0.0
          %8075 = vmatprep.subr.mxu0 0.0
          %8076 = vmatpush1.msra.mxu0 0.0
          %8077 = vmatprep.subr.mxu0 0.0
          %8078 = vmatpush1.msra.mxu0 0.0
          %8079 = vmatprep.subr.mxu0 0.0
          %8080 = vmatpush1.msra.mxu0 0.0
          %8081 = vmatprep.subr.mxu0 0.0
          %8082 = vmatpush1.msra.mxu0 0.0
          %8083 = vmatprep.subr.mxu0 0.0
          %8084 = vmatpush1.msra.mxu0 0.0
          %8085 = vmatprep.subr.mxu0 0.0
          %8086 = vmatpush1.msra.mxu0 0.0
          %8087 = vmatprep.subr.mxu0 0.0
          %8088 = vmatpush1.msra.mxu0 0.0
          %8089 = vmatprep.subr.mxu0 0.0
          %8090 = vmatpush1.msra.mxu0 0.0
          %8091 = vmatprep.subr.mxu0 0.0
          %8092 = vmatpush1.msra.mxu0 0.0
          %8093 = vmatprep.mubr.f32.mxu0 0.0
          %8094 = vmatmul.mubr.f32.gmra.mrb[0].mxu0 %v8027
          %v8095 = vpop.f32.mrb[0].mxu0
          %v8096 = vadd.f32 0.0, %v8095
          %v8097 = vpop.f32.mrb[0].mxu0
          %v8098 = vadd.f32 0.0, %v8097
          %8099 = vdwg.mxu0
          %v8102 = vcombine.low %v8096, %v8098
          %v8104 = vunpack.c.l.s4 1966171168
          %v8105 = vunpack.c.0.s8 %v8104
          %v8106 = vlaneseq
          %v8107 = vshrl.u32 %v8106, 7
          %v8108 = vsub.s32 %v8105, %v8107
          %v8109 = vrot.slane %v8102, %v8108
          %v8110 = vcombine.high %v8109, %v8109
          %v8112 = vunpack.c.l.s4 1966171168
          %v8113 = vunpack.c.0.s8 %v8112
          %v8114 = vlaneseq
          %v8115 = vshrl.u32 %v8114, 7
          %v8116 = vsub.s32 %v8113, %v8115
          %v8117 = vrot.slane %v8109, %v8116
          %v8119 = vunpack.c.l.s4 1966171168
          %v8120 = vunpack.c.0.s8 %v8119
          %v8121 = vlaneseq
          %v8122 = vshrl.u32 %v8121, 7
          %v8123 = vsub.s32 %v8120, %v8122
          %v8124 = vrot.slane %v8110, %v8123
          %v8125 = vlaneseq
          %v8126 = vshrl.u32 %v8125, 7
          %v8127 = vsub.s32 0, %v8126
          %v8128 = vrot.slane %v8117, %v8127
          %v8129 = vlaneseq
          %v8130 = vshrl.u32 %v8129, 7
          %v8131 = vsub.s32 1, %v8130
          %v8132 = vrot.slane %v8117, %v8131
          %v8133 = vlaneseq
          %v8134 = vshrl.u32 %v8133, 7
          %v8135 = vsub.s32 0, %v8134
          %v8136 = vrot.slane %v8124, %v8135
          %v8137 = vlaneseq
          %v8138 = vshrl.u32 %v8137, 7
          %v8139 = vsub.s32 1, %v8138
          %v8140 = vrot.slane %v8124, %v8139
          %v8145 = vsub.f32 %v7820, %v8128
          %v8146 = vsub.f32 %v7821, %v8132
          %v8147 = vsub.f32 %v7822, %v8128
          %v8148 = vsub.f32 %v7823, %v8132
          %v8149 = vsub.f32 %v7824, %v8128
          %v8150 = vsub.f32 %v7825, %v8132
          %v8151 = vsub.f32 %v7826, %v8128
          %v8152 = vsub.f32 %v7827, %v8132
          %v8153 = vsub.f32 %v7828, %v8128
          %v8154 = vsub.f32 %v7829, %v8132
          %v8155 = vsub.f32 %v7830, %v8128
          %v8156 = vsub.f32 %v7831, %v8132
          %v8157 = vsub.f32 %v7832, %v8128
          %v8158 = vsub.f32 %v7833, %v8132
          %v8159 = vsub.f32 %v7834, %v8128
          %v8160 = vsub.f32 %v7835, %v8132
          %v8161 = vsub.f32 %v7836, %v8136
          %v8162 = vsub.f32 %v7837, %v8140
          %v8163 = vsub.f32 %v7838, %v8136
          %v8164 = vsub.f32 %v7839, %v8140
          %v8165 = vsub.f32 %v7840, %v8136
          %v8166 = vsub.f32 %v7841, %v8140
          %v8167 = vsub.f32 %v7842, %v8136
          %v8168 = vsub.f32 %v7843, %v8140
          %v8169 = vsub.f32 %v7844, %v8136
          %v8170 = vsub.f32 %v7845, %v8140
          %v8171 = vsub.f32 %v7846, %v8136
          %v8172 = vsub.f32 %v7847, %v8140
          %v8173 = vsub.f32 %v7848, %v8136
          %v8174 = vsub.f32 %v7849, %v8140
          %v8175 = vsub.f32 %v7850, %v8136
          %v8176 = vsub.f32 %v7851, %v8140
          %v8177 = vmul.f32 %v8145, %v8145
          %v8178 = vmul.f32 %v8146, %v8146
          %v8179 = vmul.f32 %v8147, %v8147
          %v8180 = vmul.f32 %v8148, %v8148
          %v8181 = vmul.f32 %v8149, %v8149
          %v8182 = vmul.f32 %v8150, %v8150
          %v8183 = vmul.f32 %v8151, %v8151
          %v8184 = vmul.f32 %v8152, %v8152
          %v8185 = vmul.f32 %v8153, %v8153
          %v8186 = vmul.f32 %v8154, %v8154
          %v8187 = vmul.f32 %v8155, %v8155
          %v8188 = vmul.f32 %v8156, %v8156
          %v8189 = vmul.f32 %v8157, %v8157
          %v8190 = vmul.f32 %v8158, %v8158
          %v8191 = vmul.f32 %v8159, %v8159
          %v8192 = vmul.f32 %v8160, %v8160
          %v8193 = vmul.f32 %v8161, %v8161
          %v8194 = vmul.f32 %v8162, %v8162
          %v8195 = vmul.f32 %v8163, %v8163
          %v8196 = vmul.f32 %v8164, %v8164
          %v8197 = vmul.f32 %v8165, %v8165
          %v8198 = vmul.f32 %v8166, %v8166
          %v8199 = vmul.f32 %v8167, %v8167
          %v8200 = vmul.f32 %v8168, %v8168
          %v8201 = vmul.f32 %v8169, %v8169
          %v8202 = vmul.f32 %v8170, %v8170
          %v8203 = vmul.f32 %v8171, %v8171
          %v8204 = vmul.f32 %v8172, %v8172
          %v8205 = vmul.f32 %v8173, %v8173
          %v8206 = vmul.f32 %v8174, %v8174
          %v8207 = vmul.f32 %v8175, %v8175
          %v8208 = vmul.f32 %v8176, %v8176
          %v8209 = vadd.f32 %v8177, %v8179
          %v8210 = vadd.f32 %v8209, %v8181
          %v8211 = vadd.f32 %v8210, %v8183
          %v8212 = vadd.f32 %v8211, %v8185
          %v8213 = vadd.f32 %v8212, %v8187
          %v8214 = vadd.f32 %v8213, %v8189
          %v8215 = vadd.f32 %v8214, %v8191
          %v8216 = vrot.slane %v8215, 4
          %v8217 = vadd.f32 %v8215, %v8216
          %v8218 = vrot.slane %v8217, 2
          %v8219 = vadd.f32 %v8217, %v8218
          %v8220 = vrot.slane %v8219, 1
          %v8221 = vadd.f32 %v8219, %v8220
          %v8222 = vadd.f32 %v8178, %v8180
          %v8223 = vadd.f32 %v8222, %v8182
          %v8224 = vadd.f32 %v8223, %v8184
          %v8225 = vadd.f32 %v8224, %v8186
          %v8226 = vadd.f32 %v8225, %v8188
          %v8227 = vadd.f32 %v8226, %v8190
          %v8228 = vadd.f32 %v8227, %v8192
          %v8229 = vrot.slane %v8228, 4
          %v8230 = vadd.f32 %v8228, %v8229
          %v8231 = vrot.slane %v8230, 2
          %v8232 = vadd.f32 %v8230, %v8231
          %v8233 = vrot.slane %v8232, 1
          %v8234 = vadd.f32 %v8232, %v8233
          %v8235 = vadd.f32 %v8193, %v8195
          %v8236 = vadd.f32 %v8235, %v8197
          %v8237 = vadd.f32 %v8236, %v8199
          %v8238 = vadd.f32 %v8237, %v8201
          %v8239 = vadd.f32 %v8238, %v8203
          %v8240 = vadd.f32 %v8239, %v8205
          %v8241 = vadd.f32 %v8240, %v8207
          %v8242 = vrot.slane %v8241, 4
          %v8243 = vadd.f32 %v8241, %v8242
          %v8244 = vrot.slane %v8243, 2
          %v8245 = vadd.f32 %v8243, %v8244
          %v8246 = vrot.slane %v8245, 1
          %v8247 = vadd.f32 %v8245, %v8246
          %v8248 = vadd.f32 %v8194, %v8196
          %v8249 = vadd.f32 %v8248, %v8198
          %v8250 = vadd.f32 %v8249, %v8200
          %v8251 = vadd.f32 %v8250, %v8202
          %v8252 = vadd.f32 %v8251, %v8204
          %v8253 = vadd.f32 %v8252, %v8206
          %v8254 = vadd.f32 %v8253, %v8208
          %v8255 = vrot.slane %v8254, 4
          %v8256 = vadd.f32 %v8254, %v8255
          %v8257 = vrot.slane %v8256, 2
          %v8258 = vadd.f32 %v8256, %v8257
          %v8259 = vrot.slane %v8258, 1
          %v8260 = vadd.f32 %v8258, %v8259
          %v8265 = vsel %vm7948, %v8247, %v8221
          %v8266 = vsel %vm7948, %v8260, %v8234
          %8269 = vmatprep.subr.mxu0 0.0
          %8270 = vmatpush1.msra.mxu0 %v7852
          %8271 = vmatprep.subr.mxu0 0.0
          %8272 = vmatpush1.msra.mxu0 %v7853
          %8273 = vmatprep.subr.mxu0 0.0
          %8274 = vmatpush1.msra.mxu0 %v7854
          %8275 = vmatprep.subr.mxu0 0.0
          %8276 = vmatpush1.msra.mxu0 %v7855
          %8277 = vmatprep.subr.mxu0 0.0
          %8278 = vmatpush1.msra.mxu0 %v7856
          %8279 = vmatprep.subr.mxu0 0.0
          %8280 = vmatpush1.msra.mxu0 %v7857
          %8281 = vmatprep.subr.mxu0 0.0
          %8282 = vmatpush1.msra.mxu0 %v7858
          %8283 = vmatprep.subr.mxu0 0.0
          %8284 = vmatpush1.msra.mxu0 %v7859
          %8285 = vmatprep.subr.mxu0 0.0
          %8286 = vmatpush1.msra.mxu0 %v7860
          %8287 = vmatprep.subr.mxu0 0.0
          %8288 = vmatpush1.msra.mxu0 %v7861
          %8289 = vmatprep.subr.mxu0 0.0
          %8290 = vmatpush1.msra.mxu0 %v7862
          %8291 = vmatprep.subr.mxu0 0.0
          %8292 = vmatpush1.msra.mxu0 %v7863
          %8293 = vmatprep.subr.mxu0 0.0
          %8294 = vmatpush1.msra.mxu0 %v7864
          %8295 = vmatprep.subr.mxu0 0.0
          %8296 = vmatpush1.msra.mxu0 %v7865
          %8297 = vmatprep.subr.mxu0 0.0
          %8298 = vmatpush1.msra.mxu0 %v7866
          %8299 = vmatprep.subr.mxu0 0.0
          %8300 = vmatpush1.msra.mxu0 %v7867
          %8301 = vmatprep.subr.mxu0 0.0
          %8302 = vmatpush1.msra.mxu0 %v7868
          %8303 = vmatprep.subr.mxu0 0.0
          %8304 = vmatpush1.msra.mxu0 %v7869
          %8305 = vmatprep.subr.mxu0 0.0
          %8306 = vmatpush1.msra.mxu0 %v7870
          %8307 = vmatprep.subr.mxu0 0.0
          %8308 = vmatpush1.msra.mxu0 %v7871
          %8309 = vmatprep.subr.mxu0 0.0
          %8310 = vmatpush1.msra.mxu0 %v7872
          %8311 = vmatprep.subr.mxu0 0.0
          %8312 = vmatpush1.msra.mxu0 %v7873
          %8313 = vmatprep.subr.mxu0 0.0
          %8314 = vmatpush1.msra.mxu0 %v7874
          %8315 = vmatprep.subr.mxu0 0.0
          %8316 = vmatpush1.msra.mxu0 %v7875
          %8317 = vmatprep.subr.mxu0 0.0
          %8318 = vmatpush1.msra.mxu0 %v7876
          %8319 = vmatprep.subr.mxu0 0.0
          %8320 = vmatpush1.msra.mxu0 %v7877
          %8321 = vmatprep.subr.mxu0 0.0
          %8322 = vmatpush1.msra.mxu0 %v7878
          %8323 = vmatprep.subr.mxu0 0.0
          %8324 = vmatpush1.msra.mxu0 %v7879
          %8325 = vmatprep.subr.mxu0 0.0
          %8326 = vmatpush1.msra.mxu0 %v7880
          %8327 = vmatprep.subr.mxu0 0.0
          %8328 = vmatpush1.msra.mxu0 %v7881
          %8329 = vmatprep.subr.mxu0 0.0
          %8330 = vmatpush1.msra.mxu0 %v7882
          %8331 = vmatprep.subr.mxu0 0.0
          %8332 = vmatpush1.msra.mxu0 %v7883
          %8333 = vmatprep.mubr.f32.mxu0 %v8266
          %8334 = vmatmul.mubr.f32.gmra.mrb[0].mxu0 %v8265
          %v8335 = vpop.f32.mrb[0].mxu0
          %v8336 = vadd.f32 0.0, %v8335
          %v8337 = vpop.f32.mrb[0].mxu0
          %8338 = vdwg.mxu0
          %v8339 = vmul.f32 %v8336, %v8023
          %v8340 = vadd.f32 %v8339, 1e-05
          %v8341 = vrsqrt.pop %v8340
          %v8343 = vsel %vm8025, %v8341, 0
          %8345 = vmatprep.subr.mxu0 %v7885
          %8346 = vmatpush1.msra.mxu0 %v7884
          %8347 = vmatprep.subr.mxu0 %v7887
          %8348 = vmatpush1.msra.mxu0 %v7886
          %8349 = vmatprep.subr.mxu0 %v7889
          %8350 = vmatpush1.msra.mxu0 %v7888
          %8351 = vmatprep.subr.mxu0 %v7891
          %8352 = vmatpush1.msra.mxu0 %v7890
          %8353 = vmatprep.subr.mxu0 0.0
          %8354 = vmatpush1.msra.mxu0 0.0
          %8355 = vmatprep.subr.mxu0 0.0
          %8356 = vmatpush1.msra.mxu0 0.0
          %8357 = vmatprep.subr.mxu0 0.0
          %8358 = vmatpush1.msra.mxu0 0.0
          %8359 = vmatprep.subr.mxu0 0.0
          %8360 = vmatpush1.msra.mxu0 0.0
          %8361 = vmatprep.subr.mxu0 0.0
          %8362 = vmatpush1.msra.mxu0 0.0
          %8363 = vmatprep.subr.mxu0 0.0
          %8364 = vmatpush1.msra.mxu0 0.0
          %8365 = vmatprep.subr.mxu0 0.0
          %8366 = vmatpush1.msra.mxu0 0.0
          %8367 = vmatprep.subr.mxu0 0.0
          %8368 = vmatpush1.msra.mxu0 0.0
          %8369 = vmatprep.subr.mxu0 0.0
          %8370 = vmatpush1.msra.mxu0 0.0
          %8371 = vmatprep.subr.mxu0 0.0
          %8372 = vmatpush1.msra.mxu0 0.0
          %8373 = vmatprep.subr.mxu0 0.0
          %8374 = vmatpush1.msra.mxu0 0.0
          %8375 = vmatprep.subr.mxu0 0.0
          %8376 = vmatpush1.msra.mxu0 0.0
          %8377 = vmatprep.subr.mxu0 0.0
          %8378 = vmatpush1.msra.mxu0 0.0
          %8379 = vmatprep.subr.mxu0 0.0
          %8380 = vmatpush1.msra.mxu0 0.0
          %8381 = vmatprep.subr.mxu0 0.0
          %8382 = vmatpush1.msra.mxu0 0.0
          %8383 = vmatprep.subr.mxu0 0.0
          %8384 = vmatpush1.msra.mxu0 0.0
          %8385 = vmatprep.subr.mxu0 0.0
          %8386 = vmatpush1.msra.mxu0 0.0
          %8387 = vmatprep.subr.mxu0 0.0
          %8388 = vmatpush1.msra.mxu0 0.0
          %8389 = vmatprep.subr.mxu0 0.0
          %8390 = vmatpush1.msra.mxu0 0.0
          %8391 = vmatprep.subr.mxu0 0.0
          %8392 = vmatpush1.msra.mxu0 0.0
          %8393 = vmatprep.subr.mxu0 0.0
          %8394 = vmatpush1.msra.mxu0 0.0
          %8395 = vmatprep.subr.mxu0 0.0
          %8396 = vmatpush1.msra.mxu0 0.0
          %8397 = vmatprep.subr.mxu0 0.0
          %8398 = vmatpush1.msra.mxu0 0.0
          %8399 = vmatprep.subr.mxu0 0.0
          %8400 = vmatpush1.msra.mxu0 0.0
          %8401 = vmatprep.subr.mxu0 0.0
          %8402 = vmatpush1.msra.mxu0 0.0
          %8403 = vmatprep.subr.mxu0 0.0
          %8404 = vmatpush1.msra.mxu0 0.0
          %8405 = vmatprep.subr.mxu0 0.0
          %8406 = vmatpush1.msra.mxu0 0.0
          %8407 = vmatprep.subr.mxu0 0.0
          %8408 = vmatpush1.msra.mxu0 0.0
          %8409 = vmatprep.mubr.f32.mxu0 0.0
          %8410 = vmatmul.mubr.f32.gmra.mrb[0].mxu0 %v8343
          %v8411 = vpop.f32.mrb[0].mxu0
          %v8412 = vadd.f32 0.0, %v8411
          %v8413 = vpop.f32.mrb[0].mxu0
          %v8414 = vadd.f32 0.0, %v8413
          %8415 = vdwg.mxu0
          %v8418 = vcombine.low %v8412, %v8414
          %v8420 = vunpack.c.l.s4 1966171168
          %v8421 = vunpack.c.0.s8 %v8420
          %v8422 = vlaneseq
          %v8423 = vshrl.u32 %v8422, 7
          %v8424 = vsub.s32 %v8421, %v8423
          %v8425 = vrot.slane %v8418, %v8424
          %v8426 = vcombine.high %v8425, %v8425
          %v8428 = vunpack.c.l.s4 1966171168
          %v8429 = vunpack.c.0.s8 %v8428
          %v8430 = vlaneseq
          %v8431 = vshrl.u32 %v8430, 7
          %v8432 = vsub.s32 %v8429, %v8431
          %v8433 = vrot.slane %v8425, %v8432
          %v8435 = vunpack.c.l.s4 1966171168
          %v8436 = vunpack.c.0.s8 %v8435
          %v8437 = vlaneseq
          %v8438 = vshrl.u32 %v8437, 7
          %v8439 = vsub.s32 %v8436, %v8438
          %v8440 = vrot.slane %v8426, %v8439
          %v8441 = vlaneseq
          %v8442 = vshrl.u32 %v8441, 7
          %v8443 = vsub.s32 0, %v8442
          %v8444 = vrot.slane %v8433, %v8443
          %v8445 = vlaneseq
          %v8446 = vshrl.u32 %v8445, 7
          %v8447 = vsub.s32 1, %v8446
          %v8448 = vrot.slane %v8433, %v8447
          %v8449 = vlaneseq
          %v8450 = vshrl.u32 %v8449, 7
          %v8451 = vsub.s32 0, %v8450
          %v8452 = vrot.slane %v8440, %v8451
          %v8453 = vlaneseq
          %v8454 = vshrl.u32 %v8453, 7
          %v8455 = vsub.s32 1, %v8454
          %v8456 = vrot.slane %v8440, %v8455
          %v8461 = vmul.f32 %v8145, %v8444
          %v8462 = vmul.f32 %v8146, %v8448
          %v8463 = vmul.f32 %v8147, %v8444
          %v8464 = vmul.f32 %v8148, %v8448
          %v8465 = vmul.f32 %v8149, %v8444
          %v8466 = vmul.f32 %v8150, %v8448
          %v8467 = vmul.f32 %v8151, %v8444
          %v8468 = vmul.f32 %v8152, %v8448
          %v8469 = vmul.f32 %v8153, %v8444
          %v8470 = vmul.f32 %v8154, %v8448
          %v8471 = vmul.f32 %v8155, %v8444
          %v8472 = vmul.f32 %v8156, %v8448
          %v8473 = vmul.f32 %v8157, %v8444
          %v8474 = vmul.f32 %v8158, %v8448
          %v8475 = vmul.f32 %v8159, %v8444
          %v8476 = vmul.f32 %v8160, %v8448
          %v8477 = vmul.f32 %v8161, %v8452
          %v8478 = vmul.f32 %v8162, %v8456
          %v8479 = vmul.f32 %v8163, %v8452
          %v8480 = vmul.f32 %v8164, %v8456
          %v8481 = vmul.f32 %v8165, %v8452
          %v8482 = vmul.f32 %v8166, %v8456
          %v8483 = vmul.f32 %v8167, %v8452
          %v8484 = vmul.f32 %v8168, %v8456
          %v8485 = vmul.f32 %v8169, %v8452
          %v8486 = vmul.f32 %v8170, %v8456
          %v8487 = vmul.f32 %v8171, %v8452
          %v8488 = vmul.f32 %v8172, %v8456
          %v8489 = vmul.f32 %v8173, %v8452
          %v8490 = vmul.f32 %v8174, %v8456
          %v8491 = vmul.f32 %v8175, %v8452
          %v8492 = vmul.f32 %v8176, %v8456
          %v8493 = vld [vmem:[%s381] sm:$0x3]
          %v8495 = vlaneseq
          %v8496 = vshrl.u32 %v8495, 7
          %v8497 = vsub.s32 0, %v8496
          %v8498 = vrot.slane %v8493, %v8497
          %v8499 = vlaneseq
          %v8500 = vshrl.u32 %v8499, 7
          %v8501 = vsub.s32 1, %v8500
          %v8502 = vrot.slane %v8493, %v8501
          %v8505 = vmul.f32 %v8461, %v8498
          %v8506 = vmul.f32 %v8462, %v8502
          %v8507 = vmul.f32 %v8463, %v8498
          %v8508 = vmul.f32 %v8464, %v8502
          %v8509 = vmul.f32 %v8465, %v8498
          %v8510 = vmul.f32 %v8466, %v8502
          %v8511 = vmul.f32 %v8467, %v8498
          %v8512 = vmul.f32 %v8468, %v8502
          %v8513 = vmul.f32 %v8469, %v8498
          %v8514 = vmul.f32 %v8470, %v8502
          %v8515 = vmul.f32 %v8471, %v8498
          %v8516 = vmul.f32 %v8472, %v8502
          %v8517 = vmul.f32 %v8473, %v8498
          %v8518 = vmul.f32 %v8474, %v8502
          %v8519 = vmul.f32 %v8475, %v8498
          %v8520 = vmul.f32 %v8476, %v8502
          %v8521 = vmul.f32 %v8477, %v8498
          %v8522 = vmul.f32 %v8478, %v8502
          %v8523 = vmul.f32 %v8479, %v8498
          %v8524 = vmul.f32 %v8480, %v8502
          %v8525 = vmul.f32 %v8481, %v8498
          %v8526 = vmul.f32 %v8482, %v8502
          %v8527 = vmul.f32 %v8483, %v8498
          %v8528 = vmul.f32 %v8484, %v8502
          %v8529 = vmul.f32 %v8485, %v8498
          %v8530 = vmul.f32 %v8486, %v8502
          %v8531 = vmul.f32 %v8487, %v8498
          %v8532 = vmul.f32 %v8488, %v8502
          %v8533 = vmul.f32 %v8489, %v8498
          %v8534 = vmul.f32 %v8490, %v8502
          %v8535 = vmul.f32 %v8491, %v8498
          %v8536 = vmul.f32 %v8492, %v8502
          %v8537 = vld [vmem:[%s390] sm:$0x3]
          %v8539 = vlaneseq
          %v8540 = vshrl.u32 %v8539, 7
          %v8541 = vsub.s32 0, %v8540
          %v8542 = vrot.slane %v8537, %v8541
          %v8543 = vlaneseq
          %v8544 = vshrl.u32 %v8543, 7
          %v8545 = vsub.s32 1, %v8544
          %v8546 = vrot.slane %v8537, %v8545
          %v8549 = vadd.f32 %v8505, %v8542
          %v8550 = vadd.f32 %v8506, %v8546
          %v8551 = vadd.f32 %v8507, %v8542
          %v8552 = vadd.f32 %v8508, %v8546
          %v8553 = vadd.f32 %v8509, %v8542
          %v8554 = vadd.f32 %v8510, %v8546
          %v8555 = vadd.f32 %v8511, %v8542
          %v8556 = vadd.f32 %v8512, %v8546
          %v8557 = vadd.f32 %v8513, %v8542
          %v8558 = vadd.f32 %v8514, %v8546
          %v8559 = vadd.f32 %v8515, %v8542
          %v8560 = vadd.f32 %v8516, %v8546
          %v8561 = vadd.f32 %v8517, %v8542
          %v8562 = vadd.f32 %v8518, %v8546
          %v8563 = vadd.f32 %v8519, %v8542
          %v8564 = vadd.f32 %v8520, %v8546
          %v8565 = vadd.f32 %v8521, %v8542
          %v8566 = vadd.f32 %v8522, %v8546
          %v8567 = vadd.f32 %v8523, %v8542
          %v8568 = vadd.f32 %v8524, %v8546
          %v8569 = vadd.f32 %v8525, %v8542
          %v8570 = vadd.f32 %v8526, %v8546
          %v8571 = vadd.f32 %v8527, %v8542
          %v8572 = vadd.f32 %v8528, %v8546
          %v8573 = vadd.f32 %v8529, %v8542
          %v8574 = vadd.f32 %v8530, %v8546
          %v8575 = vadd.f32 %v8531, %v8542
          %v8576 = vadd.f32 %v8532, %v8546
          %v8577 = vadd.f32 %v8533, %v8542
          %v8578 = vadd.f32 %v8534, %v8546
          %v8579 = vadd.f32 %v8535, %v8542
          %v8580 = vadd.f32 %v8536, %v8546
          %v8581 = vmax.f32 %v8549, 0.0
          %v8582 = vmax.f32 %v8550, 0.0
          %v8583 = vmax.f32 %v8551, 0.0
          %v8584 = vmax.f32 %v8552, 0.0
          %v8585 = vmax.f32 %v8553, 0.0
          %v8586 = vmax.f32 %v8554, 0.0
          %v8587 = vmax.f32 %v8555, 0.0
          %v8588 = vmax.f32 %v8556, 0.0
          %v8589 = vmax.f32 %v8557, 0.0
          %v8590 = vmax.f32 %v8558, 0.0
          %v8591 = vmax.f32 %v8559, 0.0
          %v8592 = vmax.f32 %v8560, 0.0
          %v8593 = vmax.f32 %v8561, 0.0
          %v8594 = vmax.f32 %v8562, 0.0
          %v8595 = vmax.f32 %v8563, 0.0
          %v8596 = vmax.f32 %v8564, 0.0
          %v8597 = vmax.f32 %v8565, 0.0
          %v8598 = vmax.f32 %v8566, 0.0
          %v8599 = vmax.f32 %v8567, 0.0
          %v8600 = vmax.f32 %v8568, 0.0
          %v8601 = vmax.f32 %v8569, 0.0
          %v8602 = vmax.f32 %v8570, 0.0
          %v8603 = vmax.f32 %v8571, 0.0
          %v8604 = vmax.f32 %v8572, 0.0
          %v8605 = vmax.f32 %v8573, 0.0
          %v8606 = vmax.f32 %v8574, 0.0
          %v8607 = vmax.f32 %v8575, 0.0
          %v8608 = vmax.f32 %v8576, 0.0
          %v8609 = vmax.f32 %v8577, 0.0
          %v8610 = vmax.f32 %v8578, 0.0
          %v8611 = vmax.f32 %v8579, 0.0
          %v8612 = vmax.f32 %v8580, 0.0
          %8613 = vst [vmem:[%s452] sm:$0xff] %v8581
          %8614 = vst [vmem:[%s452 + $0x8] sm:$0xff] %v8582
          %8615 = vst [vmem:[%s452 + $0x10] sm:$0xff] %v8583
          %8616 = vst [vmem:[%s452 + $0x18] sm:$0xff] %v8584
          %8617 = vst [vmem:[%s452 + $0x20] sm:$0xff] %v8585
          %8618 = vst [vmem:[%s452 + $0x28] sm:$0xff] %v8586
          %8619 = vst [vmem:[%s452 + $0x30] sm:$0xff] %v8587
          %8620 = vst [vmem:[%s452 + $0x38] sm:$0xff] %v8588
          %8621 = vst [vmem:[%s452 + $0x40] sm:$0xff] %v8589
          %8622 = vst [vmem:[%s452 + $0x48] sm:$0xff] %v8590
          %8623 = vst [vmem:[%s452 + $0x50] sm:$0xff] %v8591
          %8624 = vst [vmem:[%s452 + $0x58] sm:$0xff] %v8592
          %8625 = vst [vmem:[%s452 + $0x60] sm:$0xff] %v8593
          %8626 = vst [vmem:[%s452 + $0x68] sm:$0xff] %v8594
          %8627 = vst [vmem:[%s452 + $0x70] sm:$0xff] %v8595
          %8628 = vst [vmem:[%s452 + $0x78] sm:$0xff] %v8596
          %8629 = vst [vmem:[%s452 + $0x80] sm:$0xff] %v8597
          %8630 = vst [vmem:[%s452 + $0x88] sm:$0xff] %v8598
          %8631 = vst [vmem:[%s452 + $0x90] sm:$0xff] %v8599
          %8632 = vst [vmem:[%s452 + $0x98] sm:$0xff] %v8600
          %8633 = vst [vmem:[%s452 + $0xa0] sm:$0xff] %v8601
          %8634 = vst [vmem:[%s452 + $0xa8] sm:$0xff] %v8602
          %8635 = vst [vmem:[%s452 + $0xb0] sm:$0xff] %v8603
          %8636 = vst [vmem:[%s452 + $0xb8] sm:$0xff] %v8604
          %8637 = vst [vmem:[%s452 + $0xc0] sm:$0xff] %v8605
          %8638 = vst [vmem:[%s452 + $0xc8] sm:$0xff] %v8606
          %8639 = vst [vmem:[%s452 + $0xd0] sm:$0xff] %v8607
          %8640 = vst [vmem:[%s452 + $0xd8] sm:$0xff] %v8608
          %8641 = vst [vmem:[%s452 + $0xe0] sm:$0xff] %v8609
          %8642 = vst [vmem:[%s452 + $0xe8] sm:$0xff] %v8610
          %8643 = vst [vmem:[%s452 + $0xf0] sm:$0xff] %v8611
          %8644 = vst [vmem:[%s452 + $0xf8] sm:$0xff] %v8612
        $region72: #{tpu_custom_call.1} parent=43 // pred_fallthru
          _
        %s8645 = sand.u32 %s207, 1
        %s8646 = scalar_lea.sflag [#allocation4], %s8645
        %s8647 = sand.u32 %s207, 1
        %s8648 = smul.addr %s8647, 256
        %s8649 = scalar_lea.vmem [#allocation11], %s8648
        // Predicated region
        $region73: #{tpu_custom_call.1} parent=43 // pred_check
          %p8650 = pneg %p217
        $region74: #{tpu_custom_call.1} parent=43 // pred_check_branch
          %8652 = sbr.rel (%p8650) target = $region76
        $region75: #{tpu_custom_call.1} parent=43 // pred_region
          %s8653 = smul.u32 2, %s33
          %s8655 = ssub.s32 4096, 4096
          %8656 = vsyncadd %s8646, %s8655
          %s8657 = smul.addr %s8653, 128
          %s8658 = scalar_lea.hbm %s6, %s8657
          %s8659 = sshll.u32 %s8649, 4
          %s8660 = int_to_ptr.vmem [resolvable:$true] %s8659
          %8665 = dma.vmem_to_hbm [thread:$0]  %s8660, 4096, %s8658, %s8646, 256, 512, 16
        $region76: #{tpu_custom_call.1} parent=43 // pred_fallthru
          _
      $region44: #{tpu_custom_call.1} parent=5 // pred_fallthru
        _
      %p8666 = scmp.le.s32.totalorder 2, %s24
      // Predicated region
      $region77: #{tpu_custom_call.1} parent=5 // pred_check
        %p8667 = pneg %p8666
      $region78: #{tpu_custom_call.1} parent=5 // pred_check_branch
        %8669 = sbr.rel (%p8667) target = $region80
      $region79: #{tpu_custom_call.1} parent=5 // pred_region
        %s8670 = ssub.s32 %s24, 2
        // Predicated region
        $region81: #{tpu_custom_call.1} parent=79 // pred_check
          %p8671 = pneg %p223
        $region82: #{tpu_custom_call.1} parent=79 // pred_check_branch
          %8673 = sbr.rel (%p8671) target = $region84
        $region83: #{tpu_custom_call.1} parent=79 // pred_region
          %s8674 = sand.u32 %s208, 1
          %s8675 = scalar_lea.sflag [#allocation4], %s8674
          %s8676 = sand.u32 %s208, 1
          %s8677 = smul.addr %s8676, 256
          %s8678 = scalar_lea.vmem [#allocation11], %s8677
          %8679 = dma.done %s8675, 4096
        $region84: #{tpu_custom_call.1} parent=79 // pred_fallthru
          _
      $region80: #{tpu_custom_call.1} parent=5 // pred_fallthru
        _
    $region6: #{tpu_custom_call.1} parent=1 // loop_footer
      %s28 = sadd.s32 1, %s24
    $region7: #{tpu_custom_call.1} parent=1 // loop_footer_branch
      %23 = sbr.rel target = $region3
    $region8: #{tpu_custom_call.1} parent=1 // loop_exit
      _
    %8680 = vsyncpa [#allocation3], 1
    %s8681 = scalar_lea.sflag [#allocation3], 1
    %8682 = vsyncpa %s8681, 1
    %8683 = vsyncpa [#allocation6], 1
    %s8684 = scalar_lea.sflag [#allocation6], 1
    %8685 = vsyncpa %s8684, 1
    %8686 = vsyncpa [#allocation9], 1
    %s8687 = scalar_lea.sflag [#allocation9], 1
    %8688 = vsyncpa %s8687, 1
    %8689 = vsyncpa [#allocation4], 1
    %s8690 = scalar_lea.sflag [#allocation4], 1
    %8691 = vsyncpa %s8690, 1

</llo_original>
